<compile_context>
chip_gen: v5e
topology: v5e:2x2
jax: 0.10.0
libtpu: 0.0.40
codegen_flags: <defaults>
</compile_context>

<pallas_src>
import numpy as np
import jax
import jax.numpy as jnp
from jax.experimental import pallas as pl
from jax.experimental.pallas import tpu as pltpu


# ----------------------------- static geometry -----------------------------
_B = 2                     # batch, baked into the lane axis of the fused kernel
_HW = 32                   # input spatial size (32x32 -> 16*5*5 = 400 features)
_PIX = _HW * _HW           # 1024 lanes per image
_K = 5                     # conv kernel size
_WX = _B * _PIX                       # 2048  input lanes (all images)
_WA1 = _WX - (32 * 4 + 4)             # 1916  conv1 patch / output width
_WP1 = _WA1 - 33                      # 1883  pool1 width (max pool shift 32+1)
_WA2 = _WP1 - (64 * 4 + 2 * 4)        # 1619  conv2 patch / output width
_WP2 = _WA2 - 66                      # 1553  pool2 width (max pool shift 64+2)
_NSEL = 128 * 4 + 4 * 4 + 1           # 529   lanes covering the 5x5 pool2 grid


# ----------------------------- fused Pallas kernel -----------------------------

def _lenet_kernel(x_ref, w1_ref, s1_ref, b1_ref, w2_ref, s2_ref, b2_ref,
                  sel_ref, exp_ref, msk_ref,
                  fcw_ref, fcb_ref, fc1w_ref, fc1b_ref, fc2w_ref, fc2b_ref,
                  o_ref, pat1_ref, pat2_ref):
    f32 = jnp.float32
    xt = x_ref[...]                                               # (3, 2048)

    # ---- conv1 (5x5, 3->6) as a single lane-dense GEMM ----------------------
    # im2col rows are written into VMEM scratch from 25 shifted slices of the
    # resident input; row 3*k+ci matches weight column order (dy, dx, ci).
    for k in range(_K * _K):
        dy, dx = divmod(k, _K)
        s = 32 * dy + dx
        pat1_ref[3 * k:3 * k + 3, :] = xt[:, s:s + _WA1]
    a1 = jnp.dot(w1_ref[...], pat1_ref[...], preferred_element_type=f32)   # (6, 1916)
    a1 = jnp.maximum(a1 * s1_ref[...] + b1_ref[...], 0.0)        # folded BN + ReLU

    # ---- MaxPool2d(2,2) fused as shifted-slice max ---------------------------
    # pooled pixel (h', w') of image b lives at lane b*1024 + 64*h' + 2*w'.
    p1 = jnp.maximum(jnp.maximum(a1[:, 0:_WP1], a1[:, 1:_WP1 + 1]),
                     jnp.maximum(a1[:, 32:_WP1 + 32], a1[:, 33:_WP1 + 33]))

    # ---- conv2 (5x5, 6->16): shifts double on the pooled (even) sub-grid -----
    for k in range(_K * _K):
        dy, dx = divmod(k, _K)
        s = 64 * dy + 2 * dx
        pat2_ref[6 * k:6 * k + 6, :] = p1[:, s:s + _WA2]
    a2 = jnp.dot(w2_ref[...], pat2_ref[...], preferred_element_type=f32)   # (16, 1619)
    a2 = jnp.maximum(a2 * s2_ref[...] + b2_ref[...], 0.0)

    # ---- second MaxPool2d(2,2) ----------------------------------------------
    p2 = jnp.maximum(jnp.maximum(a2[:, 0:_WP2], a2[:, 2:_WP2 + 2]),
                     jnp.maximum(a2[:, 64:_WP2 + 64], a2[:, 66:_WP2 + 66]))

    # ---- gather the 16x5x5 valid features per image + PyTorch-order flatten --
    # Done with constant 0/1 matmuls and a channel mask (no in-kernel reshapes).
    feats = []
    for b in range(_B):
        p2b = p2[:, _PIX * b:_PIX * b + _NSEL]                              # (16, 529)
        z = jnp.dot(p2b, sel_ref[...], preferred_element_type=f32)          # (16, 25)
        zrep = jnp.dot(z, exp_ref[...], preferred_element_type=f32)         # (16, 400)
        feats.append(jnp.sum(zrep * msk_ref[...], axis=0, keepdims=True))   # (1, 400)
    z = jnp.concatenate(feats, axis=0)                                      # (B, 400)

    # ---- fused MLP head: fc+ReLU, fc1+ReLU, fc2+softmax ----------------------
    h = jnp.maximum(jnp.dot(z, fcw_ref[...], preferred_element_type=f32)
                    + fcb_ref[...], 0.0)
    h = jnp.maximum(jnp.dot(h, fc1w_ref[...], preferred_element_type=f32)
                    + fc1b_ref[...], 0.0)
    logits = jnp.dot(h, fc2w_ref[...], preferred_element_type=f32) + fc2b_ref[...]
    logits = logits - jnp.max(logits, axis=-1, keepdims=True)
    e = jnp.exp(logits)
    # exact divide keeps parity with the jax.nn.softmax reference; switch to
    # pl.reciprocal(..., approx=True) if this ever matters at scale.
    o_ref[...] = e / jnp.sum(e, axis=-1, keepdims=True)


# ----------------------------- pallas_call glue -----------------------------

def _spec(shape):
    n = len(shape)
    return pl.BlockSpec(shape, lambda i, _n=n: (0,) * _n)


def lenet_forward(x, kp):
    assert x.shape == (_B, 3, _HW, _HW), x.shape
    # Single boundary permute: NCHW -> (Cin, B*H*W) so images lie along lanes.
    xt = jnp.transpose(x, (1, 0, 2, 3)).reshape(3, _WX)
    args = (xt, kp['w1'], kp['s1'], kp['b1'], kp['w2'], kp['s2'], kp['b2'],
            kp['sel'], kp['exp'], kp['msk'],
            kp['fcw'], kp['fcb'], kp['fc1w'], kp['fc1b'], kp['fc2w'], kp['fc2b'])
    return pl.pallas_call(
        _lenet_kernel,
        out_shape=jax.ShapeDtypeStruct((_B, 10), jnp.float32),
        grid=(1,),
        in_specs=[_spec(a.shape) for a in args],
        out_specs=_spec((_B, 10)),
        scratch_shapes=[pltpu.VMEM((75, _WA1), jnp.float32),    # conv1 im2col
                        pltpu.VMEM((150, _WA2), jnp.float32)],  # conv2 im2col
    )(*args)


# ----------------------------- parameter prep (one-time, host side) ---------

def prepare_kernel_params(p, eps=1e-5):
    kp = {}
    # conv weights -> GEMM layout: columns ordered (dy, dx, ci) to match the
    # in-kernel patch-row order 3*k+ci / 6*k+ci with k = 5*dy + dx.
    kp['w1'] = jnp.transpose(p['conv1_w'], (0, 2, 3, 1)).reshape(6, 75)
    kp['w2'] = jnp.transpose(p['conv2_w'], (0, 2, 3, 1)).reshape(16, 150)
    # fold inference-mode BatchNorm (+ conv bias) into per-channel scale/bias.
    s1 = p['bn1_gamma'] / jnp.sqrt(p['bn1_var'] + eps)
    kp['s1'] = s1.reshape(6, 1)
    kp['b1'] = ((p['conv1_b'] - p['bn1_mean']) * s1 + p['bn1_beta']).reshape(6, 1)
    s2 = p['bn2_gamma'] / jnp.sqrt(p['bn2_var'] + eps)
    kp['s2'] = s2.reshape(16, 1)
    kp['b2'] = ((p['conv2_b'] - p['bn2_mean']) * s2 + p['bn2_beta']).reshape(16, 1)
    # constant gather / flatten matrices: pool2 output (a, c) sits at lane
    # 128*a + 4*c; final feature order matches PyTorch flatten (ch*25 + 5a + c).
    sel = np.zeros((_NSEL, 25), np.float32)
    for a in range(5):
        for c in range(5):
            sel[128 * a + 4 * c, 5 * a + c] = 1.0
    expm = np.zeros((25, 400), np.float32)
    msk = np.zeros((16, 400), np.float32)
    for ch in range(16):
        msk[ch, ch * 25:(ch + 1) * 25] = 1.0
        for q in range(25):
            expm[q, ch * 25 + q] = 1.0
    kp['sel'] = jnp.asarray(sel)
    kp['exp'] = jnp.asarray(expm)
    kp['msk'] = jnp.asarray(msk)
    kp['fcw'] = p['fc_w']
    kp['fcb'] = p['fc_b'].reshape(1, 120)
    kp['fc1w'] = p['fc1_w']
    kp['fc1b'] = p['fc1_b'].reshape(1, 84)
    kp['fc2w'] = p['fc2_w']
    kp['fc2b'] = p['fc2_b'].reshape(1, 10)
    return kp


# ----------------------------- model params -----------------------------

def init_params(key):
    ks = jax.random.split(key, 18)
    f32 = jnp.float32
    p = {}
    p['conv1_w'] = 0.10 * jax.random.normal(ks[0], (6, 3, 5, 5), f32)
    p['conv1_b'] = 0.05 * jax.random.normal(ks[1], (6,), f32)
    p['bn1_gamma'] = 1.0 + 0.10 * jax.random.normal(ks[2], (6,), f32)
    p['bn1_beta'] = 0.10 * jax.random.normal(ks[3], (6,), f32)
    p['bn1_mean'] = 0.05 * jax.random.normal(ks[4], (6,), f32)
    p['bn1_var'] = 1.0 + 0.10 * jnp.abs(jax.random.normal(ks[5], (6,), f32))
    p['conv2_w'] = 0.10 * jax.random.normal(ks[6], (16, 6, 5, 5), f32)
    p['conv2_b'] = 0.05 * jax.random.normal(ks[7], (16,), f32)
    p['bn2_gamma'] = 1.0 + 0.10 * jax.random.normal(ks[8], (16,), f32)
    p['bn2_beta'] = 0.10 * jax.random.normal(ks[9], (16,), f32)
    p['bn2_mean'] = 0.05 * jax.random.normal(ks[10], (16,), f32)
    p['bn2_var'] = 1.0 + 0.10 * jnp.abs(jax.random.normal(ks[11], (16,), f32))
    p['fc_w'] = 0.05 * jax.random.normal(ks[12], (400, 120), f32)
    p['fc_b'] = 0.05 * jax.random.normal(ks[13], (120,), f32)
    p['fc1_w'] = 0.05 * jax.random.normal(ks[14], (120, 84), f32)
    p['fc1_b'] = 0.05 * jax.random.normal(ks[15], (84,), f32)
    p['fc2_w'] = 0.05 * jax.random.normal(ks[16], (84, 10), f32)
    p['fc2_b'] = 0.05 * jax.random.normal(ks[17], (10,), f32)
    return p


# ----------------------------- pure-JAX reference -----------------------------

def reference_forward(x, p, eps=1e-5):
    def conv(x, w, b):
        y = jax.lax.conv_general_dilated(x, w, (1, 1), 'VALID',
                                         dimension_numbers=('NCHW', 'OIHW', 'NCHW'))
        return y + b[None, :, None, None]

    def bn(x, g, bta, m, v):
        s = g / jnp.sqrt(v + eps)
        return x * s[None, :, None, None] + (bta - m * s)[None, :, None, None]

    def pool(x):
        B, C, H, W = x.shape
        return jnp.max(x.reshape(B, C, H // 2, 2, W // 2, 2), axis=(3, 5))

    out = pool(jnp.maximum(bn(conv(x, p['conv1_w'], p['conv1_b']),
                              p['bn1_gamma'], p['bn1_beta'],
                              p['bn1_mean'], p['bn1_var']), 0.0))
    out = pool(jnp.maximum(bn(conv(out, p['conv2_w'], p['conv2_b']),
                              p['bn2_gamma'], p['bn2_beta'],
                              p['bn2_mean'], p['bn2_var']), 0.0))
    out = out.reshape(out.shape[0], -1)
    out = jnp.maximum(out @ p['fc_w'] + p['fc_b'], 0.0)
    out = jnp.maximum(out @ p['fc1_w'] + p['fc1_b'], 0.0)
    out = out @ p['fc2_w'] + p['fc2_b']
    return jax.nn.softmax(out, axis=1)


# ----------------------------- main -----------------------------

if __name__ == "__main__":
    key = jax.random.PRNGKey(0)
    pkey, xkey = jax.random.split(key)
    params = init_params(pkey)
    # LeNet's fc layer expects 400 = 16*5*5 features -> input spatial is 32x32.
    x = jax.random.normal(xkey, (_B, 3, _HW, _HW), jnp.float32)

    kparams = prepare_kernel_params(params)          # one-time weight re-layout
    fwd = jax.jit(lenet_forward)
    out = jax.block_until_ready(fwd(x, kparams))

    ref = reference_forward(x, params)
    assert out.shape == (_B, 10), out.shape
    assert jnp.allclose(jnp.sum(out, axis=1), 1.0, atol=1e-4)
    err = jnp.max(jnp.abs(out - ref))
    assert jnp.allclose(out, ref, atol=2e-4, rtol=1e-3), err
    print("KERNEL_OK")
</pallas_src>

<mosaic_0001>
module attributes {stable_mosaic.version = 11 : i64} {
  func.func @_lenet_kernel(%arg0: i32, %arg1: memref<3x2048xf32, #tpu.memory_space<vmem>>, %arg2: memref<6x75xf32, #tpu.memory_space<vmem>>, %arg3: memref<6x1xf32, #tpu.memory_space<vmem>>, %arg4: memref<6x1xf32, #tpu.memory_space<vmem>>, %arg5: memref<16x150xf32, #tpu.memory_space<vmem>>, %arg6: memref<16x1xf32, #tpu.memory_space<vmem>>, %arg7: memref<16x1xf32, #tpu.memory_space<vmem>>, %arg8: memref<529x25xf32, #tpu.memory_space<vmem>>, %arg9: memref<25x400xf32, #tpu.memory_space<vmem>>, %arg10: memref<16x400xf32, #tpu.memory_space<vmem>>, %arg11: memref<400x120xf32, #tpu.memory_space<vmem>>, %arg12: memref<1x120xf32, #tpu.memory_space<vmem>>, %arg13: memref<120x84xf32, #tpu.memory_space<vmem>>, %arg14: memref<1x84xf32, #tpu.memory_space<vmem>>, %arg15: memref<84x10xf32, #tpu.memory_space<vmem>>, %arg16: memref<1x10xf32, #tpu.memory_space<vmem>>, %arg17: memref<2x10xf32, #tpu.memory_space<vmem>>, %arg18: memref<75x1916xf32, #tpu.memory_space<vmem>>, %arg19: memref<150x1619xf32, #tpu.memory_space<vmem>>) attributes {dimension_semantics = [#tpu.dimension_semantics<arbitrary>], iteration_bounds = array<i64: 1>, scalar_prefetch = 0 : i64, scratch_operands = 2 : i64, tpu.core_type = #tpu.core_type<tc>, window_params = [{pipeline_mode = #tpu.pipeline_mode<synchronous>, transform_indices = @transform_0, window_bounds = array<i64: 3, 2048>}, {pipeline_mode = #tpu.pipeline_mode<synchronous>, transform_indices = @transform_1, window_bounds = array<i64: 6, 75>}, {pipeline_mode = #tpu.pipeline_mode<synchronous>, transform_indices = @transform_2, window_bounds = array<i64: 6, 1>}, {pipeline_mode = #tpu.pipeline_mode<synchronous>, transform_indices = @transform_3, window_bounds = array<i64: 6, 1>}, {pipeline_mode = #tpu.pipeline_mode<synchronous>, transform_indices = @transform_4, window_bounds = array<i64: 16, 150>}, {pipeline_mode = #tpu.pipeline_mode<synchronous>, transform_indices = @transform_5, window_bounds = array<i64: 16, 1>}, {pipeline_mode = #tpu.pipeline_mode<synchronous>, transform_indices = @transform_6, window_bounds = array<i64: 16, 1>}, {pipeline_mode = #tpu.pipeline_mode<synchronous>, transform_indices = @transform_7, window_bounds = array<i64: 529, 25>}, {pipeline_mode = #tpu.pipeline_mode<synchronous>, transform_indices = @transform_8, window_bounds = array<i64: 25, 400>}, {pipeline_mode = #tpu.pipeline_mode<synchronous>, transform_indices = @transform_9, window_bounds = array<i64: 16, 400>}, {pipeline_mode = #tpu.pipeline_mode<synchronous>, transform_indices = @transform_10, window_bounds = array<i64: 400, 120>}, {pipeline_mode = #tpu.pipeline_mode<synchronous>, transform_indices = @transform_11, window_bounds = array<i64: 1, 120>}, {pipeline_mode = #tpu.pipeline_mode<synchronous>, transform_indices = @transform_12, window_bounds = array<i64: 120, 84>}, {pipeline_mode = #tpu.pipeline_mode<synchronous>, transform_indices = @transform_13, window_bounds = array<i64: 1, 84>}, {pipeline_mode = #tpu.pipeline_mode<synchronous>, transform_indices = @transform_14, window_bounds = array<i64: 84, 10>}, {pipeline_mode = #tpu.pipeline_mode<synchronous>, transform_indices = @transform_15, window_bounds = array<i64: 1, 10>}, {pipeline_mode = #tpu.pipeline_mode<synchronous>, transform_indices = @transform_16, window_bounds = array<i64: 2, 10>}]} {
    %c0 = arith.constant 0 : index
    %c0_0 = arith.constant 0 : index
    %0 = vector.load %arg1[%c0, %c0_0] : memref<3x2048xf32, #tpu.memory_space<vmem>>, vector<3x2048xf32>
    %1 = vector.extract_strided_slice %0 {offsets = [0, 0], sizes = [3, 1916], strides = [1, 1]} : vector<3x2048xf32> to vector<3x1916xf32>
    %c0_1 = arith.constant 0 : index
    %c0_2 = arith.constant 0 : index
    %2 = vector.load %arg18[%c0_1, %c0_2] : memref<75x1916xf32, #tpu.memory_space<vmem>>, vector<3x1916xf32>
    tpu.vector_store %arg18[%c0_1, %c0_2], %1 {strides = array<i32>} : memref<75x1916xf32, #tpu.memory_space<vmem>>, vector<3x1916xf32>,
    %3 = vector.extract_strided_slice %0 {offsets = [0, 1], sizes = [3, 1916], strides = [1, 1]} : vector<3x2048xf32> to vector<3x1916xf32>
    %c3 = arith.constant 3 : index
    %c0_3 = arith.constant 0 : index
    %4 = vector.load %arg18[%c3, %c0_3] : memref<75x1916xf32, #tpu.memory_space<vmem>>, vector<3x1916xf32>
    tpu.vector_store %arg18[%c3, %c0_3], %3 {strides = array<i32>} : memref<75x1916xf32, #tpu.memory_space<vmem>>, vector<3x1916xf32>,
    %5 = vector.extract_strided_slice %0 {offsets = [0, 2], sizes = [3, 1916], strides = [1, 1]} : vector<3x2048xf32> to vector<3x1916xf32>
    %c6 = arith.constant 6 : index
    %c0_4 = arith.constant 0 : index
    %6 = vector.load %arg18[%c6, %c0_4] : memref<75x1916xf32, #tpu.memory_space<vmem>>, vector<3x1916xf32>
    tpu.vector_store %arg18[%c6, %c0_4], %5 {strides = array<i32>} : memref<75x1916xf32, #tpu.memory_space<vmem>>, vector<3x1916xf32>,
    %7 = vector.extract_strided_slice %0 {offsets = [0, 3], sizes = [3, 1916], strides = [1, 1]} : vector<3x2048xf32> to vector<3x1916xf32>
    %c9 = arith.constant 9 : index
    %c0_5 = arith.constant 0 : index
    %8 = vector.load %arg18[%c9, %c0_5] : memref<75x1916xf32, #tpu.memory_space<vmem>>, vector<3x1916xf32>
    tpu.vector_store %arg18[%c9, %c0_5], %7 {strides = array<i32>} : memref<75x1916xf32, #tpu.memory_space<vmem>>, vector<3x1916xf32>,
    %9 = vector.extract_strided_slice %0 {offsets = [0, 4], sizes = [3, 1916], strides = [1, 1]} : vector<3x2048xf32> to vector<3x1916xf32>
    %c12 = arith.constant 12 : index
    %c0_6 = arith.constant 0 : index
    %10 = vector.load %arg18[%c12, %c0_6] : memref<75x1916xf32, #tpu.memory_space<vmem>>, vector<3x1916xf32>
    tpu.vector_store %arg18[%c12, %c0_6], %9 {strides = array<i32>} : memref<75x1916xf32, #tpu.memory_space<vmem>>, vector<3x1916xf32>,
    %11 = vector.extract_strided_slice %0 {offsets = [0, 32], sizes = [3, 1916], strides = [1, 1]} : vector<3x2048xf32> to vector<3x1916xf32>
    %c15 = arith.constant 15 : index
    %c0_7 = arith.constant 0 : index
    %12 = vector.load %arg18[%c15, %c0_7] : memref<75x1916xf32, #tpu.memory_space<vmem>>, vector<3x1916xf32>
    tpu.vector_store %arg18[%c15, %c0_7], %11 {strides = array<i32>} : memref<75x1916xf32, #tpu.memory_space<vmem>>, vector<3x1916xf32>,
    %13 = vector.extract_strided_slice %0 {offsets = [0, 33], sizes = [3, 1916], strides = [1, 1]} : vector<3x2048xf32> to vector<3x1916xf32>
    %c18 = arith.constant 18 : index
    %c0_8 = arith.constant 0 : index
    %14 = vector.load %arg18[%c18, %c0_8] : memref<75x1916xf32, #tpu.memory_space<vmem>>, vector<3x1916xf32>
    tpu.vector_store %arg18[%c18, %c0_8], %13 {strides = array<i32>} : memref<75x1916xf32, #tpu.memory_space<vmem>>, vector<3x1916xf32>,
    %15 = vector.extract_strided_slice %0 {offsets = [0, 34], sizes = [3, 1916], strides = [1, 1]} : vector<3x2048xf32> to vector<3x1916xf32>
    %c21 = arith.constant 21 : index
    %c0_9 = arith.constant 0 : index
    %16 = vector.load %arg18[%c21, %c0_9] : memref<75x1916xf32, #tpu.memory_space<vmem>>, vector<3x1916xf32>
    tpu.vector_store %arg18[%c21, %c0_9], %15 {strides = array<i32>} : memref<75x1916xf32, #tpu.memory_space<vmem>>, vector<3x1916xf32>,
    %17 = vector.extract_strided_slice %0 {offsets = [0, 35], sizes = [3, 1916], strides = [1, 1]} : vector<3x2048xf32> to vector<3x1916xf32>
    %c24 = arith.constant 24 : index
    %c0_10 = arith.constant 0 : index
    %18 = vector.load %arg18[%c24, %c0_10] : memref<75x1916xf32, #tpu.memory_space<vmem>>, vector<3x1916xf32>
    tpu.vector_store %arg18[%c24, %c0_10], %17 {strides = array<i32>} : memref<75x1916xf32, #tpu.memory_space<vmem>>, vector<3x1916xf32>,
    %19 = vector.extract_strided_slice %0 {offsets = [0, 36], sizes = [3, 1916], strides = [1, 1]} : vector<3x2048xf32> to vector<3x1916xf32>
    %c27 = arith.constant 27 : index
    %c0_11 = arith.constant 0 : index
    %20 = vector.load %arg18[%c27, %c0_11] : memref<75x1916xf32, #tpu.memory_space<vmem>>, vector<3x1916xf32>
    tpu.vector_store %arg18[%c27, %c0_11], %19 {strides = array<i32>} : memref<75x1916xf32, #tpu.memory_space<vmem>>, vector<3x1916xf32>,
    %21 = vector.extract_strided_slice %0 {offsets = [0, 64], sizes = [3, 1916], strides = [1, 1]} : vector<3x2048xf32> to vector<3x1916xf32>
    %c30 = arith.constant 30 : index
    %c0_12 = arith.constant 0 : index
    %22 = vector.load %arg18[%c30, %c0_12] : memref<75x1916xf32, #tpu.memory_space<vmem>>, vector<3x1916xf32>
    tpu.vector_store %arg18[%c30, %c0_12], %21 {strides = array<i32>} : memref<75x1916xf32, #tpu.memory_space<vmem>>, vector<3x1916xf32>,
    %23 = vector.extract_strided_slice %0 {offsets = [0, 65], sizes = [3, 1916], strides = [1, 1]} : vector<3x2048xf32> to vector<3x1916xf32>
    %c33 = arith.constant 33 : index
    %c0_13 = arith.constant 0 : index
    %24 = vector.load %arg18[%c33, %c0_13] : memref<75x1916xf32, #tpu.memory_space<vmem>>, vector<3x1916xf32>
    tpu.vector_store %arg18[%c33, %c0_13], %23 {strides = array<i32>} : memref<75x1916xf32, #tpu.memory_space<vmem>>, vector<3x1916xf32>,
    %25 = vector.extract_strided_slice %0 {offsets = [0, 66], sizes = [3, 1916], strides = [1, 1]} : vector<3x2048xf32> to vector<3x1916xf32>
    %c36 = arith.constant 36 : index
    %c0_14 = arith.constant 0 : index
    %26 = vector.load %arg18[%c36, %c0_14] : memref<75x1916xf32, #tpu.memory_space<vmem>>, vector<3x1916xf32>
    tpu.vector_store %arg18[%c36, %c0_14], %25 {strides = array<i32>} : memref<75x1916xf32, #tpu.memory_space<vmem>>, vector<3x1916xf32>,
    %27 = vector.extract_strided_slice %0 {offsets = [0, 67], sizes = [3, 1916], strides = [1, 1]} : vector<3x2048xf32> to vector<3x1916xf32>
    %c39 = arith.constant 39 : index
    %c0_15 = arith.constant 0 : index
    %28 = vector.load %arg18[%c39, %c0_15] : memref<75x1916xf32, #tpu.memory_space<vmem>>, vector<3x1916xf32>
    tpu.vector_store %arg18[%c39, %c0_15], %27 {strides = array<i32>} : memref<75x1916xf32, #tpu.memory_space<vmem>>, vector<3x1916xf32>,
    %29 = vector.extract_strided_slice %0 {offsets = [0, 68], sizes = [3, 1916], strides = [1, 1]} : vector<3x2048xf32> to vector<3x1916xf32>
    %c42 = arith.constant 42 : index
    %c0_16 = arith.constant 0 : index
    %30 = vector.load %arg18[%c42, %c0_16] : memref<75x1916xf32, #tpu.memory_space<vmem>>, vector<3x1916xf32>
    tpu.vector_store %arg18[%c42, %c0_16], %29 {strides = array<i32>} : memref<75x1916xf32, #tpu.memory_space<vmem>>, vector<3x1916xf32>,
    %31 = vector.extract_strided_slice %0 {offsets = [0, 96], sizes = [3, 1916], strides = [1, 1]} : vector<3x2048xf32> to vector<3x1916xf32>
    %c45 = arith.constant 45 : index
    %c0_17 = arith.constant 0 : index
    %32 = vector.load %arg18[%c45, %c0_17] : memref<75x1916xf32, #tpu.memory_space<vmem>>, vector<3x1916xf32>
    tpu.vector_store %arg18[%c45, %c0_17], %31 {strides = array<i32>} : memref<75x1916xf32, #tpu.memory_space<vmem>>, vector<3x1916xf32>,
    %33 = vector.extract_strided_slice %0 {offsets = [0, 97], sizes = [3, 1916], strides = [1, 1]} : vector<3x2048xf32> to vector<3x1916xf32>
    %c48 = arith.constant 48 : index
    %c0_18 = arith.constant 0 : index
    %34 = vector.load %arg18[%c48, %c0_18] : memref<75x1916xf32, #tpu.memory_space<vmem>>, vector<3x1916xf32>
    tpu.vector_store %arg18[%c48, %c0_18], %33 {strides = array<i32>} : memref<75x1916xf32, #tpu.memory_space<vmem>>, vector<3x1916xf32>,
    %35 = vector.extract_strided_slice %0 {offsets = [0, 98], sizes = [3, 1916], strides = [1, 1]} : vector<3x2048xf32> to vector<3x1916xf32>
    %c51 = arith.constant 51 : index
    %c0_19 = arith.constant 0 : index
    %36 = vector.load %arg18[%c51, %c0_19] : memref<75x1916xf32, #tpu.memory_space<vmem>>, vector<3x1916xf32>
    tpu.vector_store %arg18[%c51, %c0_19], %35 {strides = array<i32>} : memref<75x1916xf32, #tpu.memory_space<vmem>>, vector<3x1916xf32>,
    %37 = vector.extract_strided_slice %0 {offsets = [0, 99], sizes = [3, 1916], strides = [1, 1]} : vector<3x2048xf32> to vector<3x1916xf32>
    %c54 = arith.constant 54 : index
    %c0_20 = arith.constant 0 : index
    %38 = vector.load %arg18[%c54, %c0_20] : memref<75x1916xf32, #tpu.memory_space<vmem>>, vector<3x1916xf32>
    tpu.vector_store %arg18[%c54, %c0_20], %37 {strides = array<i32>} : memref<75x1916xf32, #tpu.memory_space<vmem>>, vector<3x1916xf32>,
    %39 = vector.extract_strided_slice %0 {offsets = [0, 100], sizes = [3, 1916], strides = [1, 1]} : vector<3x2048xf32> to vector<3x1916xf32>
    %c57 = arith.constant 57 : index
    %c0_21 = arith.constant 0 : index
    %40 = vector.load %arg18[%c57, %c0_21] : memref<75x1916xf32, #tpu.memory_space<vmem>>, vector<3x1916xf32>
    tpu.vector_store %arg18[%c57, %c0_21], %39 {strides = array<i32>} : memref<75x1916xf32, #tpu.memory_space<vmem>>, vector<3x1916xf32>,
    %41 = vector.extract_strided_slice %0 {offsets = [0, 128], sizes = [3, 1916], strides = [1, 1]} : vector<3x2048xf32> to vector<3x1916xf32>
    %c60 = arith.constant 60 : index
    %c0_22 = arith.constant 0 : index
    %42 = vector.load %arg18[%c60, %c0_22] : memref<75x1916xf32, #tpu.memory_space<vmem>>, vector<3x1916xf32>
    tpu.vector_store %arg18[%c60, %c0_22], %41 {strides = array<i32>} : memref<75x1916xf32, #tpu.memory_space<vmem>>, vector<3x1916xf32>,
    %43 = vector.extract_strided_slice %0 {offsets = [0, 129], sizes = [3, 1916], strides = [1, 1]} : vector<3x2048xf32> to vector<3x1916xf32>
    %c63 = arith.constant 63 : index
    %c0_23 = arith.constant 0 : index
    %44 = vector.load %arg18[%c63, %c0_23] : memref<75x1916xf32, #tpu.memory_space<vmem>>, vector<3x1916xf32>
    tpu.vector_store %arg18[%c63, %c0_23], %43 {strides = array<i32>} : memref<75x1916xf32, #tpu.memory_space<vmem>>, vector<3x1916xf32>,
    %45 = vector.extract_strided_slice %0 {offsets = [0, 130], sizes = [3, 1916], strides = [1, 1]} : vector<3x2048xf32> to vector<3x1916xf32>
    %c66 = arith.constant 66 : index
    %c0_24 = arith.constant 0 : index
    %46 = vector.load %arg18[%c66, %c0_24] : memref<75x1916xf32, #tpu.memory_space<vmem>>, vector<3x1916xf32>
    tpu.vector_store %arg18[%c66, %c0_24], %45 {strides = array<i32>} : memref<75x1916xf32, #tpu.memory_space<vmem>>, vector<3x1916xf32>,
    %47 = vector.extract_strided_slice %0 {offsets = [0, 131], sizes = [3, 1916], strides = [1, 1]} : vector<3x2048xf32> to vector<3x1916xf32>
    %c69 = arith.constant 69 : index
    %c0_25 = arith.constant 0 : index
    %48 = vector.load %arg18[%c69, %c0_25] : memref<75x1916xf32, #tpu.memory_space<vmem>>, vector<3x1916xf32>
    tpu.vector_store %arg18[%c69, %c0_25], %47 {strides = array<i32>} : memref<75x1916xf32, #tpu.memory_space<vmem>>, vector<3x1916xf32>,
    %49 = vector.extract_strided_slice %0 {offsets = [0, 132], sizes = [3, 1916], strides = [1, 1]} : vector<3x2048xf32> to vector<3x1916xf32>
    %c72 = arith.constant 72 : index
    %c0_26 = arith.constant 0 : index
    %50 = vector.load %arg18[%c72, %c0_26] : memref<75x1916xf32, #tpu.memory_space<vmem>>, vector<3x1916xf32>
    tpu.vector_store %arg18[%c72, %c0_26], %49 {strides = array<i32>} : memref<75x1916xf32, #tpu.memory_space<vmem>>, vector<3x1916xf32>,
    %c0_27 = arith.constant 0 : index
    %c0_28 = arith.constant 0 : index
    %51 = vector.load %arg2[%c0_27, %c0_28] : memref<6x75xf32, #tpu.memory_space<vmem>>, vector<6x75xf32>
    %c0_29 = arith.constant 0 : index
    %c0_30 = arith.constant 0 : index
    %52 = vector.load %arg18[%c0_29, %c0_30] : memref<75x1916xf32, #tpu.memory_space<vmem>>, vector<75x1916xf32>
    %cst = arith.constant dense<0.000000e+00> : vector<6x1916xf32>
    %53 = tpu.matmul %51, %52, %cst {dimension_numbers = #tpu.dot_dimension_numbers<[1], [0], [0], [1], [0, 0, 1, 1], [], []>} : vector<6x75xf32>, vector<75x1916xf32>, vector<6x1916xf32> -> vector<6x1916xf32>
    %c0_31 = arith.constant 0 : index
    %c0_32 = arith.constant 0 : index
    %54 = vector.load %arg3[%c0_31, %c0_32] : memref<6x1xf32, #tpu.memory_space<vmem>>, vector<6x1xf32>
    %55 = vector.broadcast %54 : vector<6x1xf32> to vector<6x1916xf32>
    %56 = arith.mulf %53, %55 : vector<6x1916xf32>
    %c0_33 = arith.constant 0 : index
    %c0_34 = arith.constant 0 : index
    %57 = vector.load %arg4[%c0_33, %c0_34] : memref<6x1xf32, #tpu.memory_space<vmem>>, vector<6x1xf32>
    %58 = vector.broadcast %57 : vector<6x1xf32> to vector<6x1916xf32>
    %59 = arith.addf %56, %58 : vector<6x1916xf32>
    %cst_35 = arith.constant 0.000000e+00 : f32
    %60 = vector.broadcast %cst_35 : f32 to vector<6x1916xf32>
    %61 = arith.maximumf %59, %60 : vector<6x1916xf32>
    %62 = vector.extract_strided_slice %61 {offsets = [0, 0], sizes = [6, 1883], strides = [1, 1]} : vector<6x1916xf32> to vector<6x1883xf32>
    %63 = vector.extract_strided_slice %61 {offsets = [0, 1], sizes = [6, 1883], strides = [1, 1]} : vector<6x1916xf32> to vector<6x1883xf32>
    %64 = arith.maximumf %62, %63 : vector<6x1883xf32>
    %65 = vector.extract_strided_slice %61 {offsets = [0, 32], sizes = [6, 1883], strides = [1, 1]} : vector<6x1916xf32> to vector<6x1883xf32>
    %66 = vector.extract_strided_slice %61 {offsets = [0, 33], sizes = [6, 1883], strides = [1, 1]} : vector<6x1916xf32> to vector<6x1883xf32>
    %67 = arith.maximumf %65, %66 : vector<6x1883xf32>
    %68 = arith.maximumf %64, %67 : vector<6x1883xf32>
    %69 = vector.extract_strided_slice %68 {offsets = [0, 0], sizes = [6, 1619], strides = [1, 1]} : vector<6x1883xf32> to vector<6x1619xf32>
    %c0_36 = arith.constant 0 : index
    %c0_37 = arith.constant 0 : index
    %70 = vector.load %arg19[%c0_36, %c0_37] : memref<150x1619xf32, #tpu.memory_space<vmem>>, vector<6x1619xf32>
    tpu.vector_store %arg19[%c0_36, %c0_37], %69 {strides = array<i32>} : memref<150x1619xf32, #tpu.memory_space<vmem>>, vector<6x1619xf32>,
    %71 = vector.extract_strided_slice %68 {offsets = [0, 2], sizes = [6, 1619], strides = [1, 1]} : vector<6x1883xf32> to vector<6x1619xf32>
    %c6_38 = arith.constant 6 : index
    %c0_39 = arith.constant 0 : index
    %72 = vector.load %arg19[%c6_38, %c0_39] : memref<150x1619xf32, #tpu.memory_space<vmem>>, vector<6x1619xf32>
    tpu.vector_store %arg19[%c6_38, %c0_39], %71 {strides = array<i32>} : memref<150x1619xf32, #tpu.memory_space<vmem>>, vector<6x1619xf32>,
    %73 = vector.extract_strided_slice %68 {offsets = [0, 4], sizes = [6, 1619], strides = [1, 1]} : vector<6x1883xf32> to vector<6x1619xf32>
    %c12_40 = arith.constant 12 : index
    %c0_41 = arith.constant 0 : index
    %74 = vector.load %arg19[%c12_40, %c0_41] : memref<150x1619xf32, #tpu.memory_space<vmem>>, vector<6x1619xf32>
    tpu.vector_store %arg19[%c12_40, %c0_41], %73 {strides = array<i32>} : memref<150x1619xf32, #tpu.memory_space<vmem>>, vector<6x1619xf32>,
    %75 = vector.extract_strided_slice %68 {offsets = [0, 6], sizes = [6, 1619], strides = [1, 1]} : vector<6x1883xf32> to vector<6x1619xf32>
    %c18_42 = arith.constant 18 : index
    %c0_43 = arith.constant 0 : index
    %76 = vector.load %arg19[%c18_42, %c0_43] : memref<150x1619xf32, #tpu.memory_space<vmem>>, vector<6x1619xf32>
    tpu.vector_store %arg19[%c18_42, %c0_43], %75 {strides = array<i32>} : memref<150x1619xf32, #tpu.memory_space<vmem>>, vector<6x1619xf32>,
    %77 = vector.extract_strided_slice %68 {offsets = [0, 8], sizes = [6, 1619], strides = [1, 1]} : vector<6x1883xf32> to vector<6x1619xf32>
    %c24_44 = arith.constant 24 : index
    %c0_45 = arith.constant 0 : index
    %78 = vector.load %arg19[%c24_44, %c0_45] : memref<150x1619xf32, #tpu.memory_space<vmem>>, vector<6x1619xf32>
    tpu.vector_store %arg19[%c24_44, %c0_45], %77 {strides = array<i32>} : memref<150x1619xf32, #tpu.memory_space<vmem>>, vector<6x1619xf32>,
    %79 = vector.extract_strided_slice %68 {offsets = [0, 64], sizes = [6, 1619], strides = [1, 1]} : vector<6x1883xf32> to vector<6x1619xf32>
    %c30_46 = arith.constant 30 : index
    %c0_47 = arith.constant 0 : index
    %80 = vector.load %arg19[%c30_46, %c0_47] : memref<150x1619xf32, #tpu.memory_space<vmem>>, vector<6x1619xf32>
    tpu.vector_store %arg19[%c30_46, %c0_47], %79 {strides = array<i32>} : memref<150x1619xf32, #tpu.memory_space<vmem>>, vector<6x1619xf32>,
    %81 = vector.extract_strided_slice %68 {offsets = [0, 66], sizes = [6, 1619], strides = [1, 1]} : vector<6x1883xf32> to vector<6x1619xf32>
    %c36_48 = arith.constant 36 : index
    %c0_49 = arith.constant 0 : index
    %82 = vector.load %arg19[%c36_48, %c0_49] : memref<150x1619xf32, #tpu.memory_space<vmem>>, vector<6x1619xf32>
    tpu.vector_store %arg19[%c36_48, %c0_49], %81 {strides = array<i32>} : memref<150x1619xf32, #tpu.memory_space<vmem>>, vector<6x1619xf32>,
    %83 = vector.extract_strided_slice %68 {offsets = [0, 68], sizes = [6, 1619], strides = [1, 1]} : vector<6x1883xf32> to vector<6x1619xf32>
    %c42_50 = arith.constant 42 : index
    %c0_51 = arith.constant 0 : index
    %84 = vector.load %arg19[%c42_50, %c0_51] : memref<150x1619xf32, #tpu.memory_space<vmem>>, vector<6x1619xf32>
    tpu.vector_store %arg19[%c42_50, %c0_51], %83 {strides = array<i32>} : memref<150x1619xf32, #tpu.memory_space<vmem>>, vector<6x1619xf32>,
    %85 = vector.extract_strided_slice %68 {offsets = [0, 70], sizes = [6, 1619], strides = [1, 1]} : vector<6x1883xf32> to vector<6x1619xf32>
    %c48_52 = arith.constant 48 : index
    %c0_53 = arith.constant 0 : index
    %86 = vector.load %arg19[%c48_52, %c0_53] : memref<150x1619xf32, #tpu.memory_space<vmem>>, vector<6x1619xf32>
    tpu.vector_store %arg19[%c48_52, %c0_53], %85 {strides = array<i32>} : memref<150x1619xf32, #tpu.memory_space<vmem>>, vector<6x1619xf32>,
    %87 = vector.extract_strided_slice %68 {offsets = [0, 72], sizes = [6, 1619], strides = [1, 1]} : vector<6x1883xf32> to vector<6x1619xf32>
    %c54_54 = arith.constant 54 : index
    %c0_55 = arith.constant 0 : index
    %88 = vector.load %arg19[%c54_54, %c0_55] : memref<150x1619xf32, #tpu.memory_space<vmem>>, vector<6x1619xf32>
    tpu.vector_store %arg19[%c54_54, %c0_55], %87 {strides = array<i32>} : memref<150x1619xf32, #tpu.memory_space<vmem>>, vector<6x1619xf32>,
    %89 = vector.extract_strided_slice %68 {offsets = [0, 128], sizes = [6, 1619], strides = [1, 1]} : vector<6x1883xf32> to vector<6x1619xf32>
    %c60_56 = arith.constant 60 : index
    %c0_57 = arith.constant 0 : index
    %90 = vector.load %arg19[%c60_56, %c0_57] : memref<150x1619xf32, #tpu.memory_space<vmem>>, vector<6x1619xf32>
    tpu.vector_store %arg19[%c60_56, %c0_57], %89 {strides = array<i32>} : memref<150x1619xf32, #tpu.memory_space<vmem>>, vector<6x1619xf32>,
    %91 = vector.extract_strided_slice %68 {offsets = [0, 130], sizes = [6, 1619], strides = [1, 1]} : vector<6x1883xf32> to vector<6x1619xf32>
    %c66_58 = arith.constant 66 : index
    %c0_59 = arith.constant 0 : index
    %92 = vector.load %arg19[%c66_58, %c0_59] : memref<150x1619xf32, #tpu.memory_space<vmem>>, vector<6x1619xf32>
    tpu.vector_store %arg19[%c66_58, %c0_59], %91 {strides = array<i32>} : memref<150x1619xf32, #tpu.memory_space<vmem>>, vector<6x1619xf32>,
    %93 = vector.extract_strided_slice %68 {offsets = [0, 132], sizes = [6, 1619], strides = [1, 1]} : vector<6x1883xf32> to vector<6x1619xf32>
    %c72_60 = arith.constant 72 : index
    %c0_61 = arith.constant 0 : index
    %94 = vector.load %arg19[%c72_60, %c0_61] : memref<150x1619xf32, #tpu.memory_space<vmem>>, vector<6x1619xf32>
    tpu.vector_store %arg19[%c72_60, %c0_61], %93 {strides = array<i32>} : memref<150x1619xf32, #tpu.memory_space<vmem>>, vector<6x1619xf32>,
    %95 = vector.extract_strided_slice %68 {offsets = [0, 134], sizes = [6, 1619], strides = [1, 1]} : vector<6x1883xf32> to vector<6x1619xf32>
    %c78 = arith.constant 78 : index
    %c0_62 = arith.constant 0 : index
    %96 = vector.load %arg19[%c78, %c0_62] : memref<150x1619xf32, #tpu.memory_space<vmem>>, vector<6x1619xf32>
    tpu.vector_store %arg19[%c78, %c0_62], %95 {strides = array<i32>} : memref<150x1619xf32, #tpu.memory_space<vmem>>, vector<6x1619xf32>,
    %97 = vector.extract_strided_slice %68 {offsets = [0, 136], sizes = [6, 1619], strides = [1, 1]} : vector<6x1883xf32> to vector<6x1619xf32>
    %c84 = arith.constant 84 : index
    %c0_63 = arith.constant 0 : index
    %98 = vector.load %arg19[%c84, %c0_63] : memref<150x1619xf32, #tpu.memory_space<vmem>>, vector<6x1619xf32>
    tpu.vector_store %arg19[%c84, %c0_63], %97 {strides = array<i32>} : memref<150x1619xf32, #tpu.memory_space<vmem>>, vector<6x1619xf32>,
    %99 = vector.extract_strided_slice %68 {offsets = [0, 192], sizes = [6, 1619], strides = [1, 1]} : vector<6x1883xf32> to vector<6x1619xf32>
    %c90 = arith.constant 90 : index
    %c0_64 = arith.constant 0 : index
    %100 = vector.load %arg19[%c90, %c0_64] : memref<150x1619xf32, #tpu.memory_space<vmem>>, vector<6x1619xf32>
    tpu.vector_store %arg19[%c90, %c0_64], %99 {strides = array<i32>} : memref<150x1619xf32, #tpu.memory_space<vmem>>, vector<6x1619xf32>,
    %101 = vector.extract_strided_slice %68 {offsets = [0, 194], sizes = [6, 1619], strides = [1, 1]} : vector<6x1883xf32> to vector<6x1619xf32>
    %c96 = arith.constant 96 : index
    %c0_65 = arith.constant 0 : index
    %102 = vector.load %arg19[%c96, %c0_65] : memref<150x1619xf32, #tpu.memory_space<vmem>>, vector<6x1619xf32>
    tpu.vector_store %arg19[%c96, %c0_65], %101 {strides = array<i32>} : memref<150x1619xf32, #tpu.memory_space<vmem>>, vector<6x1619xf32>,
    %103 = vector.extract_strided_slice %68 {offsets = [0, 196], sizes = [6, 1619], strides = [1, 1]} : vector<6x1883xf32> to vector<6x1619xf32>
    %c102 = arith.constant 102 : index
    %c0_66 = arith.constant 0 : index
    %104 = vector.load %arg19[%c102, %c0_66] : memref<150x1619xf32, #tpu.memory_space<vmem>>, vector<6x1619xf32>
    tpu.vector_store %arg19[%c102, %c0_66], %103 {strides = array<i32>} : memref<150x1619xf32, #tpu.memory_space<vmem>>, vector<6x1619xf32>,
    %105 = vector.extract_strided_slice %68 {offsets = [0, 198], sizes = [6, 1619], strides = [1, 1]} : vector<6x1883xf32> to vector<6x1619xf32>
    %c108 = arith.constant 108 : index
    %c0_67 = arith.constant 0 : index
    %106 = vector.load %arg19[%c108, %c0_67] : memref<150x1619xf32, #tpu.memory_space<vmem>>, vector<6x1619xf32>
    tpu.vector_store %arg19[%c108, %c0_67], %105 {strides = array<i32>} : memref<150x1619xf32, #tpu.memory_space<vmem>>, vector<6x1619xf32>,
    %107 = vector.extract_strided_slice %68 {offsets = [0, 200], sizes = [6, 1619], strides = [1, 1]} : vector<6x1883xf32> to vector<6x1619xf32>
    %c114 = arith.constant 114 : index
    %c0_68 = arith.constant 0 : index
    %108 = vector.load %arg19[%c114, %c0_68] : memref<150x1619xf32, #tpu.memory_space<vmem>>, vector<6x1619xf32>
    tpu.vector_store %arg19[%c114, %c0_68], %107 {strides = array<i32>} : memref<150x1619xf32, #tpu.memory_space<vmem>>, vector<6x1619xf32>,
    %109 = vector.extract_strided_slice %68 {offsets = [0, 256], sizes = [6, 1619], strides = [1, 1]} : vector<6x1883xf32> to vector<6x1619xf32>
    %c120 = arith.constant 120 : index
    %c0_69 = arith.constant 0 : index
    %110 = vector.load %arg19[%c120, %c0_69] : memref<150x1619xf32, #tpu.memory_space<vmem>>, vector<6x1619xf32>
    tpu.vector_store %arg19[%c120, %c0_69], %109 {strides = array<i32>} : memref<150x1619xf32, #tpu.memory_space<vmem>>, vector<6x1619xf32>,
    %111 = vector.extract_strided_slice %68 {offsets = [0, 258], sizes = [6, 1619], strides = [1, 1]} : vector<6x1883xf32> to vector<6x1619xf32>
    %c126 = arith.constant 126 : index
    %c0_70 = arith.constant 0 : index
    %112 = vector.load %arg19[%c126, %c0_70] : memref<150x1619xf32, #tpu.memory_space<vmem>>, vector<6x1619xf32>
    tpu.vector_store %arg19[%c126, %c0_70], %111 {strides = array<i32>} : memref<150x1619xf32, #tpu.memory_space<vmem>>, vector<6x1619xf32>,
    %113 = vector.extract_strided_slice %68 {offsets = [0, 260], sizes = [6, 1619], strides = [1, 1]} : vector<6x1883xf32> to vector<6x1619xf32>
    %c132 = arith.constant 132 : index
    %c0_71 = arith.constant 0 : index
    %114 = vector.load %arg19[%c132, %c0_71] : memref<150x1619xf32, #tpu.memory_space<vmem>>, vector<6x1619xf32>
    tpu.vector_store %arg19[%c132, %c0_71], %113 {strides = array<i32>} : memref<150x1619xf32, #tpu.memory_space<vmem>>, vector<6x1619xf32>,
    %115 = vector.extract_strided_slice %68 {offsets = [0, 262], sizes = [6, 1619], strides = [1, 1]} : vector<6x1883xf32> to vector<6x1619xf32>
    %c138 = arith.constant 138 : index
    %c0_72 = arith.constant 0 : index
    %116 = vector.load %arg19[%c138, %c0_72] : memref<150x1619xf32, #tpu.memory_space<vmem>>, vector<6x1619xf32>
    tpu.vector_store %arg19[%c138, %c0_72], %115 {strides = array<i32>} : memref<150x1619xf32, #tpu.memory_space<vmem>>, vector<6x1619xf32>,
    %117 = vector.extract_strided_slice %68 {offsets = [0, 264], sizes = [6, 1619], strides = [1, 1]} : vector<6x1883xf32> to vector<6x1619xf32>
    %c144 = arith.constant 144 : index
    %c0_73 = arith.constant 0 : index
    %118 = vector.load %arg19[%c144, %c0_73] : memref<150x1619xf32, #tpu.memory_space<vmem>>, vector<6x1619xf32>
    tpu.vector_store %arg19[%c144, %c0_73], %117 {strides = array<i32>} : memref<150x1619xf32, #tpu.memory_space<vmem>>, vector<6x1619xf32>,
    %c0_74 = arith.constant 0 : index
    %c0_75 = arith.constant 0 : index
    %119 = vector.load %arg5[%c0_74, %c0_75] : memref<16x150xf32, #tpu.memory_space<vmem>>, vector<16x150xf32>
    %c0_76 = arith.constant 0 : index
    %c0_77 = arith.constant 0 : index
    %120 = vector.load %arg19[%c0_76, %c0_77] : memref<150x1619xf32, #tpu.memory_space<vmem>>, vector<150x1619xf32>
    %cst_78 = arith.constant dense<0.000000e+00> : vector<16x1619xf32>
    %121 = tpu.matmul %119, %120, %cst_78 {dimension_numbers = #tpu.dot_dimension_numbers<[1], [0], [0], [1], [0, 0, 1, 1], [], []>} : vector<16x150xf32>, vector<150x1619xf32>, vector<16x1619xf32> -> vector<16x1619xf32>
    %c0_79 = arith.constant 0 : index
    %c0_80 = arith.constant 0 : index
    %122 = vector.load %arg6[%c0_79, %c0_80] : memref<16x1xf32, #tpu.memory_space<vmem>>, vector<16x1xf32>
    %123 = vector.broadcast %122 : vector<16x1xf32> to vector<16x1619xf32>
    %124 = arith.mulf %121, %123 : vector<16x1619xf32>
    %c0_81 = arith.constant 0 : index
    %c0_82 = arith.constant 0 : index
    %125 = vector.load %arg7[%c0_81, %c0_82] : memref<16x1xf32, #tpu.memory_space<vmem>>, vector<16x1xf32>
    %126 = vector.broadcast %125 : vector<16x1xf32> to vector<16x1619xf32>
    %127 = arith.addf %124, %126 : vector<16x1619xf32>
    %cst_83 = arith.constant 0.000000e+00 : f32
    %128 = vector.broadcast %cst_83 : f32 to vector<16x1619xf32>
    %129 = arith.maximumf %127, %128 : vector<16x1619xf32>
    %130 = vector.extract_strided_slice %129 {offsets = [0, 0], sizes = [16, 1553], strides = [1, 1]} : vector<16x1619xf32> to vector<16x1553xf32>
    %131 = vector.extract_strided_slice %129 {offsets = [0, 2], sizes = [16, 1553], strides = [1, 1]} : vector<16x1619xf32> to vector<16x1553xf32>
    %132 = arith.maximumf %130, %131 : vector<16x1553xf32>
    %133 = vector.extract_strided_slice %129 {offsets = [0, 64], sizes = [16, 1553], strides = [1, 1]} : vector<16x1619xf32> to vector<16x1553xf32>
    %134 = vector.extract_strided_slice %129 {offsets = [0, 66], sizes = [16, 1553], strides = [1, 1]} : vector<16x1619xf32> to vector<16x1553xf32>
    %135 = arith.maximumf %133, %134 : vector<16x1553xf32>
    %136 = arith.maximumf %132, %135 : vector<16x1553xf32>
    %137 = vector.extract_strided_slice %136 {offsets = [0, 0], sizes = [16, 529], strides = [1, 1]} : vector<16x1553xf32> to vector<16x529xf32>
    %c0_84 = arith.constant 0 : index
    %c0_85 = arith.constant 0 : index
    %138 = vector.load %arg8[%c0_84, %c0_85] : memref<529x25xf32, #tpu.memory_space<vmem>>, vector<529x25xf32>
    %cst_86 = arith.constant dense<0.000000e+00> : vector<16x25xf32>
    %139 = tpu.matmul %137, %138, %cst_86 {dimension_numbers = #tpu.dot_dimension_numbers<[1], [0], [0], [1], [0, 0, 1, 1], [], []>} : vector<16x529xf32>, vector<529x25xf32>, vector<16x25xf32> -> vector<16x25xf32>
    %c0_87 = arith.constant 0 : index
    %c0_88 = arith.constant 0 : index
    %140 = vector.load %arg9[%c0_87, %c0_88] : memref<25x400xf32, #tpu.memory_space<vmem>>, vector<25x400xf32>
    %cst_89 = arith.constant dense<0.000000e+00> : vector<16x400xf32>
    %141 = tpu.matmul %139, %140, %cst_89 {dimension_numbers = #tpu.dot_dimension_numbers<[1], [0], [0], [1], [0, 0, 1, 1], [], []>} : vector<16x25xf32>, vector<25x400xf32>, vector<16x400xf32> -> vector<16x400xf32>
    %c0_90 = arith.constant 0 : index
    %c0_91 = arith.constant 0 : index
    %142 = vector.load %arg10[%c0_90, %c0_91] : memref<16x400xf32, #tpu.memory_space<vmem>>, vector<16x400xf32>
    %143 = arith.mulf %141, %142 : vector<16x400xf32>
    %cst_92 = arith.constant dense<0.000000e+00> : vector<400xf32>
    %144 = vector.multi_reduction <add>, %143, %cst_92 [0] : vector<16x400xf32> to vector<400xf32>
    %145 = vector.shape_cast %144 : vector<400xf32> to vector<1x400xf32>
    %146 = vector.extract_strided_slice %136 {offsets = [0, 1024], sizes = [16, 529], strides = [1, 1]} : vector<16x1553xf32> to vector<16x529xf32>
    %c0_93 = arith.constant 0 : index
    %c0_94 = arith.constant 0 : index
    %147 = vector.load %arg8[%c0_93, %c0_94] : memref<529x25xf32, #tpu.memory_space<vmem>>, vector<529x25xf32>
    %cst_95 = arith.constant dense<0.000000e+00> : vector<16x25xf32>
    %148 = tpu.matmul %146, %147, %cst_95 {dimension_numbers = #tpu.dot_dimension_numbers<[1], [0], [0], [1], [0, 0, 1, 1], [], []>} : vector<16x529xf32>, vector<529x25xf32>, vector<16x25xf32> -> vector<16x25xf32>
    %c0_96 = arith.constant 0 : index
    %c0_97 = arith.constant 0 : index
    %149 = vector.load %arg9[%c0_96, %c0_97] : memref<25x400xf32, #tpu.memory_space<vmem>>, vector<25x400xf32>
    %cst_98 = arith.constant dense<0.000000e+00> : vector<16x400xf32>
    %150 = tpu.matmul %148, %149, %cst_98 {dimension_numbers = #tpu.dot_dimension_numbers<[1], [0], [0], [1], [0, 0, 1, 1], [], []>} : vector<16x25xf32>, vector<25x400xf32>, vector<16x400xf32> -> vector<16x400xf32>
    %c0_99 = arith.constant 0 : index
    %c0_100 = arith.constant 0 : index
    %151 = vector.load %arg10[%c0_99, %c0_100] : memref<16x400xf32, #tpu.memory_space<vmem>>, vector<16x400xf32>
    %152 = arith.mulf %150, %151 : vector<16x400xf32>
    %cst_101 = arith.constant dense<0.000000e+00> : vector<400xf32>
    %153 = vector.multi_reduction <add>, %152, %cst_101 [0] : vector<16x400xf32> to vector<400xf32>
    %154 = vector.shape_cast %153 : vector<400xf32> to vector<1x400xf32>
    %155 = tpu.concatenate %145, %154 in 0 : vector<1x400xf32>, vector<1x400xf32> -> vector<2x400xf32>
    %c0_102 = arith.constant 0 : index
    %c0_103 = arith.constant 0 : index
    %156 = vector.load %arg11[%c0_102, %c0_103] : memref<400x120xf32, #tpu.memory_space<vmem>>, vector<400x120xf32>
    %cst_104 = arith.constant dense<0.000000e+00> : vector<2x120xf32>
    %157 = tpu.matmul %155, %156, %cst_104 {dimension_numbers = #tpu.dot_dimension_numbers<[1], [0], [0], [1], [0, 0, 1, 1], [], []>} : vector<2x400xf32>, vector<400x120xf32>, vector<2x120xf32> -> vector<2x120xf32>
    %c0_105 = arith.constant 0 : index
    %c0_106 = arith.constant 0 : index
    %158 = vector.load %arg12[%c0_105, %c0_106] : memref<1x120xf32, #tpu.memory_space<vmem>>, vector<1x120xf32>
    %159 = vector.broadcast %158 : vector<1x120xf32> to vector<2x120xf32>
    %160 = arith.addf %157, %159 : vector<2x120xf32>
    %cst_107 = arith.constant 0.000000e+00 : f32
    %161 = vector.broadcast %cst_107 : f32 to vector<2x120xf32>
    %162 = arith.maximumf %160, %161 : vector<2x120xf32>
    %c0_108 = arith.constant 0 : index
    %c0_109 = arith.constant 0 : index
    %163 = vector.load %arg13[%c0_108, %c0_109] : memref<120x84xf32, #tpu.memory_space<vmem>>, vector<120x84xf32>
    %cst_110 = arith.constant dense<0.000000e+00> : vector<2x84xf32>
    %164 = tpu.matmul %162, %163, %cst_110 {dimension_numbers = #tpu.dot_dimension_numbers<[1], [0], [0], [1], [0, 0, 1, 1], [], []>} : vector<2x120xf32>, vector<120x84xf32>, vector<2x84xf32> -> vector<2x84xf32>
    %c0_111 = arith.constant 0 : index
    %c0_112 = arith.constant 0 : index
    %165 = vector.load %arg14[%c0_111, %c0_112] : memref<1x84xf32, #tpu.memory_space<vmem>>, vector<1x84xf32>
    %166 = vector.broadcast %165 : vector<1x84xf32> to vector<2x84xf32>
    %167 = arith.addf %164, %166 : vector<2x84xf32>
    %cst_113 = arith.constant 0.000000e+00 : f32
    %168 = vector.broadcast %cst_113 : f32 to vector<2x84xf32>
    %169 = arith.maximumf %167, %168 : vector<2x84xf32>
    %c0_114 = arith.constant 0 : index
    %c0_115 = arith.constant 0 : index
    %170 = vector.load %arg15[%c0_114, %c0_115] : memref<84x10xf32, #tpu.memory_space<vmem>>, vector<84x10xf32>
    %cst_116 = arith.constant dense<0.000000e+00> : vector<2x10xf32>
    %171 = tpu.matmul %169, %170, %cst_116 {dimension_numbers = #tpu.dot_dimension_numbers<[1], [0], [0], [1], [0, 0, 1, 1], [], []>} : vector<2x84xf32>, vector<84x10xf32>, vector<2x10xf32> -> vector<2x10xf32>
    %c0_117 = arith.constant 0 : index
    %c0_118 = arith.constant 0 : index
    %172 = vector.load %arg16[%c0_117, %c0_118] : memref<1x10xf32, #tpu.memory_space<vmem>>, vector<1x10xf32>
    %173 = vector.broadcast %172 : vector<1x10xf32> to vector<2x10xf32>
    %174 = arith.addf %171, %173 : vector<2x10xf32>
    %cst_119 = arith.constant dense<0xFF800000> : vector<2xf32>
    %175 = vector.multi_reduction <maximumf>, %174, %cst_119 [1] : vector<2x10xf32> to vector<2xf32>
    %176 = vector.shape_cast %175 : vector<2xf32> to vector<2x1xf32>
    %177 = vector.broadcast %176 : vector<2x1xf32> to vector<2x10xf32>
    %178 = arith.subf %174, %177 : vector<2x10xf32>
    %179 = math.exp %178 : vector<2x10xf32>
    %cst_120 = arith.constant dense<0.000000e+00> : vector<2xf32>
    %180 = vector.multi_reduction <add>, %179, %cst_120 [1] : vector<2x10xf32> to vector<2xf32>
    %181 = vector.shape_cast %180 : vector<2xf32> to vector<2x1xf32>
    %182 = vector.broadcast %181 : vector<2x1xf32> to vector<2x10xf32>
    %183 = arith.divf %179, %182 : vector<2x10xf32>
    %c0_121 = arith.constant 0 : index
    %c0_122 = arith.constant 0 : index
    %184 = vector.load %arg17[%c0_121, %c0_122] : memref<2x10xf32, #tpu.memory_space<vmem>>, vector<2x10xf32>
    tpu.vector_store %arg17[%c0_121, %c0_122], %183 {strides = array<i32>} : memref<2x10xf32, #tpu.memory_space<vmem>>, vector<2x10xf32>,
    return
  }
  func.func @transform_0(%arg0: i32) -> (i32, i32) {
    %c0_i32 = arith.constant 0 : i32
    %c0_i32_0 = arith.constant 0 : i32
    %c0_i32_1 = arith.constant 0 : i32
    return %c0_i32, %c0_i32_0 : i32, i32
  }
  func.func @transform_1(%arg0: i32) -> (i32, i32) {
    %c0_i32 = arith.constant 0 : i32
    %c0_i32_0 = arith.constant 0 : i32
    %c0_i32_1 = arith.constant 0 : i32
    return %c0_i32, %c0_i32_0 : i32, i32
  }
  func.func @transform_2(%arg0: i32) -> (i32, i32) {
    %c0_i32 = arith.constant 0 : i32
    %c0_i32_0 = arith.constant 0 : i32
    %c0_i32_1 = arith.constant 0 : i32
    return %c0_i32, %c0_i32_0 : i32, i32
  }
  func.func @transform_3(%arg0: i32) -> (i32, i32) {
    %c0_i32 = arith.constant 0 : i32
    %c0_i32_0 = arith.constant 0 : i32
    %c0_i32_1 = arith.constant 0 : i32
    return %c0_i32, %c0_i32_0 : i32, i32
  }
  func.func @transform_4(%arg0: i32) -> (i32, i32) {
    %c0_i32 = arith.constant 0 : i32
    %c0_i32_0 = arith.constant 0 : i32
    %c0_i32_1 = arith.constant 0 : i32
    return %c0_i32, %c0_i32_0 : i32, i32
  }
  func.func @transform_5(%arg0: i32) -> (i32, i32) {
    %c0_i32 = arith.constant 0 : i32
    %c0_i32_0 = arith.constant 0 : i32
    %c0_i32_1 = arith.constant 0 : i32
    return %c0_i32, %c0_i32_0 : i32, i32
  }
  func.func @transform_6(%arg0: i32) -> (i32, i32) {
    %c0_i32 = arith.constant 0 : i32
    %c0_i32_0 = arith.constant 0 : i32
    %c0_i32_1 = arith.constant 0 : i32
    return %c0_i32, %c0_i32_0 : i32, i32
  }
  func.func @transform_7(%arg0: i32) -> (i32, i32) {
    %c0_i32 = arith.constant 0 : i32
    %c0_i32_0 = arith.constant 0 : i32
    %c0_i32_1 = arith.constant 0 : i32
    return %c0_i32, %c0_i32_0 : i32, i32
  }
  func.func @transform_8(%arg0: i32) -> (i32, i32) {
    %c0_i32 = arith.constant 0 : i32
    %c0_i32_0 = arith.constant 0 : i32
    %c0_i32_1 = arith.constant 0 : i32
    return %c0_i32, %c0_i32_0 : i32, i32
  }
  func.func @transform_9(%arg0: i32) -> (i32, i32) {
    %c0_i32 = arith.constant 0 : i32
    %c0_i32_0 = arith.constant 0 : i32
    %c0_i32_1 = arith.constant 0 : i32
    return %c0_i32, %c0_i32_0 : i32, i32
  }
  func.func @transform_10(%arg0: i32) -> (i32, i32) {
    %c0_i32 = arith.constant 0 : i32
    %c0_i32_0 = arith.constant 0 : i32
    %c0_i32_1 = arith.constant 0 : i32
    return %c0_i32, %c0_i32_0 : i32, i32
  }
  func.func @transform_11(%arg0: i32) -> (i32, i32) {
    %c0_i32 = arith.constant 0 : i32
    %c0_i32_0 = arith.constant 0 : i32
    %c0_i32_1 = arith.constant 0 : i32
    return %c0_i32, %c0_i32_0 : i32, i32
  }
  func.func @transform_12(%arg0: i32) -> (i32, i32) {
    %c0_i32 = arith.constant 0 : i32
    %c0_i32_0 = arith.constant 0 : i32
    %c0_i32_1 = arith.constant 0 : i32
    return %c0_i32, %c0_i32_0 : i32, i32
  }
  func.func @transform_13(%arg0: i32) -> (i32, i32) {
    %c0_i32 = arith.constant 0 : i32
    %c0_i32_0 = arith.constant 0 : i32
    %c0_i32_1 = arith.constant 0 : i32
    return %c0_i32, %c0_i32_0 : i32, i32
  }
  func.func @transform_14(%arg0: i32) -> (i32, i32) {
    %c0_i32 = arith.constant 0 : i32
    %c0_i32_0 = arith.constant 0 : i32
    %c0_i32_1 = arith.constant 0 : i32
    return %c0_i32, %c0_i32_0 : i32, i32
  }
  func.func @transform_15(%arg0: i32) -> (i32, i32) {
    %c0_i32 = arith.constant 0 : i32
    %c0_i32_0 = arith.constant 0 : i32
    %c0_i32_1 = arith.constant 0 : i32
    return %c0_i32, %c0_i32_0 : i32, i32
  }
  func.func @transform_16(%arg0: i32) -> (i32, i32) {
    %c0_i32 = arith.constant 0 : i32
    %c0_i32_0 = arith.constant 0 : i32
    %c0_i32_1 = arith.constant 0 : i32
    return %c0_i32, %c0_i32_0 : i32, i32
  }
}

</mosaic_0001>

<llo_original>
// kernel: lenet_forward.1
$region0: #{lenet_forward.1}
  #allocation0 [shape = 'u32[]', space=smem, size = 0x4, offset = 0x4, fixed_abs, tag = 'smem constant byte address 0x4 - core index']
  #allocation1 [shape = 'u32[72,128]{1,0:T(1,128)}', space=vmem, size = 0x9000, scoped, tag = 'internal scratch']
  #allocation2 [shape = 'f32[75,1916]{1,0:T(8,128)}', space=vmem, size = 0x96000, scoped, tag = 'scratch operand']
  #allocation3 [shape = 'f32[150,1619]{1,0:T(8,128)}', space=vmem, size = 0xf7000, scoped, tag = 'scratch operand']
  %s0 = inlined_call_operand.vmem [shape: f32[3,2048], index: 0, kind: input, shape index: {}]
  %s1 = inlined_call_operand.vmem [shape: f32[6,75], index: 1, kind: input, shape index: {}]
  %s2 = inlined_call_operand.vmem [shape: f32[6,1], index: 2, kind: input, shape index: {}]
  %s3 = inlined_call_operand.vmem [shape: f32[6,1], index: 3, kind: input, shape index: {}]
  %s4 = inlined_call_operand.vmem [shape: f32[16,150], index: 4, kind: input, shape index: {}]
  %s5 = inlined_call_operand.vmem [shape: f32[16,1], index: 5, kind: input, shape index: {}]
  %s6 = inlined_call_operand.vmem [shape: f32[16,1], index: 6, kind: input, shape index: {}]
  %s7 = inlined_call_operand.vmem [shape: f32[529,25], index: 7, kind: input, shape index: {}]
  %s8 = inlined_call_operand.vmem [shape: f32[25,400], index: 8, kind: input, shape index: {}]
  %s9 = inlined_call_operand.vmem [shape: f32[16,400], index: 9, kind: input, shape index: {}]
  %s10 = inlined_call_operand.vmem [shape: f32[400,120], index: 10, kind: input, shape index: {}]
  %s11 = inlined_call_operand.vmem [shape: f32[1,120], index: 11, kind: input, shape index: {}]
  %s12 = inlined_call_operand.vmem [shape: f32[120,84], index: 12, kind: input, shape index: {}]
  %s13 = inlined_call_operand.vmem [shape: f32[1,84], index: 13, kind: input, shape index: {}]
  %s14 = inlined_call_operand.vmem [shape: f32[84,10], index: 14, kind: input, shape index: {}]
  %s15 = inlined_call_operand.vmem [shape: f32[1,10], index: 15, kind: input, shape index: {}]
  %s16 = inlined_call_operand.hbm [shape: f32[2,10], index: 16, kind: output, shape index: {}]
  %s17 = sld [smem:[#allocation0]]
  $region74: #{lenet_forward.1} parent=0
    _
  %s19 = ssub.s32 1, %s17
  %s20 = scalar_select 0, %s19, %s17
  $region1: #{lenet_forward.1} parent=0
    #allocation4 [shape = 'u8[1024]{0}', space=vmem, size = 0x400, scoped, tag = 'output window, operand 0, single buffered']
    #allocation5 [shape = 's32[1]{0}', space=sflag, size = 0x4, scoped, tag = 'scoped memory for lenet_forward.1']
    %21 = vsyncpa [#allocation5], 0
    // Predicated region
    $region2: #{lenet_forward.1} parent=1 // pred_check
      _
    $region3: #{lenet_forward.1} parent=1 // pred_check_branch
      %23 = sbr.rel (0) target = $region5
    $region4: #{lenet_forward.1} parent=1 // pred_region
      _
    $region5: #{lenet_forward.1} parent=1 // pred_fallthru
      _
    // Predicated region
    $region6: #{lenet_forward.1} parent=1 // pred_check
      _
    $region7: #{lenet_forward.1} parent=1 // pred_check_branch
      %25 = sbr.rel (0) target = $region9
    $region8: #{lenet_forward.1} parent=1 // pred_region
      _
    $region9: #{lenet_forward.1} parent=1 // pred_fallthru
      _
    // Predicated region
    $region10: #{lenet_forward.1} parent=1 // pred_check
      _
    $region11: #{lenet_forward.1} parent=1 // pred_check_branch
      %27 = sbr.rel (0) target = $region13
    $region12: #{lenet_forward.1} parent=1 // pred_region
      _
    $region13: #{lenet_forward.1} parent=1 // pred_fallthru
      _
    // Predicated region
    $region14: #{lenet_forward.1} parent=1 // pred_check
      _
    $region15: #{lenet_forward.1} parent=1 // pred_check_branch
      %29 = sbr.rel (0) target = $region17
    $region16: #{lenet_forward.1} parent=1 // pred_region
      _
    $region17: #{lenet_forward.1} parent=1 // pred_fallthru
      _
    // Predicated region
    $region18: #{lenet_forward.1} parent=1 // pred_check
      _
    $region19: #{lenet_forward.1} parent=1 // pred_check_branch
      %31 = sbr.rel (0) target = $region21
    $region20: #{lenet_forward.1} parent=1 // pred_region
      _
    $region21: #{lenet_forward.1} parent=1 // pred_fallthru
      _
    // Predicated region
    $region22: #{lenet_forward.1} parent=1 // pred_check
      _
    $region23: #{lenet_forward.1} parent=1 // pred_check_branch
      %33 = sbr.rel (0) target = $region25
    $region24: #{lenet_forward.1} parent=1 // pred_region
      _
    $region25: #{lenet_forward.1} parent=1 // pred_fallthru
      _
    // Predicated region
    $region26: #{lenet_forward.1} parent=1 // pred_check
      _
    $region27: #{lenet_forward.1} parent=1 // pred_check_branch
      %35 = sbr.rel (0) target = $region29
    $region28: #{lenet_forward.1} parent=1 // pred_region
      _
    $region29: #{lenet_forward.1} parent=1 // pred_fallthru
      _
    // Predicated region
    $region30: #{lenet_forward.1} parent=1 // pred_check
      _
    $region31: #{lenet_forward.1} parent=1 // pred_check_branch
      %37 = sbr.rel (0) target = $region33
    $region32: #{lenet_forward.1} parent=1 // pred_region
      _
    $region33: #{lenet_forward.1} parent=1 // pred_fallthru
      _
    // Predicated region
    $region34: #{lenet_forward.1} parent=1 // pred_check
      _
    $region35: #{lenet_forward.1} parent=1 // pred_check_branch
      %39 = sbr.rel (0) target = $region37
    $region36: #{lenet_forward.1} parent=1 // pred_region
      _
    $region37: #{lenet_forward.1} parent=1 // pred_fallthru
      _
    // Predicated region
    $region38: #{lenet_forward.1} parent=1 // pred_check
      _
    $region39: #{lenet_forward.1} parent=1 // pred_check_branch
      %41 = sbr.rel (0) target = $region41
    $region40: #{lenet_forward.1} parent=1 // pred_region
      _
    $region41: #{lenet_forward.1} parent=1 // pred_fallthru
      _
    // Predicated region
    $region42: #{lenet_forward.1} parent=1 // pred_check
      _
    $region43: #{lenet_forward.1} parent=1 // pred_check_branch
      %43 = sbr.rel (0) target = $region45
    $region44: #{lenet_forward.1} parent=1 // pred_region
      _
    $region45: #{lenet_forward.1} parent=1 // pred_fallthru
      _
    // Predicated region
    $region46: #{lenet_forward.1} parent=1 // pred_check
      _
    $region47: #{lenet_forward.1} parent=1 // pred_check_branch
      %45 = sbr.rel (0) target = $region49
    $region48: #{lenet_forward.1} parent=1 // pred_region
      _
    $region49: #{lenet_forward.1} parent=1 // pred_fallthru
      _
    // Predicated region
    $region50: #{lenet_forward.1} parent=1 // pred_check
      _
    $region51: #{lenet_forward.1} parent=1 // pred_check_branch
      %47 = sbr.rel (0) target = $region53
    $region52: #{lenet_forward.1} parent=1 // pred_region
      _
    $region53: #{lenet_forward.1} parent=1 // pred_fallthru
      _
    // Predicated region
    $region54: #{lenet_forward.1} parent=1 // pred_check
      _
    $region55: #{lenet_forward.1} parent=1 // pred_check_branch
      %49 = sbr.rel (0) target = $region57
    $region56: #{lenet_forward.1} parent=1 // pred_region
      _
    $region57: #{lenet_forward.1} parent=1 // pred_fallthru
      _
    // Predicated region
    $region58: #{lenet_forward.1} parent=1 // pred_check
      _
    $region59: #{lenet_forward.1} parent=1 // pred_check_branch
      %51 = sbr.rel (0) target = $region61
    $region60: #{lenet_forward.1} parent=1 // pred_region
      _
    $region61: #{lenet_forward.1} parent=1 // pred_fallthru
      _
    // Predicated region
    $region62: #{lenet_forward.1} parent=1 // pred_check
      _
    $region63: #{lenet_forward.1} parent=1 // pred_check_branch
      %53 = sbr.rel (0) target = $region65
    $region64: #{lenet_forward.1} parent=1 // pred_region
      _
    $region65: #{lenet_forward.1} parent=1 // pred_fallthru
      _
    %v54 = vld [vmem:[%s0] sm:$0x77]
    %v55 = vld [vmem:[%s0 + $0x8] sm:$0x77]
    %v56 = vld [vmem:[%s0 + $0x10] sm:$0x77]
    %v57 = vld [vmem:[%s0 + $0x18] sm:$0x77]
    %v58 = vld [vmem:[%s0 + $0x20] sm:$0x77]
    %v59 = vld [vmem:[%s0 + $0x28] sm:$0x77]
    %v60 = vld [vmem:[%s0 + $0x30] sm:$0x77]
    %v61 = vld [vmem:[%s0 + $0x38] sm:$0x77]
    %70 = vst [vmem:[#allocation1] ss:$2 sm:$0xff] %v54
    %s71 = scalar_lea.vmem [#allocation1], 16
    %72 = vst [vmem:[%s71] ss:$2 sm:$0xff] %v55
    %s73 = scalar_lea.vmem [#allocation1], 32
    %74 = vst [vmem:[%s73] ss:$2 sm:$0xff] %v56
    %s75 = scalar_lea.vmem [#allocation1], 48
    %76 = vst [vmem:[%s75] ss:$2 sm:$0xff] %v57
    %v77 = vld.sshfl [vmem:[#allocation1] sm:$0xff pattern:$0x75316420]
    %v78 = vld.sshfl [vmem:[#allocation1 + $0x8] sm:$0xff pattern:$0x75316420]
    %v79 = vld.sshfl [vmem:[#allocation1 + $0x10] sm:$0xff pattern:$0x75316420]
    %v80 = vld.sshfl [vmem:[#allocation1 + $0x18] sm:$0xff pattern:$0x75316420]
    %v81 = vld.sshfl [vmem:[#allocation1 + $0x20] sm:$0xff pattern:$0x75316420]
    %v82 = vld.sshfl [vmem:[#allocation1 + $0x28] sm:$0xff pattern:$0x75316420]
    %v83 = vld.sshfl [vmem:[#allocation1 + $0x30] sm:$0xff pattern:$0x75316420]
    %v84 = vld.sshfl [vmem:[#allocation1 + $0x38] sm:$0xff pattern:$0x75316420]
    %85 = vst [vmem:[#allocation1] ss:$2 sm:$0xff] %v58
    %86 = vst [vmem:[%s71] ss:$2 sm:$0xff] %v59
    %87 = vst [vmem:[%s73] ss:$2 sm:$0xff] %v60
    %88 = vst [vmem:[%s75] ss:$2 sm:$0xff] %v61
    %v89 = vld.sshfl [vmem:[#allocation1] sm:$0xff pattern:$0x75316420]
    %v90 = vld.sshfl [vmem:[#allocation1 + $0x8] sm:$0xff pattern:$0x75316420]
    %v91 = vld.sshfl [vmem:[#allocation1 + $0x10] sm:$0xff pattern:$0x75316420]
    %v92 = vld.sshfl [vmem:[#allocation1 + $0x18] sm:$0xff pattern:$0x75316420]
    %v93 = vld.sshfl [vmem:[#allocation1 + $0x20] sm:$0xff pattern:$0x75316420]
    %v94 = vld.sshfl [vmem:[#allocation1 + $0x28] sm:$0xff pattern:$0x75316420]
    %v95 = vld.sshfl [vmem:[#allocation1 + $0x30] sm:$0xff pattern:$0x75316420]
    %111 = vst [vmem:[#allocation2] sm:$0x7] %v77
    %112 = vst [vmem:[#allocation2 + $0x8] sm:$0x7] %v78
    %113 = vst [vmem:[#allocation2 + $0x10] sm:$0x7] %v79
    %114 = vst [vmem:[#allocation2 + $0x18] sm:$0x7] %v80
    %115 = vst [vmem:[#allocation2 + $0x20] sm:$0x7] %v81
    %116 = vst [vmem:[#allocation2 + $0x28] sm:$0x7] %v82
    %117 = vst [vmem:[#allocation2 + $0x30] sm:$0x7] %v83
    %118 = vst [vmem:[#allocation2 + $0x38] sm:$0x7] %v84
    %119 = vst [vmem:[#allocation2 + $0x40] sm:$0x7] %v89
    %120 = vst [vmem:[#allocation2 + $0x48] sm:$0x7] %v90
    %121 = vst [vmem:[#allocation2 + $0x50] sm:$0x7] %v91
    %122 = vst [vmem:[#allocation2 + $0x58] sm:$0x7] %v92
    %123 = vst [vmem:[#allocation2 + $0x60] sm:$0x7] %v93
    %124 = vst [vmem:[#allocation2 + $0x68] sm:$0x7] %v94
    %vm125 = vcmask 1009664
    %126 = vst.msk [vmem:[#allocation2 + $0x70] sm:$0x7] %vm125, %v95
    %127 = vst [vmem:[#allocation1] ss:$2 sm:$0xff] %v54
    %s128 = scalar_lea.vmem [#allocation1], 16
    %129 = vst [vmem:[%s128] ss:$2 sm:$0xff] %v55
    %s130 = scalar_lea.vmem [#allocation1], 32
    %131 = vst [vmem:[%s130] ss:$2 sm:$0xff] %v56
    %s132 = scalar_lea.vmem [#allocation1], 48
    %133 = vst [vmem:[%s132] ss:$2 sm:$0xff] %v57
    %v134 = vld.sshfl [vmem:[#allocation1] sm:$0xff pattern:$0x75316420]
    %v135 = vld.sshfl [vmem:[#allocation1 + $0x8] sm:$0xff pattern:$0x75316420]
    %v136 = vld.sshfl [vmem:[#allocation1 + $0x10] sm:$0xff pattern:$0x75316420]
    %v137 = vld.sshfl [vmem:[#allocation1 + $0x18] sm:$0xff pattern:$0x75316420]
    %v138 = vld.sshfl [vmem:[#allocation1 + $0x20] sm:$0xff pattern:$0x75316420]
    %v139 = vld.sshfl [vmem:[#allocation1 + $0x28] sm:$0xff pattern:$0x75316420]
    %v140 = vld.sshfl [vmem:[#allocation1 + $0x30] sm:$0xff pattern:$0x75316420]
    %v141 = vld.sshfl [vmem:[#allocation1 + $0x38] sm:$0xff pattern:$0x75316420]
    %142 = vst [vmem:[#allocation1] ss:$2 sm:$0xff] %v58
    %143 = vst [vmem:[%s128] ss:$2 sm:$0xff] %v59
    %144 = vst [vmem:[%s130] ss:$2 sm:$0xff] %v60
    %145 = vst [vmem:[%s132] ss:$2 sm:$0xff] %v61
    %v146 = vld.sshfl [vmem:[#allocation1] sm:$0xff pattern:$0x75316420]
    %v147 = vld.sshfl [vmem:[#allocation1 + $0x8] sm:$0xff pattern:$0x75316420]
    %v148 = vld.sshfl [vmem:[#allocation1 + $0x10] sm:$0xff pattern:$0x75316420]
    %v149 = vld.sshfl [vmem:[#allocation1 + $0x18] sm:$0xff pattern:$0x75316420]
    %v150 = vld.sshfl [vmem:[#allocation1 + $0x20] sm:$0xff pattern:$0x75316420]
    %v151 = vld.sshfl [vmem:[#allocation1 + $0x28] sm:$0xff pattern:$0x75316420]
    %v152 = vld.sshfl [vmem:[#allocation1 + $0x30] sm:$0xff pattern:$0x75316420]
    %v153 = vrot.slane %v134, 5
    %v154 = vrot.slane %v135, 5
    %v155 = vrot.slane %v136, 5
    %v156 = vrot.slane %v137, 5
    %v157 = vrot.slane %v138, 5
    %v158 = vrot.slane %v139, 5
    %v159 = vrot.slane %v140, 5
    %v160 = vrot.slane %v141, 5
    %v161 = vrot.slane %v146, 5
    %v162 = vrot.slane %v147, 5
    %v163 = vrot.slane %v148, 5
    %v164 = vrot.slane %v149, 5
    %v165 = vrot.slane %v150, 5
    %v166 = vrot.slane %v151, 5
    %v167 = vrot.slane %v152, 5
    %168 = vrot.lane.b32.xlu0 %v153, 127
    %v169 = vpop.permute.xlu0 %168
    %170 = vrot.lane.b32.xlu0 %v154, 127
    %v171 = vpop.permute.xlu0 %170
    %172 = vrot.lane.b32.xlu0 %v155, 127
    %v173 = vpop.permute.xlu0 %172
    %174 = vrot.lane.b32.xlu0 %v156, 127
    %v175 = vpop.permute.xlu0 %174
    %176 = vrot.lane.b32.xlu0 %v157, 127
    %v177 = vpop.permute.xlu0 %176
    %178 = vrot.lane.b32.xlu0 %v158, 127
    %v179 = vpop.permute.xlu0 %178
    %180 = vrot.lane.b32.xlu0 %v159, 127
    %v181 = vpop.permute.xlu0 %180
    %182 = vrot.lane.b32.xlu0 %v160, 127
    %v183 = vpop.permute.xlu0 %182
    %184 = vrot.lane.b32.xlu0 %v161, 127
    %v185 = vpop.permute.xlu0 %184
    %186 = vrot.lane.b32.xlu0 %v162, 127
    %v187 = vpop.permute.xlu0 %186
    %188 = vrot.lane.b32.xlu0 %v163, 127
    %v189 = vpop.permute.xlu0 %188
    %190 = vrot.lane.b32.xlu0 %v164, 127
    %v191 = vpop.permute.xlu0 %190
    %192 = vrot.lane.b32.xlu0 %v165, 127
    %v193 = vpop.permute.xlu0 %192
    %194 = vrot.lane.b32.xlu0 %v166, 127
    %v195 = vpop.permute.xlu0 %194
    %196 = vrot.lane.b32.xlu0 %v167, 127
    %v197 = vpop.permute.xlu0 %196
    %vm198 = vcmask 1039360
    %v199 = vsel %vm198, %v169, %v171
    %v200 = vsel %vm198, %v171, %v173
    %v201 = vsel %vm198, %v173, %v175
    %v202 = vsel %vm198, %v175, %v177
    %v203 = vsel %vm198, %v177, %v179
    %v204 = vsel %vm198, %v179, %v181
    %v205 = vsel %vm198, %v181, %v183
    %v206 = vsel %vm198, %v183, %v185
    %v207 = vsel %vm198, %v185, %v187
    %v208 = vsel %vm198, %v187, %v189
    %v209 = vsel %vm198, %v189, %v191
    %v210 = vsel %vm198, %v191, %v193
    %v211 = vsel %vm198, %v193, %v195
    %v212 = vsel %vm198, %v195, %v197
    %228 = vst [vmem:[#allocation2] sm:$0x38] %v199
    %229 = vst [vmem:[#allocation2 + $0x8] sm:$0x38] %v200
    %230 = vst [vmem:[#allocation2 + $0x10] sm:$0x38] %v201
    %231 = vst [vmem:[#allocation2 + $0x18] sm:$0x38] %v202
    %232 = vst [vmem:[#allocation2 + $0x20] sm:$0x38] %v203
    %233 = vst [vmem:[#allocation2 + $0x28] sm:$0x38] %v204
    %234 = vst [vmem:[#allocation2 + $0x30] sm:$0x38] %v205
    %235 = vst [vmem:[#allocation2 + $0x38] sm:$0x38] %v206
    %236 = vst [vmem:[#allocation2 + $0x40] sm:$0x38] %v207
    %237 = vst [vmem:[#allocation2 + $0x48] sm:$0x38] %v208
    %238 = vst [vmem:[#allocation2 + $0x50] sm:$0x38] %v209
    %239 = vst [vmem:[#allocation2 + $0x58] sm:$0x38] %v210
    %240 = vst [vmem:[#allocation2 + $0x60] sm:$0x38] %v211
    %241 = vst [vmem:[#allocation2 + $0x68] sm:$0x38] %v212
    %vm242 = vcmask 1012739
    %243 = vst.msk [vmem:[#allocation2 + $0x70] sm:$0x38] %vm242, %v197
    %244 = vst [vmem:[#allocation1] ss:$2 sm:$0xff] %v54
    %s245 = scalar_lea.vmem [#allocation1], 16
    %246 = vst [vmem:[%s245] ss:$2 sm:$0xff] %v55
    %s247 = scalar_lea.vmem [#allocation1], 32
    %248 = vst [vmem:[%s247] ss:$2 sm:$0xff] %v56
    %s249 = scalar_lea.vmem [#allocation1], 48
    %250 = vst [vmem:[%s249] ss:$2 sm:$0xff] %v57
    %v251 = vld.sshfl [vmem:[#allocation1] sm:$0xff pattern:$0x75316420]
    %v252 = vld.sshfl [vmem:[#allocation1 + $0x8] sm:$0xff pattern:$0x75316420]
    %v253 = vld.sshfl [vmem:[#allocation1 + $0x10] sm:$0xff pattern:$0x75316420]
    %v254 = vld.sshfl [vmem:[#allocation1 + $0x18] sm:$0xff pattern:$0x75316420]
    %v255 = vld.sshfl [vmem:[#allocation1 + $0x20] sm:$0xff pattern:$0x75316420]
    %v256 = vld.sshfl [vmem:[#allocation1 + $0x28] sm:$0xff pattern:$0x75316420]
    %v257 = vld.sshfl [vmem:[#allocation1 + $0x30] sm:$0xff pattern:$0x75316420]
    %v258 = vld.sshfl [vmem:[#allocation1 + $0x38] sm:$0xff pattern:$0x75316420]
    %259 = vst [vmem:[#allocation1] ss:$2 sm:$0xff] %v58
    %260 = vst [vmem:[%s245] ss:$2 sm:$0xff] %v59
    %261 = vst [vmem:[%s247] ss:$2 sm:$0xff] %v60
    %262 = vst [vmem:[%s249] ss:$2 sm:$0xff] %v61
    %v263 = vld.sshfl [vmem:[#allocation1] sm:$0xff pattern:$0x75316420]
    %v264 = vld.sshfl [vmem:[#allocation1 + $0x8] sm:$0xff pattern:$0x75316420]
    %v265 = vld.sshfl [vmem:[#allocation1 + $0x10] sm:$0xff pattern:$0x75316420]
    %v266 = vld.sshfl [vmem:[#allocation1 + $0x18] sm:$0xff pattern:$0x75316420]
    %v267 = vld.sshfl [vmem:[#allocation1 + $0x20] sm:$0xff pattern:$0x75316420]
    %v268 = vld.sshfl [vmem:[#allocation1 + $0x28] sm:$0xff pattern:$0x75316420]
    %v269 = vld.sshfl [vmem:[#allocation1 + $0x30] sm:$0xff pattern:$0x75316420]
    %v270 = vrot.slane %v251, 2
    %v271 = vrot.slane %v252, 2
    %v272 = vrot.slane %v253, 2
    %v273 = vrot.slane %v254, 2
    %v274 = vrot.slane %v255, 2
    %v275 = vrot.slane %v256, 2
    %v276 = vrot.slane %v257, 2
    %v277 = vrot.slane %v258, 2
    %v278 = vrot.slane %v263, 2
    %v279 = vrot.slane %v264, 2
    %v280 = vrot.slane %v265, 2
    %v281 = vrot.slane %v266, 2
    %v282 = vrot.slane %v267, 2
    %v283 = vrot.slane %v268, 2
    %v284 = vrot.slane %v269, 2
    %285 = vrot.lane.b32.xlu0 %v270, 126
    %v286 = vpop.permute.xlu0 %285
    %287 = vrot.lane.b32.xlu0 %v271, 126
    %v288 = vpop.permute.xlu0 %287
    %289 = vrot.lane.b32.xlu0 %v272, 126
    %v290 = vpop.permute.xlu0 %289
    %291 = vrot.lane.b32.xlu0 %v273, 126
    %v292 = vpop.permute.xlu0 %291
    %293 = vrot.lane.b32.xlu0 %v274, 126
    %v294 = vpop.permute.xlu0 %293
    %295 = vrot.lane.b32.xlu0 %v275, 126
    %v296 = vpop.permute.xlu0 %295
    %297 = vrot.lane.b32.xlu0 %v276, 126
    %v298 = vpop.permute.xlu0 %297
    %299 = vrot.lane.b32.xlu0 %v277, 126
    %v300 = vpop.permute.xlu0 %299
    %301 = vrot.lane.b32.xlu0 %v278, 126
    %v302 = vpop.permute.xlu0 %301
    %303 = vrot.lane.b32.xlu0 %v279, 126
    %v304 = vpop.permute.xlu0 %303
    %305 = vrot.lane.b32.xlu0 %v280, 126
    %v306 = vpop.permute.xlu0 %305
    %307 = vrot.lane.b32.xlu0 %v281, 126
    %v308 = vpop.permute.xlu0 %307
    %309 = vrot.lane.b32.xlu0 %v282, 126
    %v310 = vpop.permute.xlu0 %309
    %311 = vrot.lane.b32.xlu0 %v283, 126
    %v312 = vpop.permute.xlu0 %311
    %313 = vrot.lane.b32.xlu0 %v284, 126
    %v314 = vpop.permute.xlu0 %313
    %vm315 = vcmask 1031168
    %v316 = vsel %vm315, %v286, %v288
    %v317 = vsel %vm315, %v288, %v290
    %v318 = vsel %vm315, %v290, %v292
    %v319 = vsel %vm315, %v292, %v294
    %v320 = vsel %vm315, %v294, %v296
    %v321 = vsel %vm315, %v296, %v298
    %v322 = vsel %vm315, %v298, %v300
    %v323 = vsel %vm315, %v300, %v302
    %v324 = vsel %vm315, %v302, %v304
    %v325 = vsel %vm315, %v304, %v306
    %v326 = vsel %vm315, %v306, %v308
    %v327 = vsel %vm315, %v308, %v310
    %v328 = vsel %vm315, %v310, %v312
    %v329 = vsel %vm315, %v312, %v314
    %345 = vst [vmem:[#allocation2] sm:$0xc0] %v316
    %346 = vst [vmem:[#allocation2 + $0x8] sm:$0xc0] %v317
    %347 = vst [vmem:[#allocation2 + $0x10] sm:$0xc0] %v318
    %348 = vst [vmem:[#allocation2 + $0x18] sm:$0xc0] %v319
    %349 = vst [vmem:[#allocation2 + $0x20] sm:$0xc0] %v320
    %350 = vst [vmem:[#allocation2 + $0x28] sm:$0xc0] %v321
    %351 = vst [vmem:[#allocation2 + $0x30] sm:$0xc0] %v322
    %352 = vst [vmem:[#allocation2 + $0x38] sm:$0xc0] %v323
    %353 = vst [vmem:[#allocation2 + $0x40] sm:$0xc0] %v324
    %354 = vst [vmem:[#allocation2 + $0x48] sm:$0xc0] %v325
    %355 = vst [vmem:[#allocation2 + $0x50] sm:$0xc0] %v326
    %356 = vst [vmem:[#allocation2 + $0x58] sm:$0xc0] %v327
    %357 = vst [vmem:[#allocation2 + $0x60] sm:$0xc0] %v328
    %358 = vst [vmem:[#allocation2 + $0x68] sm:$0xc0] %v329
    %vm359 = vcmask 1014790
    %360 = vst.msk [vmem:[#allocation2 + $0x70] sm:$0xc0] %vm359, %v314
    %361 = vst [vmem:[#allocation2 + $0x78] sm:$0x1] %v316
    %362 = vst [vmem:[#allocation2 + $0x80] sm:$0x1] %v317
    %363 = vst [vmem:[#allocation2 + $0x88] sm:$0x1] %v318
    %364 = vst [vmem:[#allocation2 + $0x90] sm:$0x1] %v319
    %365 = vst [vmem:[#allocation2 + $0x98] sm:$0x1] %v320
    %366 = vst [vmem:[#allocation2 + $0xa0] sm:$0x1] %v321
    %367 = vst [vmem:[#allocation2 + $0xa8] sm:$0x1] %v322
    %368 = vst [vmem:[#allocation2 + $0xb0] sm:$0x1] %v323
    %369 = vst [vmem:[#allocation2 + $0xb8] sm:$0x1] %v324
    %370 = vst [vmem:[#allocation2 + $0xc0] sm:$0x1] %v325
    %371 = vst [vmem:[#allocation2 + $0xc8] sm:$0x1] %v326
    %372 = vst [vmem:[#allocation2 + $0xd0] sm:$0x1] %v327
    %373 = vst [vmem:[#allocation2 + $0xd8] sm:$0x1] %v328
    %374 = vst [vmem:[#allocation2 + $0xe0] sm:$0x1] %v329
    %vm375 = vcmask 1007616
    %376 = vst.msk [vmem:[#allocation2 + $0xe8] sm:$0x1] %vm375, %v314
    %377 = vst [vmem:[#allocation1] ss:$2 sm:$0xff] %v54
    %s378 = scalar_lea.vmem [#allocation1], 16
    %379 = vst [vmem:[%s378] ss:$2 sm:$0xff] %v55
    %s380 = scalar_lea.vmem [#allocation1], 32
    %381 = vst [vmem:[%s380] ss:$2 sm:$0xff] %v56
    %s382 = scalar_lea.vmem [#allocation1], 48
    %383 = vst [vmem:[%s382] ss:$2 sm:$0xff] %v57
    %v384 = vld.sshfl [vmem:[#allocation1] sm:$0xff pattern:$0x75316420]
    %v385 = vld.sshfl [vmem:[#allocation1 + $0x8] sm:$0xff pattern:$0x75316420]
    %v386 = vld.sshfl [vmem:[#allocation1 + $0x10] sm:$0xff pattern:$0x75316420]
    %v387 = vld.sshfl [vmem:[#allocation1 + $0x18] sm:$0xff pattern:$0x75316420]
    %v388 = vld.sshfl [vmem:[#allocation1 + $0x20] sm:$0xff pattern:$0x75316420]
    %v389 = vld.sshfl [vmem:[#allocation1 + $0x28] sm:$0xff pattern:$0x75316420]
    %v390 = vld.sshfl [vmem:[#allocation1 + $0x30] sm:$0xff pattern:$0x75316420]
    %v391 = vld.sshfl [vmem:[#allocation1 + $0x38] sm:$0xff pattern:$0x75316420]
    %392 = vst [vmem:[#allocation1] ss:$2 sm:$0xff] %v58
    %393 = vst [vmem:[%s378] ss:$2 sm:$0xff] %v59
    %394 = vst [vmem:[%s380] ss:$2 sm:$0xff] %v60
    %395 = vst [vmem:[%s382] ss:$2 sm:$0xff] %v61
    %v396 = vld.sshfl [vmem:[#allocation1] sm:$0xff pattern:$0x75316420]
    %v397 = vld.sshfl [vmem:[#allocation1 + $0x8] sm:$0xff pattern:$0x75316420]
    %v398 = vld.sshfl [vmem:[#allocation1 + $0x10] sm:$0xff pattern:$0x75316420]
    %v399 = vld.sshfl [vmem:[#allocation1 + $0x18] sm:$0xff pattern:$0x75316420]
    %v400 = vld.sshfl [vmem:[#allocation1 + $0x20] sm:$0xff pattern:$0x75316420]
    %v401 = vld.sshfl [vmem:[#allocation1 + $0x28] sm:$0xff pattern:$0x75316420]
    %v402 = vld.sshfl [vmem:[#allocation1 + $0x30] sm:$0xff pattern:$0x75316420]
    %v403 = vrot.slane %v384, 7
    %v404 = vrot.slane %v385, 7
    %v405 = vrot.slane %v386, 7
    %v406 = vrot.slane %v387, 7
    %v407 = vrot.slane %v388, 7
    %v408 = vrot.slane %v389, 7
    %v409 = vrot.slane %v390, 7
    %v410 = vrot.slane %v391, 7
    %v411 = vrot.slane %v396, 7
    %v412 = vrot.slane %v397, 7
    %v413 = vrot.slane %v398, 7
    %v414 = vrot.slane %v399, 7
    %v415 = vrot.slane %v400, 7
    %v416 = vrot.slane %v401, 7
    %v417 = vrot.slane %v402, 7
    %418 = vrot.lane.b32.xlu0 %v403, 125
    %v419 = vpop.permute.xlu0 %418
    %420 = vrot.lane.b32.xlu0 %v404, 125
    %v421 = vpop.permute.xlu0 %420
    %422 = vrot.lane.b32.xlu0 %v405, 125
    %v423 = vpop.permute.xlu0 %422
    %424 = vrot.lane.b32.xlu0 %v406, 125
    %v425 = vpop.permute.xlu0 %424
    %426 = vrot.lane.b32.xlu0 %v407, 125
    %v427 = vpop.permute.xlu0 %426
    %428 = vrot.lane.b32.xlu0 %v408, 125
    %v429 = vpop.permute.xlu0 %428
    %430 = vrot.lane.b32.xlu0 %v409, 125
    %v431 = vpop.permute.xlu0 %430
    %432 = vrot.lane.b32.xlu0 %v410, 125
    %v433 = vpop.permute.xlu0 %432
    %434 = vrot.lane.b32.xlu0 %v411, 125
    %v435 = vpop.permute.xlu0 %434
    %436 = vrot.lane.b32.xlu0 %v412, 125
    %v437 = vpop.permute.xlu0 %436
    %438 = vrot.lane.b32.xlu0 %v413, 125
    %v439 = vpop.permute.xlu0 %438
    %440 = vrot.lane.b32.xlu0 %v414, 125
    %v441 = vpop.permute.xlu0 %440
    %442 = vrot.lane.b32.xlu0 %v415, 125
    %v443 = vpop.permute.xlu0 %442
    %444 = vrot.lane.b32.xlu0 %v416, 125
    %v445 = vpop.permute.xlu0 %444
    %446 = vrot.lane.b32.xlu0 %v417, 125
    %v447 = vpop.permute.xlu0 %446
    %vm448 = vcmask 1022976
    %v449 = vsel %vm448, %v419, %v421
    %v450 = vsel %vm448, %v421, %v423
    %v451 = vsel %vm448, %v423, %v425
    %v452 = vsel %vm448, %v425, %v427
    %v453 = vsel %vm448, %v427, %v429
    %v454 = vsel %vm448, %v429, %v431
    %v455 = vsel %vm448, %v431, %v433
    %v456 = vsel %vm448, %v433, %v435
    %v457 = vsel %vm448, %v435, %v437
    %v458 = vsel %vm448, %v437, %v439
    %v459 = vsel %vm448, %v439, %v441
    %v460 = vsel %vm448, %v441, %v443
    %v461 = vsel %vm448, %v443, %v445
    %v462 = vsel %vm448, %v445, %v447
    %478 = vst [vmem:[#allocation2 + $0x78] sm:$0xe] %v449
    %479 = vst [vmem:[#allocation2 + $0x80] sm:$0xe] %v450
    %480 = vst [vmem:[#allocation2 + $0x88] sm:$0xe] %v451
    %481 = vst [vmem:[#allocation2 + $0x90] sm:$0xe] %v452
    %482 = vst [vmem:[#allocation2 + $0x98] sm:$0xe] %v453
    %483 = vst [vmem:[#allocation2 + $0xa0] sm:$0xe] %v454
    %484 = vst [vmem:[#allocation2 + $0xa8] sm:$0xe] %v455
    %485 = vst [vmem:[#allocation2 + $0xb0] sm:$0xe] %v456
    %486 = vst [vmem:[#allocation2 + $0xb8] sm:$0xe] %v457
    %487 = vst [vmem:[#allocation2 + $0xc0] sm:$0xe] %v458
    %488 = vst [vmem:[#allocation2 + $0xc8] sm:$0xe] %v459
    %489 = vst [vmem:[#allocation2 + $0xd0] sm:$0xe] %v460
    %490 = vst [vmem:[#allocation2 + $0xd8] sm:$0xe] %v461
    %491 = vst [vmem:[#allocation2 + $0xe0] sm:$0xe] %v462
    %vm492 = vcmask 1010689
    %493 = vst.msk [vmem:[#allocation2 + $0xe8] sm:$0xe] %vm492, %v447
    %s494 = scalar_lea.vmem [#allocation1], 1
    %495 = vst [vmem:[%s494] ss:$2 sm:$0xff] %v54
    %s496 = scalar_lea.vmem [#allocation1], 17
    %497 = vst [vmem:[%s496] ss:$2 sm:$0xff] %v55
    %s498 = scalar_lea.vmem [#allocation1], 33
    %499 = vst [vmem:[%s498] ss:$2 sm:$0xff] %v56
    %s500 = scalar_lea.vmem [#allocation1], 49
    %501 = vst [vmem:[%s500] ss:$2 sm:$0xff] %v57
    %v502 = vld.sshfl [vmem:[#allocation1] sm:$0xff pattern:$0x75316420]
    %v503 = vld.sshfl [vmem:[#allocation1 + $0x8] sm:$0xff pattern:$0x75316420]
    %v504 = vld.sshfl [vmem:[#allocation1 + $0x10] sm:$0xff pattern:$0x75316420]
    %v505 = vld.sshfl [vmem:[#allocation1 + $0x18] sm:$0xff pattern:$0x75316420]
    %v506 = vld.sshfl [vmem:[#allocation1 + $0x20] sm:$0xff pattern:$0x75316420]
    %v507 = vld.sshfl [vmem:[#allocation1 + $0x28] sm:$0xff pattern:$0x75316420]
    %v508 = vld.sshfl [vmem:[#allocation1 + $0x30] sm:$0xff pattern:$0x75316420]
    %v509 = vld.sshfl [vmem:[#allocation1 + $0x38] sm:$0xff pattern:$0x75316420]
    %510 = vst [vmem:[%s494] ss:$2 sm:$0xff] %v58
    %511 = vst [vmem:[%s496] ss:$2 sm:$0xff] %v59
    %512 = vst [vmem:[%s498] ss:$2 sm:$0xff] %v60
    %513 = vst [vmem:[%s500] ss:$2 sm:$0xff] %v61
    %v514 = vld.sshfl [vmem:[#allocation1] sm:$0xff pattern:$0x75316420]
    %v515 = vld.sshfl [vmem:[#allocation1 + $0x8] sm:$0xff pattern:$0x75316420]
    %v516 = vld.sshfl [vmem:[#allocation1 + $0x10] sm:$0xff pattern:$0x75316420]
    %v517 = vld.sshfl [vmem:[#allocation1 + $0x18] sm:$0xff pattern:$0x75316420]
    %v518 = vld.sshfl [vmem:[#allocation1 + $0x20] sm:$0xff pattern:$0x75316420]
    %v519 = vld.sshfl [vmem:[#allocation1 + $0x28] sm:$0xff pattern:$0x75316420]
    %v520 = vld.sshfl [vmem:[#allocation1 + $0x30] sm:$0xff pattern:$0x75316420]
    %521 = vrot.lane.b32.xlu0 %v502, 124
    %v522 = vpop.permute.xlu0 %521
    %523 = vrot.lane.b32.xlu0 %v503, 124
    %v524 = vpop.permute.xlu0 %523
    %525 = vrot.lane.b32.xlu0 %v504, 124
    %v526 = vpop.permute.xlu0 %525
    %527 = vrot.lane.b32.xlu0 %v505, 124
    %v528 = vpop.permute.xlu0 %527
    %529 = vrot.lane.b32.xlu0 %v506, 124
    %v530 = vpop.permute.xlu0 %529
    %531 = vrot.lane.b32.xlu0 %v507, 124
    %v532 = vpop.permute.xlu0 %531
    %533 = vrot.lane.b32.xlu0 %v508, 124
    %v534 = vpop.permute.xlu0 %533
    %535 = vrot.lane.b32.xlu0 %v509, 124
    %v536 = vpop.permute.xlu0 %535
    %537 = vrot.lane.b32.xlu0 %v514, 124
    %v538 = vpop.permute.xlu0 %537
    %539 = vrot.lane.b32.xlu0 %v515, 124
    %v540 = vpop.permute.xlu0 %539
    %541 = vrot.lane.b32.xlu0 %v516, 124
    %v542 = vpop.permute.xlu0 %541
    %543 = vrot.lane.b32.xlu0 %v517, 124
    %v544 = vpop.permute.xlu0 %543
    %545 = vrot.lane.b32.xlu0 %v518, 124
    %v546 = vpop.permute.xlu0 %545
    %547 = vrot.lane.b32.xlu0 %v519, 124
    %v548 = vpop.permute.xlu0 %547
    %549 = vrot.lane.b32.xlu0 %v520, 124
    %v550 = vpop.permute.xlu0 %549
    %vm551 = vcmask 1014784
    %v552 = vsel %vm551, %v522, %v524
    %v553 = vsel %vm551, %v524, %v526
    %v554 = vsel %vm551, %v526, %v528
    %v555 = vsel %vm551, %v528, %v530
    %v556 = vsel %vm551, %v530, %v532
    %v557 = vsel %vm551, %v532, %v534
    %v558 = vsel %vm551, %v534, %v536
    %v559 = vsel %vm551, %v536, %v538
    %v560 = vsel %vm551, %v538, %v540
    %v561 = vsel %vm551, %v540, %v542
    %v562 = vsel %vm551, %v542, %v544
    %v563 = vsel %vm551, %v544, %v546
    %v564 = vsel %vm551, %v546, %v548
    %v565 = vsel %vm551, %v548, %v550
    %581 = vst [vmem:[#allocation2 + $0x78] sm:$0x70] %v552
    %582 = vst [vmem:[#allocation2 + $0x80] sm:$0x70] %v553
    %583 = vst [vmem:[#allocation2 + $0x88] sm:$0x70] %v554
    %584 = vst [vmem:[#allocation2 + $0x90] sm:$0x70] %v555
    %585 = vst [vmem:[#allocation2 + $0x98] sm:$0x70] %v556
    %586 = vst [vmem:[#allocation2 + $0xa0] sm:$0x70] %v557
    %587 = vst [vmem:[#allocation2 + $0xa8] sm:$0x70] %v558
    %588 = vst [vmem:[#allocation2 + $0xb0] sm:$0x70] %v559
    %589 = vst [vmem:[#allocation2 + $0xb8] sm:$0x70] %v560
    %590 = vst [vmem:[#allocation2 + $0xc0] sm:$0x70] %v561
    %591 = vst [vmem:[#allocation2 + $0xc8] sm:$0x70] %v562
    %592 = vst [vmem:[#allocation2 + $0xd0] sm:$0x70] %v563
    %593 = vst [vmem:[#allocation2 + $0xd8] sm:$0x70] %v564
    %594 = vst [vmem:[#allocation2 + $0xe0] sm:$0x70] %v565
    %vm595 = vcmask 1013764
    %596 = vst.msk [vmem:[#allocation2 + $0xe8] sm:$0x70] %vm595, %v550
    %597 = vst [vmem:[#allocation1] ss:$2 sm:$0xff] %v54
    %s598 = scalar_lea.vmem [#allocation1], 16
    %599 = vst [vmem:[%s598] ss:$2 sm:$0xff] %v55
    %s600 = scalar_lea.vmem [#allocation1], 32
    %601 = vst [vmem:[%s600] ss:$2 sm:$0xff] %v56
    %s602 = scalar_lea.vmem [#allocation1], 48
    %603 = vst [vmem:[%s602] ss:$2 sm:$0xff] %v57
    %v604 = vld.sshfl [vmem:[#allocation1] sm:$0xff pattern:$0x75316420]
    %v605 = vld.sshfl [vmem:[#allocation1 + $0x8] sm:$0xff pattern:$0x75316420]
    %v606 = vld.sshfl [vmem:[#allocation1 + $0x10] sm:$0xff pattern:$0x75316420]
    %v607 = vld.sshfl [vmem:[#allocation1 + $0x18] sm:$0xff pattern:$0x75316420]
    %v608 = vld.sshfl [vmem:[#allocation1 + $0x20] sm:$0xff pattern:$0x75316420]
    %v609 = vld.sshfl [vmem:[#allocation1 + $0x28] sm:$0xff pattern:$0x75316420]
    %v610 = vld.sshfl [vmem:[#allocation1 + $0x30] sm:$0xff pattern:$0x75316420]
    %v611 = vld.sshfl [vmem:[#allocation1 + $0x38] sm:$0xff pattern:$0x75316420]
    %612 = vst [vmem:[#allocation1] ss:$2 sm:$0xff] %v58
    %613 = vst [vmem:[%s598] ss:$2 sm:$0xff] %v59
    %614 = vst [vmem:[%s600] ss:$2 sm:$0xff] %v60
    %615 = vst [vmem:[%s602] ss:$2 sm:$0xff] %v61
    %v616 = vld.sshfl [vmem:[#allocation1] sm:$0xff pattern:$0x75316420]
    %v617 = vld.sshfl [vmem:[#allocation1 + $0x8] sm:$0xff pattern:$0x75316420]
    %v618 = vld.sshfl [vmem:[#allocation1 + $0x10] sm:$0xff pattern:$0x75316420]
    %v619 = vld.sshfl [vmem:[#allocation1 + $0x18] sm:$0xff pattern:$0x75316420]
    %v620 = vld.sshfl [vmem:[#allocation1 + $0x20] sm:$0xff pattern:$0x75316420]
    %v621 = vld.sshfl [vmem:[#allocation1 + $0x28] sm:$0xff pattern:$0x75316420]
    %v622 = vld.sshfl [vmem:[#allocation1 + $0x30] sm:$0xff pattern:$0x75316420]
    %v623 = vld.sshfl [vmem:[#allocation1 + $0x38] sm:$0xff pattern:$0x75316420]
    %v624 = vrot.slane %v604, 1
    %v625 = vrot.slane %v605, 1
    %v626 = vrot.slane %v606, 1
    %v627 = vrot.slane %v607, 1
    %v628 = vrot.slane %v608, 1
    %v629 = vrot.slane %v609, 1
    %v630 = vrot.slane %v610, 1
    %v631 = vrot.slane %v611, 1
    %v632 = vrot.slane %v616, 1
    %v633 = vrot.slane %v617, 1
    %v634 = vrot.slane %v618, 1
    %v635 = vrot.slane %v619, 1
    %v636 = vrot.slane %v620, 1
    %v637 = vrot.slane %v621, 1
    %v638 = vrot.slane %v622, 1
    %v639 = vrot.slane %v623, 1
    %640 = vrot.lane.b32.xlu0 %v624, 96
    %v641 = vpop.permute.xlu0 %640
    %642 = vrot.lane.b32.xlu0 %v625, 96
    %v643 = vpop.permute.xlu0 %642
    %644 = vrot.lane.b32.xlu0 %v626, 96
    %v645 = vpop.permute.xlu0 %644
    %646 = vrot.lane.b32.xlu0 %v627, 96
    %v647 = vpop.permute.xlu0 %646
    %648 = vrot.lane.b32.xlu0 %v628, 96
    %v649 = vpop.permute.xlu0 %648
    %650 = vrot.lane.b32.xlu0 %v629, 96
    %v651 = vpop.permute.xlu0 %650
    %652 = vrot.lane.b32.xlu0 %v630, 96
    %v653 = vpop.permute.xlu0 %652
    %654 = vrot.lane.b32.xlu0 %v631, 96
    %v655 = vpop.permute.xlu0 %654
    %656 = vrot.lane.b32.xlu0 %v632, 96
    %v657 = vpop.permute.xlu0 %656
    %658 = vrot.lane.b32.xlu0 %v633, 96
    %v659 = vpop.permute.xlu0 %658
    %660 = vrot.lane.b32.xlu0 %v634, 96
    %v661 = vpop.permute.xlu0 %660
    %662 = vrot.lane.b32.xlu0 %v635, 96
    %v663 = vpop.permute.xlu0 %662
    %664 = vrot.lane.b32.xlu0 %v636, 96
    %v665 = vpop.permute.xlu0 %664
    %666 = vrot.lane.b32.xlu0 %v637, 96
    %v667 = vpop.permute.xlu0 %666
    %668 = vrot.lane.b32.xlu0 %v638, 96
    %v669 = vpop.permute.xlu0 %668
    %670 = vrot.lane.b32.xlu0 %v639, 96
    %v671 = vpop.permute.xlu0 %670
    %vm672 = vcmask 785408
    %v673 = vsel %vm672, %v641, %v643
    %v674 = vsel %vm672, %v643, %v645
    %v675 = vsel %vm672, %v645, %v647
    %v676 = vsel %vm672, %v647, %v649
    %v677 = vsel %vm672, %v649, %v651
    %v678 = vsel %vm672, %v651, %v653
    %v679 = vsel %vm672, %v653, %v655
    %v680 = vsel %vm672, %v655, %v657
    %v681 = vsel %vm672, %v657, %v659
    %v682 = vsel %vm672, %v659, %v661
    %v683 = vsel %vm672, %v661, %v663
    %v684 = vsel %vm672, %v663, %v665
    %v685 = vsel %vm672, %v665, %v667
    %v686 = vsel %vm672, %v667, %v669
    %v687 = vsel %vm672, %v669, %v671
    %703 = vst [vmem:[#allocation2 + $0x78] sm:$0x80] %v673
    %704 = vst [vmem:[#allocation2 + $0x80] sm:$0x80] %v674
    %705 = vst [vmem:[#allocation2 + $0x88] sm:$0x80] %v675
    %706 = vst [vmem:[#allocation2 + $0x90] sm:$0x80] %v676
    %707 = vst [vmem:[#allocation2 + $0x98] sm:$0x80] %v677
    %708 = vst [vmem:[#allocation2 + $0xa0] sm:$0x80] %v678
    %709 = vst [vmem:[#allocation2 + $0xa8] sm:$0x80] %v679
    %710 = vst [vmem:[#allocation2 + $0xb0] sm:$0x80] %v680
    %711 = vst [vmem:[#allocation2 + $0xb8] sm:$0x80] %v681
    %712 = vst [vmem:[#allocation2 + $0xc0] sm:$0x80] %v682
    %713 = vst [vmem:[#allocation2 + $0xc8] sm:$0x80] %v683
    %714 = vst [vmem:[#allocation2 + $0xd0] sm:$0x80] %v684
    %715 = vst [vmem:[#allocation2 + $0xd8] sm:$0x80] %v685
    %716 = vst [vmem:[#allocation2 + $0xe0] sm:$0x80] %v686
    %vm717 = vcmask 1014791
    %718 = vst.msk [vmem:[#allocation2 + $0xe8] sm:$0x80] %vm717, %v687
    %719 = vst [vmem:[#allocation2 + $0xf0] sm:$0x3] %v673
    %720 = vst [vmem:[#allocation2 + $0xf8] sm:$0x3] %v674
    %721 = vst [vmem:[#allocation2 + $0x100] sm:$0x3] %v675
    %722 = vst [vmem:[#allocation2 + $0x108] sm:$0x3] %v676
    %723 = vst [vmem:[#allocation2 + $0x110] sm:$0x3] %v677
    %724 = vst [vmem:[#allocation2 + $0x118] sm:$0x3] %v678
    %725 = vst [vmem:[#allocation2 + $0x120] sm:$0x3] %v679
    %726 = vst [vmem:[#allocation2 + $0x128] sm:$0x3] %v680
    %727 = vst [vmem:[#allocation2 + $0x130] sm:$0x3] %v681
    %728 = vst [vmem:[#allocation2 + $0x138] sm:$0x3] %v682
    %729 = vst [vmem:[#allocation2 + $0x140] sm:$0x3] %v683
    %730 = vst [vmem:[#allocation2 + $0x148] sm:$0x3] %v684
    %731 = vst [vmem:[#allocation2 + $0x150] sm:$0x3] %v685
    %732 = vst [vmem:[#allocation2 + $0x158] sm:$0x3] %v686
    %vm733 = vcmask 1008640
    %734 = vst.msk [vmem:[#allocation2 + $0x160] sm:$0x3] %vm733, %v687
    %735 = vst [vmem:[#allocation1] ss:$2 sm:$0xff] %v54
    %s736 = scalar_lea.vmem [#allocation1], 16
    %737 = vst [vmem:[%s736] ss:$2 sm:$0xff] %v55
    %s738 = scalar_lea.vmem [#allocation1], 32
    %739 = vst [vmem:[%s738] ss:$2 sm:$0xff] %v56
    %s740 = scalar_lea.vmem [#allocation1], 48
    %741 = vst [vmem:[%s740] ss:$2 sm:$0xff] %v57
    %v742 = vld.sshfl [vmem:[#allocation1] sm:$0xff pattern:$0x75316420]
    %v743 = vld.sshfl [vmem:[#allocation1 + $0x8] sm:$0xff pattern:$0x75316420]
    %v744 = vld.sshfl [vmem:[#allocation1 + $0x10] sm:$0xff pattern:$0x75316420]
    %v745 = vld.sshfl [vmem:[#allocation1 + $0x18] sm:$0xff pattern:$0x75316420]
    %v746 = vld.sshfl [vmem:[#allocation1 + $0x20] sm:$0xff pattern:$0x75316420]
    %v747 = vld.sshfl [vmem:[#allocation1 + $0x28] sm:$0xff pattern:$0x75316420]
    %v748 = vld.sshfl [vmem:[#allocation1 + $0x30] sm:$0xff pattern:$0x75316420]
    %v749 = vld.sshfl [vmem:[#allocation1 + $0x38] sm:$0xff pattern:$0x75316420]
    %750 = vst [vmem:[#allocation1] ss:$2 sm:$0xff] %v58
    %751 = vst [vmem:[%s736] ss:$2 sm:$0xff] %v59
    %752 = vst [vmem:[%s738] ss:$2 sm:$0xff] %v60
    %753 = vst [vmem:[%s740] ss:$2 sm:$0xff] %v61
    %v754 = vld.sshfl [vmem:[#allocation1] sm:$0xff pattern:$0x75316420]
    %v755 = vld.sshfl [vmem:[#allocation1 + $0x8] sm:$0xff pattern:$0x75316420]
    %v756 = vld.sshfl [vmem:[#allocation1 + $0x10] sm:$0xff pattern:$0x75316420]
    %v757 = vld.sshfl [vmem:[#allocation1 + $0x18] sm:$0xff pattern:$0x75316420]
    %v758 = vld.sshfl [vmem:[#allocation1 + $0x20] sm:$0xff pattern:$0x75316420]
    %v759 = vld.sshfl [vmem:[#allocation1 + $0x28] sm:$0xff pattern:$0x75316420]
    %v760 = vld.sshfl [vmem:[#allocation1 + $0x30] sm:$0xff pattern:$0x75316420]
    %v761 = vld.sshfl [vmem:[#allocation1 + $0x38] sm:$0xff pattern:$0x75316420]
    %v762 = vrot.slane %v742, 6
    %v763 = vrot.slane %v743, 6
    %v764 = vrot.slane %v744, 6
    %v765 = vrot.slane %v745, 6
    %v766 = vrot.slane %v746, 6
    %v767 = vrot.slane %v747, 6
    %v768 = vrot.slane %v748, 6
    %v769 = vrot.slane %v749, 6
    %v770 = vrot.slane %v754, 6
    %v771 = vrot.slane %v755, 6
    %v772 = vrot.slane %v756, 6
    %v773 = vrot.slane %v757, 6
    %v774 = vrot.slane %v758, 6
    %v775 = vrot.slane %v759, 6
    %v776 = vrot.slane %v760, 6
    %v777 = vrot.slane %v761, 6
    %778 = vrot.lane.b32.xlu0 %v762, 95
    %v779 = vpop.permute.xlu0 %778
    %780 = vrot.lane.b32.xlu0 %v763, 95
    %v781 = vpop.permute.xlu0 %780
    %782 = vrot.lane.b32.xlu0 %v764, 95
    %v783 = vpop.permute.xlu0 %782
    %784 = vrot.lane.b32.xlu0 %v765, 95
    %v785 = vpop.permute.xlu0 %784
    %786 = vrot.lane.b32.xlu0 %v766, 95
    %v787 = vpop.permute.xlu0 %786
    %788 = vrot.lane.b32.xlu0 %v767, 95
    %v789 = vpop.permute.xlu0 %788
    %790 = vrot.lane.b32.xlu0 %v768, 95
    %v791 = vpop.permute.xlu0 %790
    %792 = vrot.lane.b32.xlu0 %v769, 95
    %v793 = vpop.permute.xlu0 %792
    %794 = vrot.lane.b32.xlu0 %v770, 95
    %v795 = vpop.permute.xlu0 %794
    %796 = vrot.lane.b32.xlu0 %v771, 95
    %v797 = vpop.permute.xlu0 %796
    %798 = vrot.lane.b32.xlu0 %v772, 95
    %v799 = vpop.permute.xlu0 %798
    %800 = vrot.lane.b32.xlu0 %v773, 95
    %v801 = vpop.permute.xlu0 %800
    %802 = vrot.lane.b32.xlu0 %v774, 95
    %v803 = vpop.permute.xlu0 %802
    %804 = vrot.lane.b32.xlu0 %v775, 95
    %v805 = vpop.permute.xlu0 %804
    %806 = vrot.lane.b32.xlu0 %v776, 95
    %v807 = vpop.permute.xlu0 %806
    %808 = vrot.lane.b32.xlu0 %v777, 95
    %v809 = vpop.permute.xlu0 %808
    %vm810 = vcmask 777216
    %v811 = vsel %vm810, %v779, %v781
    %v812 = vsel %vm810, %v781, %v783
    %v813 = vsel %vm810, %v783, %v785
    %v814 = vsel %vm810, %v785, %v787
    %v815 = vsel %vm810, %v787, %v789
    %v816 = vsel %vm810, %v789, %v791
    %v817 = vsel %vm810, %v791, %v793
    %v818 = vsel %vm810, %v793, %v795
    %v819 = vsel %vm810, %v795, %v797
    %v820 = vsel %vm810, %v797, %v799
    %v821 = vsel %vm810, %v799, %v801
    %v822 = vsel %vm810, %v801, %v803
    %v823 = vsel %vm810, %v803, %v805
    %v824 = vsel %vm810, %v805, %v807
    %v825 = vsel %vm810, %v807, %v809
    %841 = vst [vmem:[#allocation2 + $0xf0] sm:$0x1c] %v811
    %842 = vst [vmem:[#allocation2 + $0xf8] sm:$0x1c] %v812
    %843 = vst [vmem:[#allocation2 + $0x100] sm:$0x1c] %v813
    %844 = vst [vmem:[#allocation2 + $0x108] sm:$0x1c] %v814
    %845 = vst [vmem:[#allocation2 + $0x110] sm:$0x1c] %v815
    %846 = vst [vmem:[#allocation2 + $0x118] sm:$0x1c] %v816
    %847 = vst [vmem:[#allocation2 + $0x120] sm:$0x1c] %v817
    %848 = vst [vmem:[#allocation2 + $0x128] sm:$0x1c] %v818
    %849 = vst [vmem:[#allocation2 + $0x130] sm:$0x1c] %v819
    %850 = vst [vmem:[#allocation2 + $0x138] sm:$0x1c] %v820
    %851 = vst [vmem:[#allocation2 + $0x140] sm:$0x1c] %v821
    %852 = vst [vmem:[#allocation2 + $0x148] sm:$0x1c] %v822
    %853 = vst [vmem:[#allocation2 + $0x150] sm:$0x1c] %v823
    %854 = vst [vmem:[#allocation2 + $0x158] sm:$0x1c] %v824
    %vm855 = vcmask 1011714
    %856 = vst.msk [vmem:[#allocation2 + $0x160] sm:$0x1c] %vm855, %v825
    %857 = vst [vmem:[#allocation1] ss:$2 sm:$0xff] %v54
    %s858 = scalar_lea.vmem [#allocation1], 16
    %859 = vst [vmem:[%s858] ss:$2 sm:$0xff] %v55
    %s860 = scalar_lea.vmem [#allocation1], 32
    %861 = vst [vmem:[%s860] ss:$2 sm:$0xff] %v56
    %s862 = scalar_lea.vmem [#allocation1], 48
    %863 = vst [vmem:[%s862] ss:$2 sm:$0xff] %v57
    %v864 = vld.sshfl [vmem:[#allocation1] sm:$0xff pattern:$0x75316420]
    %v865 = vld.sshfl [vmem:[#allocation1 + $0x8] sm:$0xff pattern:$0x75316420]
    %v866 = vld.sshfl [vmem:[#allocation1 + $0x10] sm:$0xff pattern:$0x75316420]
    %v867 = vld.sshfl [vmem:[#allocation1 + $0x18] sm:$0xff pattern:$0x75316420]
    %v868 = vld.sshfl [vmem:[#allocation1 + $0x20] sm:$0xff pattern:$0x75316420]
    %v869 = vld.sshfl [vmem:[#allocation1 + $0x28] sm:$0xff pattern:$0x75316420]
    %v870 = vld.sshfl [vmem:[#allocation1 + $0x30] sm:$0xff pattern:$0x75316420]
    %v871 = vld.sshfl [vmem:[#allocation1 + $0x38] sm:$0xff pattern:$0x75316420]
    %872 = vst [vmem:[#allocation1] ss:$2 sm:$0xff] %v58
    %873 = vst [vmem:[%s858] ss:$2 sm:$0xff] %v59
    %874 = vst [vmem:[%s860] ss:$2 sm:$0xff] %v60
    %875 = vst [vmem:[%s862] ss:$2 sm:$0xff] %v61
    %v876 = vld.sshfl [vmem:[#allocation1] sm:$0xff pattern:$0x75316420]
    %v877 = vld.sshfl [vmem:[#allocation1 + $0x8] sm:$0xff pattern:$0x75316420]
    %v878 = vld.sshfl [vmem:[#allocation1 + $0x10] sm:$0xff pattern:$0x75316420]
    %v879 = vld.sshfl [vmem:[#allocation1 + $0x18] sm:$0xff pattern:$0x75316420]
    %v880 = vld.sshfl [vmem:[#allocation1 + $0x20] sm:$0xff pattern:$0x75316420]
    %v881 = vld.sshfl [vmem:[#allocation1 + $0x28] sm:$0xff pattern:$0x75316420]
    %v882 = vld.sshfl [vmem:[#allocation1 + $0x30] sm:$0xff pattern:$0x75316420]
    %v883 = vld.sshfl [vmem:[#allocation1 + $0x38] sm:$0xff pattern:$0x75316420]
    %v884 = vrot.slane %v864, 3
    %v885 = vrot.slane %v865, 3
    %v886 = vrot.slane %v866, 3
    %v887 = vrot.slane %v867, 3
    %v888 = vrot.slane %v868, 3
    %v889 = vrot.slane %v869, 3
    %v890 = vrot.slane %v870, 3
    %v891 = vrot.slane %v871, 3
    %v892 = vrot.slane %v876, 3
    %v893 = vrot.slane %v877, 3
    %v894 = vrot.slane %v878, 3
    %v895 = vrot.slane %v879, 3
    %v896 = vrot.slane %v880, 3
    %v897 = vrot.slane %v881, 3
    %v898 = vrot.slane %v882, 3
    %v899 = vrot.slane %v883, 3
    %900 = vrot.lane.b32.xlu0 %v884, 94
    %v901 = vpop.permute.xlu0 %900
    %902 = vrot.lane.b32.xlu0 %v885, 94
    %v903 = vpop.permute.xlu0 %902
    %904 = vrot.lane.b32.xlu0 %v886, 94
    %v905 = vpop.permute.xlu0 %904
    %906 = vrot.lane.b32.xlu0 %v887, 94
    %v907 = vpop.permute.xlu0 %906
    %908 = vrot.lane.b32.xlu0 %v888, 94
    %v909 = vpop.permute.xlu0 %908
    %910 = vrot.lane.b32.xlu0 %v889, 94
    %v911 = vpop.permute.xlu0 %910
    %912 = vrot.lane.b32.xlu0 %v890, 94
    %v913 = vpop.permute.xlu0 %912
    %914 = vrot.lane.b32.xlu0 %v891, 94
    %v915 = vpop.permute.xlu0 %914
    %916 = vrot.lane.b32.xlu0 %v892, 94
    %v917 = vpop.permute.xlu0 %916
    %918 = vrot.lane.b32.xlu0 %v893, 94
    %v919 = vpop.permute.xlu0 %918
    %920 = vrot.lane.b32.xlu0 %v894, 94
    %v921 = vpop.permute.xlu0 %920
    %922 = vrot.lane.b32.xlu0 %v895, 94
    %v923 = vpop.permute.xlu0 %922
    %924 = vrot.lane.b32.xlu0 %v896, 94
    %v925 = vpop.permute.xlu0 %924
    %926 = vrot.lane.b32.xlu0 %v897, 94
    %v927 = vpop.permute.xlu0 %926
    %928 = vrot.lane.b32.xlu0 %v898, 94
    %v929 = vpop.permute.xlu0 %928
    %930 = vrot.lane.b32.xlu0 %v899, 94
    %v931 = vpop.permute.xlu0 %930
    %vm932 = vcmask 769024
    %v933 = vsel %vm932, %v901, %v903
    %v934 = vsel %vm932, %v903, %v905
    %v935 = vsel %vm932, %v905, %v907
    %v936 = vsel %vm932, %v907, %v909
    %v937 = vsel %vm932, %v909, %v911
    %v938 = vsel %vm932, %v911, %v913
    %v939 = vsel %vm932, %v913, %v915
    %v940 = vsel %vm932, %v915, %v917
    %v941 = vsel %vm932, %v917, %v919
    %v942 = vsel %vm932, %v919, %v921
    %v943 = vsel %vm932, %v921, %v923
    %v944 = vsel %vm932, %v923, %v925
    %v945 = vsel %vm932, %v925, %v927
    %v946 = vsel %vm932, %v927, %v929
    %v947 = vsel %vm932, %v929, %v931
    %963 = vst [vmem:[#allocation2 + $0xf0] sm:$0xe0] %v933
    %964 = vst [vmem:[#allocation2 + $0xf8] sm:$0xe0] %v934
    %965 = vst [vmem:[#allocation2 + $0x100] sm:$0xe0] %v935
    %966 = vst [vmem:[#allocation2 + $0x108] sm:$0xe0] %v936
    %967 = vst [vmem:[#allocation2 + $0x110] sm:$0xe0] %v937
    %968 = vst [vmem:[#allocation2 + $0x118] sm:$0xe0] %v938
    %969 = vst [vmem:[#allocation2 + $0x120] sm:$0xe0] %v939
    %970 = vst [vmem:[#allocation2 + $0x128] sm:$0xe0] %v940
    %971 = vst [vmem:[#allocation2 + $0x130] sm:$0xe0] %v941
    %972 = vst [vmem:[#allocation2 + $0x138] sm:$0xe0] %v942
    %973 = vst [vmem:[#allocation2 + $0x140] sm:$0xe0] %v943
    %974 = vst [vmem:[#allocation2 + $0x148] sm:$0xe0] %v944
    %975 = vst [vmem:[#allocation2 + $0x150] sm:$0xe0] %v945
    %976 = vst [vmem:[#allocation2 + $0x158] sm:$0xe0] %v946
    %vm977 = vcmask 1014789
    %978 = vst.msk [vmem:[#allocation2 + $0x160] sm:$0xe0] %vm977, %v947
    %979 = vst [vmem:[#allocation1] ss:$2 sm:$0xff] %v54
    %s980 = scalar_lea.vmem [#allocation1], 16
    %981 = vst [vmem:[%s980] ss:$2 sm:$0xff] %v55
    %s982 = scalar_lea.vmem [#allocation1], 32
    %983 = vst [vmem:[%s982] ss:$2 sm:$0xff] %v56
    %s984 = scalar_lea.vmem [#allocation1], 48
    %985 = vst [vmem:[%s984] ss:$2 sm:$0xff] %v57
    %v986 = vld.sshfl [vmem:[#allocation1] sm:$0xff pattern:$0x75316420]
    %v987 = vld.sshfl [vmem:[#allocation1 + $0x8] sm:$0xff pattern:$0x75316420]
    %v988 = vld.sshfl [vmem:[#allocation1 + $0x10] sm:$0xff pattern:$0x75316420]
    %v989 = vld.sshfl [vmem:[#allocation1 + $0x18] sm:$0xff pattern:$0x75316420]
    %v990 = vld.sshfl [vmem:[#allocation1 + $0x20] sm:$0xff pattern:$0x75316420]
    %v991 = vld.sshfl [vmem:[#allocation1 + $0x28] sm:$0xff pattern:$0x75316420]
    %v992 = vld.sshfl [vmem:[#allocation1 + $0x30] sm:$0xff pattern:$0x75316420]
    %v993 = vld.sshfl [vmem:[#allocation1 + $0x38] sm:$0xff pattern:$0x75316420]
    %994 = vst [vmem:[#allocation1] ss:$2 sm:$0xff] %v58
    %995 = vst [vmem:[%s980] ss:$2 sm:$0xff] %v59
    %996 = vst [vmem:[%s982] ss:$2 sm:$0xff] %v60
    %997 = vst [vmem:[%s984] ss:$2 sm:$0xff] %v61
    %v998 = vld.sshfl [vmem:[#allocation1] sm:$0xff pattern:$0x75316420]
    %v999 = vld.sshfl [vmem:[#allocation1 + $0x8] sm:$0xff pattern:$0x75316420]
    %v1000 = vld.sshfl [vmem:[#allocation1 + $0x10] sm:$0xff pattern:$0x75316420]
    %v1001 = vld.sshfl [vmem:[#allocation1 + $0x18] sm:$0xff pattern:$0x75316420]
    %v1002 = vld.sshfl [vmem:[#allocation1 + $0x20] sm:$0xff pattern:$0x75316420]
    %v1003 = vld.sshfl [vmem:[#allocation1 + $0x28] sm:$0xff pattern:$0x75316420]
    %v1004 = vld.sshfl [vmem:[#allocation1 + $0x30] sm:$0xff pattern:$0x75316420]
    %v1005 = vld.sshfl [vmem:[#allocation1 + $0x38] sm:$0xff pattern:$0x75316420]
    %1006 = vrot.lane.b32.xlu0 %v986, 93
    %v1007 = vpop.permute.xlu0 %1006
    %1008 = vrot.lane.b32.xlu0 %v987, 93
    %v1009 = vpop.permute.xlu0 %1008
    %1010 = vrot.lane.b32.xlu0 %v988, 93
    %v1011 = vpop.permute.xlu0 %1010
    %1012 = vrot.lane.b32.xlu0 %v989, 93
    %v1013 = vpop.permute.xlu0 %1012
    %1014 = vrot.lane.b32.xlu0 %v990, 93
    %v1015 = vpop.permute.xlu0 %1014
    %1016 = vrot.lane.b32.xlu0 %v991, 93
    %v1017 = vpop.permute.xlu0 %1016
    %1018 = vrot.lane.b32.xlu0 %v992, 93
    %v1019 = vpop.permute.xlu0 %1018
    %1020 = vrot.lane.b32.xlu0 %v993, 93
    %v1021 = vpop.permute.xlu0 %1020
    %1022 = vrot.lane.b32.xlu0 %v998, 93
    %v1023 = vpop.permute.xlu0 %1022
    %1024 = vrot.lane.b32.xlu0 %v999, 93
    %v1025 = vpop.permute.xlu0 %1024
    %1026 = vrot.lane.b32.xlu0 %v1000, 93
    %v1027 = vpop.permute.xlu0 %1026
    %1028 = vrot.lane.b32.xlu0 %v1001, 93
    %v1029 = vpop.permute.xlu0 %1028
    %1030 = vrot.lane.b32.xlu0 %v1002, 93
    %v1031 = vpop.permute.xlu0 %1030
    %1032 = vrot.lane.b32.xlu0 %v1003, 93
    %v1033 = vpop.permute.xlu0 %1032
    %1034 = vrot.lane.b32.xlu0 %v1004, 93
    %v1035 = vpop.permute.xlu0 %1034
    %1036 = vrot.lane.b32.xlu0 %v1005, 93
    %v1037 = vpop.permute.xlu0 %1036
    %vm1038 = vcmask 760832
    %v1039 = vsel %vm1038, %v1007, %v1009
    %v1040 = vsel %vm1038, %v1009, %v1011
    %v1041 = vsel %vm1038, %v1011, %v1013
    %v1042 = vsel %vm1038, %v1013, %v1015
    %v1043 = vsel %vm1038, %v1015, %v1017
    %v1044 = vsel %vm1038, %v1017, %v1019
    %v1045 = vsel %vm1038, %v1019, %v1021
    %v1046 = vsel %vm1038, %v1021, %v1023
    %v1047 = vsel %vm1038, %v1023, %v1025
    %v1048 = vsel %vm1038, %v1025, %v1027
    %v1049 = vsel %vm1038, %v1027, %v1029
    %v1050 = vsel %vm1038, %v1029, %v1031
    %v1051 = vsel %vm1038, %v1031, %v1033
    %v1052 = vsel %vm1038, %v1033, %v1035
    %v1053 = vsel %vm1038, %v1035, %v1037
    %1069 = vst [vmem:[#allocation2 + $0x168] sm:$0x7] %v1039
    %1070 = vst [vmem:[#allocation2 + $0x170] sm:$0x7] %v1040
    %1071 = vst [vmem:[#allocation2 + $0x178] sm:$0x7] %v1041
    %1072 = vst [vmem:[#allocation2 + $0x180] sm:$0x7] %v1042
    %1073 = vst [vmem:[#allocation2 + $0x188] sm:$0x7] %v1043
    %1074 = vst [vmem:[#allocation2 + $0x190] sm:$0x7] %v1044
    %1075 = vst [vmem:[#allocation2 + $0x198] sm:$0x7] %v1045
    %1076 = vst [vmem:[#allocation2 + $0x1a0] sm:$0x7] %v1046
    %1077 = vst [vmem:[#allocation2 + $0x1a8] sm:$0x7] %v1047
    %1078 = vst [vmem:[#allocation2 + $0x1b0] sm:$0x7] %v1048
    %1079 = vst [vmem:[#allocation2 + $0x1b8] sm:$0x7] %v1049
    %1080 = vst [vmem:[#allocation2 + $0x1c0] sm:$0x7] %v1050
    %1081 = vst [vmem:[#allocation2 + $0x1c8] sm:$0x7] %v1051
    %1082 = vst [vmem:[#allocation2 + $0x1d0] sm:$0x7] %v1052
    %1083 = vst.msk [vmem:[#allocation2 + $0x1d8] sm:$0x7] %vm125, %v1053
    %1084 = vst [vmem:[#allocation1] ss:$2 sm:$0xff] %v54
    %s1085 = scalar_lea.vmem [#allocation1], 16
    %1086 = vst [vmem:[%s1085] ss:$2 sm:$0xff] %v55
    %s1087 = scalar_lea.vmem [#allocation1], 32
    %1088 = vst [vmem:[%s1087] ss:$2 sm:$0xff] %v56
    %s1089 = scalar_lea.vmem [#allocation1], 48
    %1090 = vst [vmem:[%s1089] ss:$2 sm:$0xff] %v57
    %v1091 = vld.sshfl [vmem:[#allocation1] sm:$0xff pattern:$0x75316420]
    %v1092 = vld.sshfl [vmem:[#allocation1 + $0x8] sm:$0xff pattern:$0x75316420]
    %v1093 = vld.sshfl [vmem:[#allocation1 + $0x10] sm:$0xff pattern:$0x75316420]
    %v1094 = vld.sshfl [vmem:[#allocation1 + $0x18] sm:$0xff pattern:$0x75316420]
    %v1095 = vld.sshfl [vmem:[#allocation1 + $0x20] sm:$0xff pattern:$0x75316420]
    %v1096 = vld.sshfl [vmem:[#allocation1 + $0x28] sm:$0xff pattern:$0x75316420]
    %v1097 = vld.sshfl [vmem:[#allocation1 + $0x30] sm:$0xff pattern:$0x75316420]
    %v1098 = vld.sshfl [vmem:[#allocation1 + $0x38] sm:$0xff pattern:$0x75316420]
    %1099 = vst [vmem:[#allocation1] ss:$2 sm:$0xff] %v58
    %1100 = vst [vmem:[%s1085] ss:$2 sm:$0xff] %v59
    %1101 = vst [vmem:[%s1087] ss:$2 sm:$0xff] %v60
    %1102 = vst [vmem:[%s1089] ss:$2 sm:$0xff] %v61
    %v1103 = vld.sshfl [vmem:[#allocation1] sm:$0xff pattern:$0x75316420]
    %v1104 = vld.sshfl [vmem:[#allocation1 + $0x8] sm:$0xff pattern:$0x75316420]
    %v1105 = vld.sshfl [vmem:[#allocation1 + $0x10] sm:$0xff pattern:$0x75316420]
    %v1106 = vld.sshfl [vmem:[#allocation1 + $0x18] sm:$0xff pattern:$0x75316420]
    %v1107 = vld.sshfl [vmem:[#allocation1 + $0x20] sm:$0xff pattern:$0x75316420]
    %v1108 = vld.sshfl [vmem:[#allocation1 + $0x28] sm:$0xff pattern:$0x75316420]
    %v1109 = vld.sshfl [vmem:[#allocation1 + $0x30] sm:$0xff pattern:$0x75316420]
    %v1110 = vld.sshfl [vmem:[#allocation1 + $0x38] sm:$0xff pattern:$0x75316420]
    %v1111 = vrot.slane %v1091, 5
    %v1112 = vrot.slane %v1092, 5
    %v1113 = vrot.slane %v1093, 5
    %v1114 = vrot.slane %v1094, 5
    %v1115 = vrot.slane %v1095, 5
    %v1116 = vrot.slane %v1096, 5
    %v1117 = vrot.slane %v1097, 5
    %v1118 = vrot.slane %v1098, 5
    %v1119 = vrot.slane %v1103, 5
    %v1120 = vrot.slane %v1104, 5
    %v1121 = vrot.slane %v1105, 5
    %v1122 = vrot.slane %v1106, 5
    %v1123 = vrot.slane %v1107, 5
    %v1124 = vrot.slane %v1108, 5
    %v1125 = vrot.slane %v1109, 5
    %v1126 = vrot.slane %v1110, 5
    %1127 = vrot.lane.b32.xlu0 %v1111, 92
    %v1128 = vpop.permute.xlu0 %1127
    %1129 = vrot.lane.b32.xlu0 %v1112, 92
    %v1130 = vpop.permute.xlu0 %1129
    %1131 = vrot.lane.b32.xlu0 %v1113, 92
    %v1132 = vpop.permute.xlu0 %1131
    %1133 = vrot.lane.b32.xlu0 %v1114, 92
    %v1134 = vpop.permute.xlu0 %1133
    %1135 = vrot.lane.b32.xlu0 %v1115, 92
    %v1136 = vpop.permute.xlu0 %1135
    %1137 = vrot.lane.b32.xlu0 %v1116, 92
    %v1138 = vpop.permute.xlu0 %1137
    %1139 = vrot.lane.b32.xlu0 %v1117, 92
    %v1140 = vpop.permute.xlu0 %1139
    %1141 = vrot.lane.b32.xlu0 %v1118, 92
    %v1142 = vpop.permute.xlu0 %1141
    %1143 = vrot.lane.b32.xlu0 %v1119, 92
    %v1144 = vpop.permute.xlu0 %1143
    %1145 = vrot.lane.b32.xlu0 %v1120, 92
    %v1146 = vpop.permute.xlu0 %1145
    %1147 = vrot.lane.b32.xlu0 %v1121, 92
    %v1148 = vpop.permute.xlu0 %1147
    %1149 = vrot.lane.b32.xlu0 %v1122, 92
    %v1150 = vpop.permute.xlu0 %1149
    %1151 = vrot.lane.b32.xlu0 %v1123, 92
    %v1152 = vpop.permute.xlu0 %1151
    %1153 = vrot.lane.b32.xlu0 %v1124, 92
    %v1154 = vpop.permute.xlu0 %1153
    %1155 = vrot.lane.b32.xlu0 %v1125, 92
    %v1156 = vpop.permute.xlu0 %1155
    %1157 = vrot.lane.b32.xlu0 %v1126, 92
    %v1158 = vpop.permute.xlu0 %1157
    %vm1159 = vcmask 752640
    %v1160 = vsel %vm1159, %v1128, %v1130
    %v1161 = vsel %vm1159, %v1130, %v1132
    %v1162 = vsel %vm1159, %v1132, %v1134
    %v1163 = vsel %vm1159, %v1134, %v1136
    %v1164 = vsel %vm1159, %v1136, %v1138
    %v1165 = vsel %vm1159, %v1138, %v1140
    %v1166 = vsel %vm1159, %v1140, %v1142
    %v1167 = vsel %vm1159, %v1142, %v1144
    %v1168 = vsel %vm1159, %v1144, %v1146
    %v1169 = vsel %vm1159, %v1146, %v1148
    %v1170 = vsel %vm1159, %v1148, %v1150
    %v1171 = vsel %vm1159, %v1150, %v1152
    %v1172 = vsel %vm1159, %v1152, %v1154
    %v1173 = vsel %vm1159, %v1154, %v1156
    %v1174 = vsel %vm1159, %v1156, %v1158
    %1190 = vst [vmem:[#allocation2 + $0x168] sm:$0x38] %v1160
    %1191 = vst [vmem:[#allocation2 + $0x170] sm:$0x38] %v1161
    %1192 = vst [vmem:[#allocation2 + $0x178] sm:$0x38] %v1162
    %1193 = vst [vmem:[#allocation2 + $0x180] sm:$0x38] %v1163
    %1194 = vst [vmem:[#allocation2 + $0x188] sm:$0x38] %v1164
    %1195 = vst [vmem:[#allocation2 + $0x190] sm:$0x38] %v1165
    %1196 = vst [vmem:[#allocation2 + $0x198] sm:$0x38] %v1166
    %1197 = vst [vmem:[#allocation2 + $0x1a0] sm:$0x38] %v1167
    %1198 = vst [vmem:[#allocation2 + $0x1a8] sm:$0x38] %v1168
    %1199 = vst [vmem:[#allocation2 + $0x1b0] sm:$0x38] %v1169
    %1200 = vst [vmem:[#allocation2 + $0x1b8] sm:$0x38] %v1170
    %1201 = vst [vmem:[#allocation2 + $0x1c0] sm:$0x38] %v1171
    %1202 = vst [vmem:[#allocation2 + $0x1c8] sm:$0x38] %v1172
    %1203 = vst [vmem:[#allocation2 + $0x1d0] sm:$0x38] %v1173
    %1204 = vst.msk [vmem:[#allocation2 + $0x1d8] sm:$0x38] %vm242, %v1174
    %1205 = vst [vmem:[#allocation1] ss:$2 sm:$0xff] %v54
    %s1206 = scalar_lea.vmem [#allocation1], 16
    %1207 = vst [vmem:[%s1206] ss:$2 sm:$0xff] %v55
    %s1208 = scalar_lea.vmem [#allocation1], 32
    %1209 = vst [vmem:[%s1208] ss:$2 sm:$0xff] %v56
    %s1210 = scalar_lea.vmem [#allocation1], 48
    %1211 = vst [vmem:[%s1210] ss:$2 sm:$0xff] %v57
    %v1212 = vld.sshfl [vmem:[#allocation1] sm:$0xff pattern:$0x75316420]
    %v1213 = vld.sshfl [vmem:[#allocation1 + $0x8] sm:$0xff pattern:$0x75316420]
    %v1214 = vld.sshfl [vmem:[#allocation1 + $0x10] sm:$0xff pattern:$0x75316420]
    %v1215 = vld.sshfl [vmem:[#allocation1 + $0x18] sm:$0xff pattern:$0x75316420]
    %v1216 = vld.sshfl [vmem:[#allocation1 + $0x20] sm:$0xff pattern:$0x75316420]
    %v1217 = vld.sshfl [vmem:[#allocation1 + $0x28] sm:$0xff pattern:$0x75316420]
    %v1218 = vld.sshfl [vmem:[#allocation1 + $0x30] sm:$0xff pattern:$0x75316420]
    %v1219 = vld.sshfl [vmem:[#allocation1 + $0x38] sm:$0xff pattern:$0x75316420]
    %1220 = vst [vmem:[#allocation1] ss:$2 sm:$0xff] %v58
    %1221 = vst [vmem:[%s1206] ss:$2 sm:$0xff] %v59
    %1222 = vst [vmem:[%s1208] ss:$2 sm:$0xff] %v60
    %1223 = vst [vmem:[%s1210] ss:$2 sm:$0xff] %v61
    %v1224 = vld.sshfl [vmem:[#allocation1] sm:$0xff pattern:$0x75316420]
    %v1225 = vld.sshfl [vmem:[#allocation1 + $0x8] sm:$0xff pattern:$0x75316420]
    %v1226 = vld.sshfl [vmem:[#allocation1 + $0x10] sm:$0xff pattern:$0x75316420]
    %v1227 = vld.sshfl [vmem:[#allocation1 + $0x18] sm:$0xff pattern:$0x75316420]
    %v1228 = vld.sshfl [vmem:[#allocation1 + $0x20] sm:$0xff pattern:$0x75316420]
    %v1229 = vld.sshfl [vmem:[#allocation1 + $0x28] sm:$0xff pattern:$0x75316420]
    %v1230 = vld.sshfl [vmem:[#allocation1 + $0x30] sm:$0xff pattern:$0x75316420]
    %v1231 = vld.sshfl [vmem:[#allocation1 + $0x38] sm:$0xff pattern:$0x75316420]
    %v1232 = vrot.slane %v1212, 2
    %v1233 = vrot.slane %v1213, 2
    %v1234 = vrot.slane %v1214, 2
    %v1235 = vrot.slane %v1215, 2
    %v1236 = vrot.slane %v1216, 2
    %v1237 = vrot.slane %v1217, 2
    %v1238 = vrot.slane %v1218, 2
    %v1239 = vrot.slane %v1219, 2
    %v1240 = vrot.slane %v1224, 2
    %v1241 = vrot.slane %v1225, 2
    %v1242 = vrot.slane %v1226, 2
    %v1243 = vrot.slane %v1227, 2
    %v1244 = vrot.slane %v1228, 2
    %v1245 = vrot.slane %v1229, 2
    %v1246 = vrot.slane %v1230, 2
    %v1247 = vrot.slane %v1231, 2
    %1248 = vrot.lane.b32.xlu0 %v1232, 64
    %v1249 = vpop.permute.xlu0 %1248
    %1250 = vrot.lane.b32.xlu0 %v1233, 64
    %v1251 = vpop.permute.xlu0 %1250
    %1252 = vrot.lane.b32.xlu0 %v1234, 64
    %v1253 = vpop.permute.xlu0 %1252
    %1254 = vrot.lane.b32.xlu0 %v1235, 64
    %v1255 = vpop.permute.xlu0 %1254
    %1256 = vrot.lane.b32.xlu0 %v1236, 64
    %v1257 = vpop.permute.xlu0 %1256
    %1258 = vrot.lane.b32.xlu0 %v1237, 64
    %v1259 = vpop.permute.xlu0 %1258
    %1260 = vrot.lane.b32.xlu0 %v1238, 64
    %v1261 = vpop.permute.xlu0 %1260
    %1262 = vrot.lane.b32.xlu0 %v1239, 64
    %v1263 = vpop.permute.xlu0 %1262
    %1264 = vrot.lane.b32.xlu0 %v1240, 64
    %v1265 = vpop.permute.xlu0 %1264
    %1266 = vrot.lane.b32.xlu0 %v1241, 64
    %v1267 = vpop.permute.xlu0 %1266
    %1268 = vrot.lane.b32.xlu0 %v1242, 64
    %v1269 = vpop.permute.xlu0 %1268
    %1270 = vrot.lane.b32.xlu0 %v1243, 64
    %v1271 = vpop.permute.xlu0 %1270
    %1272 = vrot.lane.b32.xlu0 %v1244, 64
    %v1273 = vpop.permute.xlu0 %1272
    %1274 = vrot.lane.b32.xlu0 %v1245, 64
    %v1275 = vpop.permute.xlu0 %1274
    %1276 = vrot.lane.b32.xlu0 %v1246, 64
    %v1277 = vpop.permute.xlu0 %1276
    %1278 = vrot.lane.b32.xlu0 %v1247, 64
    %v1279 = vpop.permute.xlu0 %1278
    %vm1280 = vcmask 523264
    %v1281 = vsel %vm1280, %v1249, %v1251
    %v1282 = vsel %vm1280, %v1251, %v1253
    %v1283 = vsel %vm1280, %v1253, %v1255
    %v1284 = vsel %vm1280, %v1255, %v1257
    %v1285 = vsel %vm1280, %v1257, %v1259
    %v1286 = vsel %vm1280, %v1259, %v1261
    %v1287 = vsel %vm1280, %v1261, %v1263
    %v1288 = vsel %vm1280, %v1263, %v1265
    %v1289 = vsel %vm1280, %v1265, %v1267
    %v1290 = vsel %vm1280, %v1267, %v1269
    %v1291 = vsel %vm1280, %v1269, %v1271
    %v1292 = vsel %vm1280, %v1271, %v1273
    %v1293 = vsel %vm1280, %v1273, %v1275
    %v1294 = vsel %vm1280, %v1275, %v1277
    %v1295 = vsel %vm1280, %v1277, %v1279
    %1311 = vst [vmem:[#allocation2 + $0x168] sm:$0xc0] %v1281
    %1312 = vst [vmem:[#allocation2 + $0x170] sm:$0xc0] %v1282
    %1313 = vst [vmem:[#allocation2 + $0x178] sm:$0xc0] %v1283
    %1314 = vst [vmem:[#allocation2 + $0x180] sm:$0xc0] %v1284
    %1315 = vst [vmem:[#allocation2 + $0x188] sm:$0xc0] %v1285
    %1316 = vst [vmem:[#allocation2 + $0x190] sm:$0xc0] %v1286
    %1317 = vst [vmem:[#allocation2 + $0x198] sm:$0xc0] %v1287
    %1318 = vst [vmem:[#allocation2 + $0x1a0] sm:$0xc0] %v1288
    %1319 = vst [vmem:[#allocation2 + $0x1a8] sm:$0xc0] %v1289
    %1320 = vst [vmem:[#allocation2 + $0x1b0] sm:$0xc0] %v1290
    %1321 = vst [vmem:[#allocation2 + $0x1b8] sm:$0xc0] %v1291
    %1322 = vst [vmem:[#allocation2 + $0x1c0] sm:$0xc0] %v1292
    %1323 = vst [vmem:[#allocation2 + $0x1c8] sm:$0xc0] %v1293
    %1324 = vst [vmem:[#allocation2 + $0x1d0] sm:$0xc0] %v1294
    %1325 = vst.msk [vmem:[#allocation2 + $0x1d8] sm:$0xc0] %vm359, %v1295
    %1326 = vst [vmem:[#allocation2 + $0x1e0] sm:$0x1] %v1281
    %1327 = vst [vmem:[#allocation2 + $0x1e8] sm:$0x1] %v1282
    %1328 = vst [vmem:[#allocation2 + $0x1f0] sm:$0x1] %v1283
    %1329 = vst [vmem:[#allocation2 + $0x1f8] sm:$0x1] %v1284
    %1330 = vst [vmem:[#allocation2 + $0x200] sm:$0x1] %v1285
    %1331 = vst [vmem:[#allocation2 + $0x208] sm:$0x1] %v1286
    %1332 = vst [vmem:[#allocation2 + $0x210] sm:$0x1] %v1287
    %1333 = vst [vmem:[#allocation2 + $0x218] sm:$0x1] %v1288
    %1334 = vst [vmem:[#allocation2 + $0x220] sm:$0x1] %v1289
    %1335 = vst [vmem:[#allocation2 + $0x228] sm:$0x1] %v1290
    %1336 = vst [vmem:[#allocation2 + $0x230] sm:$0x1] %v1291
    %1337 = vst [vmem:[#allocation2 + $0x238] sm:$0x1] %v1292
    %1338 = vst [vmem:[#allocation2 + $0x240] sm:$0x1] %v1293
    %1339 = vst [vmem:[#allocation2 + $0x248] sm:$0x1] %v1294
    %1340 = vst.msk [vmem:[#allocation2 + $0x250] sm:$0x1] %vm375, %v1295
    %1341 = vst [vmem:[#allocation1] ss:$2 sm:$0xff] %v54
    %s1342 = scalar_lea.vmem [#allocation1], 16
    %1343 = vst [vmem:[%s1342] ss:$2 sm:$0xff] %v55
    %s1344 = scalar_lea.vmem [#allocation1], 32
    %1345 = vst [vmem:[%s1344] ss:$2 sm:$0xff] %v56
    %s1346 = scalar_lea.vmem [#allocation1], 48
    %1347 = vst [vmem:[%s1346] ss:$2 sm:$0xff] %v57
    %v1348 = vld.sshfl [vmem:[#allocation1] sm:$0xff pattern:$0x75316420]
    %v1349 = vld.sshfl [vmem:[#allocation1 + $0x8] sm:$0xff pattern:$0x75316420]
    %v1350 = vld.sshfl [vmem:[#allocation1 + $0x10] sm:$0xff pattern:$0x75316420]
    %v1351 = vld.sshfl [vmem:[#allocation1 + $0x18] sm:$0xff pattern:$0x75316420]
    %v1352 = vld.sshfl [vmem:[#allocation1 + $0x20] sm:$0xff pattern:$0x75316420]
    %v1353 = vld.sshfl [vmem:[#allocation1 + $0x28] sm:$0xff pattern:$0x75316420]
    %v1354 = vld.sshfl [vmem:[#allocation1 + $0x30] sm:$0xff pattern:$0x75316420]
    %v1355 = vld.sshfl [vmem:[#allocation1 + $0x38] sm:$0xff pattern:$0x75316420]
    %1356 = vst [vmem:[#allocation1] ss:$2 sm:$0xff] %v58
    %1357 = vst [vmem:[%s1342] ss:$2 sm:$0xff] %v59
    %1358 = vst [vmem:[%s1344] ss:$2 sm:$0xff] %v60
    %1359 = vst [vmem:[%s1346] ss:$2 sm:$0xff] %v61
    %v1360 = vld.sshfl [vmem:[#allocation1] sm:$0xff pattern:$0x75316420]
    %v1361 = vld.sshfl [vmem:[#allocation1 + $0x8] sm:$0xff pattern:$0x75316420]
    %v1362 = vld.sshfl [vmem:[#allocation1 + $0x10] sm:$0xff pattern:$0x75316420]
    %v1363 = vld.sshfl [vmem:[#allocation1 + $0x18] sm:$0xff pattern:$0x75316420]
    %v1364 = vld.sshfl [vmem:[#allocation1 + $0x20] sm:$0xff pattern:$0x75316420]
    %v1365 = vld.sshfl [vmem:[#allocation1 + $0x28] sm:$0xff pattern:$0x75316420]
    %v1366 = vld.sshfl [vmem:[#allocation1 + $0x30] sm:$0xff pattern:$0x75316420]
    %v1367 = vld.sshfl [vmem:[#allocation1 + $0x38] sm:$0xff pattern:$0x75316420]
    %v1368 = vrot.slane %v1348, 7
    %v1369 = vrot.slane %v1349, 7
    %v1370 = vrot.slane %v1350, 7
    %v1371 = vrot.slane %v1351, 7
    %v1372 = vrot.slane %v1352, 7
    %v1373 = vrot.slane %v1353, 7
    %v1374 = vrot.slane %v1354, 7
    %v1375 = vrot.slane %v1355, 7
    %v1376 = vrot.slane %v1360, 7
    %v1377 = vrot.slane %v1361, 7
    %v1378 = vrot.slane %v1362, 7
    %v1379 = vrot.slane %v1363, 7
    %v1380 = vrot.slane %v1364, 7
    %v1381 = vrot.slane %v1365, 7
    %v1382 = vrot.slane %v1366, 7
    %v1383 = vrot.slane %v1367, 7
    %1384 = vrot.lane.b32.xlu0 %v1368, 63
    %v1385 = vpop.permute.xlu0 %1384
    %1386 = vrot.lane.b32.xlu0 %v1369, 63
    %v1387 = vpop.permute.xlu0 %1386
    %1388 = vrot.lane.b32.xlu0 %v1370, 63
    %v1389 = vpop.permute.xlu0 %1388
    %1390 = vrot.lane.b32.xlu0 %v1371, 63
    %v1391 = vpop.permute.xlu0 %1390
    %1392 = vrot.lane.b32.xlu0 %v1372, 63
    %v1393 = vpop.permute.xlu0 %1392
    %1394 = vrot.lane.b32.xlu0 %v1373, 63
    %v1395 = vpop.permute.xlu0 %1394
    %1396 = vrot.lane.b32.xlu0 %v1374, 63
    %v1397 = vpop.permute.xlu0 %1396
    %1398 = vrot.lane.b32.xlu0 %v1375, 63
    %v1399 = vpop.permute.xlu0 %1398
    %1400 = vrot.lane.b32.xlu0 %v1376, 63
    %v1401 = vpop.permute.xlu0 %1400
    %1402 = vrot.lane.b32.xlu0 %v1377, 63
    %v1403 = vpop.permute.xlu0 %1402
    %1404 = vrot.lane.b32.xlu0 %v1378, 63
    %v1405 = vpop.permute.xlu0 %1404
    %1406 = vrot.lane.b32.xlu0 %v1379, 63
    %v1407 = vpop.permute.xlu0 %1406
    %1408 = vrot.lane.b32.xlu0 %v1380, 63
    %v1409 = vpop.permute.xlu0 %1408
    %1410 = vrot.lane.b32.xlu0 %v1381, 63
    %v1411 = vpop.permute.xlu0 %1410
    %1412 = vrot.lane.b32.xlu0 %v1382, 63
    %v1413 = vpop.permute.xlu0 %1412
    %1414 = vrot.lane.b32.xlu0 %v1383, 63
    %v1415 = vpop.permute.xlu0 %1414
    %vm1416 = vcmask 515072
    %v1417 = vsel %vm1416, %v1385, %v1387
    %v1418 = vsel %vm1416, %v1387, %v1389
    %v1419 = vsel %vm1416, %v1389, %v1391
    %v1420 = vsel %vm1416, %v1391, %v1393
    %v1421 = vsel %vm1416, %v1393, %v1395
    %v1422 = vsel %vm1416, %v1395, %v1397
    %v1423 = vsel %vm1416, %v1397, %v1399
    %v1424 = vsel %vm1416, %v1399, %v1401
    %v1425 = vsel %vm1416, %v1401, %v1403
    %v1426 = vsel %vm1416, %v1403, %v1405
    %v1427 = vsel %vm1416, %v1405, %v1407
    %v1428 = vsel %vm1416, %v1407, %v1409
    %v1429 = vsel %vm1416, %v1409, %v1411
    %v1430 = vsel %vm1416, %v1411, %v1413
    %v1431 = vsel %vm1416, %v1413, %v1415
    %1447 = vst [vmem:[#allocation2 + $0x1e0] sm:$0xe] %v1417
    %1448 = vst [vmem:[#allocation2 + $0x1e8] sm:$0xe] %v1418
    %1449 = vst [vmem:[#allocation2 + $0x1f0] sm:$0xe] %v1419
    %1450 = vst [vmem:[#allocation2 + $0x1f8] sm:$0xe] %v1420
    %1451 = vst [vmem:[#allocation2 + $0x200] sm:$0xe] %v1421
    %1452 = vst [vmem:[#allocation2 + $0x208] sm:$0xe] %v1422
    %1453 = vst [vmem:[#allocation2 + $0x210] sm:$0xe] %v1423
    %1454 = vst [vmem:[#allocation2 + $0x218] sm:$0xe] %v1424
    %1455 = vst [vmem:[#allocation2 + $0x220] sm:$0xe] %v1425
    %1456 = vst [vmem:[#allocation2 + $0x228] sm:$0xe] %v1426
    %1457 = vst [vmem:[#allocation2 + $0x230] sm:$0xe] %v1427
    %1458 = vst [vmem:[#allocation2 + $0x238] sm:$0xe] %v1428
    %1459 = vst [vmem:[#allocation2 + $0x240] sm:$0xe] %v1429
    %1460 = vst [vmem:[#allocation2 + $0x248] sm:$0xe] %v1430
    %1461 = vst.msk [vmem:[#allocation2 + $0x250] sm:$0xe] %vm492, %v1431
    %s1462 = scalar_lea.vmem [#allocation1], 1
    %1463 = vst [vmem:[%s1462] ss:$2 sm:$0xff] %v54
    %s1464 = scalar_lea.vmem [#allocation1], 17
    %1465 = vst [vmem:[%s1464] ss:$2 sm:$0xff] %v55
    %s1466 = scalar_lea.vmem [#allocation1], 33
    %1467 = vst [vmem:[%s1466] ss:$2 sm:$0xff] %v56
    %s1468 = scalar_lea.vmem [#allocation1], 49
    %1469 = vst [vmem:[%s1468] ss:$2 sm:$0xff] %v57
    %v1470 = vld.sshfl [vmem:[#allocation1] sm:$0xff pattern:$0x75316420]
    %v1471 = vld.sshfl [vmem:[#allocation1 + $0x8] sm:$0xff pattern:$0x75316420]
    %v1472 = vld.sshfl [vmem:[#allocation1 + $0x10] sm:$0xff pattern:$0x75316420]
    %v1473 = vld.sshfl [vmem:[#allocation1 + $0x18] sm:$0xff pattern:$0x75316420]
    %v1474 = vld.sshfl [vmem:[#allocation1 + $0x20] sm:$0xff pattern:$0x75316420]
    %v1475 = vld.sshfl [vmem:[#allocation1 + $0x28] sm:$0xff pattern:$0x75316420]
    %v1476 = vld.sshfl [vmem:[#allocation1 + $0x30] sm:$0xff pattern:$0x75316420]
    %v1477 = vld.sshfl [vmem:[#allocation1 + $0x38] sm:$0xff pattern:$0x75316420]
    %1478 = vst [vmem:[%s1462] ss:$2 sm:$0xff] %v58
    %1479 = vst [vmem:[%s1464] ss:$2 sm:$0xff] %v59
    %1480 = vst [vmem:[%s1466] ss:$2 sm:$0xff] %v60
    %1481 = vst [vmem:[%s1468] ss:$2 sm:$0xff] %v61
    %v1482 = vld.sshfl [vmem:[#allocation1] sm:$0xff pattern:$0x75316420]
    %v1483 = vld.sshfl [vmem:[#allocation1 + $0x8] sm:$0xff pattern:$0x75316420]
    %v1484 = vld.sshfl [vmem:[#allocation1 + $0x10] sm:$0xff pattern:$0x75316420]
    %v1485 = vld.sshfl [vmem:[#allocation1 + $0x18] sm:$0xff pattern:$0x75316420]
    %v1486 = vld.sshfl [vmem:[#allocation1 + $0x20] sm:$0xff pattern:$0x75316420]
    %v1487 = vld.sshfl [vmem:[#allocation1 + $0x28] sm:$0xff pattern:$0x75316420]
    %v1488 = vld.sshfl [vmem:[#allocation1 + $0x30] sm:$0xff pattern:$0x75316420]
    %v1489 = vld.sshfl [vmem:[#allocation1 + $0x38] sm:$0xff pattern:$0x75316420]
    %1490 = vrot.lane.b32.xlu0 %v1470, 62
    %v1491 = vpop.permute.xlu0 %1490
    %1492 = vrot.lane.b32.xlu0 %v1471, 62
    %v1493 = vpop.permute.xlu0 %1492
    %1494 = vrot.lane.b32.xlu0 %v1472, 62
    %v1495 = vpop.permute.xlu0 %1494
    %1496 = vrot.lane.b32.xlu0 %v1473, 62
    %v1497 = vpop.permute.xlu0 %1496
    %1498 = vrot.lane.b32.xlu0 %v1474, 62
    %v1499 = vpop.permute.xlu0 %1498
    %1500 = vrot.lane.b32.xlu0 %v1475, 62
    %v1501 = vpop.permute.xlu0 %1500
    %1502 = vrot.lane.b32.xlu0 %v1476, 62
    %v1503 = vpop.permute.xlu0 %1502
    %1504 = vrot.lane.b32.xlu0 %v1477, 62
    %v1505 = vpop.permute.xlu0 %1504
    %1506 = vrot.lane.b32.xlu0 %v1482, 62
    %v1507 = vpop.permute.xlu0 %1506
    %1508 = vrot.lane.b32.xlu0 %v1483, 62
    %v1509 = vpop.permute.xlu0 %1508
    %1510 = vrot.lane.b32.xlu0 %v1484, 62
    %v1511 = vpop.permute.xlu0 %1510
    %1512 = vrot.lane.b32.xlu0 %v1485, 62
    %v1513 = vpop.permute.xlu0 %1512
    %1514 = vrot.lane.b32.xlu0 %v1486, 62
    %v1515 = vpop.permute.xlu0 %1514
    %1516 = vrot.lane.b32.xlu0 %v1487, 62
    %v1517 = vpop.permute.xlu0 %1516
    %1518 = vrot.lane.b32.xlu0 %v1488, 62
    %v1519 = vpop.permute.xlu0 %1518
    %1520 = vrot.lane.b32.xlu0 %v1489, 62
    %v1521 = vpop.permute.xlu0 %1520
    %vm1522 = vcmask 506880
    %v1523 = vsel %vm1522, %v1491, %v1493
    %v1524 = vsel %vm1522, %v1493, %v1495
    %v1525 = vsel %vm1522, %v1495, %v1497
    %v1526 = vsel %vm1522, %v1497, %v1499
    %v1527 = vsel %vm1522, %v1499, %v1501
    %v1528 = vsel %vm1522, %v1501, %v1503
    %v1529 = vsel %vm1522, %v1503, %v1505
    %v1530 = vsel %vm1522, %v1505, %v1507
    %v1531 = vsel %vm1522, %v1507, %v1509
    %v1532 = vsel %vm1522, %v1509, %v1511
    %v1533 = vsel %vm1522, %v1511, %v1513
    %v1534 = vsel %vm1522, %v1513, %v1515
    %v1535 = vsel %vm1522, %v1515, %v1517
    %v1536 = vsel %vm1522, %v1517, %v1519
    %v1537 = vsel %vm1522, %v1519, %v1521
    %1553 = vst [vmem:[#allocation2 + $0x1e0] sm:$0x70] %v1523
    %1554 = vst [vmem:[#allocation2 + $0x1e8] sm:$0x70] %v1524
    %1555 = vst [vmem:[#allocation2 + $0x1f0] sm:$0x70] %v1525
    %1556 = vst [vmem:[#allocation2 + $0x1f8] sm:$0x70] %v1526
    %1557 = vst [vmem:[#allocation2 + $0x200] sm:$0x70] %v1527
    %1558 = vst [vmem:[#allocation2 + $0x208] sm:$0x70] %v1528
    %1559 = vst [vmem:[#allocation2 + $0x210] sm:$0x70] %v1529
    %1560 = vst [vmem:[#allocation2 + $0x218] sm:$0x70] %v1530
    %1561 = vst [vmem:[#allocation2 + $0x220] sm:$0x70] %v1531
    %1562 = vst [vmem:[#allocation2 + $0x228] sm:$0x70] %v1532
    %1563 = vst [vmem:[#allocation2 + $0x230] sm:$0x70] %v1533
    %1564 = vst [vmem:[#allocation2 + $0x238] sm:$0x70] %v1534
    %1565 = vst [vmem:[#allocation2 + $0x240] sm:$0x70] %v1535
    %1566 = vst [vmem:[#allocation2 + $0x248] sm:$0x70] %v1536
    %1567 = vst.msk [vmem:[#allocation2 + $0x250] sm:$0x70] %vm595, %v1537
    %1568 = vst [vmem:[#allocation1] ss:$2 sm:$0xff] %v54
    %s1569 = scalar_lea.vmem [#allocation1], 16
    %1570 = vst [vmem:[%s1569] ss:$2 sm:$0xff] %v55
    %s1571 = scalar_lea.vmem [#allocation1], 32
    %1572 = vst [vmem:[%s1571] ss:$2 sm:$0xff] %v56
    %s1573 = scalar_lea.vmem [#allocation1], 48
    %1574 = vst [vmem:[%s1573] ss:$2 sm:$0xff] %v57
    %v1575 = vld.sshfl [vmem:[#allocation1] sm:$0xff pattern:$0x75316420]
    %v1576 = vld.sshfl [vmem:[#allocation1 + $0x8] sm:$0xff pattern:$0x75316420]
    %v1577 = vld.sshfl [vmem:[#allocation1 + $0x10] sm:$0xff pattern:$0x75316420]
    %v1578 = vld.sshfl [vmem:[#allocation1 + $0x18] sm:$0xff pattern:$0x75316420]
    %v1579 = vld.sshfl [vmem:[#allocation1 + $0x20] sm:$0xff pattern:$0x75316420]
    %v1580 = vld.sshfl [vmem:[#allocation1 + $0x28] sm:$0xff pattern:$0x75316420]
    %v1581 = vld.sshfl [vmem:[#allocation1 + $0x30] sm:$0xff pattern:$0x75316420]
    %v1582 = vld.sshfl [vmem:[#allocation1 + $0x38] sm:$0xff pattern:$0x75316420]
    %1583 = vst [vmem:[#allocation1] ss:$2 sm:$0xff] %v58
    %1584 = vst [vmem:[%s1569] ss:$2 sm:$0xff] %v59
    %1585 = vst [vmem:[%s1571] ss:$2 sm:$0xff] %v60
    %1586 = vst [vmem:[%s1573] ss:$2 sm:$0xff] %v61
    %v1587 = vld.sshfl [vmem:[#allocation1] sm:$0xff pattern:$0x75316420]
    %v1588 = vld.sshfl [vmem:[#allocation1 + $0x8] sm:$0xff pattern:$0x75316420]
    %v1589 = vld.sshfl [vmem:[#allocation1 + $0x10] sm:$0xff pattern:$0x75316420]
    %v1590 = vld.sshfl [vmem:[#allocation1 + $0x18] sm:$0xff pattern:$0x75316420]
    %v1591 = vld.sshfl [vmem:[#allocation1 + $0x20] sm:$0xff pattern:$0x75316420]
    %v1592 = vld.sshfl [vmem:[#allocation1 + $0x28] sm:$0xff pattern:$0x75316420]
    %v1593 = vld.sshfl [vmem:[#allocation1 + $0x30] sm:$0xff pattern:$0x75316420]
    %v1594 = vld.sshfl [vmem:[#allocation1 + $0x38] sm:$0xff pattern:$0x75316420]
    %v1595 = vrot.slane %v1575, 1
    %v1596 = vrot.slane %v1576, 1
    %v1597 = vrot.slane %v1577, 1
    %v1598 = vrot.slane %v1578, 1
    %v1599 = vrot.slane %v1579, 1
    %v1600 = vrot.slane %v1580, 1
    %v1601 = vrot.slane %v1581, 1
    %v1602 = vrot.slane %v1582, 1
    %v1603 = vrot.slane %v1587, 1
    %v1604 = vrot.slane %v1588, 1
    %v1605 = vrot.slane %v1589, 1
    %v1606 = vrot.slane %v1590, 1
    %v1607 = vrot.slane %v1591, 1
    %v1608 = vrot.slane %v1592, 1
    %v1609 = vrot.slane %v1593, 1
    %v1610 = vrot.slane %v1594, 1
    %1611 = vrot.lane.b32.xlu0 %v1595, 61
    %v1612 = vpop.permute.xlu0 %1611
    %1613 = vrot.lane.b32.xlu0 %v1596, 61
    %v1614 = vpop.permute.xlu0 %1613
    %1615 = vrot.lane.b32.xlu0 %v1597, 61
    %v1616 = vpop.permute.xlu0 %1615
    %1617 = vrot.lane.b32.xlu0 %v1598, 61
    %v1618 = vpop.permute.xlu0 %1617
    %1619 = vrot.lane.b32.xlu0 %v1599, 61
    %v1620 = vpop.permute.xlu0 %1619
    %1621 = vrot.lane.b32.xlu0 %v1600, 61
    %v1622 = vpop.permute.xlu0 %1621
    %1623 = vrot.lane.b32.xlu0 %v1601, 61
    %v1624 = vpop.permute.xlu0 %1623
    %1625 = vrot.lane.b32.xlu0 %v1602, 61
    %v1626 = vpop.permute.xlu0 %1625
    %1627 = vrot.lane.b32.xlu0 %v1603, 61
    %v1628 = vpop.permute.xlu0 %1627
    %1629 = vrot.lane.b32.xlu0 %v1604, 61
    %v1630 = vpop.permute.xlu0 %1629
    %1631 = vrot.lane.b32.xlu0 %v1605, 61
    %v1632 = vpop.permute.xlu0 %1631
    %1633 = vrot.lane.b32.xlu0 %v1606, 61
    %v1634 = vpop.permute.xlu0 %1633
    %1635 = vrot.lane.b32.xlu0 %v1607, 61
    %v1636 = vpop.permute.xlu0 %1635
    %1637 = vrot.lane.b32.xlu0 %v1608, 61
    %v1638 = vpop.permute.xlu0 %1637
    %1639 = vrot.lane.b32.xlu0 %v1609, 61
    %v1640 = vpop.permute.xlu0 %1639
    %1641 = vrot.lane.b32.xlu0 %v1610, 61
    %v1642 = vpop.permute.xlu0 %1641
    %vm1643 = vcmask 498688
    %v1644 = vsel %vm1643, %v1612, %v1614
    %v1645 = vsel %vm1643, %v1614, %v1616
    %v1646 = vsel %vm1643, %v1616, %v1618
    %v1647 = vsel %vm1643, %v1618, %v1620
    %v1648 = vsel %vm1643, %v1620, %v1622
    %v1649 = vsel %vm1643, %v1622, %v1624
    %v1650 = vsel %vm1643, %v1624, %v1626
    %v1651 = vsel %vm1643, %v1626, %v1628
    %v1652 = vsel %vm1643, %v1628, %v1630
    %v1653 = vsel %vm1643, %v1630, %v1632
    %v1654 = vsel %vm1643, %v1632, %v1634
    %v1655 = vsel %vm1643, %v1634, %v1636
    %v1656 = vsel %vm1643, %v1636, %v1638
    %v1657 = vsel %vm1643, %v1638, %v1640
    %v1658 = vsel %vm1643, %v1640, %v1642
    %1674 = vst [vmem:[#allocation2 + $0x1e0] sm:$0x80] %v1644
    %1675 = vst [vmem:[#allocation2 + $0x1e8] sm:$0x80] %v1645
    %1676 = vst [vmem:[#allocation2 + $0x1f0] sm:$0x80] %v1646
    %1677 = vst [vmem:[#allocation2 + $0x1f8] sm:$0x80] %v1647
    %1678 = vst [vmem:[#allocation2 + $0x200] sm:$0x80] %v1648
    %1679 = vst [vmem:[#allocation2 + $0x208] sm:$0x80] %v1649
    %1680 = vst [vmem:[#allocation2 + $0x210] sm:$0x80] %v1650
    %1681 = vst [vmem:[#allocation2 + $0x218] sm:$0x80] %v1651
    %1682 = vst [vmem:[#allocation2 + $0x220] sm:$0x80] %v1652
    %1683 = vst [vmem:[#allocation2 + $0x228] sm:$0x80] %v1653
    %1684 = vst [vmem:[#allocation2 + $0x230] sm:$0x80] %v1654
    %1685 = vst [vmem:[#allocation2 + $0x238] sm:$0x80] %v1655
    %1686 = vst [vmem:[#allocation2 + $0x240] sm:$0x80] %v1656
    %1687 = vst [vmem:[#allocation2 + $0x248] sm:$0x80] %v1657
    %1688 = vst.msk [vmem:[#allocation2 + $0x250] sm:$0x80] %vm717, %v1658
    %1689 = vst [vmem:[#allocation2 + $0x258] sm:$0x3] %v1644
    %1690 = vst [vmem:[#allocation2 + $0x260] sm:$0x3] %v1645
    %1691 = vst [vmem:[#allocation2 + $0x268] sm:$0x3] %v1646
    %1692 = vst [vmem:[#allocation2 + $0x270] sm:$0x3] %v1647
    %1693 = vst [vmem:[#allocation2 + $0x278] sm:$0x3] %v1648
    %1694 = vst [vmem:[#allocation2 + $0x280] sm:$0x3] %v1649
    %1695 = vst [vmem:[#allocation2 + $0x288] sm:$0x3] %v1650
    %1696 = vst [vmem:[#allocation2 + $0x290] sm:$0x3] %v1651
    %1697 = vst [vmem:[#allocation2 + $0x298] sm:$0x3] %v1652
    %1698 = vst [vmem:[#allocation2 + $0x2a0] sm:$0x3] %v1653
    %1699 = vst [vmem:[#allocation2 + $0x2a8] sm:$0x3] %v1654
    %1700 = vst [vmem:[#allocation2 + $0x2b0] sm:$0x3] %v1655
    %1701 = vst [vmem:[#allocation2 + $0x2b8] sm:$0x3] %v1656
    %1702 = vst [vmem:[#allocation2 + $0x2c0] sm:$0x3] %v1657
    %1703 = vst.msk [vmem:[#allocation2 + $0x2c8] sm:$0x3] %vm733, %v1658
    %1704 = vst [vmem:[#allocation1] ss:$2 sm:$0xff] %v54
    %s1705 = scalar_lea.vmem [#allocation1], 16
    %1706 = vst [vmem:[%s1705] ss:$2 sm:$0xff] %v55
    %s1707 = scalar_lea.vmem [#allocation1], 32
    %1708 = vst [vmem:[%s1707] ss:$2 sm:$0xff] %v56
    %s1709 = scalar_lea.vmem [#allocation1], 48
    %1710 = vst [vmem:[%s1709] ss:$2 sm:$0xff] %v57
    %v1711 = vld.sshfl [vmem:[#allocation1] sm:$0xff pattern:$0x75316420]
    %v1712 = vld.sshfl [vmem:[#allocation1 + $0x8] sm:$0xff pattern:$0x75316420]
    %v1713 = vld.sshfl [vmem:[#allocation1 + $0x10] sm:$0xff pattern:$0x75316420]
    %v1714 = vld.sshfl [vmem:[#allocation1 + $0x18] sm:$0xff pattern:$0x75316420]
    %v1715 = vld.sshfl [vmem:[#allocation1 + $0x20] sm:$0xff pattern:$0x75316420]
    %v1716 = vld.sshfl [vmem:[#allocation1 + $0x28] sm:$0xff pattern:$0x75316420]
    %v1717 = vld.sshfl [vmem:[#allocation1 + $0x30] sm:$0xff pattern:$0x75316420]
    %v1718 = vld.sshfl [vmem:[#allocation1 + $0x38] sm:$0xff pattern:$0x75316420]
    %1719 = vst [vmem:[#allocation1] ss:$2 sm:$0xff] %v58
    %1720 = vst [vmem:[%s1705] ss:$2 sm:$0xff] %v59
    %1721 = vst [vmem:[%s1707] ss:$2 sm:$0xff] %v60
    %1722 = vst [vmem:[%s1709] ss:$2 sm:$0xff] %v61
    %v1723 = vld.sshfl [vmem:[#allocation1] sm:$0xff pattern:$0x75316420]
    %v1724 = vld.sshfl [vmem:[#allocation1 + $0x8] sm:$0xff pattern:$0x75316420]
    %v1725 = vld.sshfl [vmem:[#allocation1 + $0x10] sm:$0xff pattern:$0x75316420]
    %v1726 = vld.sshfl [vmem:[#allocation1 + $0x18] sm:$0xff pattern:$0x75316420]
    %v1727 = vld.sshfl [vmem:[#allocation1 + $0x20] sm:$0xff pattern:$0x75316420]
    %v1728 = vld.sshfl [vmem:[#allocation1 + $0x28] sm:$0xff pattern:$0x75316420]
    %v1729 = vld.sshfl [vmem:[#allocation1 + $0x30] sm:$0xff pattern:$0x75316420]
    %v1730 = vld.sshfl [vmem:[#allocation1 + $0x38] sm:$0xff pattern:$0x75316420]
    %v1731 = vrot.slane %v1711, 6
    %v1732 = vrot.slane %v1712, 6
    %v1733 = vrot.slane %v1713, 6
    %v1734 = vrot.slane %v1714, 6
    %v1735 = vrot.slane %v1715, 6
    %v1736 = vrot.slane %v1716, 6
    %v1737 = vrot.slane %v1717, 6
    %v1738 = vrot.slane %v1718, 6
    %v1739 = vrot.slane %v1723, 6
    %v1740 = vrot.slane %v1724, 6
    %v1741 = vrot.slane %v1725, 6
    %v1742 = vrot.slane %v1726, 6
    %v1743 = vrot.slane %v1727, 6
    %v1744 = vrot.slane %v1728, 6
    %v1745 = vrot.slane %v1729, 6
    %v1746 = vrot.slane %v1730, 6
    %1747 = vrot.lane.b32.xlu0 %v1731, 60
    %v1748 = vpop.permute.xlu0 %1747
    %1749 = vrot.lane.b32.xlu0 %v1732, 60
    %v1750 = vpop.permute.xlu0 %1749
    %1751 = vrot.lane.b32.xlu0 %v1733, 60
    %v1752 = vpop.permute.xlu0 %1751
    %1753 = vrot.lane.b32.xlu0 %v1734, 60
    %v1754 = vpop.permute.xlu0 %1753
    %1755 = vrot.lane.b32.xlu0 %v1735, 60
    %v1756 = vpop.permute.xlu0 %1755
    %1757 = vrot.lane.b32.xlu0 %v1736, 60
    %v1758 = vpop.permute.xlu0 %1757
    %1759 = vrot.lane.b32.xlu0 %v1737, 60
    %v1760 = vpop.permute.xlu0 %1759
    %1761 = vrot.lane.b32.xlu0 %v1738, 60
    %v1762 = vpop.permute.xlu0 %1761
    %1763 = vrot.lane.b32.xlu0 %v1739, 60
    %v1764 = vpop.permute.xlu0 %1763
    %1765 = vrot.lane.b32.xlu0 %v1740, 60
    %v1766 = vpop.permute.xlu0 %1765
    %1767 = vrot.lane.b32.xlu0 %v1741, 60
    %v1768 = vpop.permute.xlu0 %1767
    %1769 = vrot.lane.b32.xlu0 %v1742, 60
    %v1770 = vpop.permute.xlu0 %1769
    %1771 = vrot.lane.b32.xlu0 %v1743, 60
    %v1772 = vpop.permute.xlu0 %1771
    %1773 = vrot.lane.b32.xlu0 %v1744, 60
    %v1774 = vpop.permute.xlu0 %1773
    %1775 = vrot.lane.b32.xlu0 %v1745, 60
    %v1776 = vpop.permute.xlu0 %1775
    %1777 = vrot.lane.b32.xlu0 %v1746, 60
    %v1778 = vpop.permute.xlu0 %1777
    %vm1779 = vcmask 490496
    %v1780 = vsel %vm1779, %v1748, %v1750
    %v1781 = vsel %vm1779, %v1750, %v1752
    %v1782 = vsel %vm1779, %v1752, %v1754
    %v1783 = vsel %vm1779, %v1754, %v1756
    %v1784 = vsel %vm1779, %v1756, %v1758
    %v1785 = vsel %vm1779, %v1758, %v1760
    %v1786 = vsel %vm1779, %v1760, %v1762
    %v1787 = vsel %vm1779, %v1762, %v1764
    %v1788 = vsel %vm1779, %v1764, %v1766
    %v1789 = vsel %vm1779, %v1766, %v1768
    %v1790 = vsel %vm1779, %v1768, %v1770
    %v1791 = vsel %vm1779, %v1770, %v1772
    %v1792 = vsel %vm1779, %v1772, %v1774
    %v1793 = vsel %vm1779, %v1774, %v1776
    %v1794 = vsel %vm1779, %v1776, %v1778
    %1810 = vst [vmem:[#allocation2 + $0x258] sm:$0x1c] %v1780
    %1811 = vst [vmem:[#allocation2 + $0x260] sm:$0x1c] %v1781
    %1812 = vst [vmem:[#allocation2 + $0x268] sm:$0x1c] %v1782
    %1813 = vst [vmem:[#allocation2 + $0x270] sm:$0x1c] %v1783
    %1814 = vst [vmem:[#allocation2 + $0x278] sm:$0x1c] %v1784
    %1815 = vst [vmem:[#allocation2 + $0x280] sm:$0x1c] %v1785
    %1816 = vst [vmem:[#allocation2 + $0x288] sm:$0x1c] %v1786
    %1817 = vst [vmem:[#allocation2 + $0x290] sm:$0x1c] %v1787
    %1818 = vst [vmem:[#allocation2 + $0x298] sm:$0x1c] %v1788
    %1819 = vst [vmem:[#allocation2 + $0x2a0] sm:$0x1c] %v1789
    %1820 = vst [vmem:[#allocation2 + $0x2a8] sm:$0x1c] %v1790
    %1821 = vst [vmem:[#allocation2 + $0x2b0] sm:$0x1c] %v1791
    %1822 = vst [vmem:[#allocation2 + $0x2b8] sm:$0x1c] %v1792
    %1823 = vst [vmem:[#allocation2 + $0x2c0] sm:$0x1c] %v1793
    %1824 = vst.msk [vmem:[#allocation2 + $0x2c8] sm:$0x1c] %vm855, %v1794
    %1825 = vst [vmem:[#allocation1] ss:$2 sm:$0xff] %v54
    %s1826 = scalar_lea.vmem [#allocation1], 16
    %1827 = vst [vmem:[%s1826] ss:$2 sm:$0xff] %v55
    %s1828 = scalar_lea.vmem [#allocation1], 32
    %1829 = vst [vmem:[%s1828] ss:$2 sm:$0xff] %v56
    %s1830 = scalar_lea.vmem [#allocation1], 48
    %1831 = vst [vmem:[%s1830] ss:$2 sm:$0xff] %v57
    %v1832 = vld.sshfl [vmem:[#allocation1] sm:$0xff pattern:$0x75316420]
    %v1833 = vld.sshfl [vmem:[#allocation1 + $0x8] sm:$0xff pattern:$0x75316420]
    %v1834 = vld.sshfl [vmem:[#allocation1 + $0x10] sm:$0xff pattern:$0x75316420]
    %v1835 = vld.sshfl [vmem:[#allocation1 + $0x18] sm:$0xff pattern:$0x75316420]
    %v1836 = vld.sshfl [vmem:[#allocation1 + $0x20] sm:$0xff pattern:$0x75316420]
    %v1837 = vld.sshfl [vmem:[#allocation1 + $0x28] sm:$0xff pattern:$0x75316420]
    %v1838 = vld.sshfl [vmem:[#allocation1 + $0x30] sm:$0xff pattern:$0x75316420]
    %v1839 = vld.sshfl [vmem:[#allocation1 + $0x38] sm:$0xff pattern:$0x75316420]
    %1840 = vst [vmem:[#allocation1] ss:$2 sm:$0xff] %v58
    %1841 = vst [vmem:[%s1826] ss:$2 sm:$0xff] %v59
    %1842 = vst [vmem:[%s1828] ss:$2 sm:$0xff] %v60
    %1843 = vst [vmem:[%s1830] ss:$2 sm:$0xff] %v61
    %v1844 = vld.sshfl [vmem:[#allocation1] sm:$0xff pattern:$0x75316420]
    %v1845 = vld.sshfl [vmem:[#allocation1 + $0x8] sm:$0xff pattern:$0x75316420]
    %v1846 = vld.sshfl [vmem:[#allocation1 + $0x10] sm:$0xff pattern:$0x75316420]
    %v1847 = vld.sshfl [vmem:[#allocation1 + $0x18] sm:$0xff pattern:$0x75316420]
    %v1848 = vld.sshfl [vmem:[#allocation1 + $0x20] sm:$0xff pattern:$0x75316420]
    %v1849 = vld.sshfl [vmem:[#allocation1 + $0x28] sm:$0xff pattern:$0x75316420]
    %v1850 = vld.sshfl [vmem:[#allocation1 + $0x30] sm:$0xff pattern:$0x75316420]
    %v1851 = vld.sshfl [vmem:[#allocation1 + $0x38] sm:$0xff pattern:$0x75316420]
    %v1852 = vrot.slane %v1832, 3
    %v1853 = vrot.slane %v1833, 3
    %v1854 = vrot.slane %v1834, 3
    %v1855 = vrot.slane %v1835, 3
    %v1856 = vrot.slane %v1836, 3
    %v1857 = vrot.slane %v1837, 3
    %v1858 = vrot.slane %v1838, 3
    %v1859 = vrot.slane %v1839, 3
    %v1860 = vrot.slane %v1844, 3
    %v1861 = vrot.slane %v1845, 3
    %v1862 = vrot.slane %v1846, 3
    %v1863 = vrot.slane %v1847, 3
    %v1864 = vrot.slane %v1848, 3
    %v1865 = vrot.slane %v1849, 3
    %v1866 = vrot.slane %v1850, 3
    %v1867 = vrot.slane %v1851, 3
    %1868 = vrot.lane.b32.xlu0 %v1852, 32
    %v1869 = vpop.permute.xlu0 %1868
    %1870 = vrot.lane.b32.xlu0 %v1853, 32
    %v1871 = vpop.permute.xlu0 %1870
    %1872 = vrot.lane.b32.xlu0 %v1854, 32
    %v1873 = vpop.permute.xlu0 %1872
    %1874 = vrot.lane.b32.xlu0 %v1855, 32
    %v1875 = vpop.permute.xlu0 %1874
    %1876 = vrot.lane.b32.xlu0 %v1856, 32
    %v1877 = vpop.permute.xlu0 %1876
    %1878 = vrot.lane.b32.xlu0 %v1857, 32
    %v1879 = vpop.permute.xlu0 %1878
    %1880 = vrot.lane.b32.xlu0 %v1858, 32
    %v1881 = vpop.permute.xlu0 %1880
    %1882 = vrot.lane.b32.xlu0 %v1859, 32
    %v1883 = vpop.permute.xlu0 %1882
    %1884 = vrot.lane.b32.xlu0 %v1860, 32
    %v1885 = vpop.permute.xlu0 %1884
    %1886 = vrot.lane.b32.xlu0 %v1861, 32
    %v1887 = vpop.permute.xlu0 %1886
    %1888 = vrot.lane.b32.xlu0 %v1862, 32
    %v1889 = vpop.permute.xlu0 %1888
    %1890 = vrot.lane.b32.xlu0 %v1863, 32
    %v1891 = vpop.permute.xlu0 %1890
    %1892 = vrot.lane.b32.xlu0 %v1864, 32
    %v1893 = vpop.permute.xlu0 %1892
    %1894 = vrot.lane.b32.xlu0 %v1865, 32
    %v1895 = vpop.permute.xlu0 %1894
    %1896 = vrot.lane.b32.xlu0 %v1866, 32
    %v1897 = vpop.permute.xlu0 %1896
    %1898 = vrot.lane.b32.xlu0 %v1867, 32
    %v1899 = vpop.permute.xlu0 %1898
    %vm1900 = vcmask 261120
    %v1901 = vsel %vm1900, %v1869, %v1871
    %v1902 = vsel %vm1900, %v1871, %v1873
    %v1903 = vsel %vm1900, %v1873, %v1875
    %v1904 = vsel %vm1900, %v1875, %v1877
    %v1905 = vsel %vm1900, %v1877, %v1879
    %v1906 = vsel %vm1900, %v1879, %v1881
    %v1907 = vsel %vm1900, %v1881, %v1883
    %v1908 = vsel %vm1900, %v1883, %v1885
    %v1909 = vsel %vm1900, %v1885, %v1887
    %v1910 = vsel %vm1900, %v1887, %v1889
    %v1911 = vsel %vm1900, %v1889, %v1891
    %v1912 = vsel %vm1900, %v1891, %v1893
    %v1913 = vsel %vm1900, %v1893, %v1895
    %v1914 = vsel %vm1900, %v1895, %v1897
    %v1915 = vsel %vm1900, %v1897, %v1899
    %1931 = vst [vmem:[#allocation2 + $0x258] sm:$0xe0] %v1901
    %1932 = vst [vmem:[#allocation2 + $0x260] sm:$0xe0] %v1902
    %1933 = vst [vmem:[#allocation2 + $0x268] sm:$0xe0] %v1903
    %1934 = vst [vmem:[#allocation2 + $0x270] sm:$0xe0] %v1904
    %1935 = vst [vmem:[#allocation2 + $0x278] sm:$0xe0] %v1905
    %1936 = vst [vmem:[#allocation2 + $0x280] sm:$0xe0] %v1906
    %1937 = vst [vmem:[#allocation2 + $0x288] sm:$0xe0] %v1907
    %1938 = vst [vmem:[#allocation2 + $0x290] sm:$0xe0] %v1908
    %1939 = vst [vmem:[#allocation2 + $0x298] sm:$0xe0] %v1909
    %1940 = vst [vmem:[#allocation2 + $0x2a0] sm:$0xe0] %v1910
    %1941 = vst [vmem:[#allocation2 + $0x2a8] sm:$0xe0] %v1911
    %1942 = vst [vmem:[#allocation2 + $0x2b0] sm:$0xe0] %v1912
    %1943 = vst [vmem:[#allocation2 + $0x2b8] sm:$0xe0] %v1913
    %1944 = vst [vmem:[#allocation2 + $0x2c0] sm:$0xe0] %v1914
    %1945 = vst.msk [vmem:[#allocation2 + $0x2c8] sm:$0xe0] %vm977, %v1915
    %1946 = vst [vmem:[#allocation1] ss:$2 sm:$0xff] %v54
    %s1947 = scalar_lea.vmem [#allocation1], 16
    %1948 = vst [vmem:[%s1947] ss:$2 sm:$0xff] %v55
    %s1949 = scalar_lea.vmem [#allocation1], 32
    %1950 = vst [vmem:[%s1949] ss:$2 sm:$0xff] %v56
    %s1951 = scalar_lea.vmem [#allocation1], 48
    %1952 = vst [vmem:[%s1951] ss:$2 sm:$0xff] %v57
    %v1953 = vld.sshfl [vmem:[#allocation1] sm:$0xff pattern:$0x75316420]
    %v1954 = vld.sshfl [vmem:[#allocation1 + $0x8] sm:$0xff pattern:$0x75316420]
    %v1955 = vld.sshfl [vmem:[#allocation1 + $0x10] sm:$0xff pattern:$0x75316420]
    %v1956 = vld.sshfl [vmem:[#allocation1 + $0x18] sm:$0xff pattern:$0x75316420]
    %v1957 = vld.sshfl [vmem:[#allocation1 + $0x20] sm:$0xff pattern:$0x75316420]
    %v1958 = vld.sshfl [vmem:[#allocation1 + $0x28] sm:$0xff pattern:$0x75316420]
    %v1959 = vld.sshfl [vmem:[#allocation1 + $0x30] sm:$0xff pattern:$0x75316420]
    %v1960 = vld.sshfl [vmem:[#allocation1 + $0x38] sm:$0xff pattern:$0x75316420]
    %1961 = vst [vmem:[#allocation1] ss:$2 sm:$0xff] %v58
    %1962 = vst [vmem:[%s1947] ss:$2 sm:$0xff] %v59
    %1963 = vst [vmem:[%s1949] ss:$2 sm:$0xff] %v60
    %1964 = vst [vmem:[%s1951] ss:$2 sm:$0xff] %v61
    %v1965 = vld.sshfl [vmem:[#allocation1] sm:$0xff pattern:$0x75316420]
    %v1966 = vld.sshfl [vmem:[#allocation1 + $0x8] sm:$0xff pattern:$0x75316420]
    %v1967 = vld.sshfl [vmem:[#allocation1 + $0x10] sm:$0xff pattern:$0x75316420]
    %v1968 = vld.sshfl [vmem:[#allocation1 + $0x18] sm:$0xff pattern:$0x75316420]
    %v1969 = vld.sshfl [vmem:[#allocation1 + $0x20] sm:$0xff pattern:$0x75316420]
    %v1970 = vld.sshfl [vmem:[#allocation1 + $0x28] sm:$0xff pattern:$0x75316420]
    %v1971 = vld.sshfl [vmem:[#allocation1 + $0x30] sm:$0xff pattern:$0x75316420]
    %v1972 = vld.sshfl [vmem:[#allocation1 + $0x38] sm:$0xff pattern:$0x75316420]
    %1973 = vrot.lane.b32.xlu0 %v1953, 31
    %v1974 = vpop.permute.xlu0 %1973
    %1975 = vrot.lane.b32.xlu0 %v1954, 31
    %v1976 = vpop.permute.xlu0 %1975
    %1977 = vrot.lane.b32.xlu0 %v1955, 31
    %v1978 = vpop.permute.xlu0 %1977
    %1979 = vrot.lane.b32.xlu0 %v1956, 31
    %v1980 = vpop.permute.xlu0 %1979
    %1981 = vrot.lane.b32.xlu0 %v1957, 31
    %v1982 = vpop.permute.xlu0 %1981
    %1983 = vrot.lane.b32.xlu0 %v1958, 31
    %v1984 = vpop.permute.xlu0 %1983
    %1985 = vrot.lane.b32.xlu0 %v1959, 31
    %v1986 = vpop.permute.xlu0 %1985
    %1987 = vrot.lane.b32.xlu0 %v1960, 31
    %v1988 = vpop.permute.xlu0 %1987
    %1989 = vrot.lane.b32.xlu0 %v1965, 31
    %v1990 = vpop.permute.xlu0 %1989
    %1991 = vrot.lane.b32.xlu0 %v1966, 31
    %v1992 = vpop.permute.xlu0 %1991
    %1993 = vrot.lane.b32.xlu0 %v1967, 31
    %v1994 = vpop.permute.xlu0 %1993
    %1995 = vrot.lane.b32.xlu0 %v1968, 31
    %v1996 = vpop.permute.xlu0 %1995
    %1997 = vrot.lane.b32.xlu0 %v1969, 31
    %v1998 = vpop.permute.xlu0 %1997
    %1999 = vrot.lane.b32.xlu0 %v1970, 31
    %v2000 = vpop.permute.xlu0 %1999
    %2001 = vrot.lane.b32.xlu0 %v1971, 31
    %v2002 = vpop.permute.xlu0 %2001
    %2003 = vrot.lane.b32.xlu0 %v1972, 31
    %v2004 = vpop.permute.xlu0 %2003
    %vm2005 = vcmask 252928
    %v2006 = vsel %vm2005, %v1974, %v1976
    %v2007 = vsel %vm2005, %v1976, %v1978
    %v2008 = vsel %vm2005, %v1978, %v1980
    %v2009 = vsel %vm2005, %v1980, %v1982
    %v2010 = vsel %vm2005, %v1982, %v1984
    %v2011 = vsel %vm2005, %v1984, %v1986
    %v2012 = vsel %vm2005, %v1986, %v1988
    %v2013 = vsel %vm2005, %v1988, %v1990
    %v2014 = vsel %vm2005, %v1990, %v1992
    %v2015 = vsel %vm2005, %v1992, %v1994
    %v2016 = vsel %vm2005, %v1994, %v1996
    %v2017 = vsel %vm2005, %v1996, %v1998
    %v2018 = vsel %vm2005, %v1998, %v2000
    %v2019 = vsel %vm2005, %v2000, %v2002
    %v2020 = vsel %vm2005, %v2002, %v2004
    %2036 = vst [vmem:[#allocation2 + $0x2d0] sm:$0x7] %v2006
    %2037 = vst [vmem:[#allocation2 + $0x2d8] sm:$0x7] %v2007
    %2038 = vst [vmem:[#allocation2 + $0x2e0] sm:$0x7] %v2008
    %2039 = vst [vmem:[#allocation2 + $0x2e8] sm:$0x7] %v2009
    %2040 = vst [vmem:[#allocation2 + $0x2f0] sm:$0x7] %v2010
    %2041 = vst [vmem:[#allocation2 + $0x2f8] sm:$0x7] %v2011
    %2042 = vst [vmem:[#allocation2 + $0x300] sm:$0x7] %v2012
    %2043 = vst [vmem:[#allocation2 + $0x308] sm:$0x7] %v2013
    %2044 = vst [vmem:[#allocation2 + $0x310] sm:$0x7] %v2014
    %2045 = vst [vmem:[#allocation2 + $0x318] sm:$0x7] %v2015
    %2046 = vst [vmem:[#allocation2 + $0x320] sm:$0x7] %v2016
    %2047 = vst [vmem:[#allocation2 + $0x328] sm:$0x7] %v2017
    %2048 = vst [vmem:[#allocation2 + $0x330] sm:$0x7] %v2018
    %2049 = vst [vmem:[#allocation2 + $0x338] sm:$0x7] %v2019
    %2050 = vst.msk [vmem:[#allocation2 + $0x340] sm:$0x7] %vm125, %v2020
    %2051 = vst [vmem:[#allocation1] ss:$2 sm:$0xff] %v54
    %s2052 = scalar_lea.vmem [#allocation1], 16
    %2053 = vst [vmem:[%s2052] ss:$2 sm:$0xff] %v55
    %s2054 = scalar_lea.vmem [#allocation1], 32
    %2055 = vst [vmem:[%s2054] ss:$2 sm:$0xff] %v56
    %s2056 = scalar_lea.vmem [#allocation1], 48
    %2057 = vst [vmem:[%s2056] ss:$2 sm:$0xff] %v57
    %v2058 = vld.sshfl [vmem:[#allocation1] sm:$0xff pattern:$0x75316420]
    %v2059 = vld.sshfl [vmem:[#allocation1 + $0x8] sm:$0xff pattern:$0x75316420]
    %v2060 = vld.sshfl [vmem:[#allocation1 + $0x10] sm:$0xff pattern:$0x75316420]
    %v2061 = vld.sshfl [vmem:[#allocation1 + $0x18] sm:$0xff pattern:$0x75316420]
    %v2062 = vld.sshfl [vmem:[#allocation1 + $0x20] sm:$0xff pattern:$0x75316420]
    %v2063 = vld.sshfl [vmem:[#allocation1 + $0x28] sm:$0xff pattern:$0x75316420]
    %v2064 = vld.sshfl [vmem:[#allocation1 + $0x30] sm:$0xff pattern:$0x75316420]
    %v2065 = vld.sshfl [vmem:[#allocation1 + $0x38] sm:$0xff pattern:$0x75316420]
    %2066 = vst [vmem:[#allocation1] ss:$2 sm:$0xff] %v58
    %2067 = vst [vmem:[%s2052] ss:$2 sm:$0xff] %v59
    %2068 = vst [vmem:[%s2054] ss:$2 sm:$0xff] %v60
    %2069 = vst [vmem:[%s2056] ss:$2 sm:$0xff] %v61
    %v2070 = vld.sshfl [vmem:[#allocation1] sm:$0xff pattern:$0x75316420]
    %v2071 = vld.sshfl [vmem:[#allocation1 + $0x8] sm:$0xff pattern:$0x75316420]
    %v2072 = vld.sshfl [vmem:[#allocation1 + $0x10] sm:$0xff pattern:$0x75316420]
    %v2073 = vld.sshfl [vmem:[#allocation1 + $0x18] sm:$0xff pattern:$0x75316420]
    %v2074 = vld.sshfl [vmem:[#allocation1 + $0x20] sm:$0xff pattern:$0x75316420]
    %v2075 = vld.sshfl [vmem:[#allocation1 + $0x28] sm:$0xff pattern:$0x75316420]
    %v2076 = vld.sshfl [vmem:[#allocation1 + $0x30] sm:$0xff pattern:$0x75316420]
    %v2077 = vld.sshfl [vmem:[#allocation1 + $0x38] sm:$0xff pattern:$0x75316420]
    %v2078 = vrot.slane %v2058, 5
    %v2079 = vrot.slane %v2059, 5
    %v2080 = vrot.slane %v2060, 5
    %v2081 = vrot.slane %v2061, 5
    %v2082 = vrot.slane %v2062, 5
    %v2083 = vrot.slane %v2063, 5
    %v2084 = vrot.slane %v2064, 5
    %v2085 = vrot.slane %v2065, 5
    %v2086 = vrot.slane %v2070, 5
    %v2087 = vrot.slane %v2071, 5
    %v2088 = vrot.slane %v2072, 5
    %v2089 = vrot.slane %v2073, 5
    %v2090 = vrot.slane %v2074, 5
    %v2091 = vrot.slane %v2075, 5
    %v2092 = vrot.slane %v2076, 5
    %v2093 = vrot.slane %v2077, 5
    %2094 = vrot.lane.b32.xlu0 %v2078, 30
    %v2095 = vpop.permute.xlu0 %2094
    %2096 = vrot.lane.b32.xlu0 %v2079, 30
    %v2097 = vpop.permute.xlu0 %2096
    %2098 = vrot.lane.b32.xlu0 %v2080, 30
    %v2099 = vpop.permute.xlu0 %2098
    %2100 = vrot.lane.b32.xlu0 %v2081, 30
    %v2101 = vpop.permute.xlu0 %2100
    %2102 = vrot.lane.b32.xlu0 %v2082, 30
    %v2103 = vpop.permute.xlu0 %2102
    %2104 = vrot.lane.b32.xlu0 %v2083, 30
    %v2105 = vpop.permute.xlu0 %2104
    %2106 = vrot.lane.b32.xlu0 %v2084, 30
    %v2107 = vpop.permute.xlu0 %2106
    %2108 = vrot.lane.b32.xlu0 %v2085, 30
    %v2109 = vpop.permute.xlu0 %2108
    %2110 = vrot.lane.b32.xlu0 %v2086, 30
    %v2111 = vpop.permute.xlu0 %2110
    %2112 = vrot.lane.b32.xlu0 %v2087, 30
    %v2113 = vpop.permute.xlu0 %2112
    %2114 = vrot.lane.b32.xlu0 %v2088, 30
    %v2115 = vpop.permute.xlu0 %2114
    %2116 = vrot.lane.b32.xlu0 %v2089, 30
    %v2117 = vpop.permute.xlu0 %2116
    %2118 = vrot.lane.b32.xlu0 %v2090, 30
    %v2119 = vpop.permute.xlu0 %2118
    %2120 = vrot.lane.b32.xlu0 %v2091, 30
    %v2121 = vpop.permute.xlu0 %2120
    %2122 = vrot.lane.b32.xlu0 %v2092, 30
    %v2123 = vpop.permute.xlu0 %2122
    %2124 = vrot.lane.b32.xlu0 %v2093, 30
    %v2125 = vpop.permute.xlu0 %2124
    %vm2126 = vcmask 244736
    %v2127 = vsel %vm2126, %v2095, %v2097
    %v2128 = vsel %vm2126, %v2097, %v2099
    %v2129 = vsel %vm2126, %v2099, %v2101
    %v2130 = vsel %vm2126, %v2101, %v2103
    %v2131 = vsel %vm2126, %v2103, %v2105
    %v2132 = vsel %vm2126, %v2105, %v2107
    %v2133 = vsel %vm2126, %v2107, %v2109
    %v2134 = vsel %vm2126, %v2109, %v2111
    %v2135 = vsel %vm2126, %v2111, %v2113
    %v2136 = vsel %vm2126, %v2113, %v2115
    %v2137 = vsel %vm2126, %v2115, %v2117
    %v2138 = vsel %vm2126, %v2117, %v2119
    %v2139 = vsel %vm2126, %v2119, %v2121
    %v2140 = vsel %vm2126, %v2121, %v2123
    %v2141 = vsel %vm2126, %v2123, %v2125
    %2157 = vst [vmem:[#allocation2 + $0x2d0] sm:$0x38] %v2127
    %2158 = vst [vmem:[#allocation2 + $0x2d8] sm:$0x38] %v2128
    %2159 = vst [vmem:[#allocation2 + $0x2e0] sm:$0x38] %v2129
    %2160 = vst [vmem:[#allocation2 + $0x2e8] sm:$0x38] %v2130
    %2161 = vst [vmem:[#allocation2 + $0x2f0] sm:$0x38] %v2131
    %2162 = vst [vmem:[#allocation2 + $0x2f8] sm:$0x38] %v2132
    %2163 = vst [vmem:[#allocation2 + $0x300] sm:$0x38] %v2133
    %2164 = vst [vmem:[#allocation2 + $0x308] sm:$0x38] %v2134
    %2165 = vst [vmem:[#allocation2 + $0x310] sm:$0x38] %v2135
    %2166 = vst [vmem:[#allocation2 + $0x318] sm:$0x38] %v2136
    %2167 = vst [vmem:[#allocation2 + $0x320] sm:$0x38] %v2137
    %2168 = vst [vmem:[#allocation2 + $0x328] sm:$0x38] %v2138
    %2169 = vst [vmem:[#allocation2 + $0x330] sm:$0x38] %v2139
    %2170 = vst [vmem:[#allocation2 + $0x338] sm:$0x38] %v2140
    %2171 = vst.msk [vmem:[#allocation2 + $0x340] sm:$0x38] %vm242, %v2141
    %2172 = vst [vmem:[#allocation1] ss:$2 sm:$0xff] %v54
    %s2173 = scalar_lea.vmem [#allocation1], 16
    %2174 = vst [vmem:[%s2173] ss:$2 sm:$0xff] %v55
    %s2175 = scalar_lea.vmem [#allocation1], 32
    %2176 = vst [vmem:[%s2175] ss:$2 sm:$0xff] %v56
    %s2177 = scalar_lea.vmem [#allocation1], 48
    %2178 = vst [vmem:[%s2177] ss:$2 sm:$0xff] %v57
    %v2179 = vld.sshfl [vmem:[#allocation1] sm:$0xff pattern:$0x75316420]
    %v2180 = vld.sshfl [vmem:[#allocation1 + $0x8] sm:$0xff pattern:$0x75316420]
    %v2181 = vld.sshfl [vmem:[#allocation1 + $0x10] sm:$0xff pattern:$0x75316420]
    %v2182 = vld.sshfl [vmem:[#allocation1 + $0x18] sm:$0xff pattern:$0x75316420]
    %v2183 = vld.sshfl [vmem:[#allocation1 + $0x20] sm:$0xff pattern:$0x75316420]
    %v2184 = vld.sshfl [vmem:[#allocation1 + $0x28] sm:$0xff pattern:$0x75316420]
    %v2185 = vld.sshfl [vmem:[#allocation1 + $0x30] sm:$0xff pattern:$0x75316420]
    %v2186 = vld.sshfl [vmem:[#allocation1 + $0x38] sm:$0xff pattern:$0x75316420]
    %2187 = vst [vmem:[#allocation1] ss:$2 sm:$0xff] %v58
    %2188 = vst [vmem:[%s2173] ss:$2 sm:$0xff] %v59
    %2189 = vst [vmem:[%s2175] ss:$2 sm:$0xff] %v60
    %2190 = vst [vmem:[%s2177] ss:$2 sm:$0xff] %v61
    %v2191 = vld.sshfl [vmem:[#allocation1] sm:$0xff pattern:$0x75316420]
    %v2192 = vld.sshfl [vmem:[#allocation1 + $0x8] sm:$0xff pattern:$0x75316420]
    %v2193 = vld.sshfl [vmem:[#allocation1 + $0x10] sm:$0xff pattern:$0x75316420]
    %v2194 = vld.sshfl [vmem:[#allocation1 + $0x18] sm:$0xff pattern:$0x75316420]
    %v2195 = vld.sshfl [vmem:[#allocation1 + $0x20] sm:$0xff pattern:$0x75316420]
    %v2196 = vld.sshfl [vmem:[#allocation1 + $0x28] sm:$0xff pattern:$0x75316420]
    %v2197 = vld.sshfl [vmem:[#allocation1 + $0x30] sm:$0xff pattern:$0x75316420]
    %v2198 = vld.sshfl [vmem:[#allocation1 + $0x38] sm:$0xff pattern:$0x75316420]
    %v2199 = vrot.slane %v2179, 2
    %v2200 = vrot.slane %v2180, 2
    %v2201 = vrot.slane %v2181, 2
    %v2202 = vrot.slane %v2182, 2
    %v2203 = vrot.slane %v2183, 2
    %v2204 = vrot.slane %v2184, 2
    %v2205 = vrot.slane %v2185, 2
    %v2206 = vrot.slane %v2186, 2
    %v2207 = vrot.slane %v2191, 2
    %v2208 = vrot.slane %v2192, 2
    %v2209 = vrot.slane %v2193, 2
    %v2210 = vrot.slane %v2194, 2
    %v2211 = vrot.slane %v2195, 2
    %v2212 = vrot.slane %v2196, 2
    %v2213 = vrot.slane %v2197, 2
    %v2214 = vrot.slane %v2198, 2
    %2215 = vrot.lane.b32.xlu0 %v2199, 29
    %v2216 = vpop.permute.xlu0 %2215
    %2217 = vrot.lane.b32.xlu0 %v2200, 29
    %v2218 = vpop.permute.xlu0 %2217
    %2219 = vrot.lane.b32.xlu0 %v2201, 29
    %v2220 = vpop.permute.xlu0 %2219
    %2221 = vrot.lane.b32.xlu0 %v2202, 29
    %v2222 = vpop.permute.xlu0 %2221
    %2223 = vrot.lane.b32.xlu0 %v2203, 29
    %v2224 = vpop.permute.xlu0 %2223
    %2225 = vrot.lane.b32.xlu0 %v2204, 29
    %v2226 = vpop.permute.xlu0 %2225
    %2227 = vrot.lane.b32.xlu0 %v2205, 29
    %v2228 = vpop.permute.xlu0 %2227
    %2229 = vrot.lane.b32.xlu0 %v2206, 29
    %v2230 = vpop.permute.xlu0 %2229
    %2231 = vrot.lane.b32.xlu0 %v2207, 29
    %v2232 = vpop.permute.xlu0 %2231
    %2233 = vrot.lane.b32.xlu0 %v2208, 29
    %v2234 = vpop.permute.xlu0 %2233
    %2235 = vrot.lane.b32.xlu0 %v2209, 29
    %v2236 = vpop.permute.xlu0 %2235
    %2237 = vrot.lane.b32.xlu0 %v2210, 29
    %v2238 = vpop.permute.xlu0 %2237
    %2239 = vrot.lane.b32.xlu0 %v2211, 29
    %v2240 = vpop.permute.xlu0 %2239
    %2241 = vrot.lane.b32.xlu0 %v2212, 29
    %v2242 = vpop.permute.xlu0 %2241
    %2243 = vrot.lane.b32.xlu0 %v2213, 29
    %v2244 = vpop.permute.xlu0 %2243
    %2245 = vrot.lane.b32.xlu0 %v2214, 29
    %v2246 = vpop.permute.xlu0 %2245
    %vm2247 = vcmask 236544
    %v2248 = vsel %vm2247, %v2216, %v2218
    %v2249 = vsel %vm2247, %v2218, %v2220
    %v2250 = vsel %vm2247, %v2220, %v2222
    %v2251 = vsel %vm2247, %v2222, %v2224
    %v2252 = vsel %vm2247, %v2224, %v2226
    %v2253 = vsel %vm2247, %v2226, %v2228
    %v2254 = vsel %vm2247, %v2228, %v2230
    %v2255 = vsel %vm2247, %v2230, %v2232
    %v2256 = vsel %vm2247, %v2232, %v2234
    %v2257 = vsel %vm2247, %v2234, %v2236
    %v2258 = vsel %vm2247, %v2236, %v2238
    %v2259 = vsel %vm2247, %v2238, %v2240
    %v2260 = vsel %vm2247, %v2240, %v2242
    %v2261 = vsel %vm2247, %v2242, %v2244
    %v2262 = vsel %vm2247, %v2244, %v2246
    %2278 = vst [vmem:[#allocation2 + $0x2d0] sm:$0xc0] %v2248
    %2279 = vst [vmem:[#allocation2 + $0x2d8] sm:$0xc0] %v2249
    %2280 = vst [vmem:[#allocation2 + $0x2e0] sm:$0xc0] %v2250
    %2281 = vst [vmem:[#allocation2 + $0x2e8] sm:$0xc0] %v2251
    %2282 = vst [vmem:[#allocation2 + $0x2f0] sm:$0xc0] %v2252
    %2283 = vst [vmem:[#allocation2 + $0x2f8] sm:$0xc0] %v2253
    %2284 = vst [vmem:[#allocation2 + $0x300] sm:$0xc0] %v2254
    %2285 = vst [vmem:[#allocation2 + $0x308] sm:$0xc0] %v2255
    %2286 = vst [vmem:[#allocation2 + $0x310] sm:$0xc0] %v2256
    %2287 = vst [vmem:[#allocation2 + $0x318] sm:$0xc0] %v2257
    %2288 = vst [vmem:[#allocation2 + $0x320] sm:$0xc0] %v2258
    %2289 = vst [vmem:[#allocation2 + $0x328] sm:$0xc0] %v2259
    %2290 = vst [vmem:[#allocation2 + $0x330] sm:$0xc0] %v2260
    %2291 = vst [vmem:[#allocation2 + $0x338] sm:$0xc0] %v2261
    %2292 = vst.msk [vmem:[#allocation2 + $0x340] sm:$0xc0] %vm359, %v2262
    %2293 = vst [vmem:[#allocation2 + $0x348] sm:$0x1] %v2248
    %2294 = vst [vmem:[#allocation2 + $0x350] sm:$0x1] %v2249
    %2295 = vst [vmem:[#allocation2 + $0x358] sm:$0x1] %v2250
    %2296 = vst [vmem:[#allocation2 + $0x360] sm:$0x1] %v2251
    %2297 = vst [vmem:[#allocation2 + $0x368] sm:$0x1] %v2252
    %2298 = vst [vmem:[#allocation2 + $0x370] sm:$0x1] %v2253
    %2299 = vst [vmem:[#allocation2 + $0x378] sm:$0x1] %v2254
    %2300 = vst [vmem:[#allocation2 + $0x380] sm:$0x1] %v2255
    %2301 = vst [vmem:[#allocation2 + $0x388] sm:$0x1] %v2256
    %2302 = vst [vmem:[#allocation2 + $0x390] sm:$0x1] %v2257
    %2303 = vst [vmem:[#allocation2 + $0x398] sm:$0x1] %v2258
    %2304 = vst [vmem:[#allocation2 + $0x3a0] sm:$0x1] %v2259
    %2305 = vst [vmem:[#allocation2 + $0x3a8] sm:$0x1] %v2260
    %2306 = vst [vmem:[#allocation2 + $0x3b0] sm:$0x1] %v2261
    %2307 = vst.msk [vmem:[#allocation2 + $0x3b8] sm:$0x1] %vm375, %v2262
    %2308 = vst [vmem:[#allocation1] ss:$2 sm:$0xff] %v54
    %s2309 = scalar_lea.vmem [#allocation1], 16
    %2310 = vst [vmem:[%s2309] ss:$2 sm:$0xff] %v55
    %s2311 = scalar_lea.vmem [#allocation1], 32
    %2312 = vst [vmem:[%s2311] ss:$2 sm:$0xff] %v56
    %s2313 = scalar_lea.vmem [#allocation1], 48
    %2314 = vst [vmem:[%s2313] ss:$2 sm:$0xff] %v57
    %v2315 = vld.sshfl [vmem:[#allocation1] sm:$0xff pattern:$0x75316420]
    %v2316 = vld.sshfl [vmem:[#allocation1 + $0x8] sm:$0xff pattern:$0x75316420]
    %v2317 = vld.sshfl [vmem:[#allocation1 + $0x10] sm:$0xff pattern:$0x75316420]
    %v2318 = vld.sshfl [vmem:[#allocation1 + $0x18] sm:$0xff pattern:$0x75316420]
    %v2319 = vld.sshfl [vmem:[#allocation1 + $0x20] sm:$0xff pattern:$0x75316420]
    %v2320 = vld.sshfl [vmem:[#allocation1 + $0x28] sm:$0xff pattern:$0x75316420]
    %v2321 = vld.sshfl [vmem:[#allocation1 + $0x30] sm:$0xff pattern:$0x75316420]
    %v2322 = vld.sshfl [vmem:[#allocation1 + $0x38] sm:$0xff pattern:$0x75316420]
    %2323 = vst [vmem:[#allocation1] ss:$2 sm:$0xff] %v58
    %2324 = vst [vmem:[%s2309] ss:$2 sm:$0xff] %v59
    %2325 = vst [vmem:[%s2311] ss:$2 sm:$0xff] %v60
    %2326 = vst [vmem:[%s2313] ss:$2 sm:$0xff] %v61
    %v2327 = vld.sshfl [vmem:[#allocation1] sm:$0xff pattern:$0x75316420]
    %v2328 = vld.sshfl [vmem:[#allocation1 + $0x8] sm:$0xff pattern:$0x75316420]
    %v2329 = vld.sshfl [vmem:[#allocation1 + $0x10] sm:$0xff pattern:$0x75316420]
    %v2330 = vld.sshfl [vmem:[#allocation1 + $0x18] sm:$0xff pattern:$0x75316420]
    %v2331 = vld.sshfl [vmem:[#allocation1 + $0x20] sm:$0xff pattern:$0x75316420]
    %v2332 = vld.sshfl [vmem:[#allocation1 + $0x28] sm:$0xff pattern:$0x75316420]
    %v2333 = vld.sshfl [vmem:[#allocation1 + $0x30] sm:$0xff pattern:$0x75316420]
    %v2334 = vld.sshfl [vmem:[#allocation1 + $0x38] sm:$0xff pattern:$0x75316420]
    %v2335 = vrot.slane %v2315, 7
    %v2336 = vrot.slane %v2316, 7
    %v2337 = vrot.slane %v2317, 7
    %v2338 = vrot.slane %v2318, 7
    %v2339 = vrot.slane %v2319, 7
    %v2340 = vrot.slane %v2320, 7
    %v2341 = vrot.slane %v2321, 7
    %v2342 = vrot.slane %v2322, 7
    %v2343 = vrot.slane %v2327, 7
    %v2344 = vrot.slane %v2328, 7
    %v2345 = vrot.slane %v2329, 7
    %v2346 = vrot.slane %v2330, 7
    %v2347 = vrot.slane %v2331, 7
    %v2348 = vrot.slane %v2332, 7
    %v2349 = vrot.slane %v2333, 7
    %v2350 = vrot.slane %v2334, 7
    %2351 = vrot.lane.b32.xlu0 %v2335, 28
    %v2352 = vpop.permute.xlu0 %2351
    %2353 = vrot.lane.b32.xlu0 %v2336, 28
    %v2354 = vpop.permute.xlu0 %2353
    %2355 = vrot.lane.b32.xlu0 %v2337, 28
    %v2356 = vpop.permute.xlu0 %2355
    %2357 = vrot.lane.b32.xlu0 %v2338, 28
    %v2358 = vpop.permute.xlu0 %2357
    %2359 = vrot.lane.b32.xlu0 %v2339, 28
    %v2360 = vpop.permute.xlu0 %2359
    %2361 = vrot.lane.b32.xlu0 %v2340, 28
    %v2362 = vpop.permute.xlu0 %2361
    %2363 = vrot.lane.b32.xlu0 %v2341, 28
    %v2364 = vpop.permute.xlu0 %2363
    %2365 = vrot.lane.b32.xlu0 %v2342, 28
    %v2366 = vpop.permute.xlu0 %2365
    %2367 = vrot.lane.b32.xlu0 %v2343, 28
    %v2368 = vpop.permute.xlu0 %2367
    %2369 = vrot.lane.b32.xlu0 %v2344, 28
    %v2370 = vpop.permute.xlu0 %2369
    %2371 = vrot.lane.b32.xlu0 %v2345, 28
    %v2372 = vpop.permute.xlu0 %2371
    %2373 = vrot.lane.b32.xlu0 %v2346, 28
    %v2374 = vpop.permute.xlu0 %2373
    %2375 = vrot.lane.b32.xlu0 %v2347, 28
    %v2376 = vpop.permute.xlu0 %2375
    %2377 = vrot.lane.b32.xlu0 %v2348, 28
    %v2378 = vpop.permute.xlu0 %2377
    %2379 = vrot.lane.b32.xlu0 %v2349, 28
    %v2380 = vpop.permute.xlu0 %2379
    %2381 = vrot.lane.b32.xlu0 %v2350, 28
    %v2382 = vpop.permute.xlu0 %2381
    %vm2383 = vcmask 228352
    %v2384 = vsel %vm2383, %v2352, %v2354
    %v2385 = vsel %vm2383, %v2354, %v2356
    %v2386 = vsel %vm2383, %v2356, %v2358
    %v2387 = vsel %vm2383, %v2358, %v2360
    %v2388 = vsel %vm2383, %v2360, %v2362
    %v2389 = vsel %vm2383, %v2362, %v2364
    %v2390 = vsel %vm2383, %v2364, %v2366
    %v2391 = vsel %vm2383, %v2366, %v2368
    %v2392 = vsel %vm2383, %v2368, %v2370
    %v2393 = vsel %vm2383, %v2370, %v2372
    %v2394 = vsel %vm2383, %v2372, %v2374
    %v2395 = vsel %vm2383, %v2374, %v2376
    %v2396 = vsel %vm2383, %v2376, %v2378
    %v2397 = vsel %vm2383, %v2378, %v2380
    %v2398 = vsel %vm2383, %v2380, %v2382
    %2414 = vst [vmem:[#allocation2 + $0x348] sm:$0xe] %v2384
    %2415 = vst [vmem:[#allocation2 + $0x350] sm:$0xe] %v2385
    %2416 = vst [vmem:[#allocation2 + $0x358] sm:$0xe] %v2386
    %2417 = vst [vmem:[#allocation2 + $0x360] sm:$0xe] %v2387
    %2418 = vst [vmem:[#allocation2 + $0x368] sm:$0xe] %v2388
    %2419 = vst [vmem:[#allocation2 + $0x370] sm:$0xe] %v2389
    %2420 = vst [vmem:[#allocation2 + $0x378] sm:$0xe] %v2390
    %2421 = vst [vmem:[#allocation2 + $0x380] sm:$0xe] %v2391
    %2422 = vst [vmem:[#allocation2 + $0x388] sm:$0xe] %v2392
    %2423 = vst [vmem:[#allocation2 + $0x390] sm:$0xe] %v2393
    %2424 = vst [vmem:[#allocation2 + $0x398] sm:$0xe] %v2394
    %2425 = vst [vmem:[#allocation2 + $0x3a0] sm:$0xe] %v2395
    %2426 = vst [vmem:[#allocation2 + $0x3a8] sm:$0xe] %v2396
    %2427 = vst [vmem:[#allocation2 + $0x3b0] sm:$0xe] %v2397
    %2428 = vst.msk [vmem:[#allocation2 + $0x3b8] sm:$0xe] %vm492, %v2398
    %s2429 = scalar_lea.vmem [#allocation1], 1
    %2430 = vst [vmem:[%s2429] ss:$2 sm:$0xff] %v54
    %s2431 = scalar_lea.vmem [#allocation1], 17
    %2432 = vst [vmem:[%s2431] ss:$2 sm:$0xff] %v55
    %s2433 = scalar_lea.vmem [#allocation1], 33
    %2434 = vst [vmem:[%s2433] ss:$2 sm:$0xff] %v56
    %s2435 = scalar_lea.vmem [#allocation1], 49
    %2436 = vst [vmem:[%s2435] ss:$2 sm:$0xff] %v57
    %v2437 = vld.sshfl [vmem:[#allocation1 + $0x8] sm:$0xff pattern:$0x75316420]
    %v2438 = vld.sshfl [vmem:[#allocation1 + $0x10] sm:$0xff pattern:$0x75316420]
    %v2439 = vld.sshfl [vmem:[#allocation1 + $0x18] sm:$0xff pattern:$0x75316420]
    %v2440 = vld.sshfl [vmem:[#allocation1 + $0x20] sm:$0xff pattern:$0x75316420]
    %v2441 = vld.sshfl [vmem:[#allocation1 + $0x28] sm:$0xff pattern:$0x75316420]
    %v2442 = vld.sshfl [vmem:[#allocation1 + $0x30] sm:$0xff pattern:$0x75316420]
    %v2443 = vld.sshfl [vmem:[#allocation1 + $0x38] sm:$0xff pattern:$0x75316420]
    %2444 = vst [vmem:[%s2429] ss:$2 sm:$0xff] %v58
    %2445 = vst [vmem:[%s2431] ss:$2 sm:$0xff] %v59
    %2446 = vst [vmem:[%s2433] ss:$2 sm:$0xff] %v60
    %2447 = vst [vmem:[%s2435] ss:$2 sm:$0xff] %v61
    %v2448 = vld.sshfl [vmem:[#allocation1] sm:$0xff pattern:$0x75316420]
    %v2449 = vld.sshfl [vmem:[#allocation1 + $0x8] sm:$0xff pattern:$0x75316420]
    %v2450 = vld.sshfl [vmem:[#allocation1 + $0x10] sm:$0xff pattern:$0x75316420]
    %v2451 = vld.sshfl [vmem:[#allocation1 + $0x18] sm:$0xff pattern:$0x75316420]
    %v2452 = vld.sshfl [vmem:[#allocation1 + $0x20] sm:$0xff pattern:$0x75316420]
    %v2453 = vld.sshfl [vmem:[#allocation1 + $0x28] sm:$0xff pattern:$0x75316420]
    %v2454 = vld.sshfl [vmem:[#allocation1 + $0x30] sm:$0xff pattern:$0x75316420]
    %v2455 = vld.sshfl [vmem:[#allocation1 + $0x38] sm:$0xff pattern:$0x75316420]
    %2471 = vst [vmem:[#allocation2 + $0x348] sm:$0x70] %v2437
    %2472 = vst [vmem:[#allocation2 + $0x350] sm:$0x70] %v2438
    %2473 = vst [vmem:[#allocation2 + $0x358] sm:$0x70] %v2439
    %2474 = vst [vmem:[#allocation2 + $0x360] sm:$0x70] %v2440
    %2475 = vst [vmem:[#allocation2 + $0x368] sm:$0x70] %v2441
    %2476 = vst [vmem:[#allocation2 + $0x370] sm:$0x70] %v2442
    %2477 = vst [vmem:[#allocation2 + $0x378] sm:$0x70] %v2443
    %2478 = vst [vmem:[#allocation2 + $0x380] sm:$0x70] %v2448
    %2479 = vst [vmem:[#allocation2 + $0x388] sm:$0x70] %v2449
    %2480 = vst [vmem:[#allocation2 + $0x390] sm:$0x70] %v2450
    %2481 = vst [vmem:[#allocation2 + $0x398] sm:$0x70] %v2451
    %2482 = vst [vmem:[#allocation2 + $0x3a0] sm:$0x70] %v2452
    %2483 = vst [vmem:[#allocation2 + $0x3a8] sm:$0x70] %v2453
    %2484 = vst [vmem:[#allocation2 + $0x3b0] sm:$0x70] %v2454
    %2485 = vst.msk [vmem:[#allocation2 + $0x3b8] sm:$0x70] %vm595, %v2455
    %2486 = vst [vmem:[#allocation1] ss:$2 sm:$0xff] %v54
    %s2487 = scalar_lea.vmem [#allocation1], 16
    %2488 = vst [vmem:[%s2487] ss:$2 sm:$0xff] %v55
    %s2489 = scalar_lea.vmem [#allocation1], 32
    %2490 = vst [vmem:[%s2489] ss:$2 sm:$0xff] %v56
    %s2491 = scalar_lea.vmem [#allocation1], 48
    %2492 = vst [vmem:[%s2491] ss:$2 sm:$0xff] %v57
    %v2493 = vld.sshfl [vmem:[#allocation1 + $0x8] sm:$0xff pattern:$0x75316420]
    %v2494 = vld.sshfl [vmem:[#allocation1 + $0x10] sm:$0xff pattern:$0x75316420]
    %v2495 = vld.sshfl [vmem:[#allocation1 + $0x18] sm:$0xff pattern:$0x75316420]
    %v2496 = vld.sshfl [vmem:[#allocation1 + $0x20] sm:$0xff pattern:$0x75316420]
    %v2497 = vld.sshfl [vmem:[#allocation1 + $0x28] sm:$0xff pattern:$0x75316420]
    %v2498 = vld.sshfl [vmem:[#allocation1 + $0x30] sm:$0xff pattern:$0x75316420]
    %v2499 = vld.sshfl [vmem:[#allocation1 + $0x38] sm:$0xff pattern:$0x75316420]
    %2500 = vst [vmem:[#allocation1] ss:$2 sm:$0xff] %v58
    %2501 = vst [vmem:[%s2487] ss:$2 sm:$0xff] %v59
    %2502 = vst [vmem:[%s2489] ss:$2 sm:$0xff] %v60
    %2503 = vst [vmem:[%s2491] ss:$2 sm:$0xff] %v61
    %v2504 = vld.sshfl [vmem:[#allocation1] sm:$0xff pattern:$0x75316420]
    %v2505 = vld.sshfl [vmem:[#allocation1 + $0x8] sm:$0xff pattern:$0x75316420]
    %v2506 = vld.sshfl [vmem:[#allocation1 + $0x10] sm:$0xff pattern:$0x75316420]
    %v2507 = vld.sshfl [vmem:[#allocation1 + $0x18] sm:$0xff pattern:$0x75316420]
    %v2508 = vld.sshfl [vmem:[#allocation1 + $0x20] sm:$0xff pattern:$0x75316420]
    %v2509 = vld.sshfl [vmem:[#allocation1 + $0x28] sm:$0xff pattern:$0x75316420]
    %v2510 = vld.sshfl [vmem:[#allocation1 + $0x30] sm:$0xff pattern:$0x75316420]
    %v2511 = vld.sshfl [vmem:[#allocation1 + $0x38] sm:$0xff pattern:$0x75316420]
    %v2512 = vrot.slane %v2493, 1
    %v2513 = vrot.slane %v2494, 1
    %v2514 = vrot.slane %v2495, 1
    %v2515 = vrot.slane %v2496, 1
    %v2516 = vrot.slane %v2497, 1
    %v2517 = vrot.slane %v2498, 1
    %v2518 = vrot.slane %v2499, 1
    %v2519 = vrot.slane %v2504, 1
    %v2520 = vrot.slane %v2505, 1
    %v2521 = vrot.slane %v2506, 1
    %v2522 = vrot.slane %v2507, 1
    %v2523 = vrot.slane %v2508, 1
    %v2524 = vrot.slane %v2509, 1
    %v2525 = vrot.slane %v2510, 1
    %v2526 = vrot.slane %v2511, 1
    %2527 = vrot.lane.b32.xlu0 %v2512, 127
    %v2528 = vpop.permute.xlu0 %2527
    %2529 = vrot.lane.b32.xlu0 %v2513, 127
    %v2530 = vpop.permute.xlu0 %2529
    %2531 = vrot.lane.b32.xlu0 %v2514, 127
    %v2532 = vpop.permute.xlu0 %2531
    %2533 = vrot.lane.b32.xlu0 %v2515, 127
    %v2534 = vpop.permute.xlu0 %2533
    %2535 = vrot.lane.b32.xlu0 %v2516, 127
    %v2536 = vpop.permute.xlu0 %2535
    %2537 = vrot.lane.b32.xlu0 %v2517, 127
    %v2538 = vpop.permute.xlu0 %2537
    %2539 = vrot.lane.b32.xlu0 %v2518, 127
    %v2540 = vpop.permute.xlu0 %2539
    %2541 = vrot.lane.b32.xlu0 %v2519, 127
    %v2542 = vpop.permute.xlu0 %2541
    %2543 = vrot.lane.b32.xlu0 %v2520, 127
    %v2544 = vpop.permute.xlu0 %2543
    %2545 = vrot.lane.b32.xlu0 %v2521, 127
    %v2546 = vpop.permute.xlu0 %2545
    %2547 = vrot.lane.b32.xlu0 %v2522, 127
    %v2548 = vpop.permute.xlu0 %2547
    %2549 = vrot.lane.b32.xlu0 %v2523, 127
    %v2550 = vpop.permute.xlu0 %2549
    %2551 = vrot.lane.b32.xlu0 %v2524, 127
    %v2552 = vpop.permute.xlu0 %2551
    %2553 = vrot.lane.b32.xlu0 %v2525, 127
    %v2554 = vpop.permute.xlu0 %2553
    %2555 = vrot.lane.b32.xlu0 %v2526, 127
    %v2556 = vpop.permute.xlu0 %2555
    %v2557 = vsel %vm198, %v2528, %v2530
    %v2558 = vsel %vm198, %v2530, %v2532
    %v2559 = vsel %vm198, %v2532, %v2534
    %v2560 = vsel %vm198, %v2534, %v2536
    %v2561 = vsel %vm198, %v2536, %v2538
    %v2562 = vsel %vm198, %v2538, %v2540
    %v2563 = vsel %vm198, %v2540, %v2542
    %v2564 = vsel %vm198, %v2542, %v2544
    %v2565 = vsel %vm198, %v2544, %v2546
    %v2566 = vsel %vm198, %v2546, %v2548
    %v2567 = vsel %vm198, %v2548, %v2550
    %v2568 = vsel %vm198, %v2550, %v2552
    %v2569 = vsel %vm198, %v2552, %v2554
    %v2570 = vsel %vm198, %v2554, %v2556
    %2586 = vst [vmem:[#allocation2 + $0x348] sm:$0x80] %v2557
    %2587 = vst [vmem:[#allocation2 + $0x350] sm:$0x80] %v2558
    %2588 = vst [vmem:[#allocation2 + $0x358] sm:$0x80] %v2559
    %2589 = vst [vmem:[#allocation2 + $0x360] sm:$0x80] %v2560
    %2590 = vst [vmem:[#allocation2 + $0x368] sm:$0x80] %v2561
    %2591 = vst [vmem:[#allocation2 + $0x370] sm:$0x80] %v2562
    %2592 = vst [vmem:[#allocation2 + $0x378] sm:$0x80] %v2563
    %2593 = vst [vmem:[#allocation2 + $0x380] sm:$0x80] %v2564
    %2594 = vst [vmem:[#allocation2 + $0x388] sm:$0x80] %v2565
    %2595 = vst [vmem:[#allocation2 + $0x390] sm:$0x80] %v2566
    %2596 = vst [vmem:[#allocation2 + $0x398] sm:$0x80] %v2567
    %2597 = vst [vmem:[#allocation2 + $0x3a0] sm:$0x80] %v2568
    %2598 = vst [vmem:[#allocation2 + $0x3a8] sm:$0x80] %v2569
    %2599 = vst [vmem:[#allocation2 + $0x3b0] sm:$0x80] %v2570
    %2600 = vst.msk [vmem:[#allocation2 + $0x3b8] sm:$0x80] %vm717, %v2556
    %2601 = vst [vmem:[#allocation2 + $0x3c0] sm:$0x3] %v2557
    %2602 = vst [vmem:[#allocation2 + $0x3c8] sm:$0x3] %v2558
    %2603 = vst [vmem:[#allocation2 + $0x3d0] sm:$0x3] %v2559
    %2604 = vst [vmem:[#allocation2 + $0x3d8] sm:$0x3] %v2560
    %2605 = vst [vmem:[#allocation2 + $0x3e0] sm:$0x3] %v2561
    %2606 = vst [vmem:[#allocation2 + $0x3e8] sm:$0x3] %v2562
    %2607 = vst [vmem:[#allocation2 + $0x3f0] sm:$0x3] %v2563
    %2608 = vst [vmem:[#allocation2 + $0x3f8] sm:$0x3] %v2564
    %2609 = vst [vmem:[#allocation2 + $0x400] sm:$0x3] %v2565
    %2610 = vst [vmem:[#allocation2 + $0x408] sm:$0x3] %v2566
    %2611 = vst [vmem:[#allocation2 + $0x410] sm:$0x3] %v2567
    %2612 = vst [vmem:[#allocation2 + $0x418] sm:$0x3] %v2568
    %2613 = vst [vmem:[#allocation2 + $0x420] sm:$0x3] %v2569
    %2614 = vst [vmem:[#allocation2 + $0x428] sm:$0x3] %v2570
    %2615 = vst.msk [vmem:[#allocation2 + $0x430] sm:$0x3] %vm733, %v2556
    %2616 = vst [vmem:[#allocation1] ss:$2 sm:$0xff] %v54
    %s2617 = scalar_lea.vmem [#allocation1], 16
    %2618 = vst [vmem:[%s2617] ss:$2 sm:$0xff] %v55
    %s2619 = scalar_lea.vmem [#allocation1], 32
    %2620 = vst [vmem:[%s2619] ss:$2 sm:$0xff] %v56
    %s2621 = scalar_lea.vmem [#allocation1], 48
    %2622 = vst [vmem:[%s2621] ss:$2 sm:$0xff] %v57
    %v2623 = vld.sshfl [vmem:[#allocation1 + $0x8] sm:$0xff pattern:$0x75316420]
    %v2624 = vld.sshfl [vmem:[#allocation1 + $0x10] sm:$0xff pattern:$0x75316420]
    %v2625 = vld.sshfl [vmem:[#allocation1 + $0x18] sm:$0xff pattern:$0x75316420]
    %v2626 = vld.sshfl [vmem:[#allocation1 + $0x20] sm:$0xff pattern:$0x75316420]
    %v2627 = vld.sshfl [vmem:[#allocation1 + $0x28] sm:$0xff pattern:$0x75316420]
    %v2628 = vld.sshfl [vmem:[#allocation1 + $0x30] sm:$0xff pattern:$0x75316420]
    %v2629 = vld.sshfl [vmem:[#allocation1 + $0x38] sm:$0xff pattern:$0x75316420]
    %2630 = vst [vmem:[#allocation1] ss:$2 sm:$0xff] %v58
    %2631 = vst [vmem:[%s2617] ss:$2 sm:$0xff] %v59
    %2632 = vst [vmem:[%s2619] ss:$2 sm:$0xff] %v60
    %2633 = vst [vmem:[%s2621] ss:$2 sm:$0xff] %v61
    %v2634 = vld.sshfl [vmem:[#allocation1] sm:$0xff pattern:$0x75316420]
    %v2635 = vld.sshfl [vmem:[#allocation1 + $0x8] sm:$0xff pattern:$0x75316420]
    %v2636 = vld.sshfl [vmem:[#allocation1 + $0x10] sm:$0xff pattern:$0x75316420]
    %v2637 = vld.sshfl [vmem:[#allocation1 + $0x18] sm:$0xff pattern:$0x75316420]
    %v2638 = vld.sshfl [vmem:[#allocation1 + $0x20] sm:$0xff pattern:$0x75316420]
    %v2639 = vld.sshfl [vmem:[#allocation1 + $0x28] sm:$0xff pattern:$0x75316420]
    %v2640 = vld.sshfl [vmem:[#allocation1 + $0x30] sm:$0xff pattern:$0x75316420]
    %v2641 = vld.sshfl [vmem:[#allocation1 + $0x38] sm:$0xff pattern:$0x75316420]
    %v2642 = vrot.slane %v2623, 6
    %v2643 = vrot.slane %v2624, 6
    %v2644 = vrot.slane %v2625, 6
    %v2645 = vrot.slane %v2626, 6
    %v2646 = vrot.slane %v2627, 6
    %v2647 = vrot.slane %v2628, 6
    %v2648 = vrot.slane %v2629, 6
    %v2649 = vrot.slane %v2634, 6
    %v2650 = vrot.slane %v2635, 6
    %v2651 = vrot.slane %v2636, 6
    %v2652 = vrot.slane %v2637, 6
    %v2653 = vrot.slane %v2638, 6
    %v2654 = vrot.slane %v2639, 6
    %v2655 = vrot.slane %v2640, 6
    %v2656 = vrot.slane %v2641, 6
    %2657 = vrot.lane.b32.xlu0 %v2642, 126
    %v2658 = vpop.permute.xlu0 %2657
    %2659 = vrot.lane.b32.xlu0 %v2643, 126
    %v2660 = vpop.permute.xlu0 %2659
    %2661 = vrot.lane.b32.xlu0 %v2644, 126
    %v2662 = vpop.permute.xlu0 %2661
    %2663 = vrot.lane.b32.xlu0 %v2645, 126
    %v2664 = vpop.permute.xlu0 %2663
    %2665 = vrot.lane.b32.xlu0 %v2646, 126
    %v2666 = vpop.permute.xlu0 %2665
    %2667 = vrot.lane.b32.xlu0 %v2647, 126
    %v2668 = vpop.permute.xlu0 %2667
    %2669 = vrot.lane.b32.xlu0 %v2648, 126
    %v2670 = vpop.permute.xlu0 %2669
    %2671 = vrot.lane.b32.xlu0 %v2649, 126
    %v2672 = vpop.permute.xlu0 %2671
    %2673 = vrot.lane.b32.xlu0 %v2650, 126
    %v2674 = vpop.permute.xlu0 %2673
    %2675 = vrot.lane.b32.xlu0 %v2651, 126
    %v2676 = vpop.permute.xlu0 %2675
    %2677 = vrot.lane.b32.xlu0 %v2652, 126
    %v2678 = vpop.permute.xlu0 %2677
    %2679 = vrot.lane.b32.xlu0 %v2653, 126
    %v2680 = vpop.permute.xlu0 %2679
    %2681 = vrot.lane.b32.xlu0 %v2654, 126
    %v2682 = vpop.permute.xlu0 %2681
    %2683 = vrot.lane.b32.xlu0 %v2655, 126
    %v2684 = vpop.permute.xlu0 %2683
    %2685 = vrot.lane.b32.xlu0 %v2656, 126
    %v2686 = vpop.permute.xlu0 %2685
    %v2687 = vsel %vm315, %v2658, %v2660
    %v2688 = vsel %vm315, %v2660, %v2662
    %v2689 = vsel %vm315, %v2662, %v2664
    %v2690 = vsel %vm315, %v2664, %v2666
    %v2691 = vsel %vm315, %v2666, %v2668
    %v2692 = vsel %vm315, %v2668, %v2670
    %v2693 = vsel %vm315, %v2670, %v2672
    %v2694 = vsel %vm315, %v2672, %v2674
    %v2695 = vsel %vm315, %v2674, %v2676
    %v2696 = vsel %vm315, %v2676, %v2678
    %v2697 = vsel %vm315, %v2678, %v2680
    %v2698 = vsel %vm315, %v2680, %v2682
    %v2699 = vsel %vm315, %v2682, %v2684
    %v2700 = vsel %vm315, %v2684, %v2686
    %2716 = vst [vmem:[#allocation2 + $0x3c0] sm:$0x1c] %v2687
    %2717 = vst [vmem:[#allocation2 + $0x3c8] sm:$0x1c] %v2688
    %2718 = vst [vmem:[#allocation2 + $0x3d0] sm:$0x1c] %v2689
    %2719 = vst [vmem:[#allocation2 + $0x3d8] sm:$0x1c] %v2690
    %2720 = vst [vmem:[#allocation2 + $0x3e0] sm:$0x1c] %v2691
    %2721 = vst [vmem:[#allocation2 + $0x3e8] sm:$0x1c] %v2692
    %2722 = vst [vmem:[#allocation2 + $0x3f0] sm:$0x1c] %v2693
    %2723 = vst [vmem:[#allocation2 + $0x3f8] sm:$0x1c] %v2694
    %2724 = vst [vmem:[#allocation2 + $0x400] sm:$0x1c] %v2695
    %2725 = vst [vmem:[#allocation2 + $0x408] sm:$0x1c] %v2696
    %2726 = vst [vmem:[#allocation2 + $0x410] sm:$0x1c] %v2697
    %2727 = vst [vmem:[#allocation2 + $0x418] sm:$0x1c] %v2698
    %2728 = vst [vmem:[#allocation2 + $0x420] sm:$0x1c] %v2699
    %2729 = vst [vmem:[#allocation2 + $0x428] sm:$0x1c] %v2700
    %2730 = vst.msk [vmem:[#allocation2 + $0x430] sm:$0x1c] %vm855, %v2686
    %2731 = vst [vmem:[#allocation1] ss:$2 sm:$0xff] %v54
    %s2732 = scalar_lea.vmem [#allocation1], 16
    %2733 = vst [vmem:[%s2732] ss:$2 sm:$0xff] %v55
    %s2734 = scalar_lea.vmem [#allocation1], 32
    %2735 = vst [vmem:[%s2734] ss:$2 sm:$0xff] %v56
    %s2736 = scalar_lea.vmem [#allocation1], 48
    %2737 = vst [vmem:[%s2736] ss:$2 sm:$0xff] %v57
    %v2738 = vld.sshfl [vmem:[#allocation1 + $0x8] sm:$0xff pattern:$0x75316420]
    %v2739 = vld.sshfl [vmem:[#allocation1 + $0x10] sm:$0xff pattern:$0x75316420]
    %v2740 = vld.sshfl [vmem:[#allocation1 + $0x18] sm:$0xff pattern:$0x75316420]
    %v2741 = vld.sshfl [vmem:[#allocation1 + $0x20] sm:$0xff pattern:$0x75316420]
    %v2742 = vld.sshfl [vmem:[#allocation1 + $0x28] sm:$0xff pattern:$0x75316420]
    %v2743 = vld.sshfl [vmem:[#allocation1 + $0x30] sm:$0xff pattern:$0x75316420]
    %v2744 = vld.sshfl [vmem:[#allocation1 + $0x38] sm:$0xff pattern:$0x75316420]
    %2745 = vst [vmem:[#allocation1] ss:$2 sm:$0xff] %v58
    %2746 = vst [vmem:[%s2732] ss:$2 sm:$0xff] %v59
    %2747 = vst [vmem:[%s2734] ss:$2 sm:$0xff] %v60
    %2748 = vst [vmem:[%s2736] ss:$2 sm:$0xff] %v61
    %v2749 = vld.sshfl [vmem:[#allocation1] sm:$0xff pattern:$0x75316420]
    %v2750 = vld.sshfl [vmem:[#allocation1 + $0x8] sm:$0xff pattern:$0x75316420]
    %v2751 = vld.sshfl [vmem:[#allocation1 + $0x10] sm:$0xff pattern:$0x75316420]
    %v2752 = vld.sshfl [vmem:[#allocation1 + $0x18] sm:$0xff pattern:$0x75316420]
    %v2753 = vld.sshfl [vmem:[#allocation1 + $0x20] sm:$0xff pattern:$0x75316420]
    %v2754 = vld.sshfl [vmem:[#allocation1 + $0x28] sm:$0xff pattern:$0x75316420]
    %v2755 = vld.sshfl [vmem:[#allocation1 + $0x30] sm:$0xff pattern:$0x75316420]
    %v2756 = vld.sshfl [vmem:[#allocation1 + $0x38] sm:$0xff pattern:$0x75316420]
    %v2757 = vrot.slane %v2738, 3
    %v2758 = vrot.slane %v2739, 3
    %v2759 = vrot.slane %v2740, 3
    %v2760 = vrot.slane %v2741, 3
    %v2761 = vrot.slane %v2742, 3
    %v2762 = vrot.slane %v2743, 3
    %v2763 = vrot.slane %v2744, 3
    %v2764 = vrot.slane %v2749, 3
    %v2765 = vrot.slane %v2750, 3
    %v2766 = vrot.slane %v2751, 3
    %v2767 = vrot.slane %v2752, 3
    %v2768 = vrot.slane %v2753, 3
    %v2769 = vrot.slane %v2754, 3
    %v2770 = vrot.slane %v2755, 3
    %v2771 = vrot.slane %v2756, 3
    %2772 = vrot.lane.b32.xlu0 %v2757, 125
    %v2773 = vpop.permute.xlu0 %2772
    %2774 = vrot.lane.b32.xlu0 %v2758, 125
    %v2775 = vpop.permute.xlu0 %2774
    %2776 = vrot.lane.b32.xlu0 %v2759, 125
    %v2777 = vpop.permute.xlu0 %2776
    %2778 = vrot.lane.b32.xlu0 %v2760, 125
    %v2779 = vpop.permute.xlu0 %2778
    %2780 = vrot.lane.b32.xlu0 %v2761, 125
    %v2781 = vpop.permute.xlu0 %2780
    %2782 = vrot.lane.b32.xlu0 %v2762, 125
    %v2783 = vpop.permute.xlu0 %2782
    %2784 = vrot.lane.b32.xlu0 %v2763, 125
    %v2785 = vpop.permute.xlu0 %2784
    %2786 = vrot.lane.b32.xlu0 %v2764, 125
    %v2787 = vpop.permute.xlu0 %2786
    %2788 = vrot.lane.b32.xlu0 %v2765, 125
    %v2789 = vpop.permute.xlu0 %2788
    %2790 = vrot.lane.b32.xlu0 %v2766, 125
    %v2791 = vpop.permute.xlu0 %2790
    %2792 = vrot.lane.b32.xlu0 %v2767, 125
    %v2793 = vpop.permute.xlu0 %2792
    %2794 = vrot.lane.b32.xlu0 %v2768, 125
    %v2795 = vpop.permute.xlu0 %2794
    %2796 = vrot.lane.b32.xlu0 %v2769, 125
    %v2797 = vpop.permute.xlu0 %2796
    %2798 = vrot.lane.b32.xlu0 %v2770, 125
    %v2799 = vpop.permute.xlu0 %2798
    %2800 = vrot.lane.b32.xlu0 %v2771, 125
    %v2801 = vpop.permute.xlu0 %2800
    %v2802 = vsel %vm448, %v2773, %v2775
    %v2803 = vsel %vm448, %v2775, %v2777
    %v2804 = vsel %vm448, %v2777, %v2779
    %v2805 = vsel %vm448, %v2779, %v2781
    %v2806 = vsel %vm448, %v2781, %v2783
    %v2807 = vsel %vm448, %v2783, %v2785
    %v2808 = vsel %vm448, %v2785, %v2787
    %v2809 = vsel %vm448, %v2787, %v2789
    %v2810 = vsel %vm448, %v2789, %v2791
    %v2811 = vsel %vm448, %v2791, %v2793
    %v2812 = vsel %vm448, %v2793, %v2795
    %v2813 = vsel %vm448, %v2795, %v2797
    %v2814 = vsel %vm448, %v2797, %v2799
    %v2815 = vsel %vm448, %v2799, %v2801
    %2831 = vst [vmem:[#allocation2 + $0x3c0] sm:$0xe0] %v2802
    %2832 = vst [vmem:[#allocation2 + $0x3c8] sm:$0xe0] %v2803
    %2833 = vst [vmem:[#allocation2 + $0x3d0] sm:$0xe0] %v2804
    %2834 = vst [vmem:[#allocation2 + $0x3d8] sm:$0xe0] %v2805
    %2835 = vst [vmem:[#allocation2 + $0x3e0] sm:$0xe0] %v2806
    %2836 = vst [vmem:[#allocation2 + $0x3e8] sm:$0xe0] %v2807
    %2837 = vst [vmem:[#allocation2 + $0x3f0] sm:$0xe0] %v2808
    %2838 = vst [vmem:[#allocation2 + $0x3f8] sm:$0xe0] %v2809
    %2839 = vst [vmem:[#allocation2 + $0x400] sm:$0xe0] %v2810
    %2840 = vst [vmem:[#allocation2 + $0x408] sm:$0xe0] %v2811
    %2841 = vst [vmem:[#allocation2 + $0x410] sm:$0xe0] %v2812
    %2842 = vst [vmem:[#allocation2 + $0x418] sm:$0xe0] %v2813
    %2843 = vst [vmem:[#allocation2 + $0x420] sm:$0xe0] %v2814
    %2844 = vst [vmem:[#allocation2 + $0x428] sm:$0xe0] %v2815
    %2845 = vst.msk [vmem:[#allocation2 + $0x430] sm:$0xe0] %vm977, %v2801
    %2846 = vst [vmem:[#allocation1] ss:$2 sm:$0xff] %v54
    %s2847 = scalar_lea.vmem [#allocation1], 16
    %2848 = vst [vmem:[%s2847] ss:$2 sm:$0xff] %v55
    %s2849 = scalar_lea.vmem [#allocation1], 32
    %2850 = vst [vmem:[%s2849] ss:$2 sm:$0xff] %v56
    %s2851 = scalar_lea.vmem [#allocation1], 48
    %2852 = vst [vmem:[%s2851] ss:$2 sm:$0xff] %v57
    %v2853 = vld.sshfl [vmem:[#allocation1 + $0x8] sm:$0xff pattern:$0x75316420]
    %v2854 = vld.sshfl [vmem:[#allocation1 + $0x10] sm:$0xff pattern:$0x75316420]
    %v2855 = vld.sshfl [vmem:[#allocation1 + $0x18] sm:$0xff pattern:$0x75316420]
    %v2856 = vld.sshfl [vmem:[#allocation1 + $0x20] sm:$0xff pattern:$0x75316420]
    %v2857 = vld.sshfl [vmem:[#allocation1 + $0x28] sm:$0xff pattern:$0x75316420]
    %v2858 = vld.sshfl [vmem:[#allocation1 + $0x30] sm:$0xff pattern:$0x75316420]
    %v2859 = vld.sshfl [vmem:[#allocation1 + $0x38] sm:$0xff pattern:$0x75316420]
    %2860 = vst [vmem:[#allocation1] ss:$2 sm:$0xff] %v58
    %2861 = vst [vmem:[%s2847] ss:$2 sm:$0xff] %v59
    %2862 = vst [vmem:[%s2849] ss:$2 sm:$0xff] %v60
    %2863 = vst [vmem:[%s2851] ss:$2 sm:$0xff] %v61
    %v2864 = vld.sshfl [vmem:[#allocation1] sm:$0xff pattern:$0x75316420]
    %v2865 = vld.sshfl [vmem:[#allocation1 + $0x8] sm:$0xff pattern:$0x75316420]
    %v2866 = vld.sshfl [vmem:[#allocation1 + $0x10] sm:$0xff pattern:$0x75316420]
    %v2867 = vld.sshfl [vmem:[#allocation1 + $0x18] sm:$0xff pattern:$0x75316420]
    %v2868 = vld.sshfl [vmem:[#allocation1 + $0x20] sm:$0xff pattern:$0x75316420]
    %v2869 = vld.sshfl [vmem:[#allocation1 + $0x28] sm:$0xff pattern:$0x75316420]
    %v2870 = vld.sshfl [vmem:[#allocation1 + $0x30] sm:$0xff pattern:$0x75316420]
    %v2871 = vld.sshfl [vmem:[#allocation1 + $0x38] sm:$0xff pattern:$0x75316420]
    %2872 = vrot.lane.b32.xlu0 %v2853, 124
    %v2873 = vpop.permute.xlu0 %2872
    %2874 = vrot.lane.b32.xlu0 %v2854, 124
    %v2875 = vpop.permute.xlu0 %2874
    %2876 = vrot.lane.b32.xlu0 %v2855, 124
    %v2877 = vpop.permute.xlu0 %2876
    %2878 = vrot.lane.b32.xlu0 %v2856, 124
    %v2879 = vpop.permute.xlu0 %2878
    %2880 = vrot.lane.b32.xlu0 %v2857, 124
    %v2881 = vpop.permute.xlu0 %2880
    %2882 = vrot.lane.b32.xlu0 %v2858, 124
    %v2883 = vpop.permute.xlu0 %2882
    %2884 = vrot.lane.b32.xlu0 %v2859, 124
    %v2885 = vpop.permute.xlu0 %2884
    %2886 = vrot.lane.b32.xlu0 %v2864, 124
    %v2887 = vpop.permute.xlu0 %2886
    %2888 = vrot.lane.b32.xlu0 %v2865, 124
    %v2889 = vpop.permute.xlu0 %2888
    %2890 = vrot.lane.b32.xlu0 %v2866, 124
    %v2891 = vpop.permute.xlu0 %2890
    %2892 = vrot.lane.b32.xlu0 %v2867, 124
    %v2893 = vpop.permute.xlu0 %2892
    %2894 = vrot.lane.b32.xlu0 %v2868, 124
    %v2895 = vpop.permute.xlu0 %2894
    %2896 = vrot.lane.b32.xlu0 %v2869, 124
    %v2897 = vpop.permute.xlu0 %2896
    %2898 = vrot.lane.b32.xlu0 %v2870, 124
    %v2899 = vpop.permute.xlu0 %2898
    %2900 = vrot.lane.b32.xlu0 %v2871, 124
    %v2901 = vpop.permute.xlu0 %2900
    %v2902 = vsel %vm551, %v2873, %v2875
    %v2903 = vsel %vm551, %v2875, %v2877
    %v2904 = vsel %vm551, %v2877, %v2879
    %v2905 = vsel %vm551, %v2879, %v2881
    %v2906 = vsel %vm551, %v2881, %v2883
    %v2907 = vsel %vm551, %v2883, %v2885
    %v2908 = vsel %vm551, %v2885, %v2887
    %v2909 = vsel %vm551, %v2887, %v2889
    %v2910 = vsel %vm551, %v2889, %v2891
    %v2911 = vsel %vm551, %v2891, %v2893
    %v2912 = vsel %vm551, %v2893, %v2895
    %v2913 = vsel %vm551, %v2895, %v2897
    %v2914 = vsel %vm551, %v2897, %v2899
    %v2915 = vsel %vm551, %v2899, %v2901
    %2931 = vst [vmem:[#allocation2 + $0x438] sm:$0x7] %v2902
    %2932 = vst [vmem:[#allocation2 + $0x440] sm:$0x7] %v2903
    %2933 = vst [vmem:[#allocation2 + $0x448] sm:$0x7] %v2904
    %2934 = vst [vmem:[#allocation2 + $0x450] sm:$0x7] %v2905
    %2935 = vst [vmem:[#allocation2 + $0x458] sm:$0x7] %v2906
    %2936 = vst [vmem:[#allocation2 + $0x460] sm:$0x7] %v2907
    %2937 = vst [vmem:[#allocation2 + $0x468] sm:$0x7] %v2908
    %2938 = vst [vmem:[#allocation2 + $0x470] sm:$0x7] %v2909
    %2939 = vst [vmem:[#allocation2 + $0x478] sm:$0x7] %v2910
    %2940 = vst [vmem:[#allocation2 + $0x480] sm:$0x7] %v2911
    %2941 = vst [vmem:[#allocation2 + $0x488] sm:$0x7] %v2912
    %2942 = vst [vmem:[#allocation2 + $0x490] sm:$0x7] %v2913
    %2943 = vst [vmem:[#allocation2 + $0x498] sm:$0x7] %v2914
    %2944 = vst [vmem:[#allocation2 + $0x4a0] sm:$0x7] %v2915
    %2945 = vst.msk [vmem:[#allocation2 + $0x4a8] sm:$0x7] %vm125, %v2901
    %v2946 = vld [vmem:[%s1] sm:$0x3f]
    %v2947 = vld [vmem:[#allocation2] sm:$0xff]
    %v2948 = vld [vmem:[#allocation2 + $0x8] sm:$0xff]
    %v2949 = vld [vmem:[#allocation2 + $0x10] sm:$0xff]
    %v2950 = vld [vmem:[#allocation2 + $0x18] sm:$0xff]
    %v2951 = vld [vmem:[#allocation2 + $0x20] sm:$0xff]
    %v2952 = vld [vmem:[#allocation2 + $0x28] sm:$0xff]
    %v2953 = vld [vmem:[#allocation2 + $0x30] sm:$0xff]
    %v2954 = vld [vmem:[#allocation2 + $0x38] sm:$0xff]
    %v2955 = vld [vmem:[#allocation2 + $0x40] sm:$0xff]
    %v2956 = vld [vmem:[#allocation2 + $0x48] sm:$0xff]
    %v2957 = vld [vmem:[#allocation2 + $0x50] sm:$0xff]
    %v2958 = vld [vmem:[#allocation2 + $0x58] sm:$0xff]
    %v2959 = vld [vmem:[#allocation2 + $0x60] sm:$0xff]
    %v2960 = vld [vmem:[#allocation2 + $0x68] sm:$0xff]
    %v2961 = vld [vmem:[#allocation2 + $0x70] sm:$0xff]
    %v2962 = vld [vmem:[#allocation2 + $0x78] sm:$0xff]
    %v2963 = vld [vmem:[#allocation2 + $0x80] sm:$0xff]
    %v2964 = vld [vmem:[#allocation2 + $0x88] sm:$0xff]
    %v2965 = vld [vmem:[#allocation2 + $0x90] sm:$0xff]
    %v2966 = vld [vmem:[#allocation2 + $0x98] sm:$0xff]
    %v2967 = vld [vmem:[#allocation2 + $0xa0] sm:$0xff]
    %v2968 = vld [vmem:[#allocation2 + $0xa8] sm:$0xff]
    %v2969 = vld [vmem:[#allocation2 + $0xb0] sm:$0xff]
    %v2970 = vld [vmem:[#allocation2 + $0xb8] sm:$0xff]
    %v2971 = vld [vmem:[#allocation2 + $0xc0] sm:$0xff]
    %v2972 = vld [vmem:[#allocation2 + $0xc8] sm:$0xff]
    %v2973 = vld [vmem:[#allocation2 + $0xd0] sm:$0xff]
    %v2974 = vld [vmem:[#allocation2 + $0xd8] sm:$0xff]
    %v2975 = vld [vmem:[#allocation2 + $0xe0] sm:$0xff]
    %v2976 = vld [vmem:[#allocation2 + $0xe8] sm:$0xff]
    %v2977 = vld [vmem:[#allocation2 + $0xf0] sm:$0xff]
    %v2978 = vld [vmem:[#allocation2 + $0xf8] sm:$0xff]
    %v2979 = vld [vmem:[#allocation2 + $0x100] sm:$0xff]
    %v2980 = vld [vmem:[#allocation2 + $0x108] sm:$0xff]
    %v2981 = vld [vmem:[#allocation2 + $0x110] sm:$0xff]
    %v2982 = vld [vmem:[#allocation2 + $0x118] sm:$0xff]
    %v2983 = vld [vmem:[#allocation2 + $0x120] sm:$0xff]
    %v2984 = vld [vmem:[#allocation2 + $0x128] sm:$0xff]
    %v2985 = vld [vmem:[#allocation2 + $0x130] sm:$0xff]
    %v2986 = vld [vmem:[#allocation2 + $0x138] sm:$0xff]
    %v2987 = vld [vmem:[#allocation2 + $0x140] sm:$0xff]
    %v2988 = vld [vmem:[#allocation2 + $0x148] sm:$0xff]
    %v2989 = vld [vmem:[#allocation2 + $0x150] sm:$0xff]
    %v2990 = vld [vmem:[#allocation2 + $0x158] sm:$0xff]
    %v2991 = vld [vmem:[#allocation2 + $0x160] sm:$0xff]
    %v2992 = vld [vmem:[#allocation2 + $0x168] sm:$0xff]
    %v2993 = vld [vmem:[#allocation2 + $0x170] sm:$0xff]
    %v2994 = vld [vmem:[#allocation2 + $0x178] sm:$0xff]
    %v2995 = vld [vmem:[#allocation2 + $0x180] sm:$0xff]
    %v2996 = vld [vmem:[#allocation2 + $0x188] sm:$0xff]
    %v2997 = vld [vmem:[#allocation2 + $0x190] sm:$0xff]
    %v2998 = vld [vmem:[#allocation2 + $0x198] sm:$0xff]
    %v2999 = vld [vmem:[#allocation2 + $0x1a0] sm:$0xff]
    %v3000 = vld [vmem:[#allocation2 + $0x1a8] sm:$0xff]
    %v3001 = vld [vmem:[#allocation2 + $0x1b0] sm:$0xff]
    %v3002 = vld [vmem:[#allocation2 + $0x1b8] sm:$0xff]
    %v3003 = vld [vmem:[#allocation2 + $0x1c0] sm:$0xff]
    %v3004 = vld [vmem:[#allocation2 + $0x1c8] sm:$0xff]
    %v3005 = vld [vmem:[#allocation2 + $0x1d0] sm:$0xff]
    %v3006 = vld [vmem:[#allocation2 + $0x1d8] sm:$0xff]
    %v3007 = vld [vmem:[#allocation2 + $0x1e0] sm:$0xff]
    %v3008 = vld [vmem:[#allocation2 + $0x1e8] sm:$0xff]
    %v3009 = vld [vmem:[#allocation2 + $0x1f0] sm:$0xff]
    %v3010 = vld [vmem:[#allocation2 + $0x1f8] sm:$0xff]
    %v3011 = vld [vmem:[#allocation2 + $0x200] sm:$0xff]
    %v3012 = vld [vmem:[#allocation2 + $0x208] sm:$0xff]
    %v3013 = vld [vmem:[#allocation2 + $0x210] sm:$0xff]
    %v3014 = vld [vmem:[#allocation2 + $0x218] sm:$0xff]
    %v3015 = vld [vmem:[#allocation2 + $0x220] sm:$0xff]
    %v3016 = vld [vmem:[#allocation2 + $0x228] sm:$0xff]
    %v3017 = vld [vmem:[#allocation2 + $0x230] sm:$0xff]
    %v3018 = vld [vmem:[#allocation2 + $0x238] sm:$0xff]
    %v3019 = vld [vmem:[#allocation2 + $0x240] sm:$0xff]
    %v3020 = vld [vmem:[#allocation2 + $0x248] sm:$0xff]
    %v3021 = vld [vmem:[#allocation2 + $0x250] sm:$0xff]
    %v3022 = vld [vmem:[#allocation2 + $0x258] sm:$0xff]
    %v3023 = vld [vmem:[#allocation2 + $0x260] sm:$0xff]
    %v3024 = vld [vmem:[#allocation2 + $0x268] sm:$0xff]
    %v3025 = vld [vmem:[#allocation2 + $0x270] sm:$0xff]
    %v3026 = vld [vmem:[#allocation2 + $0x278] sm:$0xff]
    %v3027 = vld [vmem:[#allocation2 + $0x280] sm:$0xff]
    %v3028 = vld [vmem:[#allocation2 + $0x288] sm:$0xff]
    %v3029 = vld [vmem:[#allocation2 + $0x290] sm:$0xff]
    %v3030 = vld [vmem:[#allocation2 + $0x298] sm:$0xff]
    %v3031 = vld [vmem:[#allocation2 + $0x2a0] sm:$0xff]
    %v3032 = vld [vmem:[#allocation2 + $0x2a8] sm:$0xff]
    %v3033 = vld [vmem:[#allocation2 + $0x2b0] sm:$0xff]
    %v3034 = vld [vmem:[#allocation2 + $0x2b8] sm:$0xff]
    %v3035 = vld [vmem:[#allocation2 + $0x2c0] sm:$0xff]
    %v3036 = vld [vmem:[#allocation2 + $0x2c8] sm:$0xff]
    %v3037 = vld [vmem:[#allocation2 + $0x2d0] sm:$0xff]
    %v3038 = vld [vmem:[#allocation2 + $0x2d8] sm:$0xff]
    %v3039 = vld [vmem:[#allocation2 + $0x2e0] sm:$0xff]
    %v3040 = vld [vmem:[#allocation2 + $0x2e8] sm:$0xff]
    %v3041 = vld [vmem:[#allocation2 + $0x2f0] sm:$0xff]
    %v3042 = vld [vmem:[#allocation2 + $0x2f8] sm:$0xff]
    %v3043 = vld [vmem:[#allocation2 + $0x300] sm:$0xff]
    %v3044 = vld [vmem:[#allocation2 + $0x308] sm:$0xff]
    %v3045 = vld [vmem:[#allocation2 + $0x310] sm:$0xff]
    %v3046 = vld [vmem:[#allocation2 + $0x318] sm:$0xff]
    %v3047 = vld [vmem:[#allocation2 + $0x320] sm:$0xff]
    %v3048 = vld [vmem:[#allocation2 + $0x328] sm:$0xff]
    %v3049 = vld [vmem:[#allocation2 + $0x330] sm:$0xff]
    %v3050 = vld [vmem:[#allocation2 + $0x338] sm:$0xff]
    %v3051 = vld [vmem:[#allocation2 + $0x340] sm:$0xff]
    %v3052 = vld [vmem:[#allocation2 + $0x348] sm:$0xff]
    %v3053 = vld [vmem:[#allocation2 + $0x350] sm:$0xff]
    %v3054 = vld [vmem:[#allocation2 + $0x358] sm:$0xff]
    %v3055 = vld [vmem:[#allocation2 + $0x360] sm:$0xff]
    %v3056 = vld [vmem:[#allocation2 + $0x368] sm:$0xff]
    %v3057 = vld [vmem:[#allocation2 + $0x370] sm:$0xff]
    %v3058 = vld [vmem:[#allocation2 + $0x378] sm:$0xff]
    %v3059 = vld [vmem:[#allocation2 + $0x380] sm:$0xff]
    %v3060 = vld [vmem:[#allocation2 + $0x388] sm:$0xff]
    %v3061 = vld [vmem:[#allocation2 + $0x390] sm:$0xff]
    %v3062 = vld [vmem:[#allocation2 + $0x398] sm:$0xff]
    %v3063 = vld [vmem:[#allocation2 + $0x3a0] sm:$0xff]
    %v3064 = vld [vmem:[#allocation2 + $0x3a8] sm:$0xff]
    %v3065 = vld [vmem:[#allocation2 + $0x3b0] sm:$0xff]
    %v3066 = vld [vmem:[#allocation2 + $0x3b8] sm:$0xff]
    %v3067 = vld [vmem:[#allocation2 + $0x3c0] sm:$0xff]
    %v3068 = vld [vmem:[#allocation2 + $0x3c8] sm:$0xff]
    %v3069 = vld [vmem:[#allocation2 + $0x3d0] sm:$0xff]
    %v3070 = vld [vmem:[#allocation2 + $0x3d8] sm:$0xff]
    %v3071 = vld [vmem:[#allocation2 + $0x3e0] sm:$0xff]
    %v3072 = vld [vmem:[#allocation2 + $0x3e8] sm:$0xff]
    %v3073 = vld [vmem:[#allocation2 + $0x3f0] sm:$0xff]
    %v3074 = vld [vmem:[#allocation2 + $0x3f8] sm:$0xff]
    %v3075 = vld [vmem:[#allocation2 + $0x400] sm:$0xff]
    %v3076 = vld [vmem:[#allocation2 + $0x408] sm:$0xff]
    %v3077 = vld [vmem:[#allocation2 + $0x410] sm:$0xff]
    %v3078 = vld [vmem:[#allocation2 + $0x418] sm:$0xff]
    %v3079 = vld [vmem:[#allocation2 + $0x420] sm:$0xff]
    %v3080 = vld [vmem:[#allocation2 + $0x428] sm:$0xff]
    %v3081 = vld [vmem:[#allocation2 + $0x430] sm:$0xff]
    %v3082 = vld [vmem:[#allocation2 + $0x438] sm:$0x7]
    %v3083 = vld [vmem:[#allocation2 + $0x440] sm:$0x7]
    %v3084 = vld [vmem:[#allocation2 + $0x448] sm:$0x7]
    %v3085 = vld [vmem:[#allocation2 + $0x450] sm:$0x7]
    %v3086 = vld [vmem:[#allocation2 + $0x458] sm:$0x7]
    %v3087 = vld [vmem:[#allocation2 + $0x460] sm:$0x7]
    %v3088 = vld [vmem:[#allocation2 + $0x468] sm:$0x7]
    %v3089 = vld [vmem:[#allocation2 + $0x470] sm:$0x7]
    %v3090 = vld [vmem:[#allocation2 + $0x478] sm:$0x7]
    %v3091 = vld [vmem:[#allocation2 + $0x480] sm:$0x7]
    %v3092 = vld [vmem:[#allocation2 + $0x488] sm:$0x7]
    %v3093 = vld [vmem:[#allocation2 + $0x490] sm:$0x7]
    %v3094 = vld [vmem:[#allocation2 + $0x498] sm:$0x7]
    %v3095 = vld [vmem:[#allocation2 + $0x4a0] sm:$0x7]
    %v3096 = vld [vmem:[#allocation2 + $0x4a8] sm:$0x7]
    %vm3097 = vcmask 613376
    %v3099 = vsel %vm3097, %v2946, 0
    %vm3101 = vcmask 1042432
    %v3103 = vsel %vm3101, %v3082, 0
    %v3106 = vsel %vm3101, %v3083, 0
    %v3109 = vsel %vm3101, %v3084, 0
    %v3112 = vsel %vm3101, %v3085, 0
    %v3115 = vsel %vm3101, %v3086, 0
    %v3118 = vsel %vm3101, %v3087, 0
    %v3121 = vsel %vm3101, %v3088, 0
    %v3124 = vsel %vm3101, %v3089, 0
    %v3127 = vsel %vm3101, %v3090, 0
    %v3130 = vsel %vm3101, %v3091, 0
    %v3133 = vsel %vm3101, %v3092, 0
    %v3136 = vsel %vm3101, %v3093, 0
    %v3139 = vsel %vm3101, %v3094, 0
    %v3142 = vsel %vm3101, %v3095, 0
    %v3145 = vsel %vm3101, %v3096, 0
    %3147 = vmatpush.msra.mxu0 0.0
    %3148 = vmatpush.msra.mxu0 0.0
    %3149 = vmatpush.msra.mxu0 0.0
    %3150 = vmatpush.msra.mxu0 0.0
    %3151 = vmatpush.msra.mxu0 0.0
    %3152 = vmatpush.msra.mxu0 0.0
    %3153 = vmatpush.msra.mxu0 %v3103
    %3154 = vmatpush.msra.mxu0 %v3067
    %3155 = vmatpush.msra.mxu0 %v3052
    %3156 = vmatpush.msra.mxu0 %v3037
    %3157 = vmatpush.msra.mxu0 %v3022
    %3158 = vmatpush.msra.mxu0 %v3007
    %3159 = vmatpush.msra.mxu0 %v2992
    %3160 = vmatpush.msra.mxu0 %v2977
    %3161 = vmatpush.msra.mxu0 %v2962
    %3162 = vmatpush.msra.mxu0 %v2947
    %3163 = vmatmul.f32.gmra.mxu0 %v3099
    %v3164 = vpop.f32.mrf.mxu0
    %v3165 = vadd.f32 0.0, %v3164
    %3166 = vdwg.mxu0
    %3167 = vmatpush.msra.mxu0 0.0
    %3168 = vmatpush.msra.mxu0 0.0
    %3169 = vmatpush.msra.mxu0 0.0
    %3170 = vmatpush.msra.mxu0 0.0
    %3171 = vmatpush.msra.mxu0 0.0
    %3172 = vmatpush.msra.mxu0 0.0
    %3173 = vmatpush.msra.mxu0 %v3106
    %3174 = vmatpush.msra.mxu0 %v3068
    %3175 = vmatpush.msra.mxu0 %v3053
    %3176 = vmatpush.msra.mxu0 %v3038
    %3177 = vmatpush.msra.mxu0 %v3023
    %3178 = vmatpush.msra.mxu0 %v3008
    %3179 = vmatpush.msra.mxu0 %v2993
    %3180 = vmatpush.msra.mxu0 %v2978
    %3181 = vmatpush.msra.mxu0 %v2963
    %3182 = vmatpush.msra.mxu0 %v2948
    %3183 = vmatmul.f32.gmra.mxu0 %v3099
    %v3184 = vpop.f32.mrf.mxu0
    %v3185 = vadd.f32 0.0, %v3184
    %3186 = vdwg.mxu0
    %3187 = vmatpush.msra.mxu0 0.0
    %3188 = vmatpush.msra.mxu0 0.0
    %3189 = vmatpush.msra.mxu0 0.0
    %3190 = vmatpush.msra.mxu0 0.0
    %3191 = vmatpush.msra.mxu0 0.0
    %3192 = vmatpush.msra.mxu0 0.0
    %3193 = vmatpush.msra.mxu0 %v3109
    %3194 = vmatpush.msra.mxu0 %v3069
    %3195 = vmatpush.msra.mxu0 %v3054
    %3196 = vmatpush.msra.mxu0 %v3039
    %3197 = vmatpush.msra.mxu0 %v3024
    %3198 = vmatpush.msra.mxu0 %v3009
    %3199 = vmatpush.msra.mxu0 %v2994
    %3200 = vmatpush.msra.mxu0 %v2979
    %3201 = vmatpush.msra.mxu0 %v2964
    %3202 = vmatpush.msra.mxu0 %v2949
    %3203 = vmatmul.f32.gmra.mxu0 %v3099
    %v3204 = vpop.f32.mrf.mxu0
    %v3205 = vadd.f32 0.0, %v3204
    %3206 = vdwg.mxu0
    %3207 = vmatpush.msra.mxu0 0.0
    %3208 = vmatpush.msra.mxu0 0.0
    %3209 = vmatpush.msra.mxu0 0.0
    %3210 = vmatpush.msra.mxu0 0.0
    %3211 = vmatpush.msra.mxu0 0.0
    %3212 = vmatpush.msra.mxu0 0.0
    %3213 = vmatpush.msra.mxu0 %v3112
    %3214 = vmatpush.msra.mxu0 %v3070
    %3215 = vmatpush.msra.mxu0 %v3055
    %3216 = vmatpush.msra.mxu0 %v3040
    %3217 = vmatpush.msra.mxu0 %v3025
    %3218 = vmatpush.msra.mxu0 %v3010
    %3219 = vmatpush.msra.mxu0 %v2995
    %3220 = vmatpush.msra.mxu0 %v2980
    %3221 = vmatpush.msra.mxu0 %v2965
    %3222 = vmatpush.msra.mxu0 %v2950
    %3223 = vmatmul.f32.gmra.mxu0 %v3099
    %v3224 = vpop.f32.mrf.mxu0
    %v3225 = vadd.f32 0.0, %v3224
    %3226 = vdwg.mxu0
    %3227 = vmatpush.msra.mxu0 0.0
    %3228 = vmatpush.msra.mxu0 0.0
    %3229 = vmatpush.msra.mxu0 0.0
    %3230 = vmatpush.msra.mxu0 0.0
    %3231 = vmatpush.msra.mxu0 0.0
    %3232 = vmatpush.msra.mxu0 0.0
    %3233 = vmatpush.msra.mxu0 %v3115
    %3234 = vmatpush.msra.mxu0 %v3071
    %3235 = vmatpush.msra.mxu0 %v3056
    %3236 = vmatpush.msra.mxu0 %v3041
    %3237 = vmatpush.msra.mxu0 %v3026
    %3238 = vmatpush.msra.mxu0 %v3011
    %3239 = vmatpush.msra.mxu0 %v2996
    %3240 = vmatpush.msra.mxu0 %v2981
    %3241 = vmatpush.msra.mxu0 %v2966
    %3242 = vmatpush.msra.mxu0 %v2951
    %3243 = vmatmul.f32.gmra.mxu0 %v3099
    %v3244 = vpop.f32.mrf.mxu0
    %v3245 = vadd.f32 0.0, %v3244
    %3246 = vdwg.mxu0
    %3247 = vmatpush.msra.mxu0 0.0
    %3248 = vmatpush.msra.mxu0 0.0
    %3249 = vmatpush.msra.mxu0 0.0
    %3250 = vmatpush.msra.mxu0 0.0
    %3251 = vmatpush.msra.mxu0 0.0
    %3252 = vmatpush.msra.mxu0 0.0
    %3253 = vmatpush.msra.mxu0 %v3118
    %3254 = vmatpush.msra.mxu0 %v3072
    %3255 = vmatpush.msra.mxu0 %v3057
    %3256 = vmatpush.msra.mxu0 %v3042
    %3257 = vmatpush.msra.mxu0 %v3027
    %3258 = vmatpush.msra.mxu0 %v3012
    %3259 = vmatpush.msra.mxu0 %v2997
    %3260 = vmatpush.msra.mxu0 %v2982
    %3261 = vmatpush.msra.mxu0 %v2967
    %3262 = vmatpush.msra.mxu0 %v2952
    %3263 = vmatmul.f32.gmra.mxu0 %v3099
    %v3264 = vpop.f32.mrf.mxu0
    %v3265 = vadd.f32 0.0, %v3264
    %3266 = vdwg.mxu0
    %3267 = vmatpush.msra.mxu0 0.0
    %3268 = vmatpush.msra.mxu0 0.0
    %3269 = vmatpush.msra.mxu0 0.0
    %3270 = vmatpush.msra.mxu0 0.0
    %3271 = vmatpush.msra.mxu0 0.0
    %3272 = vmatpush.msra.mxu0 0.0
    %3273 = vmatpush.msra.mxu0 %v3121
    %3274 = vmatpush.msra.mxu0 %v3073
    %3275 = vmatpush.msra.mxu0 %v3058
    %3276 = vmatpush.msra.mxu0 %v3043
    %3277 = vmatpush.msra.mxu0 %v3028
    %3278 = vmatpush.msra.mxu0 %v3013
    %3279 = vmatpush.msra.mxu0 %v2998
    %3280 = vmatpush.msra.mxu0 %v2983
    %3281 = vmatpush.msra.mxu0 %v2968
    %3282 = vmatpush.msra.mxu0 %v2953
    %3283 = vmatmul.f32.gmra.mxu0 %v3099
    %v3284 = vpop.f32.mrf.mxu0
    %v3285 = vadd.f32 0.0, %v3284
    %3286 = vdwg.mxu0
    %3287 = vmatpush.msra.mxu0 0.0
    %3288 = vmatpush.msra.mxu0 0.0
    %3289 = vmatpush.msra.mxu0 0.0
    %3290 = vmatpush.msra.mxu0 0.0
    %3291 = vmatpush.msra.mxu0 0.0
    %3292 = vmatpush.msra.mxu0 0.0
    %3293 = vmatpush.msra.mxu0 %v3124
    %3294 = vmatpush.msra.mxu0 %v3074
    %3295 = vmatpush.msra.mxu0 %v3059
    %3296 = vmatpush.msra.mxu0 %v3044
    %3297 = vmatpush.msra.mxu0 %v3029
    %3298 = vmatpush.msra.mxu0 %v3014
    %3299 = vmatpush.msra.mxu0 %v2999
    %3300 = vmatpush.msra.mxu0 %v2984
    %3301 = vmatpush.msra.mxu0 %v2969
    %3302 = vmatpush.msra.mxu0 %v2954
    %3303 = vmatmul.f32.gmra.mxu0 %v3099
    %v3304 = vpop.f32.mrf.mxu0
    %v3305 = vadd.f32 0.0, %v3304
    %3306 = vdwg.mxu0
    %3307 = vmatpush.msra.mxu0 0.0
    %3308 = vmatpush.msra.mxu0 0.0
    %3309 = vmatpush.msra.mxu0 0.0
    %3310 = vmatpush.msra.mxu0 0.0
    %3311 = vmatpush.msra.mxu0 0.0
    %3312 = vmatpush.msra.mxu0 0.0
    %3313 = vmatpush.msra.mxu0 %v3127
    %3314 = vmatpush.msra.mxu0 %v3075
    %3315 = vmatpush.msra.mxu0 %v3060
    %3316 = vmatpush.msra.mxu0 %v3045
    %3317 = vmatpush.msra.mxu0 %v3030
    %3318 = vmatpush.msra.mxu0 %v3015
    %3319 = vmatpush.msra.mxu0 %v3000
    %3320 = vmatpush.msra.mxu0 %v2985
    %3321 = vmatpush.msra.mxu0 %v2970
    %3322 = vmatpush.msra.mxu0 %v2955
    %3323 = vmatmul.f32.gmra.mxu0 %v3099
    %v3324 = vpop.f32.mrf.mxu0
    %v3325 = vadd.f32 0.0, %v3324
    %3326 = vdwg.mxu0
    %3327 = vmatpush.msra.mxu0 0.0
    %3328 = vmatpush.msra.mxu0 0.0
    %3329 = vmatpush.msra.mxu0 0.0
    %3330 = vmatpush.msra.mxu0 0.0
    %3331 = vmatpush.msra.mxu0 0.0
    %3332 = vmatpush.msra.mxu0 0.0
    %3333 = vmatpush.msra.mxu0 %v3130
    %3334 = vmatpush.msra.mxu0 %v3076
    %3335 = vmatpush.msra.mxu0 %v3061
    %3336 = vmatpush.msra.mxu0 %v3046
    %3337 = vmatpush.msra.mxu0 %v3031
    %3338 = vmatpush.msra.mxu0 %v3016
    %3339 = vmatpush.msra.mxu0 %v3001
    %3340 = vmatpush.msra.mxu0 %v2986
    %3341 = vmatpush.msra.mxu0 %v2971
    %3342 = vmatpush.msra.mxu0 %v2956
    %3343 = vmatmul.f32.gmra.mxu0 %v3099
    %v3344 = vpop.f32.mrf.mxu0
    %v3345 = vadd.f32 0.0, %v3344
    %3346 = vdwg.mxu0
    %3347 = vmatpush.msra.mxu0 0.0
    %3348 = vmatpush.msra.mxu0 0.0
    %3349 = vmatpush.msra.mxu0 0.0
    %3350 = vmatpush.msra.mxu0 0.0
    %3351 = vmatpush.msra.mxu0 0.0
    %3352 = vmatpush.msra.mxu0 0.0
    %3353 = vmatpush.msra.mxu0 %v3133
    %3354 = vmatpush.msra.mxu0 %v3077
    %3355 = vmatpush.msra.mxu0 %v3062
    %3356 = vmatpush.msra.mxu0 %v3047
    %3357 = vmatpush.msra.mxu0 %v3032
    %3358 = vmatpush.msra.mxu0 %v3017
    %3359 = vmatpush.msra.mxu0 %v3002
    %3360 = vmatpush.msra.mxu0 %v2987
    %3361 = vmatpush.msra.mxu0 %v2972
    %3362 = vmatpush.msra.mxu0 %v2957
    %3363 = vmatmul.f32.gmra.mxu0 %v3099
    %v3364 = vpop.f32.mrf.mxu0
    %v3365 = vadd.f32 0.0, %v3364
    %3366 = vdwg.mxu0
    %3367 = vmatpush.msra.mxu0 0.0
    %3368 = vmatpush.msra.mxu0 0.0
    %3369 = vmatpush.msra.mxu0 0.0
    %3370 = vmatpush.msra.mxu0 0.0
    %3371 = vmatpush.msra.mxu0 0.0
    %3372 = vmatpush.msra.mxu0 0.0
    %3373 = vmatpush.msra.mxu0 %v3136
    %3374 = vmatpush.msra.mxu0 %v3078
    %3375 = vmatpush.msra.mxu0 %v3063
    %3376 = vmatpush.msra.mxu0 %v3048
    %3377 = vmatpush.msra.mxu0 %v3033
    %3378 = vmatpush.msra.mxu0 %v3018
    %3379 = vmatpush.msra.mxu0 %v3003
    %3380 = vmatpush.msra.mxu0 %v2988
    %3381 = vmatpush.msra.mxu0 %v2973
    %3382 = vmatpush.msra.mxu0 %v2958
    %3383 = vmatmul.f32.gmra.mxu0 %v3099
    %v3384 = vpop.f32.mrf.mxu0
    %v3385 = vadd.f32 0.0, %v3384
    %3386 = vdwg.mxu0
    %3387 = vmatpush.msra.mxu0 0.0
    %3388 = vmatpush.msra.mxu0 0.0
    %3389 = vmatpush.msra.mxu0 0.0
    %3390 = vmatpush.msra.mxu0 0.0
    %3391 = vmatpush.msra.mxu0 0.0
    %3392 = vmatpush.msra.mxu0 0.0
    %3393 = vmatpush.msra.mxu0 %v3139
    %3394 = vmatpush.msra.mxu0 %v3079
    %3395 = vmatpush.msra.mxu0 %v3064
    %3396 = vmatpush.msra.mxu0 %v3049
    %3397 = vmatpush.msra.mxu0 %v3034
    %3398 = vmatpush.msra.mxu0 %v3019
    %3399 = vmatpush.msra.mxu0 %v3004
    %3400 = vmatpush.msra.mxu0 %v2989
    %3401 = vmatpush.msra.mxu0 %v2974
    %3402 = vmatpush.msra.mxu0 %v2959
    %3403 = vmatmul.f32.gmra.mxu0 %v3099
    %v3404 = vpop.f32.mrf.mxu0
    %v3405 = vadd.f32 0.0, %v3404
    %3406 = vdwg.mxu0
    %3407 = vmatpush.msra.mxu0 0.0
    %3408 = vmatpush.msra.mxu0 0.0
    %3409 = vmatpush.msra.mxu0 0.0
    %3410 = vmatpush.msra.mxu0 0.0
    %3411 = vmatpush.msra.mxu0 0.0
    %3412 = vmatpush.msra.mxu0 0.0
    %3413 = vmatpush.msra.mxu0 %v3142
    %3414 = vmatpush.msra.mxu0 %v3080
    %3415 = vmatpush.msra.mxu0 %v3065
    %3416 = vmatpush.msra.mxu0 %v3050
    %3417 = vmatpush.msra.mxu0 %v3035
    %3418 = vmatpush.msra.mxu0 %v3020
    %3419 = vmatpush.msra.mxu0 %v3005
    %3420 = vmatpush.msra.mxu0 %v2990
    %3421 = vmatpush.msra.mxu0 %v2975
    %3422 = vmatpush.msra.mxu0 %v2960
    %3423 = vmatmul.f32.gmra.mxu0 %v3099
    %v3424 = vpop.f32.mrf.mxu0
    %v3425 = vadd.f32 0.0, %v3424
    %3426 = vdwg.mxu0
    %3427 = vmatpush.msra.mxu0 0.0
    %3428 = vmatpush.msra.mxu0 0.0
    %3429 = vmatpush.msra.mxu0 0.0
    %3430 = vmatpush.msra.mxu0 0.0
    %3431 = vmatpush.msra.mxu0 0.0
    %3432 = vmatpush.msra.mxu0 0.0
    %3433 = vmatpush.msra.mxu0 %v3145
    %3434 = vmatpush.msra.mxu0 %v3081
    %3435 = vmatpush.msra.mxu0 %v3066
    %3436 = vmatpush.msra.mxu0 %v3051
    %3437 = vmatpush.msra.mxu0 %v3036
    %3438 = vmatpush.msra.mxu0 %v3021
    %3439 = vmatpush.msra.mxu0 %v3006
    %3440 = vmatpush.msra.mxu0 %v2991
    %3441 = vmatpush.msra.mxu0 %v2976
    %3442 = vmatpush.msra.mxu0 %v2961
    %3443 = vmatmul.f32.gmra.mxu0 %v3099
    %v3444 = vpop.f32.mrf.mxu0
    %v3445 = vadd.f32 0.0, %v3444
    %3446 = vdwg.mxu0
    %v3447 = vld [vmem:[%s2] sm:$0x3f]
    %3449 = vset.pattern.permute.xlu0 0
    %3450 = vperm.xlu0 %3449, %v3447
    %v3451 = vpop.permute.xlu0 %3450
    %v3453 = vmul.f32 %v3165, %v3451
    %v3454 = vmul.f32 %v3185, %v3451
    %v3455 = vmul.f32 %v3205, %v3451
    %v3456 = vmul.f32 %v3225, %v3451
    %v3457 = vmul.f32 %v3245, %v3451
    %v3458 = vmul.f32 %v3265, %v3451
    %v3459 = vmul.f32 %v3285, %v3451
    %v3460 = vmul.f32 %v3305, %v3451
    %v3461 = vmul.f32 %v3325, %v3451
    %v3462 = vmul.f32 %v3345, %v3451
    %v3463 = vmul.f32 %v3365, %v3451
    %v3464 = vmul.f32 %v3385, %v3451
    %v3465 = vmul.f32 %v3405, %v3451
    %v3466 = vmul.f32 %v3425, %v3451
    %v3467 = vmul.f32 %v3445, %v3451
    %v3468 = vld [vmem:[%s3] sm:$0x3f]
    %3470 = vset.pattern.permute.xlu0 0
    %3471 = vperm.xlu0 %3470, %v3468
    %v3472 = vpop.permute.xlu0 %3471
    %v3474 = vadd.f32 %v3453, %v3472
    %v3475 = vadd.f32 %v3454, %v3472
    %v3476 = vadd.f32 %v3455, %v3472
    %v3477 = vadd.f32 %v3456, %v3472
    %v3478 = vadd.f32 %v3457, %v3472
    %v3479 = vadd.f32 %v3458, %v3472
    %v3480 = vadd.f32 %v3459, %v3472
    %v3481 = vadd.f32 %v3460, %v3472
    %v3482 = vadd.f32 %v3461, %v3472
    %v3483 = vadd.f32 %v3462, %v3472
    %v3484 = vadd.f32 %v3463, %v3472
    %v3485 = vadd.f32 %v3464, %v3472
    %v3486 = vadd.f32 %v3465, %v3472
    %v3487 = vadd.f32 %v3466, %v3472
    %v3488 = vadd.f32 %v3467, %v3472
    %v3489 = vmax.f32 %v3474, 0.0
    %v3490 = vmax.f32 %v3475, 0.0
    %v3491 = vmax.f32 %v3476, 0.0
    %v3492 = vmax.f32 %v3477, 0.0
    %v3493 = vmax.f32 %v3478, 0.0
    %v3494 = vmax.f32 %v3479, 0.0
    %v3495 = vmax.f32 %v3480, 0.0
    %v3496 = vmax.f32 %v3481, 0.0
    %v3497 = vmax.f32 %v3482, 0.0
    %v3498 = vmax.f32 %v3483, 0.0
    %v3499 = vmax.f32 %v3484, 0.0
    %v3500 = vmax.f32 %v3485, 0.0
    %v3501 = vmax.f32 %v3486, 0.0
    %v3502 = vmax.f32 %v3487, 0.0
    %v3503 = vmax.f32 %v3488, 0.0
    %3519 = vrot.lane.b32.xlu0 %v3489, 127
    %v3520 = vpop.permute.xlu0 %3519
    %3521 = vrot.lane.b32.xlu0 %v3490, 127
    %v3522 = vpop.permute.xlu0 %3521
    %3523 = vrot.lane.b32.xlu0 %v3491, 127
    %v3524 = vpop.permute.xlu0 %3523
    %3525 = vrot.lane.b32.xlu0 %v3492, 127
    %v3526 = vpop.permute.xlu0 %3525
    %3527 = vrot.lane.b32.xlu0 %v3493, 127
    %v3528 = vpop.permute.xlu0 %3527
    %3529 = vrot.lane.b32.xlu0 %v3494, 127
    %v3530 = vpop.permute.xlu0 %3529
    %3531 = vrot.lane.b32.xlu0 %v3495, 127
    %v3532 = vpop.permute.xlu0 %3531
    %3533 = vrot.lane.b32.xlu0 %v3496, 127
    %v3534 = vpop.permute.xlu0 %3533
    %3535 = vrot.lane.b32.xlu0 %v3497, 127
    %v3536 = vpop.permute.xlu0 %3535
    %3537 = vrot.lane.b32.xlu0 %v3498, 127
    %v3538 = vpop.permute.xlu0 %3537
    %3539 = vrot.lane.b32.xlu0 %v3499, 127
    %v3540 = vpop.permute.xlu0 %3539
    %3541 = vrot.lane.b32.xlu0 %v3500, 127
    %v3542 = vpop.permute.xlu0 %3541
    %3543 = vrot.lane.b32.xlu0 %v3501, 127
    %v3544 = vpop.permute.xlu0 %3543
    %3545 = vrot.lane.b32.xlu0 %v3502, 127
    %v3546 = vpop.permute.xlu0 %3545
    %3547 = vrot.lane.b32.xlu0 %v3503, 127
    %v3548 = vpop.permute.xlu0 %3547
    %v3549 = vsel %vm198, %v3520, %v3522
    %v3550 = vsel %vm198, %v3522, %v3524
    %v3551 = vsel %vm198, %v3524, %v3526
    %v3552 = vsel %vm198, %v3526, %v3528
    %v3553 = vsel %vm198, %v3528, %v3530
    %v3554 = vsel %vm198, %v3530, %v3532
    %v3555 = vsel %vm198, %v3532, %v3534
    %v3556 = vsel %vm198, %v3534, %v3536
    %v3557 = vsel %vm198, %v3536, %v3538
    %v3558 = vsel %vm198, %v3538, %v3540
    %v3559 = vsel %vm198, %v3540, %v3542
    %v3560 = vsel %vm198, %v3542, %v3544
    %v3561 = vsel %vm198, %v3544, %v3546
    %v3562 = vsel %vm198, %v3546, %v3548
    %v3578 = vmax.f32 %v3489, %v3549
    %v3579 = vmax.f32 %v3490, %v3550
    %v3580 = vmax.f32 %v3491, %v3551
    %v3581 = vmax.f32 %v3492, %v3552
    %v3582 = vmax.f32 %v3493, %v3553
    %v3583 = vmax.f32 %v3494, %v3554
    %v3584 = vmax.f32 %v3495, %v3555
    %v3585 = vmax.f32 %v3496, %v3556
    %v3586 = vmax.f32 %v3497, %v3557
    %v3587 = vmax.f32 %v3498, %v3558
    %v3588 = vmax.f32 %v3499, %v3559
    %v3589 = vmax.f32 %v3500, %v3560
    %v3590 = vmax.f32 %v3501, %v3561
    %v3591 = vmax.f32 %v3502, %v3562
    %v3592 = vmax.f32 %v3503, %v3548
    %3608 = vrot.lane.b32.xlu0 %v3578, 96
    %v3609 = vpop.permute.xlu0 %3608
    %3610 = vrot.lane.b32.xlu0 %v3579, 96
    %v3611 = vpop.permute.xlu0 %3610
    %3612 = vrot.lane.b32.xlu0 %v3580, 96
    %v3613 = vpop.permute.xlu0 %3612
    %3614 = vrot.lane.b32.xlu0 %v3581, 96
    %v3615 = vpop.permute.xlu0 %3614
    %3616 = vrot.lane.b32.xlu0 %v3582, 96
    %v3617 = vpop.permute.xlu0 %3616
    %3618 = vrot.lane.b32.xlu0 %v3583, 96
    %v3619 = vpop.permute.xlu0 %3618
    %3620 = vrot.lane.b32.xlu0 %v3584, 96
    %v3621 = vpop.permute.xlu0 %3620
    %3622 = vrot.lane.b32.xlu0 %v3585, 96
    %v3623 = vpop.permute.xlu0 %3622
    %3624 = vrot.lane.b32.xlu0 %v3586, 96
    %v3625 = vpop.permute.xlu0 %3624
    %3626 = vrot.lane.b32.xlu0 %v3587, 96
    %v3627 = vpop.permute.xlu0 %3626
    %3628 = vrot.lane.b32.xlu0 %v3588, 96
    %v3629 = vpop.permute.xlu0 %3628
    %3630 = vrot.lane.b32.xlu0 %v3589, 96
    %v3631 = vpop.permute.xlu0 %3630
    %3632 = vrot.lane.b32.xlu0 %v3590, 96
    %v3633 = vpop.permute.xlu0 %3632
    %3634 = vrot.lane.b32.xlu0 %v3591, 96
    %v3635 = vpop.permute.xlu0 %3634
    %3636 = vrot.lane.b32.xlu0 %v3592, 96
    %v3637 = vpop.permute.xlu0 %3636
    %v3638 = vsel %vm672, %v3609, %v3611
    %v3639 = vsel %vm672, %v3611, %v3613
    %v3640 = vsel %vm672, %v3613, %v3615
    %v3641 = vsel %vm672, %v3615, %v3617
    %v3642 = vsel %vm672, %v3617, %v3619
    %v3643 = vsel %vm672, %v3619, %v3621
    %v3644 = vsel %vm672, %v3621, %v3623
    %v3645 = vsel %vm672, %v3623, %v3625
    %v3646 = vsel %vm672, %v3625, %v3627
    %v3647 = vsel %vm672, %v3627, %v3629
    %v3648 = vsel %vm672, %v3629, %v3631
    %v3649 = vsel %vm672, %v3631, %v3633
    %v3650 = vsel %vm672, %v3633, %v3635
    %v3651 = vsel %vm672, %v3635, %v3637
    %v3667 = vmax.f32 %v3578, %v3638
    %v3668 = vmax.f32 %v3579, %v3639
    %v3669 = vmax.f32 %v3580, %v3640
    %v3670 = vmax.f32 %v3581, %v3641
    %v3671 = vmax.f32 %v3582, %v3642
    %v3672 = vmax.f32 %v3583, %v3643
    %v3673 = vmax.f32 %v3584, %v3644
    %v3674 = vmax.f32 %v3585, %v3645
    %v3675 = vmax.f32 %v3586, %v3646
    %v3676 = vmax.f32 %v3587, %v3647
    %v3677 = vmax.f32 %v3588, %v3648
    %v3678 = vmax.f32 %v3589, %v3649
    %v3679 = vmax.f32 %v3590, %v3650
    %v3680 = vmax.f32 %v3591, %v3651
    %v3681 = vmax.f32 %v3592, %v3637
    %3682 = vst [vmem:[#allocation3] sm:$0x3f] %v3667
    %3683 = vst [vmem:[#allocation3 + $0x8] sm:$0x3f] %v3668
    %3684 = vst [vmem:[#allocation3 + $0x10] sm:$0x3f] %v3669
    %3685 = vst [vmem:[#allocation3 + $0x18] sm:$0x3f] %v3670
    %3686 = vst [vmem:[#allocation3 + $0x20] sm:$0x3f] %v3671
    %3687 = vst [vmem:[#allocation3 + $0x28] sm:$0x3f] %v3672
    %3688 = vst [vmem:[#allocation3 + $0x30] sm:$0x3f] %v3673
    %3689 = vst [vmem:[#allocation3 + $0x38] sm:$0x3f] %v3674
    %3690 = vst [vmem:[#allocation3 + $0x40] sm:$0x3f] %v3675
    %3691 = vst [vmem:[#allocation3 + $0x48] sm:$0x3f] %v3676
    %3692 = vst [vmem:[#allocation3 + $0x50] sm:$0x3f] %v3677
    %3693 = vst [vmem:[#allocation3 + $0x58] sm:$0x3f] %v3678
    %vm3694 = vcmask 676864
    %3695 = vst.msk [vmem:[#allocation3 + $0x60] sm:$0x3f] %vm3694, %v3679
    %v3709 = vrot.slane %v3667, 2
    %v3710 = vrot.slane %v3668, 2
    %v3711 = vrot.slane %v3669, 2
    %v3712 = vrot.slane %v3670, 2
    %v3713 = vrot.slane %v3671, 2
    %v3714 = vrot.slane %v3672, 2
    %v3715 = vrot.slane %v3673, 2
    %v3716 = vrot.slane %v3674, 2
    %v3717 = vrot.slane %v3675, 2
    %v3718 = vrot.slane %v3676, 2
    %v3719 = vrot.slane %v3677, 2
    %v3720 = vrot.slane %v3678, 2
    %v3721 = vrot.slane %v3679, 2
    %3722 = vrot.lane.b32.xlu0 %v3709, 126
    %v3723 = vpop.permute.xlu0 %3722
    %3724 = vrot.lane.b32.xlu0 %v3710, 126
    %v3725 = vpop.permute.xlu0 %3724
    %3726 = vrot.lane.b32.xlu0 %v3711, 126
    %v3727 = vpop.permute.xlu0 %3726
    %3728 = vrot.lane.b32.xlu0 %v3712, 126
    %v3729 = vpop.permute.xlu0 %3728
    %3730 = vrot.lane.b32.xlu0 %v3713, 126
    %v3731 = vpop.permute.xlu0 %3730
    %3732 = vrot.lane.b32.xlu0 %v3714, 126
    %v3733 = vpop.permute.xlu0 %3732
    %3734 = vrot.lane.b32.xlu0 %v3715, 126
    %v3735 = vpop.permute.xlu0 %3734
    %3736 = vrot.lane.b32.xlu0 %v3716, 126
    %v3737 = vpop.permute.xlu0 %3736
    %3738 = vrot.lane.b32.xlu0 %v3717, 126
    %v3739 = vpop.permute.xlu0 %3738
    %3740 = vrot.lane.b32.xlu0 %v3718, 126
    %v3741 = vpop.permute.xlu0 %3740
    %3742 = vrot.lane.b32.xlu0 %v3719, 126
    %v3743 = vpop.permute.xlu0 %3742
    %3744 = vrot.lane.b32.xlu0 %v3720, 126
    %v3745 = vpop.permute.xlu0 %3744
    %3746 = vrot.lane.b32.xlu0 %v3721, 126
    %v3747 = vpop.permute.xlu0 %3746
    %v3748 = vsel %vm315, %v3723, %v3725
    %v3749 = vsel %vm315, %v3725, %v3727
    %v3750 = vsel %vm315, %v3727, %v3729
    %v3751 = vsel %vm315, %v3729, %v3731
    %v3752 = vsel %vm315, %v3731, %v3733
    %v3753 = vsel %vm315, %v3733, %v3735
    %v3754 = vsel %vm315, %v3735, %v3737
    %v3755 = vsel %vm315, %v3737, %v3739
    %v3756 = vsel %vm315, %v3739, %v3741
    %v3757 = vsel %vm315, %v3741, %v3743
    %v3758 = vsel %vm315, %v3743, %v3745
    %v3759 = vsel %vm315, %v3745, %v3747
    %3773 = vst [vmem:[#allocation3] sm:$0xc0] %v3748
    %3774 = vst [vmem:[#allocation3 + $0x8] sm:$0xc0] %v3749
    %3775 = vst [vmem:[#allocation3 + $0x10] sm:$0xc0] %v3750
    %3776 = vst [vmem:[#allocation3 + $0x18] sm:$0xc0] %v3751
    %3777 = vst [vmem:[#allocation3 + $0x20] sm:$0xc0] %v3752
    %3778 = vst [vmem:[#allocation3 + $0x28] sm:$0xc0] %v3753
    %3779 = vst [vmem:[#allocation3 + $0x30] sm:$0xc0] %v3754
    %3780 = vst [vmem:[#allocation3 + $0x38] sm:$0xc0] %v3755
    %3781 = vst [vmem:[#allocation3 + $0x40] sm:$0xc0] %v3756
    %3782 = vst [vmem:[#allocation3 + $0x48] sm:$0xc0] %v3757
    %3783 = vst [vmem:[#allocation3 + $0x50] sm:$0xc0] %v3758
    %3784 = vst [vmem:[#allocation3 + $0x58] sm:$0xc0] %v3759
    %vm3785 = vcmask 678918
    %3786 = vst.msk [vmem:[#allocation3 + $0x60] sm:$0xc0] %vm3785, %v3747
    %3787 = vst [vmem:[#allocation3 + $0x68] sm:$0xf] %v3748
    %3788 = vst [vmem:[#allocation3 + $0x70] sm:$0xf] %v3749
    %3789 = vst [vmem:[#allocation3 + $0x78] sm:$0xf] %v3750
    %3790 = vst [vmem:[#allocation3 + $0x80] sm:$0xf] %v3751
    %3791 = vst [vmem:[#allocation3 + $0x88] sm:$0xf] %v3752
    %3792 = vst [vmem:[#allocation3 + $0x90] sm:$0xf] %v3753
    %3793 = vst [vmem:[#allocation3 + $0x98] sm:$0xf] %v3754
    %3794 = vst [vmem:[#allocation3 + $0xa0] sm:$0xf] %v3755
    %3795 = vst [vmem:[#allocation3 + $0xa8] sm:$0xf] %v3756
    %3796 = vst [vmem:[#allocation3 + $0xb0] sm:$0xf] %v3757
    %3797 = vst [vmem:[#allocation3 + $0xb8] sm:$0xf] %v3758
    %3798 = vst [vmem:[#allocation3 + $0xc0] sm:$0xf] %v3759
    %vm3799 = vcmask 674816
    %3800 = vst.msk [vmem:[#allocation3 + $0xc8] sm:$0xf] %vm3799, %v3747
    %v3801 = vrot.slane %v3667, 4
    %v3802 = vrot.slane %v3668, 4
    %v3803 = vrot.slane %v3669, 4
    %v3804 = vrot.slane %v3670, 4
    %v3805 = vrot.slane %v3671, 4
    %v3806 = vrot.slane %v3672, 4
    %v3807 = vrot.slane %v3673, 4
    %v3808 = vrot.slane %v3674, 4
    %v3809 = vrot.slane %v3675, 4
    %v3810 = vrot.slane %v3676, 4
    %v3811 = vrot.slane %v3677, 4
    %v3812 = vrot.slane %v3678, 4
    %v3813 = vrot.slane %v3679, 4
    %3814 = vrot.lane.b32.xlu0 %v3801, 124
    %v3815 = vpop.permute.xlu0 %3814
    %3816 = vrot.lane.b32.xlu0 %v3802, 124
    %v3817 = vpop.permute.xlu0 %3816
    %3818 = vrot.lane.b32.xlu0 %v3803, 124
    %v3819 = vpop.permute.xlu0 %3818
    %3820 = vrot.lane.b32.xlu0 %v3804, 124
    %v3821 = vpop.permute.xlu0 %3820
    %3822 = vrot.lane.b32.xlu0 %v3805, 124
    %v3823 = vpop.permute.xlu0 %3822
    %3824 = vrot.lane.b32.xlu0 %v3806, 124
    %v3825 = vpop.permute.xlu0 %3824
    %3826 = vrot.lane.b32.xlu0 %v3807, 124
    %v3827 = vpop.permute.xlu0 %3826
    %3828 = vrot.lane.b32.xlu0 %v3808, 124
    %v3829 = vpop.permute.xlu0 %3828
    %3830 = vrot.lane.b32.xlu0 %v3809, 124
    %v3831 = vpop.permute.xlu0 %3830
    %3832 = vrot.lane.b32.xlu0 %v3810, 124
    %v3833 = vpop.permute.xlu0 %3832
    %3834 = vrot.lane.b32.xlu0 %v3811, 124
    %v3835 = vpop.permute.xlu0 %3834
    %3836 = vrot.lane.b32.xlu0 %v3812, 124
    %v3837 = vpop.permute.xlu0 %3836
    %3838 = vrot.lane.b32.xlu0 %v3813, 124
    %v3839 = vpop.permute.xlu0 %3838
    %v3840 = vsel %vm551, %v3815, %v3817
    %v3841 = vsel %vm551, %v3817, %v3819
    %v3842 = vsel %vm551, %v3819, %v3821
    %v3843 = vsel %vm551, %v3821, %v3823
    %v3844 = vsel %vm551, %v3823, %v3825
    %v3845 = vsel %vm551, %v3825, %v3827
    %v3846 = vsel %vm551, %v3827, %v3829
    %v3847 = vsel %vm551, %v3829, %v3831
    %v3848 = vsel %vm551, %v3831, %v3833
    %v3849 = vsel %vm551, %v3833, %v3835
    %v3850 = vsel %vm551, %v3835, %v3837
    %v3851 = vsel %vm551, %v3837, %v3839
    %3865 = vst [vmem:[#allocation3 + $0x68] sm:$0xf0] %v3840
    %3866 = vst [vmem:[#allocation3 + $0x70] sm:$0xf0] %v3841
    %3867 = vst [vmem:[#allocation3 + $0x78] sm:$0xf0] %v3842
    %3868 = vst [vmem:[#allocation3 + $0x80] sm:$0xf0] %v3843
    %3869 = vst [vmem:[#allocation3 + $0x88] sm:$0xf0] %v3844
    %3870 = vst [vmem:[#allocation3 + $0x90] sm:$0xf0] %v3845
    %3871 = vst [vmem:[#allocation3 + $0x98] sm:$0xf0] %v3846
    %3872 = vst [vmem:[#allocation3 + $0xa0] sm:$0xf0] %v3847
    %3873 = vst [vmem:[#allocation3 + $0xa8] sm:$0xf0] %v3848
    %3874 = vst [vmem:[#allocation3 + $0xb0] sm:$0xf0] %v3849
    %3875 = vst [vmem:[#allocation3 + $0xb8] sm:$0xf0] %v3850
    %3876 = vst [vmem:[#allocation3 + $0xc0] sm:$0xf0] %v3851
    %vm3877 = vcmask 678916
    %3878 = vst.msk [vmem:[#allocation3 + $0xc8] sm:$0xf0] %vm3877, %v3839
    %3879 = vst [vmem:[#allocation3 + $0xd0] sm:$0x3] %v3840
    %3880 = vst [vmem:[#allocation3 + $0xd8] sm:$0x3] %v3841
    %3881 = vst [vmem:[#allocation3 + $0xe0] sm:$0x3] %v3842
    %3882 = vst [vmem:[#allocation3 + $0xe8] sm:$0x3] %v3843
    %3883 = vst [vmem:[#allocation3 + $0xf0] sm:$0x3] %v3844
    %3884 = vst [vmem:[#allocation3 + $0xf8] sm:$0x3] %v3845
    %3885 = vst [vmem:[#allocation3 + $0x100] sm:$0x3] %v3846
    %3886 = vst [vmem:[#allocation3 + $0x108] sm:$0x3] %v3847
    %3887 = vst [vmem:[#allocation3 + $0x110] sm:$0x3] %v3848
    %3888 = vst [vmem:[#allocation3 + $0x118] sm:$0x3] %v3849
    %3889 = vst [vmem:[#allocation3 + $0x120] sm:$0x3] %v3850
    %3890 = vst [vmem:[#allocation3 + $0x128] sm:$0x3] %v3851
    %vm3891 = vcmask 672768
    %3892 = vst.msk [vmem:[#allocation3 + $0x130] sm:$0x3] %vm3891, %v3839
    %v3893 = vrot.slane %v3667, 6
    %v3894 = vrot.slane %v3668, 6
    %v3895 = vrot.slane %v3669, 6
    %v3896 = vrot.slane %v3670, 6
    %v3897 = vrot.slane %v3671, 6
    %v3898 = vrot.slane %v3672, 6
    %v3899 = vrot.slane %v3673, 6
    %v3900 = vrot.slane %v3674, 6
    %v3901 = vrot.slane %v3675, 6
    %v3902 = vrot.slane %v3676, 6
    %v3903 = vrot.slane %v3677, 6
    %v3904 = vrot.slane %v3678, 6
    %v3905 = vrot.slane %v3679, 6
    %3906 = vrot.lane.b32.xlu0 %v3893, 122
    %v3907 = vpop.permute.xlu0 %3906
    %3908 = vrot.lane.b32.xlu0 %v3894, 122
    %v3909 = vpop.permute.xlu0 %3908
    %3910 = vrot.lane.b32.xlu0 %v3895, 122
    %v3911 = vpop.permute.xlu0 %3910
    %3912 = vrot.lane.b32.xlu0 %v3896, 122
    %v3913 = vpop.permute.xlu0 %3912
    %3914 = vrot.lane.b32.xlu0 %v3897, 122
    %v3915 = vpop.permute.xlu0 %3914
    %3916 = vrot.lane.b32.xlu0 %v3898, 122
    %v3917 = vpop.permute.xlu0 %3916
    %3918 = vrot.lane.b32.xlu0 %v3899, 122
    %v3919 = vpop.permute.xlu0 %3918
    %3920 = vrot.lane.b32.xlu0 %v3900, 122
    %v3921 = vpop.permute.xlu0 %3920
    %3922 = vrot.lane.b32.xlu0 %v3901, 122
    %v3923 = vpop.permute.xlu0 %3922
    %3924 = vrot.lane.b32.xlu0 %v3902, 122
    %v3925 = vpop.permute.xlu0 %3924
    %3926 = vrot.lane.b32.xlu0 %v3903, 122
    %v3927 = vpop.permute.xlu0 %3926
    %3928 = vrot.lane.b32.xlu0 %v3904, 122
    %v3929 = vpop.permute.xlu0 %3928
    %3930 = vrot.lane.b32.xlu0 %v3905, 122
    %v3931 = vpop.permute.xlu0 %3930
    %vm3932 = vcmask 998400
    %v3933 = vsel %vm3932, %v3907, %v3909
    %v3934 = vsel %vm3932, %v3909, %v3911
    %v3935 = vsel %vm3932, %v3911, %v3913
    %v3936 = vsel %vm3932, %v3913, %v3915
    %v3937 = vsel %vm3932, %v3915, %v3917
    %v3938 = vsel %vm3932, %v3917, %v3919
    %v3939 = vsel %vm3932, %v3919, %v3921
    %v3940 = vsel %vm3932, %v3921, %v3923
    %v3941 = vsel %vm3932, %v3923, %v3925
    %v3942 = vsel %vm3932, %v3925, %v3927
    %v3943 = vsel %vm3932, %v3927, %v3929
    %v3944 = vsel %vm3932, %v3929, %v3931
    %3958 = vst [vmem:[#allocation3 + $0xd0] sm:$0xfc] %v3933
    %3959 = vst [vmem:[#allocation3 + $0xd8] sm:$0xfc] %v3934
    %3960 = vst [vmem:[#allocation3 + $0xe0] sm:$0xfc] %v3935
    %3961 = vst [vmem:[#allocation3 + $0xe8] sm:$0xfc] %v3936
    %3962 = vst [vmem:[#allocation3 + $0xf0] sm:$0xfc] %v3937
    %3963 = vst [vmem:[#allocation3 + $0xf8] sm:$0xfc] %v3938
    %3964 = vst [vmem:[#allocation3 + $0x100] sm:$0xfc] %v3939
    %3965 = vst [vmem:[#allocation3 + $0x108] sm:$0xfc] %v3940
    %3966 = vst [vmem:[#allocation3 + $0x110] sm:$0xfc] %v3941
    %3967 = vst [vmem:[#allocation3 + $0x118] sm:$0xfc] %v3942
    %3968 = vst [vmem:[#allocation3 + $0x120] sm:$0xfc] %v3943
    %3969 = vst [vmem:[#allocation3 + $0x128] sm:$0xfc] %v3944
    %vm3970 = vcmask 678914
    %3971 = vst.msk [vmem:[#allocation3 + $0x130] sm:$0xfc] %vm3970, %v3931
    %3972 = vrot.lane.b32.xlu0 %v3667, 120
    %v3973 = vpop.permute.xlu0 %3972
    %3974 = vrot.lane.b32.xlu0 %v3668, 120
    %v3975 = vpop.permute.xlu0 %3974
    %3976 = vrot.lane.b32.xlu0 %v3669, 120
    %v3977 = vpop.permute.xlu0 %3976
    %3978 = vrot.lane.b32.xlu0 %v3670, 120
    %v3979 = vpop.permute.xlu0 %3978
    %3980 = vrot.lane.b32.xlu0 %v3671, 120
    %v3981 = vpop.permute.xlu0 %3980
    %3982 = vrot.lane.b32.xlu0 %v3672, 120
    %v3983 = vpop.permute.xlu0 %3982
    %3984 = vrot.lane.b32.xlu0 %v3673, 120
    %v3985 = vpop.permute.xlu0 %3984
    %3986 = vrot.lane.b32.xlu0 %v3674, 120
    %v3987 = vpop.permute.xlu0 %3986
    %3988 = vrot.lane.b32.xlu0 %v3675, 120
    %v3989 = vpop.permute.xlu0 %3988
    %3990 = vrot.lane.b32.xlu0 %v3676, 120
    %v3991 = vpop.permute.xlu0 %3990
    %3992 = vrot.lane.b32.xlu0 %v3677, 120
    %v3993 = vpop.permute.xlu0 %3992
    %3994 = vrot.lane.b32.xlu0 %v3678, 120
    %v3995 = vpop.permute.xlu0 %3994
    %3996 = vrot.lane.b32.xlu0 %v3679, 120
    %v3997 = vpop.permute.xlu0 %3996
    %vm3998 = vcmask 982016
    %v3999 = vsel %vm3998, %v3973, %v3975
    %v4000 = vsel %vm3998, %v3975, %v3977
    %v4001 = vsel %vm3998, %v3977, %v3979
    %v4002 = vsel %vm3998, %v3979, %v3981
    %v4003 = vsel %vm3998, %v3981, %v3983
    %v4004 = vsel %vm3998, %v3983, %v3985
    %v4005 = vsel %vm3998, %v3985, %v3987
    %v4006 = vsel %vm3998, %v3987, %v3989
    %v4007 = vsel %vm3998, %v3989, %v3991
    %v4008 = vsel %vm3998, %v3991, %v3993
    %v4009 = vsel %vm3998, %v3993, %v3995
    %v4010 = vsel %vm3998, %v3995, %v3997
    %4024 = vst [vmem:[#allocation3 + $0x138] sm:$0x3f] %v3999
    %4025 = vst [vmem:[#allocation3 + $0x140] sm:$0x3f] %v4000
    %4026 = vst [vmem:[#allocation3 + $0x148] sm:$0x3f] %v4001
    %4027 = vst [vmem:[#allocation3 + $0x150] sm:$0x3f] %v4002
    %4028 = vst [vmem:[#allocation3 + $0x158] sm:$0x3f] %v4003
    %4029 = vst [vmem:[#allocation3 + $0x160] sm:$0x3f] %v4004
    %4030 = vst [vmem:[#allocation3 + $0x168] sm:$0x3f] %v4005
    %4031 = vst [vmem:[#allocation3 + $0x170] sm:$0x3f] %v4006
    %4032 = vst [vmem:[#allocation3 + $0x178] sm:$0x3f] %v4007
    %4033 = vst [vmem:[#allocation3 + $0x180] sm:$0x3f] %v4008
    %4034 = vst [vmem:[#allocation3 + $0x188] sm:$0x3f] %v4009
    %4035 = vst [vmem:[#allocation3 + $0x190] sm:$0x3f] %v4010
    %4036 = vst.msk [vmem:[#allocation3 + $0x198] sm:$0x3f] %vm3694, %v3997
    %v4038 = vrot.slane %v3680, 2
    %4039 = vrot.lane.b32.xlu0 %v3709, 64
    %v4040 = vpop.permute.xlu0 %4039
    %4041 = vrot.lane.b32.xlu0 %v3710, 64
    %v4042 = vpop.permute.xlu0 %4041
    %4043 = vrot.lane.b32.xlu0 %v3711, 64
    %v4044 = vpop.permute.xlu0 %4043
    %4045 = vrot.lane.b32.xlu0 %v3712, 64
    %v4046 = vpop.permute.xlu0 %4045
    %4047 = vrot.lane.b32.xlu0 %v3713, 64
    %v4048 = vpop.permute.xlu0 %4047
    %4049 = vrot.lane.b32.xlu0 %v3714, 64
    %v4050 = vpop.permute.xlu0 %4049
    %4051 = vrot.lane.b32.xlu0 %v3715, 64
    %v4052 = vpop.permute.xlu0 %4051
    %4053 = vrot.lane.b32.xlu0 %v3716, 64
    %v4054 = vpop.permute.xlu0 %4053
    %4055 = vrot.lane.b32.xlu0 %v3717, 64
    %v4056 = vpop.permute.xlu0 %4055
    %4057 = vrot.lane.b32.xlu0 %v3718, 64
    %v4058 = vpop.permute.xlu0 %4057
    %4059 = vrot.lane.b32.xlu0 %v3719, 64
    %v4060 = vpop.permute.xlu0 %4059
    %4061 = vrot.lane.b32.xlu0 %v3720, 64
    %v4062 = vpop.permute.xlu0 %4061
    %4063 = vrot.lane.b32.xlu0 %v3721, 64
    %v4064 = vpop.permute.xlu0 %4063
    %4065 = vrot.lane.b32.xlu0 %v4038, 64
    %v4066 = vpop.permute.xlu0 %4065
    %v4067 = vsel %vm1280, %v4040, %v4042
    %v4068 = vsel %vm1280, %v4042, %v4044
    %v4069 = vsel %vm1280, %v4044, %v4046
    %v4070 = vsel %vm1280, %v4046, %v4048
    %v4071 = vsel %vm1280, %v4048, %v4050
    %v4072 = vsel %vm1280, %v4050, %v4052
    %v4073 = vsel %vm1280, %v4052, %v4054
    %v4074 = vsel %vm1280, %v4054, %v4056
    %v4075 = vsel %vm1280, %v4056, %v4058
    %v4076 = vsel %vm1280, %v4058, %v4060
    %v4077 = vsel %vm1280, %v4060, %v4062
    %v4078 = vsel %vm1280, %v4062, %v4064
    %v4079 = vsel %vm1280, %v4064, %v4066
    %4093 = vst [vmem:[#allocation3 + $0x138] sm:$0xc0] %v4067
    %4094 = vst [vmem:[#allocation3 + $0x140] sm:$0xc0] %v4068
    %4095 = vst [vmem:[#allocation3 + $0x148] sm:$0xc0] %v4069
    %4096 = vst [vmem:[#allocation3 + $0x150] sm:$0xc0] %v4070
    %4097 = vst [vmem:[#allocation3 + $0x158] sm:$0xc0] %v4071
    %4098 = vst [vmem:[#allocation3 + $0x160] sm:$0xc0] %v4072
    %4099 = vst [vmem:[#allocation3 + $0x168] sm:$0xc0] %v4073
    %4100 = vst [vmem:[#allocation3 + $0x170] sm:$0xc0] %v4074
    %4101 = vst [vmem:[#allocation3 + $0x178] sm:$0xc0] %v4075
    %4102 = vst [vmem:[#allocation3 + $0x180] sm:$0xc0] %v4076
    %4103 = vst [vmem:[#allocation3 + $0x188] sm:$0xc0] %v4077
    %4104 = vst [vmem:[#allocation3 + $0x190] sm:$0xc0] %v4078
    %4105 = vst.msk [vmem:[#allocation3 + $0x198] sm:$0xc0] %vm3785, %v4079
    %4106 = vst [vmem:[#allocation3 + $0x1a0] sm:$0xf] %v4067
    %4107 = vst [vmem:[#allocation3 + $0x1a8] sm:$0xf] %v4068
    %4108 = vst [vmem:[#allocation3 + $0x1b0] sm:$0xf] %v4069
    %4109 = vst [vmem:[#allocation3 + $0x1b8] sm:$0xf] %v4070
    %4110 = vst [vmem:[#allocation3 + $0x1c0] sm:$0xf] %v4071
    %4111 = vst [vmem:[#allocation3 + $0x1c8] sm:$0xf] %v4072
    %4112 = vst [vmem:[#allocation3 + $0x1d0] sm:$0xf] %v4073
    %4113 = vst [vmem:[#allocation3 + $0x1d8] sm:$0xf] %v4074
    %4114 = vst [vmem:[#allocation3 + $0x1e0] sm:$0xf] %v4075
    %4115 = vst [vmem:[#allocation3 + $0x1e8] sm:$0xf] %v4076
    %4116 = vst [vmem:[#allocation3 + $0x1f0] sm:$0xf] %v4077
    %4117 = vst [vmem:[#allocation3 + $0x1f8] sm:$0xf] %v4078
    %4118 = vst.msk [vmem:[#allocation3 + $0x200] sm:$0xf] %vm3799, %v4079
    %v4119 = vrot.slane %v3680, 4
    %4120 = vrot.lane.b32.xlu0 %v3801, 62
    %v4121 = vpop.permute.xlu0 %4120
    %4122 = vrot.lane.b32.xlu0 %v3802, 62
    %v4123 = vpop.permute.xlu0 %4122
    %4124 = vrot.lane.b32.xlu0 %v3803, 62
    %v4125 = vpop.permute.xlu0 %4124
    %4126 = vrot.lane.b32.xlu0 %v3804, 62
    %v4127 = vpop.permute.xlu0 %4126
    %4128 = vrot.lane.b32.xlu0 %v3805, 62
    %v4129 = vpop.permute.xlu0 %4128
    %4130 = vrot.lane.b32.xlu0 %v3806, 62
    %v4131 = vpop.permute.xlu0 %4130
    %4132 = vrot.lane.b32.xlu0 %v3807, 62
    %v4133 = vpop.permute.xlu0 %4132
    %4134 = vrot.lane.b32.xlu0 %v3808, 62
    %v4135 = vpop.permute.xlu0 %4134
    %4136 = vrot.lane.b32.xlu0 %v3809, 62
    %v4137 = vpop.permute.xlu0 %4136
    %4138 = vrot.lane.b32.xlu0 %v3810, 62
    %v4139 = vpop.permute.xlu0 %4138
    %4140 = vrot.lane.b32.xlu0 %v3811, 62
    %v4141 = vpop.permute.xlu0 %4140
    %4142 = vrot.lane.b32.xlu0 %v3812, 62
    %v4143 = vpop.permute.xlu0 %4142
    %4144 = vrot.lane.b32.xlu0 %v3813, 62
    %v4145 = vpop.permute.xlu0 %4144
    %4146 = vrot.lane.b32.xlu0 %v4119, 62
    %v4147 = vpop.permute.xlu0 %4146
    %v4148 = vsel %vm1522, %v4121, %v4123
    %v4149 = vsel %vm1522, %v4123, %v4125
    %v4150 = vsel %vm1522, %v4125, %v4127
    %v4151 = vsel %vm1522, %v4127, %v4129
    %v4152 = vsel %vm1522, %v4129, %v4131
    %v4153 = vsel %vm1522, %v4131, %v4133
    %v4154 = vsel %vm1522, %v4133, %v4135
    %v4155 = vsel %vm1522, %v4135, %v4137
    %v4156 = vsel %vm1522, %v4137, %v4139
    %v4157 = vsel %vm1522, %v4139, %v4141
    %v4158 = vsel %vm1522, %v4141, %v4143
    %v4159 = vsel %vm1522, %v4143, %v4145
    %v4160 = vsel %vm1522, %v4145, %v4147
    %4174 = vst [vmem:[#allocation3 + $0x1a0] sm:$0xf0] %v4148
    %4175 = vst [vmem:[#allocation3 + $0x1a8] sm:$0xf0] %v4149
    %4176 = vst [vmem:[#allocation3 + $0x1b0] sm:$0xf0] %v4150
    %4177 = vst [vmem:[#allocation3 + $0x1b8] sm:$0xf0] %v4151
    %4178 = vst [vmem:[#allocation3 + $0x1c0] sm:$0xf0] %v4152
    %4179 = vst [vmem:[#allocation3 + $0x1c8] sm:$0xf0] %v4153
    %4180 = vst [vmem:[#allocation3 + $0x1d0] sm:$0xf0] %v4154
    %4181 = vst [vmem:[#allocation3 + $0x1d8] sm:$0xf0] %v4155
    %4182 = vst [vmem:[#allocation3 + $0x1e0] sm:$0xf0] %v4156
    %4183 = vst [vmem:[#allocation3 + $0x1e8] sm:$0xf0] %v4157
    %4184 = vst [vmem:[#allocation3 + $0x1f0] sm:$0xf0] %v4158
    %4185 = vst [vmem:[#allocation3 + $0x1f8] sm:$0xf0] %v4159
    %4186 = vst.msk [vmem:[#allocation3 + $0x200] sm:$0xf0] %vm3877, %v4160
    %4187 = vst [vmem:[#allocation3 + $0x208] sm:$0x3] %v4148
    %4188 = vst [vmem:[#allocation3 + $0x210] sm:$0x3] %v4149
    %4189 = vst [vmem:[#allocation3 + $0x218] sm:$0x3] %v4150
    %4190 = vst [vmem:[#allocation3 + $0x220] sm:$0x3] %v4151
    %4191 = vst [vmem:[#allocation3 + $0x228] sm:$0x3] %v4152
    %4192 = vst [vmem:[#allocation3 + $0x230] sm:$0x3] %v4153
    %4193 = vst [vmem:[#allocation3 + $0x238] sm:$0x3] %v4154
    %4194 = vst [vmem:[#allocation3 + $0x240] sm:$0x3] %v4155
    %4195 = vst [vmem:[#allocation3 + $0x248] sm:$0x3] %v4156
    %4196 = vst [vmem:[#allocation3 + $0x250] sm:$0x3] %v4157
    %4197 = vst [vmem:[#allocation3 + $0x258] sm:$0x3] %v4158
    %4198 = vst [vmem:[#allocation3 + $0x260] sm:$0x3] %v4159
    %4199 = vst.msk [vmem:[#allocation3 + $0x268] sm:$0x3] %vm3891, %v4160
    %v4200 = vrot.slane %v3680, 6
    %4201 = vrot.lane.b32.xlu0 %v3893, 60
    %v4202 = vpop.permute.xlu0 %4201
    %4203 = vrot.lane.b32.xlu0 %v3894, 60
    %v4204 = vpop.permute.xlu0 %4203
    %4205 = vrot.lane.b32.xlu0 %v3895, 60
    %v4206 = vpop.permute.xlu0 %4205
    %4207 = vrot.lane.b32.xlu0 %v3896, 60
    %v4208 = vpop.permute.xlu0 %4207
    %4209 = vrot.lane.b32.xlu0 %v3897, 60
    %v4210 = vpop.permute.xlu0 %4209
    %4211 = vrot.lane.b32.xlu0 %v3898, 60
    %v4212 = vpop.permute.xlu0 %4211
    %4213 = vrot.lane.b32.xlu0 %v3899, 60
    %v4214 = vpop.permute.xlu0 %4213
    %4215 = vrot.lane.b32.xlu0 %v3900, 60
    %v4216 = vpop.permute.xlu0 %4215
    %4217 = vrot.lane.b32.xlu0 %v3901, 60
    %v4218 = vpop.permute.xlu0 %4217
    %4219 = vrot.lane.b32.xlu0 %v3902, 60
    %v4220 = vpop.permute.xlu0 %4219
    %4221 = vrot.lane.b32.xlu0 %v3903, 60
    %v4222 = vpop.permute.xlu0 %4221
    %4223 = vrot.lane.b32.xlu0 %v3904, 60
    %v4224 = vpop.permute.xlu0 %4223
    %4225 = vrot.lane.b32.xlu0 %v3905, 60
    %v4226 = vpop.permute.xlu0 %4225
    %4227 = vrot.lane.b32.xlu0 %v4200, 60
    %v4228 = vpop.permute.xlu0 %4227
    %v4229 = vsel %vm1779, %v4202, %v4204
    %v4230 = vsel %vm1779, %v4204, %v4206
    %v4231 = vsel %vm1779, %v4206, %v4208
    %v4232 = vsel %vm1779, %v4208, %v4210
    %v4233 = vsel %vm1779, %v4210, %v4212
    %v4234 = vsel %vm1779, %v4212, %v4214
    %v4235 = vsel %vm1779, %v4214, %v4216
    %v4236 = vsel %vm1779, %v4216, %v4218
    %v4237 = vsel %vm1779, %v4218, %v4220
    %v4238 = vsel %vm1779, %v4220, %v4222
    %v4239 = vsel %vm1779, %v4222, %v4224
    %v4240 = vsel %vm1779, %v4224, %v4226
    %v4241 = vsel %vm1779, %v4226, %v4228
    %4255 = vst [vmem:[#allocation3 + $0x208] sm:$0xfc] %v4229
    %4256 = vst [vmem:[#allocation3 + $0x210] sm:$0xfc] %v4230
    %4257 = vst [vmem:[#allocation3 + $0x218] sm:$0xfc] %v4231
    %4258 = vst [vmem:[#allocation3 + $0x220] sm:$0xfc] %v4232
    %4259 = vst [vmem:[#allocation3 + $0x228] sm:$0xfc] %v4233
    %4260 = vst [vmem:[#allocation3 + $0x230] sm:$0xfc] %v4234
    %4261 = vst [vmem:[#allocation3 + $0x238] sm:$0xfc] %v4235
    %4262 = vst [vmem:[#allocation3 + $0x240] sm:$0xfc] %v4236
    %4263 = vst [vmem:[#allocation3 + $0x248] sm:$0xfc] %v4237
    %4264 = vst [vmem:[#allocation3 + $0x250] sm:$0xfc] %v4238
    %4265 = vst [vmem:[#allocation3 + $0x258] sm:$0xfc] %v4239
    %4266 = vst [vmem:[#allocation3 + $0x260] sm:$0xfc] %v4240
    %4267 = vst.msk [vmem:[#allocation3 + $0x268] sm:$0xfc] %vm3970, %v4241
    %4268 = vrot.lane.b32.xlu0 %v3667, 58
    %v4269 = vpop.permute.xlu0 %4268
    %4270 = vrot.lane.b32.xlu0 %v3668, 58
    %v4271 = vpop.permute.xlu0 %4270
    %4272 = vrot.lane.b32.xlu0 %v3669, 58
    %v4273 = vpop.permute.xlu0 %4272
    %4274 = vrot.lane.b32.xlu0 %v3670, 58
    %v4275 = vpop.permute.xlu0 %4274
    %4276 = vrot.lane.b32.xlu0 %v3671, 58
    %v4277 = vpop.permute.xlu0 %4276
    %4278 = vrot.lane.b32.xlu0 %v3672, 58
    %v4279 = vpop.permute.xlu0 %4278
    %4280 = vrot.lane.b32.xlu0 %v3673, 58
    %v4281 = vpop.permute.xlu0 %4280
    %4282 = vrot.lane.b32.xlu0 %v3674, 58
    %v4283 = vpop.permute.xlu0 %4282
    %4284 = vrot.lane.b32.xlu0 %v3675, 58
    %v4285 = vpop.permute.xlu0 %4284
    %4286 = vrot.lane.b32.xlu0 %v3676, 58
    %v4287 = vpop.permute.xlu0 %4286
    %4288 = vrot.lane.b32.xlu0 %v3677, 58
    %v4289 = vpop.permute.xlu0 %4288
    %4290 = vrot.lane.b32.xlu0 %v3678, 58
    %v4291 = vpop.permute.xlu0 %4290
    %4292 = vrot.lane.b32.xlu0 %v3679, 58
    %v4293 = vpop.permute.xlu0 %4292
    %4294 = vrot.lane.b32.xlu0 %v3680, 58
    %v4295 = vpop.permute.xlu0 %4294
    %vm4296 = vcmask 474112
    %v4297 = vsel %vm4296, %v4269, %v4271
    %v4298 = vsel %vm4296, %v4271, %v4273
    %v4299 = vsel %vm4296, %v4273, %v4275
    %v4300 = vsel %vm4296, %v4275, %v4277
    %v4301 = vsel %vm4296, %v4277, %v4279
    %v4302 = vsel %vm4296, %v4279, %v4281
    %v4303 = vsel %vm4296, %v4281, %v4283
    %v4304 = vsel %vm4296, %v4283, %v4285
    %v4305 = vsel %vm4296, %v4285, %v4287
    %v4306 = vsel %vm4296, %v4287, %v4289
    %v4307 = vsel %vm4296, %v4289, %v4291
    %v4308 = vsel %vm4296, %v4291, %v4293
    %v4309 = vsel %vm4296, %v4293, %v4295
    %4323 = vst [vmem:[#allocation3 + $0x270] sm:$0x3f] %v4297
    %4324 = vst [vmem:[#allocation3 + $0x278] sm:$0x3f] %v4298
    %4325 = vst [vmem:[#allocation3 + $0x280] sm:$0x3f] %v4299
    %4326 = vst [vmem:[#allocation3 + $0x288] sm:$0x3f] %v4300
    %4327 = vst [vmem:[#allocation3 + $0x290] sm:$0x3f] %v4301
    %4328 = vst [vmem:[#allocation3 + $0x298] sm:$0x3f] %v4302
    %4329 = vst [vmem:[#allocation3 + $0x2a0] sm:$0x3f] %v4303
    %4330 = vst [vmem:[#allocation3 + $0x2a8] sm:$0x3f] %v4304
    %4331 = vst [vmem:[#allocation3 + $0x2b0] sm:$0x3f] %v4305
    %4332 = vst [vmem:[#allocation3 + $0x2b8] sm:$0x3f] %v4306
    %4333 = vst [vmem:[#allocation3 + $0x2c0] sm:$0x3f] %v4307
    %4334 = vst [vmem:[#allocation3 + $0x2c8] sm:$0x3f] %v4308
    %4335 = vst.msk [vmem:[#allocation3 + $0x2d0] sm:$0x3f] %vm3694, %v4309
    %4336 = vrot.lane.b32.xlu0 %v3709, 56
    %v4337 = vpop.permute.xlu0 %4336
    %4338 = vrot.lane.b32.xlu0 %v3710, 56
    %v4339 = vpop.permute.xlu0 %4338
    %4340 = vrot.lane.b32.xlu0 %v3711, 56
    %v4341 = vpop.permute.xlu0 %4340
    %4342 = vrot.lane.b32.xlu0 %v3712, 56
    %v4343 = vpop.permute.xlu0 %4342
    %4344 = vrot.lane.b32.xlu0 %v3713, 56
    %v4345 = vpop.permute.xlu0 %4344
    %4346 = vrot.lane.b32.xlu0 %v3714, 56
    %v4347 = vpop.permute.xlu0 %4346
    %4348 = vrot.lane.b32.xlu0 %v3715, 56
    %v4349 = vpop.permute.xlu0 %4348
    %4350 = vrot.lane.b32.xlu0 %v3716, 56
    %v4351 = vpop.permute.xlu0 %4350
    %4352 = vrot.lane.b32.xlu0 %v3717, 56
    %v4353 = vpop.permute.xlu0 %4352
    %4354 = vrot.lane.b32.xlu0 %v3718, 56
    %v4355 = vpop.permute.xlu0 %4354
    %4356 = vrot.lane.b32.xlu0 %v3719, 56
    %v4357 = vpop.permute.xlu0 %4356
    %4358 = vrot.lane.b32.xlu0 %v3720, 56
    %v4359 = vpop.permute.xlu0 %4358
    %4360 = vrot.lane.b32.xlu0 %v3721, 56
    %v4361 = vpop.permute.xlu0 %4360
    %4362 = vrot.lane.b32.xlu0 %v4038, 56
    %v4363 = vpop.permute.xlu0 %4362
    %vm4364 = vcmask 457728
    %v4365 = vsel %vm4364, %v4337, %v4339
    %v4366 = vsel %vm4364, %v4339, %v4341
    %v4367 = vsel %vm4364, %v4341, %v4343
    %v4368 = vsel %vm4364, %v4343, %v4345
    %v4369 = vsel %vm4364, %v4345, %v4347
    %v4370 = vsel %vm4364, %v4347, %v4349
    %v4371 = vsel %vm4364, %v4349, %v4351
    %v4372 = vsel %vm4364, %v4351, %v4353
    %v4373 = vsel %vm4364, %v4353, %v4355
    %v4374 = vsel %vm4364, %v4355, %v4357
    %v4375 = vsel %vm4364, %v4357, %v4359
    %v4376 = vsel %vm4364, %v4359, %v4361
    %v4377 = vsel %vm4364, %v4361, %v4363
    %4391 = vst [vmem:[#allocation3 + $0x270] sm:$0xc0] %v4365
    %4392 = vst [vmem:[#allocation3 + $0x278] sm:$0xc0] %v4366
    %4393 = vst [vmem:[#allocation3 + $0x280] sm:$0xc0] %v4367
    %4394 = vst [vmem:[#allocation3 + $0x288] sm:$0xc0] %v4368
    %4395 = vst [vmem:[#allocation3 + $0x290] sm:$0xc0] %v4369
    %4396 = vst [vmem:[#allocation3 + $0x298] sm:$0xc0] %v4370
    %4397 = vst [vmem:[#allocation3 + $0x2a0] sm:$0xc0] %v4371
    %4398 = vst [vmem:[#allocation3 + $0x2a8] sm:$0xc0] %v4372
    %4399 = vst [vmem:[#allocation3 + $0x2b0] sm:$0xc0] %v4373
    %4400 = vst [vmem:[#allocation3 + $0x2b8] sm:$0xc0] %v4374
    %4401 = vst [vmem:[#allocation3 + $0x2c0] sm:$0xc0] %v4375
    %4402 = vst [vmem:[#allocation3 + $0x2c8] sm:$0xc0] %v4376
    %4403 = vst.msk [vmem:[#allocation3 + $0x2d0] sm:$0xc0] %vm3785, %v4377
    %4404 = vst [vmem:[#allocation3 + $0x2d8] sm:$0xf] %v4365
    %4405 = vst [vmem:[#allocation3 + $0x2e0] sm:$0xf] %v4366
    %4406 = vst [vmem:[#allocation3 + $0x2e8] sm:$0xf] %v4367
    %4407 = vst [vmem:[#allocation3 + $0x2f0] sm:$0xf] %v4368
    %4408 = vst [vmem:[#allocation3 + $0x2f8] sm:$0xf] %v4369
    %4409 = vst [vmem:[#allocation3 + $0x300] sm:$0xf] %v4370
    %4410 = vst [vmem:[#allocation3 + $0x308] sm:$0xf] %v4371
    %4411 = vst [vmem:[#allocation3 + $0x310] sm:$0xf] %v4372
    %4412 = vst [vmem:[#allocation3 + $0x318] sm:$0xf] %v4373
    %4413 = vst [vmem:[#allocation3 + $0x320] sm:$0xf] %v4374
    %4414 = vst [vmem:[#allocation3 + $0x328] sm:$0xf] %v4375
    %4415 = vst [vmem:[#allocation3 + $0x330] sm:$0xf] %v4376
    %4416 = vst.msk [vmem:[#allocation3 + $0x338] sm:$0xf] %vm3799, %v4377
    %4430 = vst [vmem:[#allocation3 + $0x2d8] sm:$0xf0] %v3802
    %4431 = vst [vmem:[#allocation3 + $0x2e0] sm:$0xf0] %v3803
    %4432 = vst [vmem:[#allocation3 + $0x2e8] sm:$0xf0] %v3804
    %4433 = vst [vmem:[#allocation3 + $0x2f0] sm:$0xf0] %v3805
    %4434 = vst [vmem:[#allocation3 + $0x2f8] sm:$0xf0] %v3806
    %4435 = vst [vmem:[#allocation3 + $0x300] sm:$0xf0] %v3807
    %4436 = vst [vmem:[#allocation3 + $0x308] sm:$0xf0] %v3808
    %4437 = vst [vmem:[#allocation3 + $0x310] sm:$0xf0] %v3809
    %4438 = vst [vmem:[#allocation3 + $0x318] sm:$0xf0] %v3810
    %4439 = vst [vmem:[#allocation3 + $0x320] sm:$0xf0] %v3811
    %4440 = vst [vmem:[#allocation3 + $0x328] sm:$0xf0] %v3812
    %4441 = vst [vmem:[#allocation3 + $0x330] sm:$0xf0] %v3813
    %4442 = vst.msk [vmem:[#allocation3 + $0x338] sm:$0xf0] %vm3877, %v4119
    %4443 = vst [vmem:[#allocation3 + $0x340] sm:$0x3] %v3802
    %4444 = vst [vmem:[#allocation3 + $0x348] sm:$0x3] %v3803
    %4445 = vst [vmem:[#allocation3 + $0x350] sm:$0x3] %v3804
    %4446 = vst [vmem:[#allocation3 + $0x358] sm:$0x3] %v3805
    %4447 = vst [vmem:[#allocation3 + $0x360] sm:$0x3] %v3806
    %4448 = vst [vmem:[#allocation3 + $0x368] sm:$0x3] %v3807
    %4449 = vst [vmem:[#allocation3 + $0x370] sm:$0x3] %v3808
    %4450 = vst [vmem:[#allocation3 + $0x378] sm:$0x3] %v3809
    %4451 = vst [vmem:[#allocation3 + $0x380] sm:$0x3] %v3810
    %4452 = vst [vmem:[#allocation3 + $0x388] sm:$0x3] %v3811
    %4453 = vst [vmem:[#allocation3 + $0x390] sm:$0x3] %v3812
    %4454 = vst [vmem:[#allocation3 + $0x398] sm:$0x3] %v3813
    %4455 = vst.msk [vmem:[#allocation3 + $0x3a0] sm:$0x3] %vm3891, %v4119
    %4456 = vrot.lane.b32.xlu0 %v3894, 126
    %v4457 = vpop.permute.xlu0 %4456
    %4458 = vrot.lane.b32.xlu0 %v3895, 126
    %v4459 = vpop.permute.xlu0 %4458
    %4460 = vrot.lane.b32.xlu0 %v3896, 126
    %v4461 = vpop.permute.xlu0 %4460
    %4462 = vrot.lane.b32.xlu0 %v3897, 126
    %v4463 = vpop.permute.xlu0 %4462
    %4464 = vrot.lane.b32.xlu0 %v3898, 126
    %v4465 = vpop.permute.xlu0 %4464
    %4466 = vrot.lane.b32.xlu0 %v3899, 126
    %v4467 = vpop.permute.xlu0 %4466
    %4468 = vrot.lane.b32.xlu0 %v3900, 126
    %v4469 = vpop.permute.xlu0 %4468
    %4470 = vrot.lane.b32.xlu0 %v3901, 126
    %v4471 = vpop.permute.xlu0 %4470
    %4472 = vrot.lane.b32.xlu0 %v3902, 126
    %v4473 = vpop.permute.xlu0 %4472
    %4474 = vrot.lane.b32.xlu0 %v3903, 126
    %v4475 = vpop.permute.xlu0 %4474
    %4476 = vrot.lane.b32.xlu0 %v3904, 126
    %v4477 = vpop.permute.xlu0 %4476
    %4478 = vrot.lane.b32.xlu0 %v3905, 126
    %v4479 = vpop.permute.xlu0 %4478
    %4480 = vrot.lane.b32.xlu0 %v4200, 126
    %v4481 = vpop.permute.xlu0 %4480
    %v4482 = vsel %vm315, %v4457, %v4459
    %v4483 = vsel %vm315, %v4459, %v4461
    %v4484 = vsel %vm315, %v4461, %v4463
    %v4485 = vsel %vm315, %v4463, %v4465
    %v4486 = vsel %vm315, %v4465, %v4467
    %v4487 = vsel %vm315, %v4467, %v4469
    %v4488 = vsel %vm315, %v4469, %v4471
    %v4489 = vsel %vm315, %v4471, %v4473
    %v4490 = vsel %vm315, %v4473, %v4475
    %v4491 = vsel %vm315, %v4475, %v4477
    %v4492 = vsel %vm315, %v4477, %v4479
    %v4493 = vsel %vm315, %v4479, %v4481
    %4507 = vst [vmem:[#allocation3 + $0x340] sm:$0xfc] %v4482
    %4508 = vst [vmem:[#allocation3 + $0x348] sm:$0xfc] %v4483
    %4509 = vst [vmem:[#allocation3 + $0x350] sm:$0xfc] %v4484
    %4510 = vst [vmem:[#allocation3 + $0x358] sm:$0xfc] %v4485
    %4511 = vst [vmem:[#allocation3 + $0x360] sm:$0xfc] %v4486
    %4512 = vst [vmem:[#allocation3 + $0x368] sm:$0xfc] %v4487
    %4513 = vst [vmem:[#allocation3 + $0x370] sm:$0xfc] %v4488
    %4514 = vst [vmem:[#allocation3 + $0x378] sm:$0xfc] %v4489
    %4515 = vst [vmem:[#allocation3 + $0x380] sm:$0xfc] %v4490
    %4516 = vst [vmem:[#allocation3 + $0x388] sm:$0xfc] %v4491
    %4517 = vst [vmem:[#allocation3 + $0x390] sm:$0xfc] %v4492
    %4518 = vst [vmem:[#allocation3 + $0x398] sm:$0xfc] %v4493
    %4519 = vst.msk [vmem:[#allocation3 + $0x3a0] sm:$0xfc] %vm3970, %v4481
    %4520 = vrot.lane.b32.xlu0 %v3668, 124
    %v4521 = vpop.permute.xlu0 %4520
    %4522 = vrot.lane.b32.xlu0 %v3669, 124
    %v4523 = vpop.permute.xlu0 %4522
    %4524 = vrot.lane.b32.xlu0 %v3670, 124
    %v4525 = vpop.permute.xlu0 %4524
    %4526 = vrot.lane.b32.xlu0 %v3671, 124
    %v4527 = vpop.permute.xlu0 %4526
    %4528 = vrot.lane.b32.xlu0 %v3672, 124
    %v4529 = vpop.permute.xlu0 %4528
    %4530 = vrot.lane.b32.xlu0 %v3673, 124
    %v4531 = vpop.permute.xlu0 %4530
    %4532 = vrot.lane.b32.xlu0 %v3674, 124
    %v4533 = vpop.permute.xlu0 %4532
    %4534 = vrot.lane.b32.xlu0 %v3675, 124
    %v4535 = vpop.permute.xlu0 %4534
    %4536 = vrot.lane.b32.xlu0 %v3676, 124
    %v4537 = vpop.permute.xlu0 %4536
    %4538 = vrot.lane.b32.xlu0 %v3677, 124
    %v4539 = vpop.permute.xlu0 %4538
    %4540 = vrot.lane.b32.xlu0 %v3678, 124
    %v4541 = vpop.permute.xlu0 %4540
    %4542 = vrot.lane.b32.xlu0 %v3679, 124
    %v4543 = vpop.permute.xlu0 %4542
    %4544 = vrot.lane.b32.xlu0 %v3680, 124
    %v4545 = vpop.permute.xlu0 %4544
    %v4546 = vsel %vm551, %v4521, %v4523
    %v4547 = vsel %vm551, %v4523, %v4525
    %v4548 = vsel %vm551, %v4525, %v4527
    %v4549 = vsel %vm551, %v4527, %v4529
    %v4550 = vsel %vm551, %v4529, %v4531
    %v4551 = vsel %vm551, %v4531, %v4533
    %v4552 = vsel %vm551, %v4533, %v4535
    %v4553 = vsel %vm551, %v4535, %v4537
    %v4554 = vsel %vm551, %v4537, %v4539
    %v4555 = vsel %vm551, %v4539, %v4541
    %v4556 = vsel %vm551, %v4541, %v4543
    %v4557 = vsel %vm551, %v4543, %v4545
    %4571 = vst [vmem:[#allocation3 + $0x3a8] sm:$0x3f] %v4546
    %4572 = vst [vmem:[#allocation3 + $0x3b0] sm:$0x3f] %v4547
    %4573 = vst [vmem:[#allocation3 + $0x3b8] sm:$0x3f] %v4548
    %4574 = vst [vmem:[#allocation3 + $0x3c0] sm:$0x3f] %v4549
    %4575 = vst [vmem:[#allocation3 + $0x3c8] sm:$0x3f] %v4550
    %4576 = vst [vmem:[#allocation3 + $0x3d0] sm:$0x3f] %v4551
    %4577 = vst [vmem:[#allocation3 + $0x3d8] sm:$0x3f] %v4552
    %4578 = vst [vmem:[#allocation3 + $0x3e0] sm:$0x3f] %v4553
    %4579 = vst [vmem:[#allocation3 + $0x3e8] sm:$0x3f] %v4554
    %4580 = vst [vmem:[#allocation3 + $0x3f0] sm:$0x3f] %v4555
    %4581 = vst [vmem:[#allocation3 + $0x3f8] sm:$0x3f] %v4556
    %4582 = vst [vmem:[#allocation3 + $0x400] sm:$0x3f] %v4557
    %4583 = vst.msk [vmem:[#allocation3 + $0x408] sm:$0x3f] %vm3694, %v4545
    %4584 = vrot.lane.b32.xlu0 %v3710, 122
    %v4585 = vpop.permute.xlu0 %4584
    %4586 = vrot.lane.b32.xlu0 %v3711, 122
    %v4587 = vpop.permute.xlu0 %4586
    %4588 = vrot.lane.b32.xlu0 %v3712, 122
    %v4589 = vpop.permute.xlu0 %4588
    %4590 = vrot.lane.b32.xlu0 %v3713, 122
    %v4591 = vpop.permute.xlu0 %4590
    %4592 = vrot.lane.b32.xlu0 %v3714, 122
    %v4593 = vpop.permute.xlu0 %4592
    %4594 = vrot.lane.b32.xlu0 %v3715, 122
    %v4595 = vpop.permute.xlu0 %4594
    %4596 = vrot.lane.b32.xlu0 %v3716, 122
    %v4597 = vpop.permute.xlu0 %4596
    %4598 = vrot.lane.b32.xlu0 %v3717, 122
    %v4599 = vpop.permute.xlu0 %4598
    %4600 = vrot.lane.b32.xlu0 %v3718, 122
    %v4601 = vpop.permute.xlu0 %4600
    %4602 = vrot.lane.b32.xlu0 %v3719, 122
    %v4603 = vpop.permute.xlu0 %4602
    %4604 = vrot.lane.b32.xlu0 %v3720, 122
    %v4605 = vpop.permute.xlu0 %4604
    %4606 = vrot.lane.b32.xlu0 %v3721, 122
    %v4607 = vpop.permute.xlu0 %4606
    %4608 = vrot.lane.b32.xlu0 %v4038, 122
    %v4609 = vpop.permute.xlu0 %4608
    %v4610 = vsel %vm3932, %v4585, %v4587
    %v4611 = vsel %vm3932, %v4587, %v4589
    %v4612 = vsel %vm3932, %v4589, %v4591
    %v4613 = vsel %vm3932, %v4591, %v4593
    %v4614 = vsel %vm3932, %v4593, %v4595
    %v4615 = vsel %vm3932, %v4595, %v4597
    %v4616 = vsel %vm3932, %v4597, %v4599
    %v4617 = vsel %vm3932, %v4599, %v4601
    %v4618 = vsel %vm3932, %v4601, %v4603
    %v4619 = vsel %vm3932, %v4603, %v4605
    %v4620 = vsel %vm3932, %v4605, %v4607
    %v4621 = vsel %vm3932, %v4607, %v4609
    %4635 = vst [vmem:[#allocation3 + $0x3a8] sm:$0xc0] %v4610
    %4636 = vst [vmem:[#allocation3 + $0x3b0] sm:$0xc0] %v4611
    %4637 = vst [vmem:[#allocation3 + $0x3b8] sm:$0xc0] %v4612
    %4638 = vst [vmem:[#allocation3 + $0x3c0] sm:$0xc0] %v4613
    %4639 = vst [vmem:[#allocation3 + $0x3c8] sm:$0xc0] %v4614
    %4640 = vst [vmem:[#allocation3 + $0x3d0] sm:$0xc0] %v4615
    %4641 = vst [vmem:[#allocation3 + $0x3d8] sm:$0xc0] %v4616
    %4642 = vst [vmem:[#allocation3 + $0x3e0] sm:$0xc0] %v4617
    %4643 = vst [vmem:[#allocation3 + $0x3e8] sm:$0xc0] %v4618
    %4644 = vst [vmem:[#allocation3 + $0x3f0] sm:$0xc0] %v4619
    %4645 = vst [vmem:[#allocation3 + $0x3f8] sm:$0xc0] %v4620
    %4646 = vst [vmem:[#allocation3 + $0x400] sm:$0xc0] %v4621
    %4647 = vst.msk [vmem:[#allocation3 + $0x408] sm:$0xc0] %vm3785, %v4609
    %4648 = vst [vmem:[#allocation3 + $0x410] sm:$0xf] %v4610
    %4649 = vst [vmem:[#allocation3 + $0x418] sm:$0xf] %v4611
    %4650 = vst [vmem:[#allocation3 + $0x420] sm:$0xf] %v4612
    %4651 = vst [vmem:[#allocation3 + $0x428] sm:$0xf] %v4613
    %4652 = vst [vmem:[#allocation3 + $0x430] sm:$0xf] %v4614
    %4653 = vst [vmem:[#allocation3 + $0x438] sm:$0xf] %v4615
    %4654 = vst [vmem:[#allocation3 + $0x440] sm:$0xf] %v4616
    %4655 = vst [vmem:[#allocation3 + $0x448] sm:$0xf] %v4617
    %4656 = vst [vmem:[#allocation3 + $0x450] sm:$0xf] %v4618
    %4657 = vst [vmem:[#allocation3 + $0x458] sm:$0xf] %v4619
    %4658 = vst [vmem:[#allocation3 + $0x460] sm:$0xf] %v4620
    %4659 = vst [vmem:[#allocation3 + $0x468] sm:$0xf] %v4621
    %4660 = vst.msk [vmem:[#allocation3 + $0x470] sm:$0xf] %vm3799, %v4609
    %4661 = vrot.lane.b32.xlu0 %v3802, 120
    %v4662 = vpop.permute.xlu0 %4661
    %4663 = vrot.lane.b32.xlu0 %v3803, 120
    %v4664 = vpop.permute.xlu0 %4663
    %4665 = vrot.lane.b32.xlu0 %v3804, 120
    %v4666 = vpop.permute.xlu0 %4665
    %4667 = vrot.lane.b32.xlu0 %v3805, 120
    %v4668 = vpop.permute.xlu0 %4667
    %4669 = vrot.lane.b32.xlu0 %v3806, 120
    %v4670 = vpop.permute.xlu0 %4669
    %4671 = vrot.lane.b32.xlu0 %v3807, 120
    %v4672 = vpop.permute.xlu0 %4671
    %4673 = vrot.lane.b32.xlu0 %v3808, 120
    %v4674 = vpop.permute.xlu0 %4673
    %4675 = vrot.lane.b32.xlu0 %v3809, 120
    %v4676 = vpop.permute.xlu0 %4675
    %4677 = vrot.lane.b32.xlu0 %v3810, 120
    %v4678 = vpop.permute.xlu0 %4677
    %4679 = vrot.lane.b32.xlu0 %v3811, 120
    %v4680 = vpop.permute.xlu0 %4679
    %4681 = vrot.lane.b32.xlu0 %v3812, 120
    %v4682 = vpop.permute.xlu0 %4681
    %4683 = vrot.lane.b32.xlu0 %v3813, 120
    %v4684 = vpop.permute.xlu0 %4683
    %4685 = vrot.lane.b32.xlu0 %v4119, 120
    %v4686 = vpop.permute.xlu0 %4685
    %v4687 = vsel %vm3998, %v4662, %v4664
    %v4688 = vsel %vm3998, %v4664, %v4666
    %v4689 = vsel %vm3998, %v4666, %v4668
    %v4690 = vsel %vm3998, %v4668, %v4670
    %v4691 = vsel %vm3998, %v4670, %v4672
    %v4692 = vsel %vm3998, %v4672, %v4674
    %v4693 = vsel %vm3998, %v4674, %v4676
    %v4694 = vsel %vm3998, %v4676, %v4678
    %v4695 = vsel %vm3998, %v4678, %v4680
    %v4696 = vsel %vm3998, %v4680, %v4682
    %v4697 = vsel %vm3998, %v4682, %v4684
    %v4698 = vsel %vm3998, %v4684, %v4686
    %4712 = vst [vmem:[#allocation3 + $0x410] sm:$0xf0] %v4687
    %4713 = vst [vmem:[#allocation3 + $0x418] sm:$0xf0] %v4688
    %4714 = vst [vmem:[#allocation3 + $0x420] sm:$0xf0] %v4689
    %4715 = vst [vmem:[#allocation3 + $0x428] sm:$0xf0] %v4690
    %4716 = vst [vmem:[#allocation3 + $0x430] sm:$0xf0] %v4691
    %4717 = vst [vmem:[#allocation3 + $0x438] sm:$0xf0] %v4692
    %4718 = vst [vmem:[#allocation3 + $0x440] sm:$0xf0] %v4693
    %4719 = vst [vmem:[#allocation3 + $0x448] sm:$0xf0] %v4694
    %4720 = vst [vmem:[#allocation3 + $0x450] sm:$0xf0] %v4695
    %4721 = vst [vmem:[#allocation3 + $0x458] sm:$0xf0] %v4696
    %4722 = vst [vmem:[#allocation3 + $0x460] sm:$0xf0] %v4697
    %4723 = vst [vmem:[#allocation3 + $0x468] sm:$0xf0] %v4698
    %4724 = vst.msk [vmem:[#allocation3 + $0x470] sm:$0xf0] %vm3877, %v4686
    %4725 = vst [vmem:[#allocation3 + $0x478] sm:$0x3] %v4687
    %4726 = vst [vmem:[#allocation3 + $0x480] sm:$0x3] %v4688
    %4727 = vst [vmem:[#allocation3 + $0x488] sm:$0x3] %v4689
    %4728 = vst [vmem:[#allocation3 + $0x490] sm:$0x3] %v4690
    %4729 = vst [vmem:[#allocation3 + $0x498] sm:$0x3] %v4691
    %4730 = vst [vmem:[#allocation3 + $0x4a0] sm:$0x3] %v4692
    %4731 = vst [vmem:[#allocation3 + $0x4a8] sm:$0x3] %v4693
    %4732 = vst [vmem:[#allocation3 + $0x4b0] sm:$0x3] %v4694
    %4733 = vst [vmem:[#allocation3 + $0x4b8] sm:$0x3] %v4695
    %4734 = vst [vmem:[#allocation3 + $0x4c0] sm:$0x3] %v4696
    %4735 = vst [vmem:[#allocation3 + $0x4c8] sm:$0x3] %v4697
    %4736 = vst [vmem:[#allocation3 + $0x4d0] sm:$0x3] %v4698
    %4737 = vst.msk [vmem:[#allocation3 + $0x4d8] sm:$0x3] %vm3891, %v4686
    %v4739 = vrot.slane %v3681, 6
    %4740 = vrot.lane.b32.xlu0 %v3894, 64
    %v4741 = vpop.permute.xlu0 %4740
    %4742 = vrot.lane.b32.xlu0 %v3895, 64
    %v4743 = vpop.permute.xlu0 %4742
    %4744 = vrot.lane.b32.xlu0 %v3896, 64
    %v4745 = vpop.permute.xlu0 %4744
    %4746 = vrot.lane.b32.xlu0 %v3897, 64
    %v4747 = vpop.permute.xlu0 %4746
    %4748 = vrot.lane.b32.xlu0 %v3898, 64
    %v4749 = vpop.permute.xlu0 %4748
    %4750 = vrot.lane.b32.xlu0 %v3899, 64
    %v4751 = vpop.permute.xlu0 %4750
    %4752 = vrot.lane.b32.xlu0 %v3900, 64
    %v4753 = vpop.permute.xlu0 %4752
    %4754 = vrot.lane.b32.xlu0 %v3901, 64
    %v4755 = vpop.permute.xlu0 %4754
    %4756 = vrot.lane.b32.xlu0 %v3902, 64
    %v4757 = vpop.permute.xlu0 %4756
    %4758 = vrot.lane.b32.xlu0 %v3903, 64
    %v4759 = vpop.permute.xlu0 %4758
    %4760 = vrot.lane.b32.xlu0 %v3904, 64
    %v4761 = vpop.permute.xlu0 %4760
    %4762 = vrot.lane.b32.xlu0 %v3905, 64
    %v4763 = vpop.permute.xlu0 %4762
    %4764 = vrot.lane.b32.xlu0 %v4200, 64
    %v4765 = vpop.permute.xlu0 %4764
    %4766 = vrot.lane.b32.xlu0 %v4739, 64
    %v4767 = vpop.permute.xlu0 %4766
    %v4768 = vsel %vm1280, %v4741, %v4743
    %v4769 = vsel %vm1280, %v4743, %v4745
    %v4770 = vsel %vm1280, %v4745, %v4747
    %v4771 = vsel %vm1280, %v4747, %v4749
    %v4772 = vsel %vm1280, %v4749, %v4751
    %v4773 = vsel %vm1280, %v4751, %v4753
    %v4774 = vsel %vm1280, %v4753, %v4755
    %v4775 = vsel %vm1280, %v4755, %v4757
    %v4776 = vsel %vm1280, %v4757, %v4759
    %v4777 = vsel %vm1280, %v4759, %v4761
    %v4778 = vsel %vm1280, %v4761, %v4763
    %v4779 = vsel %vm1280, %v4763, %v4765
    %v4780 = vsel %vm1280, %v4765, %v4767
    %4794 = vst [vmem:[#allocation3 + $0x478] sm:$0xfc] %v4768
    %4795 = vst [vmem:[#allocation3 + $0x480] sm:$0xfc] %v4769
    %4796 = vst [vmem:[#allocation3 + $0x488] sm:$0xfc] %v4770
    %4797 = vst [vmem:[#allocation3 + $0x490] sm:$0xfc] %v4771
    %4798 = vst [vmem:[#allocation3 + $0x498] sm:$0xfc] %v4772
    %4799 = vst [vmem:[#allocation3 + $0x4a0] sm:$0xfc] %v4773
    %4800 = vst [vmem:[#allocation3 + $0x4a8] sm:$0xfc] %v4774
    %4801 = vst [vmem:[#allocation3 + $0x4b0] sm:$0xfc] %v4775
    %4802 = vst [vmem:[#allocation3 + $0x4b8] sm:$0xfc] %v4776
    %4803 = vst [vmem:[#allocation3 + $0x4c0] sm:$0xfc] %v4777
    %4804 = vst [vmem:[#allocation3 + $0x4c8] sm:$0xfc] %v4778
    %4805 = vst [vmem:[#allocation3 + $0x4d0] sm:$0xfc] %v4779
    %4806 = vst.msk [vmem:[#allocation3 + $0x4d8] sm:$0xfc] %vm3970, %v4780
    %4807 = vrot.lane.b32.xlu0 %v3668, 62
    %v4808 = vpop.permute.xlu0 %4807
    %4809 = vrot.lane.b32.xlu0 %v3669, 62
    %v4810 = vpop.permute.xlu0 %4809
    %4811 = vrot.lane.b32.xlu0 %v3670, 62
    %v4812 = vpop.permute.xlu0 %4811
    %4813 = vrot.lane.b32.xlu0 %v3671, 62
    %v4814 = vpop.permute.xlu0 %4813
    %4815 = vrot.lane.b32.xlu0 %v3672, 62
    %v4816 = vpop.permute.xlu0 %4815
    %4817 = vrot.lane.b32.xlu0 %v3673, 62
    %v4818 = vpop.permute.xlu0 %4817
    %4819 = vrot.lane.b32.xlu0 %v3674, 62
    %v4820 = vpop.permute.xlu0 %4819
    %4821 = vrot.lane.b32.xlu0 %v3675, 62
    %v4822 = vpop.permute.xlu0 %4821
    %4823 = vrot.lane.b32.xlu0 %v3676, 62
    %v4824 = vpop.permute.xlu0 %4823
    %4825 = vrot.lane.b32.xlu0 %v3677, 62
    %v4826 = vpop.permute.xlu0 %4825
    %4827 = vrot.lane.b32.xlu0 %v3678, 62
    %v4828 = vpop.permute.xlu0 %4827
    %4829 = vrot.lane.b32.xlu0 %v3679, 62
    %v4830 = vpop.permute.xlu0 %4829
    %4831 = vrot.lane.b32.xlu0 %v3680, 62
    %v4832 = vpop.permute.xlu0 %4831
    %4833 = vrot.lane.b32.xlu0 %v3681, 62
    %v4834 = vpop.permute.xlu0 %4833
    %v4835 = vsel %vm1522, %v4808, %v4810
    %v4836 = vsel %vm1522, %v4810, %v4812
    %v4837 = vsel %vm1522, %v4812, %v4814
    %v4838 = vsel %vm1522, %v4814, %v4816
    %v4839 = vsel %vm1522, %v4816, %v4818
    %v4840 = vsel %vm1522, %v4818, %v4820
    %v4841 = vsel %vm1522, %v4820, %v4822
    %v4842 = vsel %vm1522, %v4822, %v4824
    %v4843 = vsel %vm1522, %v4824, %v4826
    %v4844 = vsel %vm1522, %v4826, %v4828
    %v4845 = vsel %vm1522, %v4828, %v4830
    %v4846 = vsel %vm1522, %v4830, %v4832
    %v4847 = vsel %vm1522, %v4832, %v4834
    %4861 = vst [vmem:[#allocation3 + $0x4e0] sm:$0x3f] %v4835
    %4862 = vst [vmem:[#allocation3 + $0x4e8] sm:$0x3f] %v4836
    %4863 = vst [vmem:[#allocation3 + $0x4f0] sm:$0x3f] %v4837
    %4864 = vst [vmem:[#allocation3 + $0x4f8] sm:$0x3f] %v4838
    %4865 = vst [vmem:[#allocation3 + $0x500] sm:$0x3f] %v4839
    %4866 = vst [vmem:[#allocation3 + $0x508] sm:$0x3f] %v4840
    %4867 = vst [vmem:[#allocation3 + $0x510] sm:$0x3f] %v4841
    %4868 = vst [vmem:[#allocation3 + $0x518] sm:$0x3f] %v4842
    %4869 = vst [vmem:[#allocation3 + $0x520] sm:$0x3f] %v4843
    %4870 = vst [vmem:[#allocation3 + $0x528] sm:$0x3f] %v4844
    %4871 = vst [vmem:[#allocation3 + $0x530] sm:$0x3f] %v4845
    %4872 = vst [vmem:[#allocation3 + $0x538] sm:$0x3f] %v4846
    %4873 = vst.msk [vmem:[#allocation3 + $0x540] sm:$0x3f] %vm3694, %v4847
    %v4874 = vrot.slane %v3681, 2
    %4875 = vrot.lane.b32.xlu0 %v3710, 60
    %v4876 = vpop.permute.xlu0 %4875
    %4877 = vrot.lane.b32.xlu0 %v3711, 60
    %v4878 = vpop.permute.xlu0 %4877
    %4879 = vrot.lane.b32.xlu0 %v3712, 60
    %v4880 = vpop.permute.xlu0 %4879
    %4881 = vrot.lane.b32.xlu0 %v3713, 60
    %v4882 = vpop.permute.xlu0 %4881
    %4883 = vrot.lane.b32.xlu0 %v3714, 60
    %v4884 = vpop.permute.xlu0 %4883
    %4885 = vrot.lane.b32.xlu0 %v3715, 60
    %v4886 = vpop.permute.xlu0 %4885
    %4887 = vrot.lane.b32.xlu0 %v3716, 60
    %v4888 = vpop.permute.xlu0 %4887
    %4889 = vrot.lane.b32.xlu0 %v3717, 60
    %v4890 = vpop.permute.xlu0 %4889
    %4891 = vrot.lane.b32.xlu0 %v3718, 60
    %v4892 = vpop.permute.xlu0 %4891
    %4893 = vrot.lane.b32.xlu0 %v3719, 60
    %v4894 = vpop.permute.xlu0 %4893
    %4895 = vrot.lane.b32.xlu0 %v3720, 60
    %v4896 = vpop.permute.xlu0 %4895
    %4897 = vrot.lane.b32.xlu0 %v3721, 60
    %v4898 = vpop.permute.xlu0 %4897
    %4899 = vrot.lane.b32.xlu0 %v4038, 60
    %v4900 = vpop.permute.xlu0 %4899
    %4901 = vrot.lane.b32.xlu0 %v4874, 60
    %v4902 = vpop.permute.xlu0 %4901
    %v4903 = vsel %vm1779, %v4876, %v4878
    %v4904 = vsel %vm1779, %v4878, %v4880
    %v4905 = vsel %vm1779, %v4880, %v4882
    %v4906 = vsel %vm1779, %v4882, %v4884
    %v4907 = vsel %vm1779, %v4884, %v4886
    %v4908 = vsel %vm1779, %v4886, %v4888
    %v4909 = vsel %vm1779, %v4888, %v4890
    %v4910 = vsel %vm1779, %v4890, %v4892
    %v4911 = vsel %vm1779, %v4892, %v4894
    %v4912 = vsel %vm1779, %v4894, %v4896
    %v4913 = vsel %vm1779, %v4896, %v4898
    %v4914 = vsel %vm1779, %v4898, %v4900
    %v4915 = vsel %vm1779, %v4900, %v4902
    %4929 = vst [vmem:[#allocation3 + $0x4e0] sm:$0xc0] %v4903
    %4930 = vst [vmem:[#allocation3 + $0x4e8] sm:$0xc0] %v4904
    %4931 = vst [vmem:[#allocation3 + $0x4f0] sm:$0xc0] %v4905
    %4932 = vst [vmem:[#allocation3 + $0x4f8] sm:$0xc0] %v4906
    %4933 = vst [vmem:[#allocation3 + $0x500] sm:$0xc0] %v4907
    %4934 = vst [vmem:[#allocation3 + $0x508] sm:$0xc0] %v4908
    %4935 = vst [vmem:[#allocation3 + $0x510] sm:$0xc0] %v4909
    %4936 = vst [vmem:[#allocation3 + $0x518] sm:$0xc0] %v4910
    %4937 = vst [vmem:[#allocation3 + $0x520] sm:$0xc0] %v4911
    %4938 = vst [vmem:[#allocation3 + $0x528] sm:$0xc0] %v4912
    %4939 = vst [vmem:[#allocation3 + $0x530] sm:$0xc0] %v4913
    %4940 = vst [vmem:[#allocation3 + $0x538] sm:$0xc0] %v4914
    %4941 = vst.msk [vmem:[#allocation3 + $0x540] sm:$0xc0] %vm3785, %v4915
    %4942 = vst [vmem:[#allocation3 + $0x548] sm:$0xf] %v4903
    %4943 = vst [vmem:[#allocation3 + $0x550] sm:$0xf] %v4904
    %4944 = vst [vmem:[#allocation3 + $0x558] sm:$0xf] %v4905
    %4945 = vst [vmem:[#allocation3 + $0x560] sm:$0xf] %v4906
    %4946 = vst [vmem:[#allocation3 + $0x568] sm:$0xf] %v4907
    %4947 = vst [vmem:[#allocation3 + $0x570] sm:$0xf] %v4908
    %4948 = vst [vmem:[#allocation3 + $0x578] sm:$0xf] %v4909
    %4949 = vst [vmem:[#allocation3 + $0x580] sm:$0xf] %v4910
    %4950 = vst [vmem:[#allocation3 + $0x588] sm:$0xf] %v4911
    %4951 = vst [vmem:[#allocation3 + $0x590] sm:$0xf] %v4912
    %4952 = vst [vmem:[#allocation3 + $0x598] sm:$0xf] %v4913
    %4953 = vst [vmem:[#allocation3 + $0x5a0] sm:$0xf] %v4914
    %4954 = vst.msk [vmem:[#allocation3 + $0x5a8] sm:$0xf] %vm3799, %v4915
    %v4955 = vrot.slane %v3681, 4
    %4956 = vrot.lane.b32.xlu0 %v3802, 58
    %v4957 = vpop.permute.xlu0 %4956
    %4958 = vrot.lane.b32.xlu0 %v3803, 58
    %v4959 = vpop.permute.xlu0 %4958
    %4960 = vrot.lane.b32.xlu0 %v3804, 58
    %v4961 = vpop.permute.xlu0 %4960
    %4962 = vrot.lane.b32.xlu0 %v3805, 58
    %v4963 = vpop.permute.xlu0 %4962
    %4964 = vrot.lane.b32.xlu0 %v3806, 58
    %v4965 = vpop.permute.xlu0 %4964
    %4966 = vrot.lane.b32.xlu0 %v3807, 58
    %v4967 = vpop.permute.xlu0 %4966
    %4968 = vrot.lane.b32.xlu0 %v3808, 58
    %v4969 = vpop.permute.xlu0 %4968
    %4970 = vrot.lane.b32.xlu0 %v3809, 58
    %v4971 = vpop.permute.xlu0 %4970
    %4972 = vrot.lane.b32.xlu0 %v3810, 58
    %v4973 = vpop.permute.xlu0 %4972
    %4974 = vrot.lane.b32.xlu0 %v3811, 58
    %v4975 = vpop.permute.xlu0 %4974
    %4976 = vrot.lane.b32.xlu0 %v3812, 58
    %v4977 = vpop.permute.xlu0 %4976
    %4978 = vrot.lane.b32.xlu0 %v3813, 58
    %v4979 = vpop.permute.xlu0 %4978
    %4980 = vrot.lane.b32.xlu0 %v4119, 58
    %v4981 = vpop.permute.xlu0 %4980
    %4982 = vrot.lane.b32.xlu0 %v4955, 58
    %v4983 = vpop.permute.xlu0 %4982
    %v4984 = vsel %vm4296, %v4957, %v4959
    %v4985 = vsel %vm4296, %v4959, %v4961
    %v4986 = vsel %vm4296, %v4961, %v4963
    %v4987 = vsel %vm4296, %v4963, %v4965
    %v4988 = vsel %vm4296, %v4965, %v4967
    %v4989 = vsel %vm4296, %v4967, %v4969
    %v4990 = vsel %vm4296, %v4969, %v4971
    %v4991 = vsel %vm4296, %v4971, %v4973
    %v4992 = vsel %vm4296, %v4973, %v4975
    %v4993 = vsel %vm4296, %v4975, %v4977
    %v4994 = vsel %vm4296, %v4977, %v4979
    %v4995 = vsel %vm4296, %v4979, %v4981
    %v4996 = vsel %vm4296, %v4981, %v4983
    %5010 = vst [vmem:[#allocation3 + $0x548] sm:$0xf0] %v4984
    %5011 = vst [vmem:[#allocation3 + $0x550] sm:$0xf0] %v4985
    %5012 = vst [vmem:[#allocation3 + $0x558] sm:$0xf0] %v4986
    %5013 = vst [vmem:[#allocation3 + $0x560] sm:$0xf0] %v4987
    %5014 = vst [vmem:[#allocation3 + $0x568] sm:$0xf0] %v4988
    %5015 = vst [vmem:[#allocation3 + $0x570] sm:$0xf0] %v4989
    %5016 = vst [vmem:[#allocation3 + $0x578] sm:$0xf0] %v4990
    %5017 = vst [vmem:[#allocation3 + $0x580] sm:$0xf0] %v4991
    %5018 = vst [vmem:[#allocation3 + $0x588] sm:$0xf0] %v4992
    %5019 = vst [vmem:[#allocation3 + $0x590] sm:$0xf0] %v4993
    %5020 = vst [vmem:[#allocation3 + $0x598] sm:$0xf0] %v4994
    %5021 = vst [vmem:[#allocation3 + $0x5a0] sm:$0xf0] %v4995
    %5022 = vst.msk [vmem:[#allocation3 + $0x5a8] sm:$0xf0] %vm3877, %v4996
    %5023 = vst [vmem:[#allocation3 + $0x5b0] sm:$0x3] %v4984
    %5024 = vst [vmem:[#allocation3 + $0x5b8] sm:$0x3] %v4985
    %5025 = vst [vmem:[#allocation3 + $0x5c0] sm:$0x3] %v4986
    %5026 = vst [vmem:[#allocation3 + $0x5c8] sm:$0x3] %v4987
    %5027 = vst [vmem:[#allocation3 + $0x5d0] sm:$0x3] %v4988
    %5028 = vst [vmem:[#allocation3 + $0x5d8] sm:$0x3] %v4989
    %5029 = vst [vmem:[#allocation3 + $0x5e0] sm:$0x3] %v4990
    %5030 = vst [vmem:[#allocation3 + $0x5e8] sm:$0x3] %v4991
    %5031 = vst [vmem:[#allocation3 + $0x5f0] sm:$0x3] %v4992
    %5032 = vst [vmem:[#allocation3 + $0x5f8] sm:$0x3] %v4993
    %5033 = vst [vmem:[#allocation3 + $0x600] sm:$0x3] %v4994
    %5034 = vst [vmem:[#allocation3 + $0x608] sm:$0x3] %v4995
    %5035 = vst.msk [vmem:[#allocation3 + $0x610] sm:$0x3] %vm3891, %v4996
    %5036 = vrot.lane.b32.xlu0 %v3894, 56
    %v5037 = vpop.permute.xlu0 %5036
    %5038 = vrot.lane.b32.xlu0 %v3895, 56
    %v5039 = vpop.permute.xlu0 %5038
    %5040 = vrot.lane.b32.xlu0 %v3896, 56
    %v5041 = vpop.permute.xlu0 %5040
    %5042 = vrot.lane.b32.xlu0 %v3897, 56
    %v5043 = vpop.permute.xlu0 %5042
    %5044 = vrot.lane.b32.xlu0 %v3898, 56
    %v5045 = vpop.permute.xlu0 %5044
    %5046 = vrot.lane.b32.xlu0 %v3899, 56
    %v5047 = vpop.permute.xlu0 %5046
    %5048 = vrot.lane.b32.xlu0 %v3900, 56
    %v5049 = vpop.permute.xlu0 %5048
    %5050 = vrot.lane.b32.xlu0 %v3901, 56
    %v5051 = vpop.permute.xlu0 %5050
    %5052 = vrot.lane.b32.xlu0 %v3902, 56
    %v5053 = vpop.permute.xlu0 %5052
    %5054 = vrot.lane.b32.xlu0 %v3903, 56
    %v5055 = vpop.permute.xlu0 %5054
    %5056 = vrot.lane.b32.xlu0 %v3904, 56
    %v5057 = vpop.permute.xlu0 %5056
    %5058 = vrot.lane.b32.xlu0 %v3905, 56
    %v5059 = vpop.permute.xlu0 %5058
    %5060 = vrot.lane.b32.xlu0 %v4200, 56
    %v5061 = vpop.permute.xlu0 %5060
    %5062 = vrot.lane.b32.xlu0 %v4739, 56
    %v5063 = vpop.permute.xlu0 %5062
    %v5064 = vsel %vm4364, %v5037, %v5039
    %v5065 = vsel %vm4364, %v5039, %v5041
    %v5066 = vsel %vm4364, %v5041, %v5043
    %v5067 = vsel %vm4364, %v5043, %v5045
    %v5068 = vsel %vm4364, %v5045, %v5047
    %v5069 = vsel %vm4364, %v5047, %v5049
    %v5070 = vsel %vm4364, %v5049, %v5051
    %v5071 = vsel %vm4364, %v5051, %v5053
    %v5072 = vsel %vm4364, %v5053, %v5055
    %v5073 = vsel %vm4364, %v5055, %v5057
    %v5074 = vsel %vm4364, %v5057, %v5059
    %v5075 = vsel %vm4364, %v5059, %v5061
    %v5076 = vsel %vm4364, %v5061, %v5063
    %5090 = vst [vmem:[#allocation3 + $0x5b0] sm:$0xfc] %v5064
    %5091 = vst [vmem:[#allocation3 + $0x5b8] sm:$0xfc] %v5065
    %5092 = vst [vmem:[#allocation3 + $0x5c0] sm:$0xfc] %v5066
    %5093 = vst [vmem:[#allocation3 + $0x5c8] sm:$0xfc] %v5067
    %5094 = vst [vmem:[#allocation3 + $0x5d0] sm:$0xfc] %v5068
    %5095 = vst [vmem:[#allocation3 + $0x5d8] sm:$0xfc] %v5069
    %5096 = vst [vmem:[#allocation3 + $0x5e0] sm:$0xfc] %v5070
    %5097 = vst [vmem:[#allocation3 + $0x5e8] sm:$0xfc] %v5071
    %5098 = vst [vmem:[#allocation3 + $0x5f0] sm:$0xfc] %v5072
    %5099 = vst [vmem:[#allocation3 + $0x5f8] sm:$0xfc] %v5073
    %5100 = vst [vmem:[#allocation3 + $0x600] sm:$0xfc] %v5074
    %5101 = vst [vmem:[#allocation3 + $0x608] sm:$0xfc] %v5075
    %5102 = vst.msk [vmem:[#allocation3 + $0x610] sm:$0xfc] %vm3970, %v5076
    %5103 = vst [vmem:[#allocation3 + $0x618] sm:$0x3f] %v3669
    %5104 = vst [vmem:[#allocation3 + $0x620] sm:$0x3f] %v3670
    %5105 = vst [vmem:[#allocation3 + $0x628] sm:$0x3f] %v3671
    %5106 = vst [vmem:[#allocation3 + $0x630] sm:$0x3f] %v3672
    %5107 = vst [vmem:[#allocation3 + $0x638] sm:$0x3f] %v3673
    %5108 = vst [vmem:[#allocation3 + $0x640] sm:$0x3f] %v3674
    %5109 = vst [vmem:[#allocation3 + $0x648] sm:$0x3f] %v3675
    %5110 = vst [vmem:[#allocation3 + $0x650] sm:$0x3f] %v3676
    %5111 = vst [vmem:[#allocation3 + $0x658] sm:$0x3f] %v3677
    %5112 = vst [vmem:[#allocation3 + $0x660] sm:$0x3f] %v3678
    %5113 = vst [vmem:[#allocation3 + $0x668] sm:$0x3f] %v3679
    %5114 = vst [vmem:[#allocation3 + $0x670] sm:$0x3f] %v3680
    %5115 = vst.msk [vmem:[#allocation3 + $0x678] sm:$0x3f] %vm3694, %v3681
    %5116 = vrot.lane.b32.xlu0 %v4038, 126
    %v5117 = vpop.permute.xlu0 %5116
    %5118 = vrot.lane.b32.xlu0 %v4874, 126
    %v5119 = vpop.permute.xlu0 %5118
    %v5120 = vsel %vm315, %v3747, %v5117
    %v5121 = vsel %vm315, %v5117, %v5119
    %5125 = vst [vmem:[#allocation3 + $0x618] sm:$0xc0] %v3750
    %5126 = vst [vmem:[#allocation3 + $0x620] sm:$0xc0] %v3751
    %5127 = vst [vmem:[#allocation3 + $0x628] sm:$0xc0] %v3752
    %5128 = vst [vmem:[#allocation3 + $0x630] sm:$0xc0] %v3753
    %5129 = vst [vmem:[#allocation3 + $0x638] sm:$0xc0] %v3754
    %5130 = vst [vmem:[#allocation3 + $0x640] sm:$0xc0] %v3755
    %5131 = vst [vmem:[#allocation3 + $0x648] sm:$0xc0] %v3756
    %5132 = vst [vmem:[#allocation3 + $0x650] sm:$0xc0] %v3757
    %5133 = vst [vmem:[#allocation3 + $0x658] sm:$0xc0] %v3758
    %5134 = vst [vmem:[#allocation3 + $0x660] sm:$0xc0] %v3759
    %5135 = vst [vmem:[#allocation3 + $0x668] sm:$0xc0] %v5120
    %5136 = vst [vmem:[#allocation3 + $0x670] sm:$0xc0] %v5121
    %5137 = vst.msk [vmem:[#allocation3 + $0x678] sm:$0xc0] %vm3785, %v5119
    %5138 = vst [vmem:[#allocation3 + $0x680] sm:$0xf] %v3750
    %5139 = vst [vmem:[#allocation3 + $0x688] sm:$0xf] %v3751
    %5140 = vst [vmem:[#allocation3 + $0x690] sm:$0xf] %v3752
    %5141 = vst [vmem:[#allocation3 + $0x698] sm:$0xf] %v3753
    %5142 = vst [vmem:[#allocation3 + $0x6a0] sm:$0xf] %v3754
    %5143 = vst [vmem:[#allocation3 + $0x6a8] sm:$0xf] %v3755
    %5144 = vst [vmem:[#allocation3 + $0x6b0] sm:$0xf] %v3756
    %5145 = vst [vmem:[#allocation3 + $0x6b8] sm:$0xf] %v3757
    %5146 = vst [vmem:[#allocation3 + $0x6c0] sm:$0xf] %v3758
    %5147 = vst [vmem:[#allocation3 + $0x6c8] sm:$0xf] %v3759
    %5148 = vst [vmem:[#allocation3 + $0x6d0] sm:$0xf] %v5120
    %5149 = vst [vmem:[#allocation3 + $0x6d8] sm:$0xf] %v5121
    %5150 = vst.msk [vmem:[#allocation3 + $0x6e0] sm:$0xf] %vm3799, %v5119
    %5151 = vrot.lane.b32.xlu0 %v4119, 124
    %v5152 = vpop.permute.xlu0 %5151
    %5153 = vrot.lane.b32.xlu0 %v4955, 124
    %v5154 = vpop.permute.xlu0 %5153
    %v5155 = vsel %vm551, %v3839, %v5152
    %v5156 = vsel %vm551, %v5152, %v5154
    %5160 = vst [vmem:[#allocation3 + $0x680] sm:$0xf0] %v3842
    %5161 = vst [vmem:[#allocation3 + $0x688] sm:$0xf0] %v3843
    %5162 = vst [vmem:[#allocation3 + $0x690] sm:$0xf0] %v3844
    %5163 = vst [vmem:[#allocation3 + $0x698] sm:$0xf0] %v3845
    %5164 = vst [vmem:[#allocation3 + $0x6a0] sm:$0xf0] %v3846
    %5165 = vst [vmem:[#allocation3 + $0x6a8] sm:$0xf0] %v3847
    %5166 = vst [vmem:[#allocation3 + $0x6b0] sm:$0xf0] %v3848
    %5167 = vst [vmem:[#allocation3 + $0x6b8] sm:$0xf0] %v3849
    %5168 = vst [vmem:[#allocation3 + $0x6c0] sm:$0xf0] %v3850
    %5169 = vst [vmem:[#allocation3 + $0x6c8] sm:$0xf0] %v3851
    %5170 = vst [vmem:[#allocation3 + $0x6d0] sm:$0xf0] %v5155
    %5171 = vst [vmem:[#allocation3 + $0x6d8] sm:$0xf0] %v5156
    %5172 = vst.msk [vmem:[#allocation3 + $0x6e0] sm:$0xf0] %vm3877, %v5154
    %5173 = vst [vmem:[#allocation3 + $0x6e8] sm:$0x3] %v3842
    %5174 = vst [vmem:[#allocation3 + $0x6f0] sm:$0x3] %v3843
    %5175 = vst [vmem:[#allocation3 + $0x6f8] sm:$0x3] %v3844
    %5176 = vst [vmem:[#allocation3 + $0x700] sm:$0x3] %v3845
    %5177 = vst [vmem:[#allocation3 + $0x708] sm:$0x3] %v3846
    %5178 = vst [vmem:[#allocation3 + $0x710] sm:$0x3] %v3847
    %5179 = vst [vmem:[#allocation3 + $0x718] sm:$0x3] %v3848
    %5180 = vst [vmem:[#allocation3 + $0x720] sm:$0x3] %v3849
    %5181 = vst [vmem:[#allocation3 + $0x728] sm:$0x3] %v3850
    %5182 = vst [vmem:[#allocation3 + $0x730] sm:$0x3] %v3851
    %5183 = vst [vmem:[#allocation3 + $0x738] sm:$0x3] %v5155
    %5184 = vst [vmem:[#allocation3 + $0x740] sm:$0x3] %v5156
    %5185 = vst.msk [vmem:[#allocation3 + $0x748] sm:$0x3] %vm3891, %v5154
    %5186 = vrot.lane.b32.xlu0 %v4200, 122
    %v5187 = vpop.permute.xlu0 %5186
    %5188 = vrot.lane.b32.xlu0 %v4739, 122
    %v5189 = vpop.permute.xlu0 %5188
    %v5190 = vsel %vm3932, %v3931, %v5187
    %v5191 = vsel %vm3932, %v5187, %v5189
    %5195 = vst [vmem:[#allocation3 + $0x6e8] sm:$0xfc] %v3935
    %5196 = vst [vmem:[#allocation3 + $0x6f0] sm:$0xfc] %v3936
    %5197 = vst [vmem:[#allocation3 + $0x6f8] sm:$0xfc] %v3937
    %5198 = vst [vmem:[#allocation3 + $0x700] sm:$0xfc] %v3938
    %5199 = vst [vmem:[#allocation3 + $0x708] sm:$0xfc] %v3939
    %5200 = vst [vmem:[#allocation3 + $0x710] sm:$0xfc] %v3940
    %5201 = vst [vmem:[#allocation3 + $0x718] sm:$0xfc] %v3941
    %5202 = vst [vmem:[#allocation3 + $0x720] sm:$0xfc] %v3942
    %5203 = vst [vmem:[#allocation3 + $0x728] sm:$0xfc] %v3943
    %5204 = vst [vmem:[#allocation3 + $0x730] sm:$0xfc] %v3944
    %5205 = vst [vmem:[#allocation3 + $0x738] sm:$0xfc] %v5190
    %5206 = vst [vmem:[#allocation3 + $0x740] sm:$0xfc] %v5191
    %5207 = vst.msk [vmem:[#allocation3 + $0x748] sm:$0xfc] %vm3970, %v5189
    %5208 = vrot.lane.b32.xlu0 %v3680, 120
    %v5209 = vpop.permute.xlu0 %5208
    %5210 = vrot.lane.b32.xlu0 %v3681, 120
    %v5211 = vpop.permute.xlu0 %5210
    %v5212 = vsel %vm3998, %v3997, %v5209
    %v5213 = vsel %vm3998, %v5209, %v5211
    %5217 = vst [vmem:[#allocation3 + $0x750] sm:$0x3f] %v4001
    %5218 = vst [vmem:[#allocation3 + $0x758] sm:$0x3f] %v4002
    %5219 = vst [vmem:[#allocation3 + $0x760] sm:$0x3f] %v4003
    %5220 = vst [vmem:[#allocation3 + $0x768] sm:$0x3f] %v4004
    %5221 = vst [vmem:[#allocation3 + $0x770] sm:$0x3f] %v4005
    %5222 = vst [vmem:[#allocation3 + $0x778] sm:$0x3f] %v4006
    %5223 = vst [vmem:[#allocation3 + $0x780] sm:$0x3f] %v4007
    %5224 = vst [vmem:[#allocation3 + $0x788] sm:$0x3f] %v4008
    %5225 = vst [vmem:[#allocation3 + $0x790] sm:$0x3f] %v4009
    %5226 = vst [vmem:[#allocation3 + $0x798] sm:$0x3f] %v4010
    %5227 = vst [vmem:[#allocation3 + $0x7a0] sm:$0x3f] %v5212
    %5228 = vst [vmem:[#allocation3 + $0x7a8] sm:$0x3f] %v5213
    %5229 = vst.msk [vmem:[#allocation3 + $0x7b0] sm:$0x3f] %vm3694, %v5211
    %v5230 = vld [vmem:[%s4] sm:$0xff]
    %v5231 = vld [vmem:[%s4 + $0x8] sm:$0xff]
    %v5232 = vld [vmem:[%s4 + $0x10] sm:$0xff]
    %v5233 = vld [vmem:[%s4 + $0x18] sm:$0xff]
    %v5234 = vld [vmem:[#allocation3] sm:$0xff]
    %v5235 = vld [vmem:[#allocation3 + $0x8] sm:$0xff]
    %v5236 = vld [vmem:[#allocation3 + $0x10] sm:$0xff]
    %v5237 = vld [vmem:[#allocation3 + $0x18] sm:$0xff]
    %v5238 = vld [vmem:[#allocation3 + $0x20] sm:$0xff]
    %v5239 = vld [vmem:[#allocation3 + $0x28] sm:$0xff]
    %v5240 = vld [vmem:[#allocation3 + $0x30] sm:$0xff]
    %v5241 = vld [vmem:[#allocation3 + $0x40] sm:$0xff]
    %v5242 = vld [vmem:[#allocation3 + $0x48] sm:$0xff]
    %v5243 = vld [vmem:[#allocation3 + $0x50] sm:$0xff]
    %v5244 = vld [vmem:[#allocation3 + $0x58] sm:$0xff]
    %v5245 = vld [vmem:[#allocation3 + $0x60] sm:$0xff]
    %v5246 = vld [vmem:[#allocation3 + $0x68] sm:$0xff]
    %v5247 = vld [vmem:[#allocation3 + $0x70] sm:$0xff]
    %v5248 = vld [vmem:[#allocation3 + $0x78] sm:$0xff]
    %v5249 = vld [vmem:[#allocation3 + $0x80] sm:$0xff]
    %v5250 = vld [vmem:[#allocation3 + $0x88] sm:$0xff]
    %v5251 = vld [vmem:[#allocation3 + $0x90] sm:$0xff]
    %v5252 = vld [vmem:[#allocation3 + $0x98] sm:$0xff]
    %v5253 = vld [vmem:[#allocation3 + $0xa8] sm:$0xff]
    %v5254 = vld [vmem:[#allocation3 + $0xb0] sm:$0xff]
    %v5255 = vld [vmem:[#allocation3 + $0xb8] sm:$0xff]
    %v5256 = vld [vmem:[#allocation3 + $0xc0] sm:$0xff]
    %v5257 = vld [vmem:[#allocation3 + $0xc8] sm:$0xff]
    %v5258 = vld [vmem:[#allocation3 + $0xd0] sm:$0xff]
    %v5259 = vld [vmem:[#allocation3 + $0xd8] sm:$0xff]
    %v5260 = vld [vmem:[#allocation3 + $0xe0] sm:$0xff]
    %v5261 = vld [vmem:[#allocation3 + $0xe8] sm:$0xff]
    %v5262 = vld [vmem:[#allocation3 + $0xf0] sm:$0xff]
    %v5263 = vld [vmem:[#allocation3 + $0xf8] sm:$0xff]
    %v5264 = vld [vmem:[#allocation3 + $0x100] sm:$0xff]
    %v5265 = vld [vmem:[#allocation3 + $0x110] sm:$0xff]
    %v5266 = vld [vmem:[#allocation3 + $0x118] sm:$0xff]
    %v5267 = vld [vmem:[#allocation3 + $0x120] sm:$0xff]
    %v5268 = vld [vmem:[#allocation3 + $0x128] sm:$0xff]
    %v5269 = vld [vmem:[#allocation3 + $0x130] sm:$0xff]
    %v5270 = vld [vmem:[#allocation3 + $0x138] sm:$0xff]
    %v5271 = vld [vmem:[#allocation3 + $0x140] sm:$0xff]
    %v5272 = vld [vmem:[#allocation3 + $0x148] sm:$0xff]
    %v5273 = vld [vmem:[#allocation3 + $0x150] sm:$0xff]
    %v5274 = vld [vmem:[#allocation3 + $0x158] sm:$0xff]
    %v5275 = vld [vmem:[#allocation3 + $0x160] sm:$0xff]
    %v5276 = vld [vmem:[#allocation3 + $0x168] sm:$0xff]
    %v5277 = vld [vmem:[#allocation3 + $0x178] sm:$0xff]
    %v5278 = vld [vmem:[#allocation3 + $0x180] sm:$0xff]
    %v5279 = vld [vmem:[#allocation3 + $0x188] sm:$0xff]
    %v5280 = vld [vmem:[#allocation3 + $0x190] sm:$0xff]
    %v5281 = vld [vmem:[#allocation3 + $0x198] sm:$0xff]
    %v5282 = vld [vmem:[#allocation3 + $0x1a0] sm:$0xff]
    %v5283 = vld [vmem:[#allocation3 + $0x1a8] sm:$0xff]
    %v5284 = vld [vmem:[#allocation3 + $0x1b0] sm:$0xff]
    %v5285 = vld [vmem:[#allocation3 + $0x1b8] sm:$0xff]
    %v5286 = vld [vmem:[#allocation3 + $0x1c0] sm:$0xff]
    %v5287 = vld [vmem:[#allocation3 + $0x1c8] sm:$0xff]
    %v5288 = vld [vmem:[#allocation3 + $0x1d0] sm:$0xff]
    %v5289 = vld [vmem:[#allocation3 + $0x1e0] sm:$0xff]
    %v5290 = vld [vmem:[#allocation3 + $0x1e8] sm:$0xff]
    %v5291 = vld [vmem:[#allocation3 + $0x1f0] sm:$0xff]
    %v5292 = vld [vmem:[#allocation3 + $0x1f8] sm:$0xff]
    %v5293 = vld [vmem:[#allocation3 + $0x200] sm:$0xff]
    %v5294 = vld [vmem:[#allocation3 + $0x208] sm:$0xff]
    %v5295 = vld [vmem:[#allocation3 + $0x210] sm:$0xff]
    %v5296 = vld [vmem:[#allocation3 + $0x218] sm:$0xff]
    %v5297 = vld [vmem:[#allocation3 + $0x220] sm:$0xff]
    %v5298 = vld [vmem:[#allocation3 + $0x228] sm:$0xff]
    %v5299 = vld [vmem:[#allocation3 + $0x230] sm:$0xff]
    %v5300 = vld [vmem:[#allocation3 + $0x238] sm:$0xff]
    %v5301 = vld [vmem:[#allocation3 + $0x248] sm:$0xff]
    %v5302 = vld [vmem:[#allocation3 + $0x250] sm:$0xff]
    %v5303 = vld [vmem:[#allocation3 + $0x258] sm:$0xff]
    %v5304 = vld [vmem:[#allocation3 + $0x260] sm:$0xff]
    %v5305 = vld [vmem:[#allocation3 + $0x268] sm:$0xff]
    %v5306 = vld [vmem:[#allocation3 + $0x270] sm:$0xff]
    %v5307 = vld [vmem:[#allocation3 + $0x278] sm:$0xff]
    %v5308 = vld [vmem:[#allocation3 + $0x280] sm:$0xff]
    %v5309 = vld [vmem:[#allocation3 + $0x288] sm:$0xff]
    %v5310 = vld [vmem:[#allocation3 + $0x290] sm:$0xff]
    %v5311 = vld [vmem:[#allocation3 + $0x298] sm:$0xff]
    %v5312 = vld [vmem:[#allocation3 + $0x2a0] sm:$0xff]
    %v5313 = vld [vmem:[#allocation3 + $0x2b0] sm:$0xff]
    %v5314 = vld [vmem:[#allocation3 + $0x2b8] sm:$0xff]
    %v5315 = vld [vmem:[#allocation3 + $0x2c0] sm:$0xff]
    %v5316 = vld [vmem:[#allocation3 + $0x2c8] sm:$0xff]
    %v5317 = vld [vmem:[#allocation3 + $0x2d0] sm:$0xff]
    %v5318 = vld [vmem:[#allocation3 + $0x2d8] sm:$0xff]
    %v5319 = vld [vmem:[#allocation3 + $0x2e0] sm:$0xff]
    %v5320 = vld [vmem:[#allocation3 + $0x2e8] sm:$0xff]
    %v5321 = vld [vmem:[#allocation3 + $0x2f0] sm:$0xff]
    %v5322 = vld [vmem:[#allocation3 + $0x2f8] sm:$0xff]
    %v5323 = vld [vmem:[#allocation3 + $0x300] sm:$0xff]
    %v5324 = vld [vmem:[#allocation3 + $0x308] sm:$0xff]
    %v5325 = vld [vmem:[#allocation3 + $0x318] sm:$0xff]
    %v5326 = vld [vmem:[#allocation3 + $0x320] sm:$0xff]
    %v5327 = vld [vmem:[#allocation3 + $0x328] sm:$0xff]
    %v5328 = vld [vmem:[#allocation3 + $0x330] sm:$0xff]
    %v5329 = vld [vmem:[#allocation3 + $0x338] sm:$0xff]
    %v5330 = vld [vmem:[#allocation3 + $0x340] sm:$0xff]
    %v5331 = vld [vmem:[#allocation3 + $0x348] sm:$0xff]
    %v5332 = vld [vmem:[#allocation3 + $0x350] sm:$0xff]
    %v5333 = vld [vmem:[#allocation3 + $0x358] sm:$0xff]
    %v5334 = vld [vmem:[#allocation3 + $0x360] sm:$0xff]
    %v5335 = vld [vmem:[#allocation3 + $0x368] sm:$0xff]
    %v5336 = vld [vmem:[#allocation3 + $0x370] sm:$0xff]
    %v5337 = vld [vmem:[#allocation3 + $0x380] sm:$0xff]
    %v5338 = vld [vmem:[#allocation3 + $0x388] sm:$0xff]
    %v5339 = vld [vmem:[#allocation3 + $0x390] sm:$0xff]
    %v5340 = vld [vmem:[#allocation3 + $0x398] sm:$0xff]
    %v5341 = vld [vmem:[#allocation3 + $0x3a0] sm:$0xff]
    %v5342 = vld [vmem:[#allocation3 + $0x3a8] sm:$0xff]
    %v5343 = vld [vmem:[#allocation3 + $0x3b0] sm:$0xff]
    %v5344 = vld [vmem:[#allocation3 + $0x3b8] sm:$0xff]
    %v5345 = vld [vmem:[#allocation3 + $0x3c0] sm:$0xff]
    %v5346 = vld [vmem:[#allocation3 + $0x3c8] sm:$0xff]
    %v5347 = vld [vmem:[#allocation3 + $0x3d0] sm:$0xff]
    %v5348 = vld [vmem:[#allocation3 + $0x3d8] sm:$0xff]
    %v5349 = vld [vmem:[#allocation3 + $0x3e8] sm:$0xff]
    %v5350 = vld [vmem:[#allocation3 + $0x3f0] sm:$0xff]
    %v5351 = vld [vmem:[#allocation3 + $0x3f8] sm:$0xff]
    %v5352 = vld [vmem:[#allocation3 + $0x400] sm:$0xff]
    %v5353 = vld [vmem:[#allocation3 + $0x408] sm:$0xff]
    %v5354 = vld [vmem:[#allocation3 + $0x410] sm:$0xff]
    %v5355 = vld [vmem:[#allocation3 + $0x418] sm:$0xff]
    %v5356 = vld [vmem:[#allocation3 + $0x420] sm:$0xff]
    %v5357 = vld [vmem:[#allocation3 + $0x428] sm:$0xff]
    %v5358 = vld [vmem:[#allocation3 + $0x430] sm:$0xff]
    %v5359 = vld [vmem:[#allocation3 + $0x438] sm:$0xff]
    %v5360 = vld [vmem:[#allocation3 + $0x440] sm:$0xff]
    %v5361 = vld [vmem:[#allocation3 + $0x450] sm:$0xff]
    %v5362 = vld [vmem:[#allocation3 + $0x458] sm:$0xff]
    %v5363 = vld [vmem:[#allocation3 + $0x460] sm:$0xff]
    %v5364 = vld [vmem:[#allocation3 + $0x468] sm:$0xff]
    %v5365 = vld [vmem:[#allocation3 + $0x470] sm:$0xff]
    %v5366 = vld [vmem:[#allocation3 + $0x478] sm:$0xff]
    %v5367 = vld [vmem:[#allocation3 + $0x480] sm:$0xff]
    %v5368 = vld [vmem:[#allocation3 + $0x488] sm:$0xff]
    %v5369 = vld [vmem:[#allocation3 + $0x490] sm:$0xff]
    %v5370 = vld [vmem:[#allocation3 + $0x498] sm:$0xff]
    %v5371 = vld [vmem:[#allocation3 + $0x4a0] sm:$0xff]
    %v5372 = vld [vmem:[#allocation3 + $0x4a8] sm:$0xff]
    %v5373 = vld [vmem:[#allocation3 + $0x4b8] sm:$0xff]
    %v5374 = vld [vmem:[#allocation3 + $0x4c0] sm:$0xff]
    %v5375 = vld [vmem:[#allocation3 + $0x4c8] sm:$0xff]
    %v5376 = vld [vmem:[#allocation3 + $0x4d0] sm:$0xff]
    %v5377 = vld [vmem:[#allocation3 + $0x4d8] sm:$0xff]
    %v5378 = vld [vmem:[#allocation3 + $0x4e0] sm:$0xff]
    %v5379 = vld [vmem:[#allocation3 + $0x4e8] sm:$0xff]
    %v5380 = vld [vmem:[#allocation3 + $0x4f0] sm:$0xff]
    %v5381 = vld [vmem:[#allocation3 + $0x4f8] sm:$0xff]
    %v5382 = vld [vmem:[#allocation3 + $0x500] sm:$0xff]
    %v5383 = vld [vmem:[#allocation3 + $0x508] sm:$0xff]
    %v5384 = vld [vmem:[#allocation3 + $0x510] sm:$0xff]
    %v5385 = vld [vmem:[#allocation3 + $0x520] sm:$0xff]
    %v5386 = vld [vmem:[#allocation3 + $0x528] sm:$0xff]
    %v5387 = vld [vmem:[#allocation3 + $0x530] sm:$0xff]
    %v5388 = vld [vmem:[#allocation3 + $0x538] sm:$0xff]
    %v5389 = vld [vmem:[#allocation3 + $0x540] sm:$0xff]
    %v5390 = vld [vmem:[#allocation3 + $0x548] sm:$0xff]
    %v5391 = vld [vmem:[#allocation3 + $0x550] sm:$0xff]
    %v5392 = vld [vmem:[#allocation3 + $0x558] sm:$0xff]
    %v5393 = vld [vmem:[#allocation3 + $0x560] sm:$0xff]
    %v5394 = vld [vmem:[#allocation3 + $0x568] sm:$0xff]
    %v5395 = vld [vmem:[#allocation3 + $0x570] sm:$0xff]
    %v5396 = vld [vmem:[#allocation3 + $0x578] sm:$0xff]
    %v5397 = vld [vmem:[#allocation3 + $0x588] sm:$0xff]
    %v5398 = vld [vmem:[#allocation3 + $0x590] sm:$0xff]
    %v5399 = vld [vmem:[#allocation3 + $0x598] sm:$0xff]
    %v5400 = vld [vmem:[#allocation3 + $0x5a0] sm:$0xff]
    %v5401 = vld [vmem:[#allocation3 + $0x5a8] sm:$0xff]
    %v5402 = vld [vmem:[#allocation3 + $0x5b0] sm:$0xff]
    %v5403 = vld [vmem:[#allocation3 + $0x5b8] sm:$0xff]
    %v5404 = vld [vmem:[#allocation3 + $0x5c0] sm:$0xff]
    %v5405 = vld [vmem:[#allocation3 + $0x5c8] sm:$0xff]
    %v5406 = vld [vmem:[#allocation3 + $0x5d0] sm:$0xff]
    %v5407 = vld [vmem:[#allocation3 + $0x5d8] sm:$0xff]
    %v5408 = vld [vmem:[#allocation3 + $0x5e0] sm:$0xff]
    %v5409 = vld [vmem:[#allocation3 + $0x5f0] sm:$0xff]
    %v5410 = vld [vmem:[#allocation3 + $0x5f8] sm:$0xff]
    %v5411 = vld [vmem:[#allocation3 + $0x600] sm:$0xff]
    %v5412 = vld [vmem:[#allocation3 + $0x608] sm:$0xff]
    %v5413 = vld [vmem:[#allocation3 + $0x610] sm:$0xff]
    %v5414 = vld [vmem:[#allocation3 + $0x618] sm:$0xff]
    %v5415 = vld [vmem:[#allocation3 + $0x620] sm:$0xff]
    %v5416 = vld [vmem:[#allocation3 + $0x628] sm:$0xff]
    %v5417 = vld [vmem:[#allocation3 + $0x630] sm:$0xff]
    %v5418 = vld [vmem:[#allocation3 + $0x638] sm:$0xff]
    %v5419 = vld [vmem:[#allocation3 + $0x640] sm:$0xff]
    %v5420 = vld [vmem:[#allocation3 + $0x648] sm:$0xff]
    %v5421 = vld [vmem:[#allocation3 + $0x658] sm:$0xff]
    %v5422 = vld [vmem:[#allocation3 + $0x660] sm:$0xff]
    %v5423 = vld [vmem:[#allocation3 + $0x668] sm:$0xff]
    %v5424 = vld [vmem:[#allocation3 + $0x670] sm:$0xff]
    %v5425 = vld [vmem:[#allocation3 + $0x678] sm:$0xff]
    %v5426 = vld [vmem:[#allocation3 + $0x680] sm:$0xff]
    %v5427 = vld [vmem:[#allocation3 + $0x688] sm:$0xff]
    %v5428 = vld [vmem:[#allocation3 + $0x690] sm:$0xff]
    %v5429 = vld [vmem:[#allocation3 + $0x698] sm:$0xff]
    %v5430 = vld [vmem:[#allocation3 + $0x6a0] sm:$0xff]
    %v5431 = vld [vmem:[#allocation3 + $0x6a8] sm:$0xff]
    %v5432 = vld [vmem:[#allocation3 + $0x6b0] sm:$0xff]
    %v5433 = vld [vmem:[#allocation3 + $0x6c0] sm:$0xff]
    %v5434 = vld [vmem:[#allocation3 + $0x6c8] sm:$0xff]
    %v5435 = vld [vmem:[#allocation3 + $0x6d0] sm:$0xff]
    %v5436 = vld [vmem:[#allocation3 + $0x6d8] sm:$0xff]
    %v5437 = vld [vmem:[#allocation3 + $0x6e0] sm:$0xff]
    %v5438 = vld [vmem:[#allocation3 + $0x6e8] sm:$0xff]
    %v5439 = vld [vmem:[#allocation3 + $0x6f0] sm:$0xff]
    %v5440 = vld [vmem:[#allocation3 + $0x6f8] sm:$0xff]
    %v5441 = vld [vmem:[#allocation3 + $0x700] sm:$0xff]
    %v5442 = vld [vmem:[#allocation3 + $0x708] sm:$0xff]
    %v5443 = vld [vmem:[#allocation3 + $0x710] sm:$0xff]
    %v5444 = vld [vmem:[#allocation3 + $0x718] sm:$0xff]
    %v5445 = vld [vmem:[#allocation3 + $0x728] sm:$0xff]
    %v5446 = vld [vmem:[#allocation3 + $0x730] sm:$0xff]
    %v5447 = vld [vmem:[#allocation3 + $0x738] sm:$0xff]
    %v5448 = vld [vmem:[#allocation3 + $0x740] sm:$0xff]
    %v5449 = vld [vmem:[#allocation3 + $0x748] sm:$0xff]
    %v5450 = vld [vmem:[#allocation3 + $0x750] sm:$0x3f]
    %v5451 = vld [vmem:[#allocation3 + $0x758] sm:$0x3f]
    %v5452 = vld [vmem:[#allocation3 + $0x760] sm:$0x3f]
    %v5453 = vld [vmem:[#allocation3 + $0x768] sm:$0x3f]
    %v5454 = vld [vmem:[#allocation3 + $0x770] sm:$0x3f]
    %v5455 = vld [vmem:[#allocation3 + $0x778] sm:$0x3f]
    %v5456 = vld [vmem:[#allocation3 + $0x780] sm:$0x3f]
    %v5457 = vld [vmem:[#allocation3 + $0x790] sm:$0x3f]
    %v5458 = vld [vmem:[#allocation3 + $0x798] sm:$0x3f]
    %v5459 = vld [vmem:[#allocation3 + $0x7a0] sm:$0x3f]
    %v5460 = vld [vmem:[#allocation3 + $0x7a8] sm:$0x3f]
    %v5461 = vld [vmem:[#allocation3 + $0x7b0] sm:$0x3f]
    %vm5462 = vcmask 179200
    %v5464 = vsel %vm5462, %v5231, 0
    %v5467 = vsel %vm5462, %v5233, 0
    %vm5469 = vcmask 1045504
    %v5471 = vsel %vm5469, %v5450, 0
    %v5474 = vsel %vm5469, %v5451, 0
    %v5477 = vsel %vm5469, %v5452, 0
    %v5480 = vsel %vm5469, %v5453, 0
    %v5483 = vsel %vm5469, %v5454, 0
    %v5486 = vsel %vm5469, %v5455, 0
    %v5489 = vsel %vm5469, %v5456, 0
    %v5492 = vsel %vm5469, %v5457, 0
    %v5495 = vsel %vm5469, %v5458, 0
    %v5498 = vsel %vm5469, %v5459, 0
    %v5501 = vsel %vm5469, %v5460, 0
    %v5504 = vsel %vm5469, %v5461, 0
    %5506 = vmatpush.msra.mxu0 %v5414
    %5507 = vmatpush.msra.mxu0 %v5402
    %5508 = vmatpush.msra.mxu0 %v5390
    %5509 = vmatpush.msra.mxu0 %v5378
    %5510 = vmatpush.msra.mxu0 %v5366
    %5511 = vmatpush.msra.mxu0 %v5354
    %5512 = vmatpush.msra.mxu0 %v5342
    %5513 = vmatpush.msra.mxu0 %v5330
    %5514 = vmatpush.msra.mxu0 %v5318
    %5515 = vmatpush.msra.mxu0 %v5306
    %5516 = vmatpush.msra.mxu0 %v5294
    %5517 = vmatpush.msra.mxu0 %v5282
    %5518 = vmatpush.msra.mxu0 %v5270
    %5519 = vmatpush.msra.mxu0 %v5258
    %5520 = vmatpush.msra.mxu0 %v5246
    %5521 = vmatpush.msra.mxu0 %v5234
    %5522 = vmatmul.f32.gmra.mxu0 %v5230
    %v5523 = vpop.f32.mrf.mxu0
    %v5524 = vadd.f32 0.0, %v5523
    %5525 = vmatmul.f32.gmra.mxu0 %v5232
    %v5526 = vpop.f32.mrf.mxu0
    %v5527 = vadd.f32 0.0, %v5526
    %5528 = vdwg.mxu0
    %5529 = vmatpush.msra.mxu0 0.0
    %5530 = vmatpush.msra.mxu0 0.0
    %5531 = vmatpush.msra.mxu0 0.0
    %5532 = vmatpush.msra.mxu0 0.0
    %5533 = vmatpush.msra.mxu0 0.0
    %5534 = vmatpush.msra.mxu0 0.0
    %5535 = vmatpush.msra.mxu0 0.0
    %5536 = vmatpush.msra.mxu0 0.0
    %5537 = vmatpush.msra.mxu0 0.0
    %5538 = vmatpush.msra.mxu0 0.0
    %5539 = vmatpush.msra.mxu0 0.0
    %5540 = vmatpush.msra.mxu0 0.0
    %5541 = vmatpush.msra.mxu0 0.0
    %5542 = vmatpush.msra.mxu0 %v5471
    %5543 = vmatpush.msra.mxu0 %v5438
    %5544 = vmatpush.msra.mxu0 %v5426
    %5545 = vmatmul.f32.gmra.mxu0 %v5464
    %v5546 = vpop.f32.mrf.mxu0
    %v5547 = vadd.f32 %v5524, %v5546
    %5548 = vmatmul.f32.gmra.mxu0 %v5467
    %v5549 = vpop.f32.mrf.mxu0
    %v5550 = vadd.f32 %v5527, %v5549
    %5551 = vdwg.mxu0
    %5552 = vmatpush.msra.mxu0 %v5415
    %5553 = vmatpush.msra.mxu0 %v5403
    %5554 = vmatpush.msra.mxu0 %v5391
    %5555 = vmatpush.msra.mxu0 %v5379
    %5556 = vmatpush.msra.mxu0 %v5367
    %5557 = vmatpush.msra.mxu0 %v5355
    %5558 = vmatpush.msra.mxu0 %v5343
    %5559 = vmatpush.msra.mxu0 %v5331
    %5560 = vmatpush.msra.mxu0 %v5319
    %5561 = vmatpush.msra.mxu0 %v5307
    %5562 = vmatpush.msra.mxu0 %v5295
    %5563 = vmatpush.msra.mxu0 %v5283
    %5564 = vmatpush.msra.mxu0 %v5271
    %5565 = vmatpush.msra.mxu0 %v5259
    %5566 = vmatpush.msra.mxu0 %v5247
    %5567 = vmatpush.msra.mxu0 %v5235
    %5568 = vmatmul.f32.gmra.mxu0 %v5230
    %v5569 = vpop.f32.mrf.mxu0
    %v5570 = vadd.f32 0.0, %v5569
    %5571 = vmatmul.f32.gmra.mxu0 %v5232
    %v5572 = vpop.f32.mrf.mxu0
    %v5573 = vadd.f32 0.0, %v5572
    %5574 = vdwg.mxu0
    %5575 = vmatpush.msra.mxu0 0.0
    %5576 = vmatpush.msra.mxu0 0.0
    %5577 = vmatpush.msra.mxu0 0.0
    %5578 = vmatpush.msra.mxu0 0.0
    %5579 = vmatpush.msra.mxu0 0.0
    %5580 = vmatpush.msra.mxu0 0.0
    %5581 = vmatpush.msra.mxu0 0.0
    %5582 = vmatpush.msra.mxu0 0.0
    %5583 = vmatpush.msra.mxu0 0.0
    %5584 = vmatpush.msra.mxu0 0.0
    %5585 = vmatpush.msra.mxu0 0.0
    %5586 = vmatpush.msra.mxu0 0.0
    %5587 = vmatpush.msra.mxu0 0.0
    %5588 = vmatpush.msra.mxu0 %v5474
    %5589 = vmatpush.msra.mxu0 %v5439
    %5590 = vmatpush.msra.mxu0 %v5427
    %5591 = vmatmul.f32.gmra.mxu0 %v5464
    %v5592 = vpop.f32.mrf.mxu0
    %v5593 = vadd.f32 %v5570, %v5592
    %5594 = vmatmul.f32.gmra.mxu0 %v5467
    %v5595 = vpop.f32.mrf.mxu0
    %v5596 = vadd.f32 %v5573, %v5595
    %5597 = vdwg.mxu0
    %5598 = vmatpush.msra.mxu0 %v5416
    %5599 = vmatpush.msra.mxu0 %v5404
    %5600 = vmatpush.msra.mxu0 %v5392
    %5601 = vmatpush.msra.mxu0 %v5380
    %5602 = vmatpush.msra.mxu0 %v5368
    %5603 = vmatpush.msra.mxu0 %v5356
    %5604 = vmatpush.msra.mxu0 %v5344
    %5605 = vmatpush.msra.mxu0 %v5332
    %5606 = vmatpush.msra.mxu0 %v5320
    %5607 = vmatpush.msra.mxu0 %v5308
    %5608 = vmatpush.msra.mxu0 %v5296
    %5609 = vmatpush.msra.mxu0 %v5284
    %5610 = vmatpush.msra.mxu0 %v5272
    %5611 = vmatpush.msra.mxu0 %v5260
    %5612 = vmatpush.msra.mxu0 %v5248
    %5613 = vmatpush.msra.mxu0 %v5236
    %5614 = vmatmul.f32.gmra.mxu0 %v5230
    %v5615 = vpop.f32.mrf.mxu0
    %v5616 = vadd.f32 0.0, %v5615
    %5617 = vmatmul.f32.gmra.mxu0 %v5232
    %v5618 = vpop.f32.mrf.mxu0
    %v5619 = vadd.f32 0.0, %v5618
    %5620 = vdwg.mxu0
    %5621 = vmatpush.msra.mxu0 0.0
    %5622 = vmatpush.msra.mxu0 0.0
    %5623 = vmatpush.msra.mxu0 0.0
    %5624 = vmatpush.msra.mxu0 0.0
    %5625 = vmatpush.msra.mxu0 0.0
    %5626 = vmatpush.msra.mxu0 0.0
    %5627 = vmatpush.msra.mxu0 0.0
    %5628 = vmatpush.msra.mxu0 0.0
    %5629 = vmatpush.msra.mxu0 0.0
    %5630 = vmatpush.msra.mxu0 0.0
    %5631 = vmatpush.msra.mxu0 0.0
    %5632 = vmatpush.msra.mxu0 0.0
    %5633 = vmatpush.msra.mxu0 0.0
    %5634 = vmatpush.msra.mxu0 %v5477
    %5635 = vmatpush.msra.mxu0 %v5440
    %5636 = vmatpush.msra.mxu0 %v5428
    %5637 = vmatmul.f32.gmra.mxu0 %v5464
    %v5638 = vpop.f32.mrf.mxu0
    %v5639 = vadd.f32 %v5616, %v5638
    %5640 = vmatmul.f32.gmra.mxu0 %v5467
    %v5641 = vpop.f32.mrf.mxu0
    %v5642 = vadd.f32 %v5619, %v5641
    %5643 = vdwg.mxu0
    %5644 = vmatpush.msra.mxu0 %v5417
    %5645 = vmatpush.msra.mxu0 %v5405
    %5646 = vmatpush.msra.mxu0 %v5393
    %5647 = vmatpush.msra.mxu0 %v5381
    %5648 = vmatpush.msra.mxu0 %v5369
    %5649 = vmatpush.msra.mxu0 %v5357
    %5650 = vmatpush.msra.mxu0 %v5345
    %5651 = vmatpush.msra.mxu0 %v5333
    %5652 = vmatpush.msra.mxu0 %v5321
    %5653 = vmatpush.msra.mxu0 %v5309
    %5654 = vmatpush.msra.mxu0 %v5297
    %5655 = vmatpush.msra.mxu0 %v5285
    %5656 = vmatpush.msra.mxu0 %v5273
    %5657 = vmatpush.msra.mxu0 %v5261
    %5658 = vmatpush.msra.mxu0 %v5249
    %5659 = vmatpush.msra.mxu0 %v5237
    %5660 = vmatmul.f32.gmra.mxu0 %v5230
    %v5661 = vpop.f32.mrf.mxu0
    %v5662 = vadd.f32 0.0, %v5661
    %5663 = vmatmul.f32.gmra.mxu0 %v5232
    %v5664 = vpop.f32.mrf.mxu0
    %v5665 = vadd.f32 0.0, %v5664
    %5666 = vdwg.mxu0
    %5667 = vmatpush.msra.mxu0 0.0
    %5668 = vmatpush.msra.mxu0 0.0
    %5669 = vmatpush.msra.mxu0 0.0
    %5670 = vmatpush.msra.mxu0 0.0
    %5671 = vmatpush.msra.mxu0 0.0
    %5672 = vmatpush.msra.mxu0 0.0
    %5673 = vmatpush.msra.mxu0 0.0
    %5674 = vmatpush.msra.mxu0 0.0
    %5675 = vmatpush.msra.mxu0 0.0
    %5676 = vmatpush.msra.mxu0 0.0
    %5677 = vmatpush.msra.mxu0 0.0
    %5678 = vmatpush.msra.mxu0 0.0
    %5679 = vmatpush.msra.mxu0 0.0
    %5680 = vmatpush.msra.mxu0 %v5480
    %5681 = vmatpush.msra.mxu0 %v5441
    %5682 = vmatpush.msra.mxu0 %v5429
    %5683 = vmatmul.f32.gmra.mxu0 %v5464
    %v5684 = vpop.f32.mrf.mxu0
    %v5685 = vadd.f32 %v5662, %v5684
    %5686 = vmatmul.f32.gmra.mxu0 %v5467
    %v5687 = vpop.f32.mrf.mxu0
    %v5688 = vadd.f32 %v5665, %v5687
    %5689 = vdwg.mxu0
    %5690 = vmatpush.msra.mxu0 %v5418
    %5691 = vmatpush.msra.mxu0 %v5406
    %5692 = vmatpush.msra.mxu0 %v5394
    %5693 = vmatpush.msra.mxu0 %v5382
    %5694 = vmatpush.msra.mxu0 %v5370
    %5695 = vmatpush.msra.mxu0 %v5358
    %5696 = vmatpush.msra.mxu0 %v5346
    %5697 = vmatpush.msra.mxu0 %v5334
    %5698 = vmatpush.msra.mxu0 %v5322
    %5699 = vmatpush.msra.mxu0 %v5310
    %5700 = vmatpush.msra.mxu0 %v5298
    %5701 = vmatpush.msra.mxu0 %v5286
    %5702 = vmatpush.msra.mxu0 %v5274
    %5703 = vmatpush.msra.mxu0 %v5262
    %5704 = vmatpush.msra.mxu0 %v5250
    %5705 = vmatpush.msra.mxu0 %v5238
    %5706 = vmatmul.f32.gmra.mxu0 %v5230
    %v5707 = vpop.f32.mrf.mxu0
    %v5708 = vadd.f32 0.0, %v5707
    %5709 = vmatmul.f32.gmra.mxu0 %v5232
    %v5710 = vpop.f32.mrf.mxu0
    %v5711 = vadd.f32 0.0, %v5710
    %5712 = vdwg.mxu0
    %5713 = vmatpush.msra.mxu0 0.0
    %5714 = vmatpush.msra.mxu0 0.0
    %5715 = vmatpush.msra.mxu0 0.0
    %5716 = vmatpush.msra.mxu0 0.0
    %5717 = vmatpush.msra.mxu0 0.0
    %5718 = vmatpush.msra.mxu0 0.0
    %5719 = vmatpush.msra.mxu0 0.0
    %5720 = vmatpush.msra.mxu0 0.0
    %5721 = vmatpush.msra.mxu0 0.0
    %5722 = vmatpush.msra.mxu0 0.0
    %5723 = vmatpush.msra.mxu0 0.0
    %5724 = vmatpush.msra.mxu0 0.0
    %5725 = vmatpush.msra.mxu0 0.0
    %5726 = vmatpush.msra.mxu0 %v5483
    %5727 = vmatpush.msra.mxu0 %v5442
    %5728 = vmatpush.msra.mxu0 %v5430
    %5729 = vmatmul.f32.gmra.mxu0 %v5464
    %v5730 = vpop.f32.mrf.mxu0
    %v5731 = vadd.f32 %v5708, %v5730
    %5732 = vmatmul.f32.gmra.mxu0 %v5467
    %v5733 = vpop.f32.mrf.mxu0
    %v5734 = vadd.f32 %v5711, %v5733
    %5735 = vdwg.mxu0
    %5736 = vmatpush.msra.mxu0 %v5419
    %5737 = vmatpush.msra.mxu0 %v5407
    %5738 = vmatpush.msra.mxu0 %v5395
    %5739 = vmatpush.msra.mxu0 %v5383
    %5740 = vmatpush.msra.mxu0 %v5371
    %5741 = vmatpush.msra.mxu0 %v5359
    %5742 = vmatpush.msra.mxu0 %v5347
    %5743 = vmatpush.msra.mxu0 %v5335
    %5744 = vmatpush.msra.mxu0 %v5323
    %5745 = vmatpush.msra.mxu0 %v5311
    %5746 = vmatpush.msra.mxu0 %v5299
    %5747 = vmatpush.msra.mxu0 %v5287
    %5748 = vmatpush.msra.mxu0 %v5275
    %5749 = vmatpush.msra.mxu0 %v5263
    %5750 = vmatpush.msra.mxu0 %v5251
    %5751 = vmatpush.msra.mxu0 %v5239
    %5752 = vmatmul.f32.gmra.mxu0 %v5230
    %v5753 = vpop.f32.mrf.mxu0
    %v5754 = vadd.f32 0.0, %v5753
    %5755 = vmatmul.f32.gmra.mxu0 %v5232
    %v5756 = vpop.f32.mrf.mxu0
    %v5757 = vadd.f32 0.0, %v5756
    %5758 = vdwg.mxu0
    %5759 = vmatpush.msra.mxu0 0.0
    %5760 = vmatpush.msra.mxu0 0.0
    %5761 = vmatpush.msra.mxu0 0.0
    %5762 = vmatpush.msra.mxu0 0.0
    %5763 = vmatpush.msra.mxu0 0.0
    %5764 = vmatpush.msra.mxu0 0.0
    %5765 = vmatpush.msra.mxu0 0.0
    %5766 = vmatpush.msra.mxu0 0.0
    %5767 = vmatpush.msra.mxu0 0.0
    %5768 = vmatpush.msra.mxu0 0.0
    %5769 = vmatpush.msra.mxu0 0.0
    %5770 = vmatpush.msra.mxu0 0.0
    %5771 = vmatpush.msra.mxu0 0.0
    %5772 = vmatpush.msra.mxu0 %v5486
    %5773 = vmatpush.msra.mxu0 %v5443
    %5774 = vmatpush.msra.mxu0 %v5431
    %5775 = vmatmul.f32.gmra.mxu0 %v5464
    %v5776 = vpop.f32.mrf.mxu0
    %v5777 = vadd.f32 %v5754, %v5776
    %5778 = vmatmul.f32.gmra.mxu0 %v5467
    %v5779 = vpop.f32.mrf.mxu0
    %v5780 = vadd.f32 %v5757, %v5779
    %5781 = vdwg.mxu0
    %5782 = vmatpush.msra.mxu0 %v5420
    %5783 = vmatpush.msra.mxu0 %v5408
    %5784 = vmatpush.msra.mxu0 %v5396
    %5785 = vmatpush.msra.mxu0 %v5384
    %5786 = vmatpush.msra.mxu0 %v5372
    %5787 = vmatpush.msra.mxu0 %v5360
    %5788 = vmatpush.msra.mxu0 %v5348
    %5789 = vmatpush.msra.mxu0 %v5336
    %5790 = vmatpush.msra.mxu0 %v5324
    %5791 = vmatpush.msra.mxu0 %v5312
    %5792 = vmatpush.msra.mxu0 %v5300
    %5793 = vmatpush.msra.mxu0 %v5288
    %5794 = vmatpush.msra.mxu0 %v5276
    %5795 = vmatpush.msra.mxu0 %v5264
    %5796 = vmatpush.msra.mxu0 %v5252
    %5797 = vmatpush.msra.mxu0 %v5240
    %5798 = vmatmul.f32.gmra.mxu0 %v5230
    %v5799 = vpop.f32.mrf.mxu0
    %v5800 = vadd.f32 0.0, %v5799
    %5801 = vmatmul.f32.gmra.mxu0 %v5232
    %v5802 = vpop.f32.mrf.mxu0
    %v5803 = vadd.f32 0.0, %v5802
    %5804 = vdwg.mxu0
    %5805 = vmatpush.msra.mxu0 0.0
    %5806 = vmatpush.msra.mxu0 0.0
    %5807 = vmatpush.msra.mxu0 0.0
    %5808 = vmatpush.msra.mxu0 0.0
    %5809 = vmatpush.msra.mxu0 0.0
    %5810 = vmatpush.msra.mxu0 0.0
    %5811 = vmatpush.msra.mxu0 0.0
    %5812 = vmatpush.msra.mxu0 0.0
    %5813 = vmatpush.msra.mxu0 0.0
    %5814 = vmatpush.msra.mxu0 0.0
    %5815 = vmatpush.msra.mxu0 0.0
    %5816 = vmatpush.msra.mxu0 0.0
    %5817 = vmatpush.msra.mxu0 0.0
    %5818 = vmatpush.msra.mxu0 %v5489
    %5819 = vmatpush.msra.mxu0 %v5444
    %5820 = vmatpush.msra.mxu0 %v5432
    %5821 = vmatmul.f32.gmra.mxu0 %v5464
    %v5822 = vpop.f32.mrf.mxu0
    %v5823 = vadd.f32 %v5800, %v5822
    %5824 = vmatmul.f32.gmra.mxu0 %v5467
    %v5825 = vpop.f32.mrf.mxu0
    %v5826 = vadd.f32 %v5803, %v5825
    %5827 = vdwg.mxu0
    %5828 = vmatpush.msra.mxu0 %v5421
    %5829 = vmatpush.msra.mxu0 %v5409
    %5830 = vmatpush.msra.mxu0 %v5397
    %5831 = vmatpush.msra.mxu0 %v5385
    %5832 = vmatpush.msra.mxu0 %v5373
    %5833 = vmatpush.msra.mxu0 %v5361
    %5834 = vmatpush.msra.mxu0 %v5349
    %5835 = vmatpush.msra.mxu0 %v5337
    %5836 = vmatpush.msra.mxu0 %v5325
    %5837 = vmatpush.msra.mxu0 %v5313
    %5838 = vmatpush.msra.mxu0 %v5301
    %5839 = vmatpush.msra.mxu0 %v5289
    %5840 = vmatpush.msra.mxu0 %v5277
    %5841 = vmatpush.msra.mxu0 %v5265
    %5842 = vmatpush.msra.mxu0 %v5253
    %5843 = vmatpush.msra.mxu0 %v5241
    %5844 = vmatmul.f32.gmra.mxu0 %v5230
    %v5845 = vpop.f32.mrf.mxu0
    %v5846 = vadd.f32 0.0, %v5845
    %5847 = vmatmul.f32.gmra.mxu0 %v5232
    %v5848 = vpop.f32.mrf.mxu0
    %v5849 = vadd.f32 0.0, %v5848
    %5850 = vdwg.mxu0
    %5851 = vmatpush.msra.mxu0 0.0
    %5852 = vmatpush.msra.mxu0 0.0
    %5853 = vmatpush.msra.mxu0 0.0
    %5854 = vmatpush.msra.mxu0 0.0
    %5855 = vmatpush.msra.mxu0 0.0
    %5856 = vmatpush.msra.mxu0 0.0
    %5857 = vmatpush.msra.mxu0 0.0
    %5858 = vmatpush.msra.mxu0 0.0
    %5859 = vmatpush.msra.mxu0 0.0
    %5860 = vmatpush.msra.mxu0 0.0
    %5861 = vmatpush.msra.mxu0 0.0
    %5862 = vmatpush.msra.mxu0 0.0
    %5863 = vmatpush.msra.mxu0 0.0
    %5864 = vmatpush.msra.mxu0 %v5492
    %5865 = vmatpush.msra.mxu0 %v5445
    %5866 = vmatpush.msra.mxu0 %v5433
    %5867 = vmatmul.f32.gmra.mxu0 %v5464
    %v5868 = vpop.f32.mrf.mxu0
    %v5869 = vadd.f32 %v5846, %v5868
    %5870 = vmatmul.f32.gmra.mxu0 %v5467
    %v5871 = vpop.f32.mrf.mxu0
    %v5872 = vadd.f32 %v5849, %v5871
    %5873 = vdwg.mxu0
    %5874 = vmatpush.msra.mxu0 %v5422
    %5875 = vmatpush.msra.mxu0 %v5410
    %5876 = vmatpush.msra.mxu0 %v5398
    %5877 = vmatpush.msra.mxu0 %v5386
    %5878 = vmatpush.msra.mxu0 %v5374
    %5879 = vmatpush.msra.mxu0 %v5362
    %5880 = vmatpush.msra.mxu0 %v5350
    %5881 = vmatpush.msra.mxu0 %v5338
    %5882 = vmatpush.msra.mxu0 %v5326
    %5883 = vmatpush.msra.mxu0 %v5314
    %5884 = vmatpush.msra.mxu0 %v5302
    %5885 = vmatpush.msra.mxu0 %v5290
    %5886 = vmatpush.msra.mxu0 %v5278
    %5887 = vmatpush.msra.mxu0 %v5266
    %5888 = vmatpush.msra.mxu0 %v5254
    %5889 = vmatpush.msra.mxu0 %v5242
    %5890 = vmatmul.f32.gmra.mxu0 %v5230
    %v5891 = vpop.f32.mrf.mxu0
    %v5892 = vadd.f32 0.0, %v5891
    %5893 = vmatmul.f32.gmra.mxu0 %v5232
    %v5894 = vpop.f32.mrf.mxu0
    %v5895 = vadd.f32 0.0, %v5894
    %5896 = vdwg.mxu0
    %5897 = vmatpush.msra.mxu0 0.0
    %5898 = vmatpush.msra.mxu0 0.0
    %5899 = vmatpush.msra.mxu0 0.0
    %5900 = vmatpush.msra.mxu0 0.0
    %5901 = vmatpush.msra.mxu0 0.0
    %5902 = vmatpush.msra.mxu0 0.0
    %5903 = vmatpush.msra.mxu0 0.0
    %5904 = vmatpush.msra.mxu0 0.0
    %5905 = vmatpush.msra.mxu0 0.0
    %5906 = vmatpush.msra.mxu0 0.0
    %5907 = vmatpush.msra.mxu0 0.0
    %5908 = vmatpush.msra.mxu0 0.0
    %5909 = vmatpush.msra.mxu0 0.0
    %5910 = vmatpush.msra.mxu0 %v5495
    %5911 = vmatpush.msra.mxu0 %v5446
    %5912 = vmatpush.msra.mxu0 %v5434
    %5913 = vmatmul.f32.gmra.mxu0 %v5464
    %v5914 = vpop.f32.mrf.mxu0
    %v5915 = vadd.f32 %v5892, %v5914
    %5916 = vmatmul.f32.gmra.mxu0 %v5467
    %v5917 = vpop.f32.mrf.mxu0
    %v5918 = vadd.f32 %v5895, %v5917
    %5919 = vdwg.mxu0
    %5920 = vmatpush.msra.mxu0 %v5423
    %5921 = vmatpush.msra.mxu0 %v5411
    %5922 = vmatpush.msra.mxu0 %v5399
    %5923 = vmatpush.msra.mxu0 %v5387
    %5924 = vmatpush.msra.mxu0 %v5375
    %5925 = vmatpush.msra.mxu0 %v5363
    %5926 = vmatpush.msra.mxu0 %v5351
    %5927 = vmatpush.msra.mxu0 %v5339
    %5928 = vmatpush.msra.mxu0 %v5327
    %5929 = vmatpush.msra.mxu0 %v5315
    %5930 = vmatpush.msra.mxu0 %v5303
    %5931 = vmatpush.msra.mxu0 %v5291
    %5932 = vmatpush.msra.mxu0 %v5279
    %5933 = vmatpush.msra.mxu0 %v5267
    %5934 = vmatpush.msra.mxu0 %v5255
    %5935 = vmatpush.msra.mxu0 %v5243
    %5936 = vmatmul.f32.gmra.mxu0 %v5230
    %v5937 = vpop.f32.mrf.mxu0
    %v5938 = vadd.f32 0.0, %v5937
    %5939 = vmatmul.f32.gmra.mxu0 %v5232
    %v5940 = vpop.f32.mrf.mxu0
    %v5941 = vadd.f32 0.0, %v5940
    %5942 = vdwg.mxu0
    %5943 = vmatpush.msra.mxu0 0.0
    %5944 = vmatpush.msra.mxu0 0.0
    %5945 = vmatpush.msra.mxu0 0.0
    %5946 = vmatpush.msra.mxu0 0.0
    %5947 = vmatpush.msra.mxu0 0.0
    %5948 = vmatpush.msra.mxu0 0.0
    %5949 = vmatpush.msra.mxu0 0.0
    %5950 = vmatpush.msra.mxu0 0.0
    %5951 = vmatpush.msra.mxu0 0.0
    %5952 = vmatpush.msra.mxu0 0.0
    %5953 = vmatpush.msra.mxu0 0.0
    %5954 = vmatpush.msra.mxu0 0.0
    %5955 = vmatpush.msra.mxu0 0.0
    %5956 = vmatpush.msra.mxu0 %v5498
    %5957 = vmatpush.msra.mxu0 %v5447
    %5958 = vmatpush.msra.mxu0 %v5435
    %5959 = vmatmul.f32.gmra.mxu0 %v5464
    %v5960 = vpop.f32.mrf.mxu0
    %v5961 = vadd.f32 %v5938, %v5960
    %5962 = vmatmul.f32.gmra.mxu0 %v5467
    %v5963 = vpop.f32.mrf.mxu0
    %v5964 = vadd.f32 %v5941, %v5963
    %5965 = vdwg.mxu0
    %5966 = vmatpush.msra.mxu0 %v5424
    %5967 = vmatpush.msra.mxu0 %v5412
    %5968 = vmatpush.msra.mxu0 %v5400
    %5969 = vmatpush.msra.mxu0 %v5388
    %5970 = vmatpush.msra.mxu0 %v5376
    %5971 = vmatpush.msra.mxu0 %v5364
    %5972 = vmatpush.msra.mxu0 %v5352
    %5973 = vmatpush.msra.mxu0 %v5340
    %5974 = vmatpush.msra.mxu0 %v5328
    %5975 = vmatpush.msra.mxu0 %v5316
    %5976 = vmatpush.msra.mxu0 %v5304
    %5977 = vmatpush.msra.mxu0 %v5292
    %5978 = vmatpush.msra.mxu0 %v5280
    %5979 = vmatpush.msra.mxu0 %v5268
    %5980 = vmatpush.msra.mxu0 %v5256
    %5981 = vmatpush.msra.mxu0 %v5244
    %5982 = vmatmul.f32.gmra.mxu0 %v5230
    %v5983 = vpop.f32.mrf.mxu0
    %v5984 = vadd.f32 0.0, %v5983
    %5985 = vmatmul.f32.gmra.mxu0 %v5232
    %v5986 = vpop.f32.mrf.mxu0
    %v5987 = vadd.f32 0.0, %v5986
    %5988 = vdwg.mxu0
    %5989 = vmatpush.msra.mxu0 0.0
    %5990 = vmatpush.msra.mxu0 0.0
    %5991 = vmatpush.msra.mxu0 0.0
    %5992 = vmatpush.msra.mxu0 0.0
    %5993 = vmatpush.msra.mxu0 0.0
    %5994 = vmatpush.msra.mxu0 0.0
    %5995 = vmatpush.msra.mxu0 0.0
    %5996 = vmatpush.msra.mxu0 0.0
    %5997 = vmatpush.msra.mxu0 0.0
    %5998 = vmatpush.msra.mxu0 0.0
    %5999 = vmatpush.msra.mxu0 0.0
    %6000 = vmatpush.msra.mxu0 0.0
    %6001 = vmatpush.msra.mxu0 0.0
    %6002 = vmatpush.msra.mxu0 %v5501
    %6003 = vmatpush.msra.mxu0 %v5448
    %6004 = vmatpush.msra.mxu0 %v5436
    %6005 = vmatmul.f32.gmra.mxu0 %v5464
    %v6006 = vpop.f32.mrf.mxu0
    %v6007 = vadd.f32 %v5984, %v6006
    %6008 = vmatmul.f32.gmra.mxu0 %v5467
    %v6009 = vpop.f32.mrf.mxu0
    %v6010 = vadd.f32 %v5987, %v6009
    %6011 = vdwg.mxu0
    %6012 = vmatpush.msra.mxu0 %v5425
    %6013 = vmatpush.msra.mxu0 %v5413
    %6014 = vmatpush.msra.mxu0 %v5401
    %6015 = vmatpush.msra.mxu0 %v5389
    %6016 = vmatpush.msra.mxu0 %v5377
    %6017 = vmatpush.msra.mxu0 %v5365
    %6018 = vmatpush.msra.mxu0 %v5353
    %6019 = vmatpush.msra.mxu0 %v5341
    %6020 = vmatpush.msra.mxu0 %v5329
    %6021 = vmatpush.msra.mxu0 %v5317
    %6022 = vmatpush.msra.mxu0 %v5305
    %6023 = vmatpush.msra.mxu0 %v5293
    %6024 = vmatpush.msra.mxu0 %v5281
    %6025 = vmatpush.msra.mxu0 %v5269
    %6026 = vmatpush.msra.mxu0 %v5257
    %6027 = vmatpush.msra.mxu0 %v5245
    %6028 = vmatmul.f32.gmra.mxu0 %v5230
    %v6029 = vpop.f32.mrf.mxu0
    %v6030 = vadd.f32 0.0, %v6029
    %6031 = vmatmul.f32.gmra.mxu0 %v5232
    %v6032 = vpop.f32.mrf.mxu0
    %v6033 = vadd.f32 0.0, %v6032
    %6034 = vdwg.mxu0
    %6035 = vmatpush.msra.mxu0 0.0
    %6036 = vmatpush.msra.mxu0 0.0
    %6037 = vmatpush.msra.mxu0 0.0
    %6038 = vmatpush.msra.mxu0 0.0
    %6039 = vmatpush.msra.mxu0 0.0
    %6040 = vmatpush.msra.mxu0 0.0
    %6041 = vmatpush.msra.mxu0 0.0
    %6042 = vmatpush.msra.mxu0 0.0
    %6043 = vmatpush.msra.mxu0 0.0
    %6044 = vmatpush.msra.mxu0 0.0
    %6045 = vmatpush.msra.mxu0 0.0
    %6046 = vmatpush.msra.mxu0 0.0
    %6047 = vmatpush.msra.mxu0 0.0
    %6048 = vmatpush.msra.mxu0 %v5504
    %6049 = vmatpush.msra.mxu0 %v5449
    %6050 = vmatpush.msra.mxu0 %v5437
    %6051 = vmatmul.f32.gmra.mxu0 %v5464
    %v6052 = vpop.f32.mrf.mxu0
    %v6053 = vadd.f32 %v6030, %v6052
    %6054 = vmatmul.f32.gmra.mxu0 %v5467
    %v6055 = vpop.f32.mrf.mxu0
    %v6056 = vadd.f32 %v6033, %v6055
    %6057 = vdwg.mxu0
    %v6058 = vld [vmem:[%s5] sm:$0xff]
    %v6059 = vld [vmem:[%s5 + $0x8] sm:$0xff]
    %6061 = vset.pattern.permute.xlu0 0
    %6062 = vperm.xlu0 %6061, %v6058
    %v6063 = vpop.permute.xlu0 %6062
    %6066 = vset.pattern.permute.xlu0 0
    %6067 = vperm.xlu0 %6066, %v6059
    %v6068 = vpop.permute.xlu0 %6067
    %v6070 = vmul.f32 %v5547, %v6063
    %v6071 = vmul.f32 %v5593, %v6063
    %v6072 = vmul.f32 %v5639, %v6063
    %v6073 = vmul.f32 %v5685, %v6063
    %v6074 = vmul.f32 %v5731, %v6063
    %v6075 = vmul.f32 %v5777, %v6063
    %v6076 = vmul.f32 %v5823, %v6063
    %v6077 = vmul.f32 %v5869, %v6063
    %v6078 = vmul.f32 %v5915, %v6063
    %v6079 = vmul.f32 %v5961, %v6063
    %v6080 = vmul.f32 %v6007, %v6063
    %v6081 = vmul.f32 %v6053, %v6063
    %v6082 = vmul.f32 %v5550, %v6068
    %v6083 = vmul.f32 %v5596, %v6068
    %v6084 = vmul.f32 %v5642, %v6068
    %v6085 = vmul.f32 %v5688, %v6068
    %v6086 = vmul.f32 %v5734, %v6068
    %v6087 = vmul.f32 %v5780, %v6068
    %v6088 = vmul.f32 %v5826, %v6068
    %v6089 = vmul.f32 %v5872, %v6068
    %v6090 = vmul.f32 %v5918, %v6068
    %v6091 = vmul.f32 %v5964, %v6068
    %v6092 = vmul.f32 %v6010, %v6068
    %v6093 = vmul.f32 %v6056, %v6068
    %v6094 = vld [vmem:[%s6] sm:$0xff]
    %v6095 = vld [vmem:[%s6 + $0x8] sm:$0xff]
    %6097 = vset.pattern.permute.xlu0 0
    %6098 = vperm.xlu0 %6097, %v6094
    %v6099 = vpop.permute.xlu0 %6098
    %6102 = vset.pattern.permute.xlu0 0
    %6103 = vperm.xlu0 %6102, %v6095
    %v6104 = vpop.permute.xlu0 %6103
    %v6106 = vadd.f32 %v6070, %v6099
    %v6107 = vadd.f32 %v6071, %v6099
    %v6108 = vadd.f32 %v6072, %v6099
    %v6109 = vadd.f32 %v6073, %v6099
    %v6110 = vadd.f32 %v6074, %v6099
    %v6111 = vadd.f32 %v6075, %v6099
    %v6112 = vadd.f32 %v6076, %v6099
    %v6113 = vadd.f32 %v6077, %v6099
    %v6114 = vadd.f32 %v6078, %v6099
    %v6115 = vadd.f32 %v6079, %v6099
    %v6116 = vadd.f32 %v6080, %v6099
    %v6117 = vadd.f32 %v6081, %v6099
    %v6118 = vadd.f32 %v6082, %v6104
    %v6119 = vadd.f32 %v6083, %v6104
    %v6120 = vadd.f32 %v6084, %v6104
    %v6121 = vadd.f32 %v6085, %v6104
    %v6122 = vadd.f32 %v6086, %v6104
    %v6123 = vadd.f32 %v6087, %v6104
    %v6124 = vadd.f32 %v6088, %v6104
    %v6125 = vadd.f32 %v6089, %v6104
    %v6126 = vadd.f32 %v6090, %v6104
    %v6127 = vadd.f32 %v6091, %v6104
    %v6128 = vadd.f32 %v6092, %v6104
    %v6129 = vadd.f32 %v6093, %v6104
    %v6130 = vmax.f32 %v6106, 0.0
    %v6131 = vmax.f32 %v6107, 0.0
    %v6132 = vmax.f32 %v6108, 0.0
    %v6133 = vmax.f32 %v6109, 0.0
    %v6134 = vmax.f32 %v6110, 0.0
    %v6135 = vmax.f32 %v6111, 0.0
    %v6136 = vmax.f32 %v6112, 0.0
    %v6137 = vmax.f32 %v6113, 0.0
    %v6138 = vmax.f32 %v6114, 0.0
    %v6139 = vmax.f32 %v6115, 0.0
    %v6140 = vmax.f32 %v6116, 0.0
    %v6141 = vmax.f32 %v6117, 0.0
    %v6142 = vmax.f32 %v6118, 0.0
    %v6143 = vmax.f32 %v6119, 0.0
    %v6144 = vmax.f32 %v6120, 0.0
    %v6145 = vmax.f32 %v6121, 0.0
    %v6146 = vmax.f32 %v6122, 0.0
    %v6147 = vmax.f32 %v6123, 0.0
    %v6148 = vmax.f32 %v6124, 0.0
    %v6149 = vmax.f32 %v6125, 0.0
    %v6150 = vmax.f32 %v6126, 0.0
    %v6151 = vmax.f32 %v6127, 0.0
    %v6152 = vmax.f32 %v6128, 0.0
    %v6153 = vmax.f32 %v6129, 0.0
    %6176 = vrot.lane.b32.xlu0 %v6130, 126
    %v6177 = vpop.permute.xlu0 %6176
    %6178 = vrot.lane.b32.xlu0 %v6131, 126
    %v6179 = vpop.permute.xlu0 %6178
    %6180 = vrot.lane.b32.xlu0 %v6132, 126
    %v6181 = vpop.permute.xlu0 %6180
    %6182 = vrot.lane.b32.xlu0 %v6133, 126
    %v6183 = vpop.permute.xlu0 %6182
    %6184 = vrot.lane.b32.xlu0 %v6134, 126
    %v6185 = vpop.permute.xlu0 %6184
    %6186 = vrot.lane.b32.xlu0 %v6135, 126
    %v6187 = vpop.permute.xlu0 %6186
    %6188 = vrot.lane.b32.xlu0 %v6137, 126
    %v6189 = vpop.permute.xlu0 %6188
    %6190 = vrot.lane.b32.xlu0 %v6138, 126
    %v6191 = vpop.permute.xlu0 %6190
    %6192 = vrot.lane.b32.xlu0 %v6139, 126
    %v6193 = vpop.permute.xlu0 %6192
    %6194 = vrot.lane.b32.xlu0 %v6140, 126
    %v6195 = vpop.permute.xlu0 %6194
    %6196 = vrot.lane.b32.xlu0 %v6141, 126
    %v6197 = vpop.permute.xlu0 %6196
    %6198 = vrot.lane.b32.xlu0 %v6142, 126
    %v6199 = vpop.permute.xlu0 %6198
    %6200 = vrot.lane.b32.xlu0 %v6143, 126
    %v6201 = vpop.permute.xlu0 %6200
    %6202 = vrot.lane.b32.xlu0 %v6144, 126
    %v6203 = vpop.permute.xlu0 %6202
    %6204 = vrot.lane.b32.xlu0 %v6145, 126
    %v6205 = vpop.permute.xlu0 %6204
    %6206 = vrot.lane.b32.xlu0 %v6146, 126
    %v6207 = vpop.permute.xlu0 %6206
    %6208 = vrot.lane.b32.xlu0 %v6147, 126
    %v6209 = vpop.permute.xlu0 %6208
    %6210 = vrot.lane.b32.xlu0 %v6149, 126
    %v6211 = vpop.permute.xlu0 %6210
    %6212 = vrot.lane.b32.xlu0 %v6150, 126
    %v6213 = vpop.permute.xlu0 %6212
    %6214 = vrot.lane.b32.xlu0 %v6151, 126
    %v6215 = vpop.permute.xlu0 %6214
    %6216 = vrot.lane.b32.xlu0 %v6152, 126
    %v6217 = vpop.permute.xlu0 %6216
    %6218 = vrot.lane.b32.xlu0 %v6153, 126
    %v6219 = vpop.permute.xlu0 %6218
    %v6220 = vsel %vm315, %v6177, %v6179
    %v6221 = vsel %vm315, %v6179, %v6181
    %v6222 = vsel %vm315, %v6181, %v6183
    %v6223 = vsel %vm315, %v6183, %v6185
    %v6224 = vsel %vm315, %v6185, %v6187
    %v6225 = vsel %vm315, %v6189, %v6191
    %v6226 = vsel %vm315, %v6191, %v6193
    %v6227 = vsel %vm315, %v6193, %v6195
    %v6228 = vsel %vm315, %v6195, %v6197
    %v6229 = vsel %vm315, %v6199, %v6201
    %v6230 = vsel %vm315, %v6201, %v6203
    %v6231 = vsel %vm315, %v6203, %v6205
    %v6232 = vsel %vm315, %v6205, %v6207
    %v6233 = vsel %vm315, %v6207, %v6209
    %v6234 = vsel %vm315, %v6211, %v6213
    %v6235 = vsel %vm315, %v6213, %v6215
    %v6236 = vsel %vm315, %v6215, %v6217
    %v6237 = vsel %vm315, %v6217, %v6219
    %v6258 = vmax.f32 %v6130, %v6220
    %v6259 = vmax.f32 %v6131, %v6221
    %v6260 = vmax.f32 %v6132, %v6222
    %v6261 = vmax.f32 %v6133, %v6223
    %v6262 = vmax.f32 %v6134, %v6224
    %v6263 = vmax.f32 %v6137, %v6225
    %v6264 = vmax.f32 %v6138, %v6226
    %v6265 = vmax.f32 %v6139, %v6227
    %v6266 = vmax.f32 %v6140, %v6228
    %v6267 = vmax.f32 %v6141, %v6197
    %v6268 = vmax.f32 %v6142, %v6229
    %v6269 = vmax.f32 %v6143, %v6230
    %v6270 = vmax.f32 %v6144, %v6231
    %v6271 = vmax.f32 %v6145, %v6232
    %v6272 = vmax.f32 %v6146, %v6233
    %v6273 = vmax.f32 %v6149, %v6234
    %v6274 = vmax.f32 %v6150, %v6235
    %v6275 = vmax.f32 %v6151, %v6236
    %v6276 = vmax.f32 %v6152, %v6237
    %v6277 = vmax.f32 %v6153, %v6219
    %6280 = vrot.lane.b32.xlu0 %v6136, 126
    %v6281 = vpop.permute.xlu0 %6280
    %6282 = vrot.lane.b32.xlu0 %v6148, 126
    %v6283 = vpop.permute.xlu0 %6282
    %v6284 = vsel %vm315, %v6187, %v6281
    %v6285 = vsel %vm315, %v6209, %v6283
    %v6288 = vmax.f32 %v6135, %v6284
    %v6289 = vmax.f32 %v6147, %v6285
    %6312 = vrot.lane.b32.xlu0 %v6258, 64
    %v6313 = vpop.permute.xlu0 %6312
    %6314 = vrot.lane.b32.xlu0 %v6259, 64
    %v6315 = vpop.permute.xlu0 %6314
    %6316 = vrot.lane.b32.xlu0 %v6260, 64
    %v6317 = vpop.permute.xlu0 %6316
    %6318 = vrot.lane.b32.xlu0 %v6261, 64
    %v6319 = vpop.permute.xlu0 %6318
    %6320 = vrot.lane.b32.xlu0 %v6262, 64
    %v6321 = vpop.permute.xlu0 %6320
    %6322 = vrot.lane.b32.xlu0 %v6288, 64
    %v6323 = vpop.permute.xlu0 %6322
    %6324 = vrot.lane.b32.xlu0 %v6263, 64
    %v6325 = vpop.permute.xlu0 %6324
    %6326 = vrot.lane.b32.xlu0 %v6264, 64
    %v6327 = vpop.permute.xlu0 %6326
    %6328 = vrot.lane.b32.xlu0 %v6265, 64
    %v6329 = vpop.permute.xlu0 %6328
    %6330 = vrot.lane.b32.xlu0 %v6266, 64
    %v6331 = vpop.permute.xlu0 %6330
    %6332 = vrot.lane.b32.xlu0 %v6267, 64
    %v6333 = vpop.permute.xlu0 %6332
    %6334 = vrot.lane.b32.xlu0 %v6268, 64
    %v6335 = vpop.permute.xlu0 %6334
    %6336 = vrot.lane.b32.xlu0 %v6269, 64
    %v6337 = vpop.permute.xlu0 %6336
    %6338 = vrot.lane.b32.xlu0 %v6270, 64
    %v6339 = vpop.permute.xlu0 %6338
    %6340 = vrot.lane.b32.xlu0 %v6271, 64
    %v6341 = vpop.permute.xlu0 %6340
    %6342 = vrot.lane.b32.xlu0 %v6272, 64
    %v6343 = vpop.permute.xlu0 %6342
    %6344 = vrot.lane.b32.xlu0 %v6289, 64
    %v6345 = vpop.permute.xlu0 %6344
    %6346 = vrot.lane.b32.xlu0 %v6273, 64
    %v6347 = vpop.permute.xlu0 %6346
    %6348 = vrot.lane.b32.xlu0 %v6274, 64
    %v6349 = vpop.permute.xlu0 %6348
    %6350 = vrot.lane.b32.xlu0 %v6275, 64
    %v6351 = vpop.permute.xlu0 %6350
    %6352 = vrot.lane.b32.xlu0 %v6276, 64
    %v6353 = vpop.permute.xlu0 %6352
    %6354 = vrot.lane.b32.xlu0 %v6277, 64
    %v6355 = vpop.permute.xlu0 %6354
    %v6356 = vsel %vm1280, %v6313, %v6315
    %v6357 = vsel %vm1280, %v6315, %v6317
    %v6358 = vsel %vm1280, %v6317, %v6319
    %v6359 = vsel %vm1280, %v6319, %v6321
    %v6360 = vsel %vm1280, %v6321, %v6323
    %v6361 = vsel %vm1280, %v6325, %v6327
    %v6362 = vsel %vm1280, %v6327, %v6329
    %v6363 = vsel %vm1280, %v6329, %v6331
    %v6364 = vsel %vm1280, %v6331, %v6333
    %v6365 = vsel %vm1280, %v6335, %v6337
    %v6366 = vsel %vm1280, %v6337, %v6339
    %v6367 = vsel %vm1280, %v6339, %v6341
    %v6368 = vsel %vm1280, %v6341, %v6343
    %v6369 = vsel %vm1280, %v6343, %v6345
    %v6370 = vsel %vm1280, %v6347, %v6349
    %v6371 = vsel %vm1280, %v6349, %v6351
    %v6372 = vsel %vm1280, %v6351, %v6353
    %v6373 = vsel %vm1280, %v6353, %v6355
    %v6394 = vmax.f32 %v6258, %v6356
    %v6395 = vmax.f32 %v6259, %v6357
    %v6396 = vmax.f32 %v6260, %v6358
    %v6397 = vmax.f32 %v6261, %v6359
    %v6398 = vmax.f32 %v6262, %v6360
    %v6399 = vmax.f32 %v6263, %v6361
    %v6400 = vmax.f32 %v6264, %v6362
    %v6401 = vmax.f32 %v6265, %v6363
    %v6402 = vmax.f32 %v6266, %v6364
    %v6403 = vmax.f32 %v6267, %v6333
    %v6404 = vmax.f32 %v6268, %v6365
    %v6405 = vmax.f32 %v6269, %v6366
    %v6406 = vmax.f32 %v6270, %v6367
    %v6407 = vmax.f32 %v6271, %v6368
    %v6408 = vmax.f32 %v6272, %v6369
    %v6409 = vmax.f32 %v6273, %v6370
    %v6410 = vmax.f32 %v6274, %v6371
    %v6411 = vmax.f32 %v6275, %v6372
    %v6412 = vmax.f32 %v6276, %v6373
    %v6413 = vmax.f32 %v6277, %v6355
    %v6414 = vld [vmem:[%s7] sm:$0xff]
    %v6415 = vld [vmem:[%s7 + $0x8] sm:$0xff]
    %v6416 = vld [vmem:[%s7 + $0x10] sm:$0xff]
    %v6417 = vld [vmem:[%s7 + $0x18] sm:$0xff]
    %v6418 = vld [vmem:[%s7 + $0x20] sm:$0xff]
    %v6419 = vld [vmem:[%s7 + $0x28] sm:$0xff]
    %v6420 = vld [vmem:[%s7 + $0x30] sm:$0xff]
    %v6421 = vld [vmem:[%s7 + $0x38] sm:$0xff]
    %v6422 = vld [vmem:[%s7 + $0x40] sm:$0xff]
    %v6423 = vld [vmem:[%s7 + $0x48] sm:$0xff]
    %v6424 = vld [vmem:[%s7 + $0x50] sm:$0xff]
    %v6425 = vld [vmem:[%s7 + $0x58] sm:$0xff]
    %v6426 = vld [vmem:[%s7 + $0x60] sm:$0xff]
    %v6427 = vld [vmem:[%s7 + $0x68] sm:$0xff]
    %v6428 = vld [vmem:[%s7 + $0x70] sm:$0xff]
    %v6429 = vld [vmem:[%s7 + $0x78] sm:$0xff]
    %v6430 = vld [vmem:[%s7 + $0x80] sm:$0xff]
    %v6431 = vld [vmem:[%s7 + $0x88] sm:$0xff]
    %v6432 = vld [vmem:[%s7 + $0x90] sm:$0xff]
    %v6433 = vld [vmem:[%s7 + $0x98] sm:$0xff]
    %v6434 = vld [vmem:[%s7 + $0xa0] sm:$0xff]
    %v6435 = vld [vmem:[%s7 + $0xa8] sm:$0xff]
    %v6436 = vld [vmem:[%s7 + $0xb0] sm:$0xff]
    %v6437 = vld [vmem:[%s7 + $0xb8] sm:$0xff]
    %v6438 = vld [vmem:[%s7 + $0xc0] sm:$0xff]
    %v6439 = vld [vmem:[%s7 + $0xc8] sm:$0xff]
    %v6440 = vld [vmem:[%s7 + $0xd0] sm:$0xff]
    %v6441 = vld [vmem:[%s7 + $0xd8] sm:$0xff]
    %v6442 = vld [vmem:[%s7 + $0xe0] sm:$0xff]
    %v6443 = vld [vmem:[%s7 + $0xe8] sm:$0xff]
    %v6444 = vld [vmem:[%s7 + $0xf0] sm:$0xff]
    %v6445 = vld [vmem:[%s7 + $0xf8] sm:$0xff]
    %v6446 = vld [vmem:[%s7 + $0x100] sm:$0xff]
    %v6447 = vld [vmem:[%s7 + $0x108] sm:$0xff]
    %v6448 = vld [vmem:[%s7 + $0x110] sm:$0xff]
    %v6449 = vld [vmem:[%s7 + $0x118] sm:$0xff]
    %v6450 = vld [vmem:[%s7 + $0x120] sm:$0xff]
    %v6451 = vld [vmem:[%s7 + $0x128] sm:$0xff]
    %v6452 = vld [vmem:[%s7 + $0x130] sm:$0xff]
    %v6453 = vld [vmem:[%s7 + $0x138] sm:$0xff]
    %v6454 = vld [vmem:[%s7 + $0x140] sm:$0xff]
    %v6455 = vld [vmem:[%s7 + $0x148] sm:$0xff]
    %v6456 = vld [vmem:[%s7 + $0x150] sm:$0xff]
    %v6457 = vld [vmem:[%s7 + $0x158] sm:$0xff]
    %v6458 = vld [vmem:[%s7 + $0x160] sm:$0xff]
    %v6459 = vld [vmem:[%s7 + $0x168] sm:$0xff]
    %v6460 = vld [vmem:[%s7 + $0x170] sm:$0xff]
    %v6461 = vld [vmem:[%s7 + $0x178] sm:$0xff]
    %v6462 = vld [vmem:[%s7 + $0x180] sm:$0xff]
    %v6463 = vld [vmem:[%s7 + $0x188] sm:$0xff]
    %v6464 = vld [vmem:[%s7 + $0x190] sm:$0xff]
    %v6465 = vld [vmem:[%s7 + $0x198] sm:$0xff]
    %v6466 = vld [vmem:[%s7 + $0x1a0] sm:$0xff]
    %v6467 = vld [vmem:[%s7 + $0x1a8] sm:$0xff]
    %v6468 = vld [vmem:[%s7 + $0x1b0] sm:$0xff]
    %v6469 = vld [vmem:[%s7 + $0x1b8] sm:$0xff]
    %v6470 = vld [vmem:[%s7 + $0x1c0] sm:$0xff]
    %v6471 = vld [vmem:[%s7 + $0x1c8] sm:$0xff]
    %v6472 = vld [vmem:[%s7 + $0x1d0] sm:$0xff]
    %v6473 = vld [vmem:[%s7 + $0x1d8] sm:$0xff]
    %v6474 = vld [vmem:[%s7 + $0x1e0] sm:$0xff]
    %v6475 = vld [vmem:[%s7 + $0x1e8] sm:$0xff]
    %v6476 = vld [vmem:[%s7 + $0x1f0] sm:$0xff]
    %v6477 = vld [vmem:[%s7 + $0x1f8] sm:$0xff]
    %v6478 = vld [vmem:[%s7 + $0x200] sm:$0xff]
    %v6479 = vld [vmem:[%s7 + $0x208] sm:$0xff]
    %v6480 = vld [vmem:[%s7 + $0x210] sm:$0x1]
    %vm6481 = vcmask 138240
    %v6483 = vsel %vm6481, %v6398, 0
    %v6486 = vsel %vm6481, %v6408, 0
    %vm6488 = vcmask 1040384
    %v6490 = vsel %vm6488, %v6480, 0
    %6492 = vmatpush.msra.mxu0 %v6429
    %6493 = vmatpush.msra.mxu0 %v6428
    %6494 = vmatpush.msra.mxu0 %v6427
    %6495 = vmatpush.msra.mxu0 %v6426
    %6496 = vmatpush.msra.mxu0 %v6425
    %6497 = vmatpush.msra.mxu0 %v6424
    %6498 = vmatpush.msra.mxu0 %v6423
    %6499 = vmatpush.msra.mxu0 %v6422
    %6500 = vmatpush.msra.mxu0 %v6421
    %6501 = vmatpush.msra.mxu0 %v6420
    %6502 = vmatpush.msra.mxu0 %v6419
    %6503 = vmatpush.msra.mxu0 %v6418
    %6504 = vmatpush.msra.mxu0 %v6417
    %6505 = vmatpush.msra.mxu0 %v6416
    %6506 = vmatpush.msra.mxu0 %v6415
    %6507 = vmatpush.msra.mxu0 %v6414
    %6508 = vmatmul.f32.gmra.mxu0 %v6394
    %v6509 = vpop.f32.mrf.mxu0
    %v6510 = vadd.f32 0.0, %v6509
    %6511 = vmatmul.f32.gmra.mxu0 %v6404
    %v6512 = vpop.f32.mrf.mxu0
    %v6513 = vadd.f32 0.0, %v6512
    %6514 = vdwg.mxu0
    %6515 = vmatpush.msra.mxu0 %v6445
    %6516 = vmatpush.msra.mxu0 %v6444
    %6517 = vmatpush.msra.mxu0 %v6443
    %6518 = vmatpush.msra.mxu0 %v6442
    %6519 = vmatpush.msra.mxu0 %v6441
    %6520 = vmatpush.msra.mxu0 %v6440
    %6521 = vmatpush.msra.mxu0 %v6439
    %6522 = vmatpush.msra.mxu0 %v6438
    %6523 = vmatpush.msra.mxu0 %v6437
    %6524 = vmatpush.msra.mxu0 %v6436
    %6525 = vmatpush.msra.mxu0 %v6435
    %6526 = vmatpush.msra.mxu0 %v6434
    %6527 = vmatpush.msra.mxu0 %v6433
    %6528 = vmatpush.msra.mxu0 %v6432
    %6529 = vmatpush.msra.mxu0 %v6431
    %6530 = vmatpush.msra.mxu0 %v6430
    %6531 = vmatmul.f32.gmra.mxu0 %v6395
    %v6532 = vpop.f32.mrf.mxu0
    %v6533 = vadd.f32 %v6510, %v6532
    %6534 = vmatmul.f32.gmra.mxu0 %v6405
    %v6535 = vpop.f32.mrf.mxu0
    %v6536 = vadd.f32 %v6513, %v6535
    %6537 = vdwg.mxu0
    %6538 = vmatpush.msra.mxu0 %v6461
    %6539 = vmatpush.msra.mxu0 %v6460
    %6540 = vmatpush.msra.mxu0 %v6459
    %6541 = vmatpush.msra.mxu0 %v6458
    %6542 = vmatpush.msra.mxu0 %v6457
    %6543 = vmatpush.msra.mxu0 %v6456
    %6544 = vmatpush.msra.mxu0 %v6455
    %6545 = vmatpush.msra.mxu0 %v6454
    %6546 = vmatpush.msra.mxu0 %v6453
    %6547 = vmatpush.msra.mxu0 %v6452
    %6548 = vmatpush.msra.mxu0 %v6451
    %6549 = vmatpush.msra.mxu0 %v6450
    %6550 = vmatpush.msra.mxu0 %v6449
    %6551 = vmatpush.msra.mxu0 %v6448
    %6552 = vmatpush.msra.mxu0 %v6447
    %6553 = vmatpush.msra.mxu0 %v6446
    %6554 = vmatmul.f32.gmra.mxu0 %v6396
    %v6555 = vpop.f32.mrf.mxu0
    %v6556 = vadd.f32 %v6533, %v6555
    %6557 = vmatmul.f32.gmra.mxu0 %v6406
    %v6558 = vpop.f32.mrf.mxu0
    %v6559 = vadd.f32 %v6536, %v6558
    %6560 = vdwg.mxu0
    %6561 = vmatpush.msra.mxu0 %v6477
    %6562 = vmatpush.msra.mxu0 %v6476
    %6563 = vmatpush.msra.mxu0 %v6475
    %6564 = vmatpush.msra.mxu0 %v6474
    %6565 = vmatpush.msra.mxu0 %v6473
    %6566 = vmatpush.msra.mxu0 %v6472
    %6567 = vmatpush.msra.mxu0 %v6471
    %6568 = vmatpush.msra.mxu0 %v6470
    %6569 = vmatpush.msra.mxu0 %v6469
    %6570 = vmatpush.msra.mxu0 %v6468
    %6571 = vmatpush.msra.mxu0 %v6467
    %6572 = vmatpush.msra.mxu0 %v6466
    %6573 = vmatpush.msra.mxu0 %v6465
    %6574 = vmatpush.msra.mxu0 %v6464
    %6575 = vmatpush.msra.mxu0 %v6463
    %6576 = vmatpush.msra.mxu0 %v6462
    %6577 = vmatmul.f32.gmra.mxu0 %v6397
    %v6578 = vpop.f32.mrf.mxu0
    %v6579 = vadd.f32 %v6556, %v6578
    %6580 = vmatmul.f32.gmra.mxu0 %v6407
    %v6581 = vpop.f32.mrf.mxu0
    %v6582 = vadd.f32 %v6559, %v6581
    %6583 = vdwg.mxu0
    %6584 = vmatpush.msra.mxu0 0.0
    %6585 = vmatpush.msra.mxu0 0.0
    %6586 = vmatpush.msra.mxu0 0.0
    %6587 = vmatpush.msra.mxu0 0.0
    %6588 = vmatpush.msra.mxu0 0.0
    %6589 = vmatpush.msra.mxu0 0.0
    %6590 = vmatpush.msra.mxu0 0.0
    %6591 = vmatpush.msra.mxu0 0.0
    %6592 = vmatpush.msra.mxu0 0.0
    %6593 = vmatpush.msra.mxu0 0.0
    %6594 = vmatpush.msra.mxu0 0.0
    %6595 = vmatpush.msra.mxu0 0.0
    %6596 = vmatpush.msra.mxu0 0.0
    %6597 = vmatpush.msra.mxu0 %v6490
    %6598 = vmatpush.msra.mxu0 %v6479
    %6599 = vmatpush.msra.mxu0 %v6478
    %6600 = vmatmul.f32.gmra.mxu0 %v6483
    %v6601 = vpop.f32.mrf.mxu0
    %v6602 = vadd.f32 %v6579, %v6601
    %6603 = vmatmul.f32.gmra.mxu0 %v6486
    %v6604 = vpop.f32.mrf.mxu0
    %v6605 = vadd.f32 %v6582, %v6604
    %6606 = vdwg.mxu0
    %v6607 = vld [vmem:[%s8] sm:$0xff]
    %v6608 = vld [vmem:[%s8 + $0x8] sm:$0xff]
    %v6609 = vld [vmem:[%s8 + $0x10] sm:$0xff]
    %v6610 = vld [vmem:[%s8 + $0x18] sm:$0xff]
    %v6611 = vld [vmem:[%s8 + $0x20] sm:$0xff]
    %v6612 = vld [vmem:[%s8 + $0x28] sm:$0xff]
    %v6613 = vld [vmem:[%s8 + $0x30] sm:$0xff]
    %v6614 = vld [vmem:[%s8 + $0x38] sm:$0xff]
    %v6615 = vld [vmem:[%s8 + $0x40] sm:$0xff]
    %v6616 = vld [vmem:[%s8 + $0x48] sm:$0xff]
    %v6617 = vld [vmem:[%s8 + $0x50] sm:$0xff]
    %v6618 = vld [vmem:[%s8 + $0x58] sm:$0xff]
    %v6619 = vld [vmem:[%s8 + $0x60] sm:$0x1]
    %v6620 = vld [vmem:[%s8 + $0x68] sm:$0x1]
    %v6621 = vld [vmem:[%s8 + $0x70] sm:$0x1]
    %v6622 = vld [vmem:[%s8 + $0x78] sm:$0x1]
    %vm6623 = vcmask 203776
    %v6625 = vsel %vm6623, %v6602, 0
    %v6628 = vsel %vm6623, %v6605, 0
    %v6631 = vsel %vm6488, %v6619, 0
    %v6634 = vsel %vm6488, %v6620, 0
    %v6637 = vsel %vm6488, %v6621, 0
    %v6640 = vsel %vm6488, %v6622, 0
    %6642 = vmatpush.msra.mxu0 0.0
    %6643 = vmatpush.msra.mxu0 0.0
    %6644 = vmatpush.msra.mxu0 0.0
    %6645 = vmatpush.msra.mxu0 0.0
    %6646 = vmatpush.msra.mxu0 0.0
    %6647 = vmatpush.msra.mxu0 0.0
    %6648 = vmatpush.msra.mxu0 0.0
    %6649 = vmatpush.msra.mxu0 0.0
    %6650 = vmatpush.msra.mxu0 0.0
    %6651 = vmatpush.msra.mxu0 0.0
    %6652 = vmatpush.msra.mxu0 0.0
    %6653 = vmatpush.msra.mxu0 0.0
    %6654 = vmatpush.msra.mxu0 %v6631
    %6655 = vmatpush.msra.mxu0 %v6615
    %6656 = vmatpush.msra.mxu0 %v6611
    %6657 = vmatpush.msra.mxu0 %v6607
    %6658 = vmatmul.f32.gmra.mxu0 %v6625
    %v6659 = vpop.f32.mrf.mxu0
    %v6660 = vadd.f32 0.0, %v6659
    %6661 = vmatmul.f32.gmra.mxu0 %v6628
    %v6662 = vpop.f32.mrf.mxu0
    %v6663 = vadd.f32 0.0, %v6662
    %6664 = vdwg.mxu0
    %6665 = vmatpush.msra.mxu0 0.0
    %6666 = vmatpush.msra.mxu0 0.0
    %6667 = vmatpush.msra.mxu0 0.0
    %6668 = vmatpush.msra.mxu0 0.0
    %6669 = vmatpush.msra.mxu0 0.0
    %6670 = vmatpush.msra.mxu0 0.0
    %6671 = vmatpush.msra.mxu0 0.0
    %6672 = vmatpush.msra.mxu0 0.0
    %6673 = vmatpush.msra.mxu0 0.0
    %6674 = vmatpush.msra.mxu0 0.0
    %6675 = vmatpush.msra.mxu0 0.0
    %6676 = vmatpush.msra.mxu0 0.0
    %6677 = vmatpush.msra.mxu0 %v6634
    %6678 = vmatpush.msra.mxu0 %v6616
    %6679 = vmatpush.msra.mxu0 %v6612
    %6680 = vmatpush.msra.mxu0 %v6608
    %6681 = vmatmul.f32.gmra.mxu0 %v6625
    %v6682 = vpop.f32.mrf.mxu0
    %v6683 = vadd.f32 0.0, %v6682
    %6684 = vmatmul.f32.gmra.mxu0 %v6628
    %v6685 = vpop.f32.mrf.mxu0
    %v6686 = vadd.f32 0.0, %v6685
    %6687 = vdwg.mxu0
    %6688 = vmatpush.msra.mxu0 0.0
    %6689 = vmatpush.msra.mxu0 0.0
    %6690 = vmatpush.msra.mxu0 0.0
    %6691 = vmatpush.msra.mxu0 0.0
    %6692 = vmatpush.msra.mxu0 0.0
    %6693 = vmatpush.msra.mxu0 0.0
    %6694 = vmatpush.msra.mxu0 0.0
    %6695 = vmatpush.msra.mxu0 0.0
    %6696 = vmatpush.msra.mxu0 0.0
    %6697 = vmatpush.msra.mxu0 0.0
    %6698 = vmatpush.msra.mxu0 0.0
    %6699 = vmatpush.msra.mxu0 0.0
    %6700 = vmatpush.msra.mxu0 %v6637
    %6701 = vmatpush.msra.mxu0 %v6617
    %6702 = vmatpush.msra.mxu0 %v6613
    %6703 = vmatpush.msra.mxu0 %v6609
    %6704 = vmatmul.f32.gmra.mxu0 %v6625
    %v6705 = vpop.f32.mrf.mxu0
    %v6706 = vadd.f32 0.0, %v6705
    %6707 = vmatmul.f32.gmra.mxu0 %v6628
    %v6708 = vpop.f32.mrf.mxu0
    %v6709 = vadd.f32 0.0, %v6708
    %6710 = vdwg.mxu0
    %6711 = vmatpush.msra.mxu0 0.0
    %6712 = vmatpush.msra.mxu0 0.0
    %6713 = vmatpush.msra.mxu0 0.0
    %6714 = vmatpush.msra.mxu0 0.0
    %6715 = vmatpush.msra.mxu0 0.0
    %6716 = vmatpush.msra.mxu0 0.0
    %6717 = vmatpush.msra.mxu0 0.0
    %6718 = vmatpush.msra.mxu0 0.0
    %6719 = vmatpush.msra.mxu0 0.0
    %6720 = vmatpush.msra.mxu0 0.0
    %6721 = vmatpush.msra.mxu0 0.0
    %6722 = vmatpush.msra.mxu0 0.0
    %6723 = vmatpush.msra.mxu0 %v6640
    %6724 = vmatpush.msra.mxu0 %v6618
    %6725 = vmatpush.msra.mxu0 %v6614
    %6726 = vmatpush.msra.mxu0 %v6610
    %6727 = vmatmul.f32.gmra.mxu0 %v6625
    %v6728 = vpop.f32.mrf.mxu0
    %v6729 = vadd.f32 0.0, %v6728
    %6730 = vmatmul.f32.gmra.mxu0 %v6628
    %v6731 = vpop.f32.mrf.mxu0
    %v6732 = vadd.f32 0.0, %v6731
    %6733 = vdwg.mxu0
    %v6734 = vld [vmem:[%s9] sm:$0xff]
    %v6735 = vld [vmem:[%s9 + $0x8] sm:$0xff]
    %v6736 = vld [vmem:[%s9 + $0x10] sm:$0xff]
    %v6737 = vld [vmem:[%s9 + $0x18] sm:$0xff]
    %v6738 = vld [vmem:[%s9 + $0x20] sm:$0xff]
    %v6739 = vld [vmem:[%s9 + $0x28] sm:$0xff]
    %v6740 = vld [vmem:[%s9 + $0x30] sm:$0xff]
    %v6741 = vld [vmem:[%s9 + $0x38] sm:$0xff]
    %v6742 = vmul.f32 %v6660, %v6734
    %v6743 = vmul.f32 %v6683, %v6735
    %v6744 = vmul.f32 %v6706, %v6736
    %v6745 = vmul.f32 %v6729, %v6737
    %v6746 = vmul.f32 %v6663, %v6738
    %v6747 = vmul.f32 %v6686, %v6739
    %v6748 = vmul.f32 %v6709, %v6740
    %v6749 = vmul.f32 %v6732, %v6741
    %v6750 = vadd.f32 %v6742, %v6746
    %v6751 = vrot.slane %v6750, 4
    %v6752 = vadd.f32 %v6750, %v6751
    %v6753 = vrot.slane %v6752, 2
    %v6754 = vadd.f32 %v6752, %v6753
    %v6755 = vrot.slane %v6754, 1
    %v6756 = vadd.f32 %v6754, %v6755
    %v6757 = vadd.f32 %v6743, %v6747
    %v6758 = vrot.slane %v6757, 4
    %v6759 = vadd.f32 %v6757, %v6758
    %v6760 = vrot.slane %v6759, 2
    %v6761 = vadd.f32 %v6759, %v6760
    %v6762 = vrot.slane %v6761, 1
    %v6763 = vadd.f32 %v6761, %v6762
    %v6764 = vadd.f32 %v6744, %v6748
    %v6765 = vrot.slane %v6764, 4
    %v6766 = vadd.f32 %v6764, %v6765
    %v6767 = vrot.slane %v6766, 2
    %v6768 = vadd.f32 %v6766, %v6767
    %v6769 = vrot.slane %v6768, 1
    %v6770 = vadd.f32 %v6768, %v6769
    %vm6771 = vcmask 130048
    %v6772 = vsel %vm6771, %v6745, 0.0
    %v6773 = vsel %vm6771, %v6749, 0.0
    %v6774 = vadd.f32 %v6772, %v6773
    %v6775 = vrot.slane %v6774, 4
    %v6776 = vadd.f32 %v6774, %v6775
    %v6777 = vrot.slane %v6776, 2
    %v6778 = vadd.f32 %v6776, %v6777
    %v6779 = vrot.slane %v6778, 1
    %v6780 = vadd.f32 %v6778, %v6779
    %v6782 = vsel %vm6481, %v6403, 0
    %v6785 = vsel %vm6481, %v6413, 0
    %6787 = vmatpush.msra.mxu0 %v6429
    %6788 = vmatpush.msra.mxu0 %v6428
    %6789 = vmatpush.msra.mxu0 %v6427
    %6790 = vmatpush.msra.mxu0 %v6426
    %6791 = vmatpush.msra.mxu0 %v6425
    %6792 = vmatpush.msra.mxu0 %v6424
    %6793 = vmatpush.msra.mxu0 %v6423
    %6794 = vmatpush.msra.mxu0 %v6422
    %6795 = vmatpush.msra.mxu0 %v6421
    %6796 = vmatpush.msra.mxu0 %v6420
    %6797 = vmatpush.msra.mxu0 %v6419
    %6798 = vmatpush.msra.mxu0 %v6418
    %6799 = vmatpush.msra.mxu0 %v6417
    %6800 = vmatpush.msra.mxu0 %v6416
    %6801 = vmatpush.msra.mxu0 %v6415
    %6802 = vmatpush.msra.mxu0 %v6414
    %6803 = vmatmul.f32.gmra.mxu0 %v6399
    %v6804 = vpop.f32.mrf.mxu0
    %v6805 = vadd.f32 0.0, %v6804
    %6806 = vmatmul.f32.gmra.mxu0 %v6409
    %v6807 = vpop.f32.mrf.mxu0
    %v6808 = vadd.f32 0.0, %v6807
    %6809 = vdwg.mxu0
    %6810 = vmatpush.msra.mxu0 %v6445
    %6811 = vmatpush.msra.mxu0 %v6444
    %6812 = vmatpush.msra.mxu0 %v6443
    %6813 = vmatpush.msra.mxu0 %v6442
    %6814 = vmatpush.msra.mxu0 %v6441
    %6815 = vmatpush.msra.mxu0 %v6440
    %6816 = vmatpush.msra.mxu0 %v6439
    %6817 = vmatpush.msra.mxu0 %v6438
    %6818 = vmatpush.msra.mxu0 %v6437
    %6819 = vmatpush.msra.mxu0 %v6436
    %6820 = vmatpush.msra.mxu0 %v6435
    %6821 = vmatpush.msra.mxu0 %v6434
    %6822 = vmatpush.msra.mxu0 %v6433
    %6823 = vmatpush.msra.mxu0 %v6432
    %6824 = vmatpush.msra.mxu0 %v6431
    %6825 = vmatpush.msra.mxu0 %v6430
    %6826 = vmatmul.f32.gmra.mxu0 %v6400
    %v6827 = vpop.f32.mrf.mxu0
    %v6828 = vadd.f32 %v6805, %v6827
    %6829 = vmatmul.f32.gmra.mxu0 %v6410
    %v6830 = vpop.f32.mrf.mxu0
    %v6831 = vadd.f32 %v6808, %v6830
    %6832 = vdwg.mxu0
    %6833 = vmatpush.msra.mxu0 %v6461
    %6834 = vmatpush.msra.mxu0 %v6460
    %6835 = vmatpush.msra.mxu0 %v6459
    %6836 = vmatpush.msra.mxu0 %v6458
    %6837 = vmatpush.msra.mxu0 %v6457
    %6838 = vmatpush.msra.mxu0 %v6456
    %6839 = vmatpush.msra.mxu0 %v6455
    %6840 = vmatpush.msra.mxu0 %v6454
    %6841 = vmatpush.msra.mxu0 %v6453
    %6842 = vmatpush.msra.mxu0 %v6452
    %6843 = vmatpush.msra.mxu0 %v6451
    %6844 = vmatpush.msra.mxu0 %v6450
    %6845 = vmatpush.msra.mxu0 %v6449
    %6846 = vmatpush.msra.mxu0 %v6448
    %6847 = vmatpush.msra.mxu0 %v6447
    %6848 = vmatpush.msra.mxu0 %v6446
    %6849 = vmatmul.f32.gmra.mxu0 %v6401
    %v6850 = vpop.f32.mrf.mxu0
    %v6851 = vadd.f32 %v6828, %v6850
    %6852 = vmatmul.f32.gmra.mxu0 %v6411
    %v6853 = vpop.f32.mrf.mxu0
    %v6854 = vadd.f32 %v6831, %v6853
    %6855 = vdwg.mxu0
    %6856 = vmatpush.msra.mxu0 %v6477
    %6857 = vmatpush.msra.mxu0 %v6476
    %6858 = vmatpush.msra.mxu0 %v6475
    %6859 = vmatpush.msra.mxu0 %v6474
    %6860 = vmatpush.msra.mxu0 %v6473
    %6861 = vmatpush.msra.mxu0 %v6472
    %6862 = vmatpush.msra.mxu0 %v6471
    %6863 = vmatpush.msra.mxu0 %v6470
    %6864 = vmatpush.msra.mxu0 %v6469
    %6865 = vmatpush.msra.mxu0 %v6468
    %6866 = vmatpush.msra.mxu0 %v6467
    %6867 = vmatpush.msra.mxu0 %v6466
    %6868 = vmatpush.msra.mxu0 %v6465
    %6869 = vmatpush.msra.mxu0 %v6464
    %6870 = vmatpush.msra.mxu0 %v6463
    %6871 = vmatpush.msra.mxu0 %v6462
    %6872 = vmatmul.f32.gmra.mxu0 %v6402
    %v6873 = vpop.f32.mrf.mxu0
    %v6874 = vadd.f32 %v6851, %v6873
    %6875 = vmatmul.f32.gmra.mxu0 %v6412
    %v6876 = vpop.f32.mrf.mxu0
    %v6877 = vadd.f32 %v6854, %v6876
    %6878 = vdwg.mxu0
    %6879 = vmatpush.msra.mxu0 0.0
    %6880 = vmatpush.msra.mxu0 0.0
    %6881 = vmatpush.msra.mxu0 0.0
    %6882 = vmatpush.msra.mxu0 0.0
    %6883 = vmatpush.msra.mxu0 0.0
    %6884 = vmatpush.msra.mxu0 0.0
    %6885 = vmatpush.msra.mxu0 0.0
    %6886 = vmatpush.msra.mxu0 0.0
    %6887 = vmatpush.msra.mxu0 0.0
    %6888 = vmatpush.msra.mxu0 0.0
    %6889 = vmatpush.msra.mxu0 0.0
    %6890 = vmatpush.msra.mxu0 0.0
    %6891 = vmatpush.msra.mxu0 0.0
    %6892 = vmatpush.msra.mxu0 %v6490
    %6893 = vmatpush.msra.mxu0 %v6479
    %6894 = vmatpush.msra.mxu0 %v6478
    %6895 = vmatmul.f32.gmra.mxu0 %v6782
    %v6896 = vpop.f32.mrf.mxu0
    %v6897 = vadd.f32 %v6874, %v6896
    %6898 = vmatmul.f32.gmra.mxu0 %v6785
    %v6899 = vpop.f32.mrf.mxu0
    %v6900 = vadd.f32 %v6877, %v6899
    %6901 = vdwg.mxu0
    %v6903 = vsel %vm6623, %v6897, 0
    %v6906 = vsel %vm6623, %v6900, 0
    %6908 = vmatpush.msra.mxu0 0.0
    %6909 = vmatpush.msra.mxu0 0.0
    %6910 = vmatpush.msra.mxu0 0.0
    %6911 = vmatpush.msra.mxu0 0.0
    %6912 = vmatpush.msra.mxu0 0.0
    %6913 = vmatpush.msra.mxu0 0.0
    %6914 = vmatpush.msra.mxu0 0.0
    %6915 = vmatpush.msra.mxu0 0.0
    %6916 = vmatpush.msra.mxu0 0.0
    %6917 = vmatpush.msra.mxu0 0.0
    %6918 = vmatpush.msra.mxu0 0.0
    %6919 = vmatpush.msra.mxu0 0.0
    %6920 = vmatpush.msra.mxu0 %v6631
    %6921 = vmatpush.msra.mxu0 %v6615
    %6922 = vmatpush.msra.mxu0 %v6611
    %6923 = vmatpush.msra.mxu0 %v6607
    %6924 = vmatmul.f32.gmra.mxu0 %v6903
    %v6925 = vpop.f32.mrf.mxu0
    %v6926 = vadd.f32 0.0, %v6925
    %6927 = vmatmul.f32.gmra.mxu0 %v6906
    %v6928 = vpop.f32.mrf.mxu0
    %v6929 = vadd.f32 0.0, %v6928
    %6930 = vdwg.mxu0
    %6931 = vmatpush.msra.mxu0 0.0
    %6932 = vmatpush.msra.mxu0 0.0
    %6933 = vmatpush.msra.mxu0 0.0
    %6934 = vmatpush.msra.mxu0 0.0
    %6935 = vmatpush.msra.mxu0 0.0
    %6936 = vmatpush.msra.mxu0 0.0
    %6937 = vmatpush.msra.mxu0 0.0
    %6938 = vmatpush.msra.mxu0 0.0
    %6939 = vmatpush.msra.mxu0 0.0
    %6940 = vmatpush.msra.mxu0 0.0
    %6941 = vmatpush.msra.mxu0 0.0
    %6942 = vmatpush.msra.mxu0 0.0
    %6943 = vmatpush.msra.mxu0 %v6634
    %6944 = vmatpush.msra.mxu0 %v6616
    %6945 = vmatpush.msra.mxu0 %v6612
    %6946 = vmatpush.msra.mxu0 %v6608
    %6947 = vmatmul.f32.gmra.mxu0 %v6903
    %v6948 = vpop.f32.mrf.mxu0
    %v6949 = vadd.f32 0.0, %v6948
    %6950 = vmatmul.f32.gmra.mxu0 %v6906
    %v6951 = vpop.f32.mrf.mxu0
    %v6952 = vadd.f32 0.0, %v6951
    %6953 = vdwg.mxu0
    %6954 = vmatpush.msra.mxu0 0.0
    %6955 = vmatpush.msra.mxu0 0.0
    %6956 = vmatpush.msra.mxu0 0.0
    %6957 = vmatpush.msra.mxu0 0.0
    %6958 = vmatpush.msra.mxu0 0.0
    %6959 = vmatpush.msra.mxu0 0.0
    %6960 = vmatpush.msra.mxu0 0.0
    %6961 = vmatpush.msra.mxu0 0.0
    %6962 = vmatpush.msra.mxu0 0.0
    %6963 = vmatpush.msra.mxu0 0.0
    %6964 = vmatpush.msra.mxu0 0.0
    %6965 = vmatpush.msra.mxu0 0.0
    %6966 = vmatpush.msra.mxu0 %v6637
    %6967 = vmatpush.msra.mxu0 %v6617
    %6968 = vmatpush.msra.mxu0 %v6613
    %6969 = vmatpush.msra.mxu0 %v6609
    %6970 = vmatmul.f32.gmra.mxu0 %v6903
    %v6971 = vpop.f32.mrf.mxu0
    %v6972 = vadd.f32 0.0, %v6971
    %6973 = vmatmul.f32.gmra.mxu0 %v6906
    %v6974 = vpop.f32.mrf.mxu0
    %v6975 = vadd.f32 0.0, %v6974
    %6976 = vdwg.mxu0
    %6977 = vmatpush.msra.mxu0 0.0
    %6978 = vmatpush.msra.mxu0 0.0
    %6979 = vmatpush.msra.mxu0 0.0
    %6980 = vmatpush.msra.mxu0 0.0
    %6981 = vmatpush.msra.mxu0 0.0
    %6982 = vmatpush.msra.mxu0 0.0
    %6983 = vmatpush.msra.mxu0 0.0
    %6984 = vmatpush.msra.mxu0 0.0
    %6985 = vmatpush.msra.mxu0 0.0
    %6986 = vmatpush.msra.mxu0 0.0
    %6987 = vmatpush.msra.mxu0 0.0
    %6988 = vmatpush.msra.mxu0 0.0
    %6989 = vmatpush.msra.mxu0 %v6640
    %6990 = vmatpush.msra.mxu0 %v6618
    %6991 = vmatpush.msra.mxu0 %v6614
    %6992 = vmatpush.msra.mxu0 %v6610
    %6993 = vmatmul.f32.gmra.mxu0 %v6903
    %v6994 = vpop.f32.mrf.mxu0
    %v6995 = vadd.f32 0.0, %v6994
    %6996 = vmatmul.f32.gmra.mxu0 %v6906
    %v6997 = vpop.f32.mrf.mxu0
    %v6998 = vadd.f32 0.0, %v6997
    %6999 = vdwg.mxu0
    %v7000 = vmul.f32 %v6926, %v6734
    %v7001 = vmul.f32 %v6949, %v6735
    %v7002 = vmul.f32 %v6972, %v6736
    %v7003 = vmul.f32 %v6995, %v6737
    %v7004 = vmul.f32 %v6929, %v6738
    %v7005 = vmul.f32 %v6952, %v6739
    %v7006 = vmul.f32 %v6975, %v6740
    %v7007 = vmul.f32 %v6998, %v6741
    %v7008 = vadd.f32 %v7000, %v7004
    %v7009 = vrot.slane %v7008, 4
    %v7010 = vadd.f32 %v7008, %v7009
    %v7011 = vrot.slane %v7010, 2
    %v7012 = vadd.f32 %v7010, %v7011
    %v7013 = vrot.slane %v7012, 1
    %v7014 = vadd.f32 %v7012, %v7013
    %v7015 = vadd.f32 %v7001, %v7005
    %v7016 = vrot.slane %v7015, 4
    %v7017 = vadd.f32 %v7015, %v7016
    %v7018 = vrot.slane %v7017, 2
    %v7019 = vadd.f32 %v7017, %v7018
    %v7020 = vrot.slane %v7019, 1
    %v7021 = vadd.f32 %v7019, %v7020
    %v7022 = vadd.f32 %v7002, %v7006
    %v7023 = vrot.slane %v7022, 4
    %v7024 = vadd.f32 %v7022, %v7023
    %v7025 = vrot.slane %v7024, 2
    %v7026 = vadd.f32 %v7024, %v7025
    %v7027 = vrot.slane %v7026, 1
    %v7028 = vadd.f32 %v7026, %v7027
    %v7029 = vsel %vm6771, %v7003, 0.0
    %v7030 = vsel %vm6771, %v7007, 0.0
    %v7031 = vadd.f32 %v7029, %v7030
    %v7032 = vrot.slane %v7031, 4
    %v7033 = vadd.f32 %v7031, %v7032
    %v7034 = vrot.slane %v7033, 2
    %v7035 = vadd.f32 %v7033, %v7034
    %v7036 = vrot.slane %v7035, 1
    %v7037 = vadd.f32 %v7035, %v7036
    %v7038 = vsel %vm6488, %v6756, %v7014
    %v7039 = vsel %vm6488, %v6763, %v7021
    %v7040 = vsel %vm6488, %v6770, %v7028
    %v7041 = vsel %vm6488, %v6780, %v7037
    %v7042 = vld [vmem:[%s10] sm:$0xff]
    %v7043 = vld [vmem:[%s10 + $0x8] sm:$0xff]
    %v7044 = vld [vmem:[%s10 + $0x10] sm:$0xff]
    %v7045 = vld [vmem:[%s10 + $0x18] sm:$0xff]
    %v7046 = vld [vmem:[%s10 + $0x20] sm:$0xff]
    %v7047 = vld [vmem:[%s10 + $0x28] sm:$0xff]
    %v7048 = vld [vmem:[%s10 + $0x30] sm:$0xff]
    %v7049 = vld [vmem:[%s10 + $0x38] sm:$0xff]
    %v7050 = vld [vmem:[%s10 + $0x40] sm:$0xff]
    %v7051 = vld [vmem:[%s10 + $0x48] sm:$0xff]
    %v7052 = vld [vmem:[%s10 + $0x50] sm:$0xff]
    %v7053 = vld [vmem:[%s10 + $0x58] sm:$0xff]
    %v7054 = vld [vmem:[%s10 + $0x60] sm:$0xff]
    %v7055 = vld [vmem:[%s10 + $0x68] sm:$0xff]
    %v7056 = vld [vmem:[%s10 + $0x70] sm:$0xff]
    %v7057 = vld [vmem:[%s10 + $0x78] sm:$0xff]
    %v7058 = vld [vmem:[%s10 + $0x80] sm:$0xff]
    %v7059 = vld [vmem:[%s10 + $0x88] sm:$0xff]
    %v7060 = vld [vmem:[%s10 + $0x90] sm:$0xff]
    %v7061 = vld [vmem:[%s10 + $0x98] sm:$0xff]
    %v7062 = vld [vmem:[%s10 + $0xa0] sm:$0xff]
    %v7063 = vld [vmem:[%s10 + $0xa8] sm:$0xff]
    %v7064 = vld [vmem:[%s10 + $0xb0] sm:$0xff]
    %v7065 = vld [vmem:[%s10 + $0xb8] sm:$0xff]
    %v7066 = vld [vmem:[%s10 + $0xc0] sm:$0xff]
    %v7067 = vld [vmem:[%s10 + $0xc8] sm:$0xff]
    %v7068 = vld [vmem:[%s10 + $0xd0] sm:$0xff]
    %v7069 = vld [vmem:[%s10 + $0xd8] sm:$0xff]
    %v7070 = vld [vmem:[%s10 + $0xe0] sm:$0xff]
    %v7071 = vld [vmem:[%s10 + $0xe8] sm:$0xff]
    %v7072 = vld [vmem:[%s10 + $0xf0] sm:$0xff]
    %v7073 = vld [vmem:[%s10 + $0xf8] sm:$0xff]
    %v7074 = vld [vmem:[%s10 + $0x100] sm:$0xff]
    %v7075 = vld [vmem:[%s10 + $0x108] sm:$0xff]
    %v7076 = vld [vmem:[%s10 + $0x110] sm:$0xff]
    %v7077 = vld [vmem:[%s10 + $0x118] sm:$0xff]
    %v7078 = vld [vmem:[%s10 + $0x120] sm:$0xff]
    %v7079 = vld [vmem:[%s10 + $0x128] sm:$0xff]
    %v7080 = vld [vmem:[%s10 + $0x130] sm:$0xff]
    %v7081 = vld [vmem:[%s10 + $0x138] sm:$0xff]
    %v7082 = vld [vmem:[%s10 + $0x140] sm:$0xff]
    %v7083 = vld [vmem:[%s10 + $0x148] sm:$0xff]
    %v7084 = vld [vmem:[%s10 + $0x150] sm:$0xff]
    %v7085 = vld [vmem:[%s10 + $0x158] sm:$0xff]
    %v7086 = vld [vmem:[%s10 + $0x160] sm:$0xff]
    %v7087 = vld [vmem:[%s10 + $0x168] sm:$0xff]
    %v7088 = vld [vmem:[%s10 + $0x170] sm:$0xff]
    %v7089 = vld [vmem:[%s10 + $0x178] sm:$0xff]
    %v7090 = vld [vmem:[%s10 + $0x180] sm:$0xff]
    %v7091 = vld [vmem:[%s10 + $0x188] sm:$0xff]
    %v7092 = vld [vmem:[%s11] sm:$0x1]
    %v7094 = vperm.slane %v7092, 0
    %v7097 = vsel %vm6771, %v7041, 0
    %7099 = vmatpush.msra.mxu0 %v7057
    %7100 = vmatpush.msra.mxu0 %v7056
    %7101 = vmatpush.msra.mxu0 %v7055
    %7102 = vmatpush.msra.mxu0 %v7054
    %7103 = vmatpush.msra.mxu0 %v7053
    %7104 = vmatpush.msra.mxu0 %v7052
    %7105 = vmatpush.msra.mxu0 %v7051
    %7106 = vmatpush.msra.mxu0 %v7050
    %7107 = vmatpush.msra.mxu0 %v7049
    %7108 = vmatpush.msra.mxu0 %v7048
    %7109 = vmatpush.msra.mxu0 %v7047
    %7110 = vmatpush.msra.mxu0 %v7046
    %7111 = vmatpush.msra.mxu0 %v7045
    %7112 = vmatpush.msra.mxu0 %v7044
    %7113 = vmatpush.msra.mxu0 %v7043
    %7114 = vmatpush.msra.mxu0 %v7042
    %7115 = vmatmul.f32.gmra.mxu0 %v7038
    %v7116 = vpop.f32.mrf.mxu0
    %v7117 = vadd.f32 %v7094, %v7116
    %7118 = vdwg.mxu0
    %7119 = vmatpush.msra.mxu0 %v7073
    %7120 = vmatpush.msra.mxu0 %v7072
    %7121 = vmatpush.msra.mxu0 %v7071
    %7122 = vmatpush.msra.mxu0 %v7070
    %7123 = vmatpush.msra.mxu0 %v7069
    %7124 = vmatpush.msra.mxu0 %v7068
    %7125 = vmatpush.msra.mxu0 %v7067
    %7126 = vmatpush.msra.mxu0 %v7066
    %7127 = vmatpush.msra.mxu0 %v7065
    %7128 = vmatpush.msra.mxu0 %v7064
    %7129 = vmatpush.msra.mxu0 %v7063
    %7130 = vmatpush.msra.mxu0 %v7062
    %7131 = vmatpush.msra.mxu0 %v7061
    %7132 = vmatpush.msra.mxu0 %v7060
    %7133 = vmatpush.msra.mxu0 %v7059
    %7134 = vmatpush.msra.mxu0 %v7058
    %7135 = vmatmul.f32.gmra.mxu0 %v7039
    %v7136 = vpop.f32.mrf.mxu0
    %v7137 = vadd.f32 %v7117, %v7136
    %7138 = vdwg.mxu0
    %7139 = vmatpush.msra.mxu0 %v7089
    %7140 = vmatpush.msra.mxu0 %v7088
    %7141 = vmatpush.msra.mxu0 %v7087
    %7142 = vmatpush.msra.mxu0 %v7086
    %7143 = vmatpush.msra.mxu0 %v7085
    %7144 = vmatpush.msra.mxu0 %v7084
    %7145 = vmatpush.msra.mxu0 %v7083
    %7146 = vmatpush.msra.mxu0 %v7082
    %7147 = vmatpush.msra.mxu0 %v7081
    %7148 = vmatpush.msra.mxu0 %v7080
    %7149 = vmatpush.msra.mxu0 %v7079
    %7150 = vmatpush.msra.mxu0 %v7078
    %7151 = vmatpush.msra.mxu0 %v7077
    %7152 = vmatpush.msra.mxu0 %v7076
    %7153 = vmatpush.msra.mxu0 %v7075
    %7154 = vmatpush.msra.mxu0 %v7074
    %7155 = vmatmul.f32.gmra.mxu0 %v7040
    %v7156 = vpop.f32.mrf.mxu0
    %v7157 = vadd.f32 %v7137, %v7156
    %7158 = vdwg.mxu0
    %7159 = vmatpush.msra.mxu0 0.0
    %7160 = vmatpush.msra.mxu0 0.0
    %7161 = vmatpush.msra.mxu0 0.0
    %7162 = vmatpush.msra.mxu0 0.0
    %7163 = vmatpush.msra.mxu0 0.0
    %7164 = vmatpush.msra.mxu0 0.0
    %7165 = vmatpush.msra.mxu0 0.0
    %7166 = vmatpush.msra.mxu0 0.0
    %7167 = vmatpush.msra.mxu0 0.0
    %7168 = vmatpush.msra.mxu0 0.0
    %7169 = vmatpush.msra.mxu0 0.0
    %7170 = vmatpush.msra.mxu0 0.0
    %7171 = vmatpush.msra.mxu0 0.0
    %7172 = vmatpush.msra.mxu0 0.0
    %7173 = vmatpush.msra.mxu0 %v7091
    %7174 = vmatpush.msra.mxu0 %v7090
    %7175 = vmatmul.f32.gmra.mxu0 %v7097
    %v7176 = vpop.f32.mrf.mxu0
    %v7177 = vadd.f32 %v7157, %v7176
    %7178 = vdwg.mxu0
    %v7179 = vmax.f32 %v7177, 0.0
    %v7180 = vld [vmem:[%s12] sm:$0xff]
    %v7181 = vld [vmem:[%s12 + $0x8] sm:$0xff]
    %v7182 = vld [vmem:[%s12 + $0x10] sm:$0xff]
    %v7183 = vld [vmem:[%s12 + $0x18] sm:$0xff]
    %v7184 = vld [vmem:[%s12 + $0x20] sm:$0xff]
    %v7185 = vld [vmem:[%s12 + $0x28] sm:$0xff]
    %v7186 = vld [vmem:[%s12 + $0x30] sm:$0xff]
    %v7187 = vld [vmem:[%s12 + $0x38] sm:$0xff]
    %v7188 = vld [vmem:[%s12 + $0x40] sm:$0xff]
    %v7189 = vld [vmem:[%s12 + $0x48] sm:$0xff]
    %v7190 = vld [vmem:[%s12 + $0x50] sm:$0xff]
    %v7191 = vld [vmem:[%s12 + $0x58] sm:$0xff]
    %v7192 = vld [vmem:[%s12 + $0x60] sm:$0xff]
    %v7193 = vld [vmem:[%s12 + $0x68] sm:$0xff]
    %v7194 = vld [vmem:[%s12 + $0x70] sm:$0xff]
    %v7195 = vld [vmem:[%s13] sm:$0x1]
    %v7197 = vperm.slane %v7195, 0
    %v7200 = vsel %vm3998, %v7179, 0
    %7202 = vmatpush.msra.mxu0 0.0
    %7203 = vmatpush.msra.mxu0 %v7194
    %7204 = vmatpush.msra.mxu0 %v7193
    %7205 = vmatpush.msra.mxu0 %v7192
    %7206 = vmatpush.msra.mxu0 %v7191
    %7207 = vmatpush.msra.mxu0 %v7190
    %7208 = vmatpush.msra.mxu0 %v7189
    %7209 = vmatpush.msra.mxu0 %v7188
    %7210 = vmatpush.msra.mxu0 %v7187
    %7211 = vmatpush.msra.mxu0 %v7186
    %7212 = vmatpush.msra.mxu0 %v7185
    %7213 = vmatpush.msra.mxu0 %v7184
    %7214 = vmatpush.msra.mxu0 %v7183
    %7215 = vmatpush.msra.mxu0 %v7182
    %7216 = vmatpush.msra.mxu0 %v7181
    %7217 = vmatpush.msra.mxu0 %v7180
    %7218 = vmatmul.f32.gmra.mxu0 %v7200
    %v7219 = vpop.f32.mrf.mxu0
    %v7220 = vadd.f32 %v7197, %v7219
    %7221 = vdwg.mxu0
    %v7222 = vmax.f32 %v7220, 0.0
    %v7223 = vld [vmem:[%s14] sm:$0xff]
    %v7224 = vld [vmem:[%s14 + $0x8] sm:$0xff]
    %v7225 = vld [vmem:[%s14 + $0x10] sm:$0xff]
    %v7226 = vld [vmem:[%s14 + $0x18] sm:$0xff]
    %v7227 = vld [vmem:[%s14 + $0x20] sm:$0xff]
    %v7228 = vld [vmem:[%s14 + $0x28] sm:$0xff]
    %v7229 = vld [vmem:[%s14 + $0x30] sm:$0xff]
    %v7230 = vld [vmem:[%s14 + $0x38] sm:$0xff]
    %v7231 = vld [vmem:[%s14 + $0x40] sm:$0xff]
    %v7232 = vld [vmem:[%s14 + $0x48] sm:$0xff]
    %v7233 = vld [vmem:[%s14 + $0x50] sm:$0xf]
    %v7234 = vld [vmem:[%s15] sm:$0x1]
    %v7236 = vperm.slane %v7234, 0
    %vm7238 = vcmask 687104
    %v7240 = vsel %vm7238, %v7222, 0
    %vm7242 = vcmask 1043456
    %v7244 = vsel %vm7242, %v7233, 0
    %7246 = vmatpush.msra.mxu0 0.0
    %7247 = vmatpush.msra.mxu0 0.0
    %7248 = vmatpush.msra.mxu0 0.0
    %7249 = vmatpush.msra.mxu0 0.0
    %7250 = vmatpush.msra.mxu0 0.0
    %7251 = vmatpush.msra.mxu0 %v7244
    %7252 = vmatpush.msra.mxu0 %v7232
    %7253 = vmatpush.msra.mxu0 %v7231
    %7254 = vmatpush.msra.mxu0 %v7230
    %7255 = vmatpush.msra.mxu0 %v7229
    %7256 = vmatpush.msra.mxu0 %v7228
    %7257 = vmatpush.msra.mxu0 %v7227
    %7258 = vmatpush.msra.mxu0 %v7226
    %7259 = vmatpush.msra.mxu0 %v7225
    %7260 = vmatpush.msra.mxu0 %v7224
    %7261 = vmatpush.msra.mxu0 %v7223
    %7262 = vmatmul.f32.gmra.mxu0 %v7240
    %v7263 = vpop.f32.mrf.mxu0
    %v7264 = vadd.f32 %v7236, %v7263
    %7265 = vdwg.mxu0
    %vm7266 = vcmask 74752
    %v7267 = vsel %vm7266, %v7264, -inf
    %7268 = vmax.xlane.f32.xlu0 %v7267
    %v7269 = vpop.xlane.xlu0 %7268
    %v7270 = vsub.f32 %v7264, %v7269
    %v7271 = vmul.f32 %v7270, 1.442695
    %v7272 = vpow.pop %v7271
    %v7273 = vsel %vm7266, %v7272, 0.0
    %7274 = vadd.xlane.f32.xlu0 %v7273
    %v7275 = vpop.xlane.xlu0 %7274
    %v7276 = vrcp.pop %v7275
    %v7277 = vmul.f32 %v7275, %v7276
    %v7278 = vsub.f32 1.0, %v7277
    %v7279 = vmul.f32 %v7276, %v7278
    %v7280 = vadd.f32 %v7276, %v7279
    %vm7281 = vweird.f32 %v7275
    %vm7282 = vweird.f32 %v7276
    %vm7283 = vmor %vm7281, %vm7282
    %v7284 = vsel %vm7283, %v7276, %v7280
    %v7285 = vand.u32 2147483647, %v7275
    %vm7286 = vcmp.eq.f32.partialorder %v7285, 8.507059e+37
    %v7287 = vand.u32 %v7275, 2147483648
    %v7288 = vor.u32 1.1754944e-38, %v7287
    %v7289 = vsel %vm7286, %v7288, %v7284
    %v7290 = vmul.f32 %v7272, %v7289
    %7291 = vst.msk [vmem:[#allocation4] sm:$0x3] %vm7266, %v7290
    // Predicated region
    $region66: #{lenet_forward.1} parent=1 // pred_check
      _
    $region67: #{lenet_forward.1} parent=1 // pred_check_branch
      %7293 = sbr.rel (0) target = $region69
    $region68: #{lenet_forward.1} parent=1 // pred_region
      %7295 = vsyncadd [#allocation5], 0
      %s7297 = sshll.u32 [#allocation4], 4
      %s7298 = int_to_ptr.vmem [resolvable:$true] %s7297
      %s7299 = sshll.u32 %s16, 4
      %s7300 = int_to_ptr.hbm [resolvable:$true] %s7299
      %7302 = dma.vmem_to_hbm [thread:$0]  %s7298, 32, %s7300, [#allocation5]
    $region69: #{lenet_forward.1} parent=1 // pred_fallthru
      _
    // Predicated region
    $region70: #{lenet_forward.1} parent=1 // pred_check
      _
    $region71: #{lenet_forward.1} parent=1 // pred_check_branch
      %7304 = sbr.rel (0) target = $region73
    $region72: #{lenet_forward.1} parent=1 // pred_region
      %7306 = dma.done [#allocation5], 32
    $region73: #{lenet_forward.1} parent=1 // pred_fallthru
      _
    %7307 = vsyncpa [#allocation5], 1

</llo_original>
